<compile_context>
chip_gen: v6e
topology: v6e:2x2x1
jax: 0.10.0
libtpu: 0.0.40
codegen_flags: <defaults>
</compile_context>

<pallas_src>
import jax
import jax.numpy as jnp
from jax.experimental import pallas as pl
from jax.experimental.pallas import tpu as pltpu  # noqa: F401  (TPU backend assumed)

# ----------------------- small synthetic config -----------------------
BATCH = 2
IMAGE_SIZE = 16
PATCH_SIZE = 4
CHANNELS = 3
ENC_DIM = 32
ENC_DEPTH = 1
ENC_HEADS = 4
ENC_DIM_HEAD = 8
ENC_MLP_DIM = 64
DEC_DIM = 48
DEC_DEPTH = 1
DEC_HEADS = 4
DEC_DIM_HEAD = 16
DEC_MLP_DIM = DEC_DIM * 4
MASKING_RATIO = 0.75
APPLY_DECODER_POS_EMB_ALL = False   # matches the reference default (conditional add)

NUM_PATCHES = (IMAGE_SIZE // PATCH_SIZE) ** 2       # 16
PATCH_DIM = PATCH_SIZE * PATCH_SIZE * CHANNELS      # 48 (pixel_values_per_patch)
POS_LEN = NUM_PATCHES + 1                           # ViT pos_embedding has cls slot
NUM_MASKED = int(MASKING_RATIO * NUM_PATCHES)       # 12
NUM_UNMASKED = NUM_PATCHES - NUM_MASKED             # 4

# -------- packed 1-row parameter slab layout (one VMEM input, one DMA) --------
PACK_W = max(ENC_DIM, ENC_MLP_DIM, DEC_DIM, DEC_MLP_DIM, PATCH_DIM)   # 192
ROW_PATCH_B = 0
ROW_E2D_B = 1
ROW_PIX_B = 2
ROW_MASK_TOK = 3
ROW_ENC_BASE = 4                                    # 7 rows / encoder layer
ROW_DEC_BASE = ROW_ENC_BASE + 7 * ENC_DEPTH         # 7 rows / decoder layer
N_VEC_ROWS = ROW_DEC_BASE + 7 * DEC_DEPTH           # 18


# ----------------------- in-kernel building blocks -----------------------
def _ln(x, g, b):
    # x: (M, D); g, b: (1, D)
    mu = jnp.mean(x, axis=-1, keepdims=True)
    xc = x - mu
    var = jnp.mean(xc * xc, axis=-1, keepdims=True)
    return xc * jax.lax.rsqrt(var + 1e-5) * g + b


def _gelu(x):
    # exact GELU (torch.nn.GELU default) -- kept exact for spec fidelity
    return 0.5 * x * (1.0 + jax.lax.erf(x * 0.7071067811865476))


def _transformer_flat(x, wqkv_ref, wout_ref, w1_ref, w2_ref, vec_ref, vec_base,
                      *, depth, heads, dim_head, dim, mlp_dim, batch, seq):
    """Pre-norm transformer on batch-flattened tokens x: (batch*seq, dim), f32.

    All token-wise matmuls (qkv, out-projection, FF) operate on the full (B*S, D)
    slab; only the SxS score/softmax is computed per batch element (block-diagonal
    attention).  Head outputs are lane-concatenated and projected with a single
    (B*S, inner) @ (inner, dim) matmul.  Weights are read once per layer.
    """
    f32 = jnp.float32
    inner = heads * dim_head
    scale = dim_head ** -0.5
    for l in range(depth):
        base = vec_base + 7 * l
        ln1g = vec_ref[base + 0:base + 1, :dim]
        ln1b = vec_ref[base + 1:base + 2, :dim]
        bout = vec_ref[base + 2:base + 3, :dim]
        ln2g = vec_ref[base + 3:base + 4, :dim]
        ln2b = vec_ref[base + 4:base + 5, :dim]
        b1 = vec_ref[base + 5:base + 6, :mlp_dim]
        b2 = vec_ref[base + 6:base + 7, :dim]
        wqkv = wqkv_ref[l]      # (dim, 3*inner)
        wout = wout_ref[l]      # (inner, dim)
        w1 = w1_ref[l]          # (dim, mlp_dim)
        w2 = w2_ref[l]          # (mlp_dim, dim)

        # ---- attention ----
        xn = _ln(x, ln1g, ln1b)
        qkv = jnp.dot(xn, wqkv, preferred_element_type=f32)          # (B*S, 3*inner)
        per_batch = []
        for b in range(batch):
            qkv_b = qkv[b * seq:(b + 1) * seq]                       # (S, 3*inner)
            head_outs = []
            for h in range(heads):
                lo = h * dim_head
                q = qkv_b[:, lo:lo + dim_head]
                k = qkv_b[:, inner + lo:inner + lo + dim_head]
                v = qkv_b[:, 2 * inner + lo:2 * inner + lo + dim_head]
                s = jax.lax.dot_general(q, k, (((1,), (1,)), ((), ())),
                                        preferred_element_type=f32) * scale  # (S, S)
                s = s - jnp.max(s, axis=-1, keepdims=True)
                e = jnp.exp(s)
                p = e * pl.reciprocal(jnp.sum(e, axis=-1, keepdims=True), approx=True)
                head_outs.append(jnp.dot(p, v, preferred_element_type=f32))  # (S, Dh)
            per_batch.append(jnp.concatenate(head_outs, axis=1))     # (S, inner)
        attn = jnp.concatenate(per_batch, axis=0)                    # (B*S, inner)
        x = jnp.dot(attn, wout, preferred_element_type=f32) + bout + x

        # ---- feed-forward ----
        xn = _ln(x, ln2g, ln2b)
        hdn = _gelu(jnp.dot(xn, w1, preferred_element_type=f32) + b1)
        x = jnp.dot(hdn, w2, preferred_element_type=f32) + b2 + x
    return x


# ----------------------------- fused MAE kernel -----------------------------
def _mae_kernel(patches_ref, rand_ref, inv_ref, pos_ref, dpos_ref,
                patch_w_ref, e2d_w_ref, pix_w_ref,
                enc_wqkv_ref, enc_wout_ref, enc_w1_ref, enc_w2_ref,
                dec_wqkv_ref, dec_wout_ref, dec_w1_ref, dec_w2_ref,
                vec_ref,
                recon_ref, loss_ref):
    f32 = jnp.float32
    N = NUM_PATCHES
    NM = NUM_MASKED
    NU = NUM_UNMASKED
    B = rand_ref.shape[0] // N

    # packed 1-row params
    patch_b = vec_ref[ROW_PATCH_B:ROW_PATCH_B + 1, :ENC_DIM]
    e2d_b = vec_ref[ROW_E2D_B:ROW_E2D_B + 1, :DEC_DIM]
    pix_b = vec_ref[ROW_PIX_B:ROW_PIX_B + 1, :PATCH_DIM]
    mask_tok = vec_ref[ROW_MASK_TOK:ROW_MASK_TOK + 1, :DEC_DIM]

    pos = pos_ref[...]                      # (N, ENC_DIM)
    dpos = dpos_ref[...]                    # (N, DEC_DIM)
    patches = patches_ref[...]              # (B*N, PATCH_DIM)

    # --- per-batch 0/1 permutation matrices built on-chip from int32 indices ---
    # p_rand[r, c] = (rand_idx[r] == c)  -> (p_rand @ x)[r] = x[rand_idx[r]]   (gather)
    # p_inv [r, c] = (inv_idx[r]  == c)  -> (p_inv  @ y)[r] = y[inv_idx[r]]    (reorder)
    iota_c = jax.lax.broadcasted_iota(jnp.int32, (N, N), 1)
    p_rand, p_inv = [], []
    for b in range(B):
        p_rand.append(jnp.where(rand_ref[b * N:(b + 1) * N, :] == iota_c, 1.0, 0.0))
        p_inv.append(jnp.where(inv_ref[b * N:(b + 1) * N, :] == iota_c, 1.0, 0.0))

    # --- patch embedding on ALL patches (batch flattened into rows) ---
    emb_all = (jnp.dot(patches, patch_w_ref[...], preferred_element_type=f32)
               + patch_b)                                            # (B*N, ENC_DIM)

    enc_in_list, masked_patch_list, mask_dpos_list, unmask_dpos_list = [], [], [], []
    for b in range(B):
        tok_all_b = emb_all[b * N:(b + 1) * N] + pos                 # (N, ENC_DIM)
        perm_tok = jnp.dot(p_rand[b], tok_all_b, preferred_element_type=f32)
        enc_in_list.append(perm_tok[NM:])                            # unmasked tokens
        perm_patch = jnp.dot(p_rand[b], patches[b * N:(b + 1) * N],
                             preferred_element_type=f32)
        masked_patch_list.append(perm_patch[:NM])                    # masked raw patches
        perm_dpos = jnp.dot(p_rand[b], dpos, preferred_element_type=f32)
        mask_dpos_list.append(perm_dpos[:NM])                        # dec pos @ masked
        if APPLY_DECODER_POS_EMB_ALL:
            unmask_dpos_list.append(perm_dpos[NM:])

    enc_in = jnp.concatenate(enc_in_list, axis=0)                    # (B*NU, ENC_DIM)

    # --- encoder transformer (batch flattened, block-diagonal attention) ---
    enc_out = _transformer_flat(
        enc_in, enc_wqkv_ref, enc_wout_ref, enc_w1_ref, enc_w2_ref,
        vec_ref, ROW_ENC_BASE,
        depth=ENC_DEPTH, heads=ENC_HEADS, dim_head=ENC_DIM_HEAD,
        dim=ENC_DIM, mlp_dim=ENC_MLP_DIM, batch=B, seq=NU)

    # --- enc_to_dec on encoded tokens AND on the raw (pre-transformer) tokens,
    #     matching the reference `self.enc_to_dec(tokens)` for the reconstruction ---
    e2d_w = e2d_w_ref[...]
    dec_unmasked = jnp.dot(enc_out, e2d_w, preferred_element_type=f32) + e2d_b  # (B*NU, DEC)
    raw_unmasked = jnp.dot(enc_in, e2d_w, preferred_element_type=f32) + e2d_b   # (B*NU, DEC)
    if APPLY_DECODER_POS_EMB_ALL:
        dec_unmasked = dec_unmasked + jnp.concatenate(unmask_dpos_list, axis=0)

    # --- decoder input: cat([mask_token + dec_pos(masked), enc_to_dec(encoded)]) ---
    dec_in_list = []
    for b in range(B):
        mtok = mask_tok + mask_dpos_list[b]                          # (NM, DEC_DIM)
        dec_in_list.append(jnp.concatenate(
            [mtok, dec_unmasked[b * NU:(b + 1) * NU]], axis=0))      # (N, DEC_DIM)
    dec_in = jnp.concatenate(dec_in_list, axis=0)                    # (B*N, DEC_DIM)

    # --- decoder transformer ---
    dec_out = _transformer_flat(
        dec_in, dec_wqkv_ref, dec_wout_ref, dec_w1_ref, dec_w2_ref,
        vec_ref, ROW_DEC_BASE,
        depth=DEC_DEPTH, heads=DEC_HEADS, dim_head=DEC_DIM_HEAD,
        dim=DEC_DIM, mlp_dim=DEC_MLP_DIM, batch=B, seq=N)

    # --- to_pixels on [decoded masked ; enc_to_dec(raw unmasked)]  (slot order) ---
    comb_list = []
    for b in range(B):
        comb_list.append(jnp.concatenate(
            [dec_out[b * N:b * N + NM], raw_unmasked[b * NU:(b + 1) * NU]], axis=0))
    combined = jnp.concatenate(comb_list, axis=0)                    # (B*N, DEC_DIM)
    pix_all = (jnp.dot(combined, pix_w_ref[...], preferred_element_type=f32)
               + pix_b)                                              # (B*N, PATCH_DIM)

    # --- reorder back to original patch order (permutation -> gather with inverse) ---
    recon_list = []
    for b in range(B):
        recon_list.append(jnp.dot(p_inv[b], pix_all[b * N:(b + 1) * N],
                                  preferred_element_type=f32))
    recon_ref[...] = jnp.concatenate(recon_list, axis=0)             # (B*N, PATCH_DIM)

    # --- MSE loss over masked predictions (mean over all elements) ---
    pred_masked = jnp.concatenate([pix_all[b * N:b * N + NM] for b in range(B)], axis=0)
    target = jnp.concatenate(masked_patch_list, axis=0)
    diff = pred_masked - target
    loss_ref[...] = (jnp.sum(diff * diff, keepdims=True)
                     * (1.0 / float(B * NM * PATCH_DIM)))


# -------------------------- parameter construction --------------------------
def _make_transformer_weights(key, dim, depth, heads, dim_head, mlp_dim):
    inner = heads * dim_head
    wqkv, wout, w1, w2, vec_rows = [], [], [], [], []
    for _ in range(depth):
        key, k0, k1, k2, k3 = jax.random.split(key, 5)
        wqkv.append(0.02 * jax.random.normal(k0, (dim, 3 * inner), jnp.float32))
        wout.append(0.02 * jax.random.normal(k1, (inner, dim), jnp.float32))
        w1.append(0.02 * jax.random.normal(k2, (dim, mlp_dim), jnp.float32))
        w2.append(0.02 * jax.random.normal(k3, (mlp_dim, dim), jnp.float32))
        vec_rows += [jnp.ones((dim,), jnp.float32),    # ln1 gamma
                     jnp.zeros((dim,), jnp.float32),   # ln1 beta
                     jnp.zeros((dim,), jnp.float32),   # b_out
                     jnp.ones((dim,), jnp.float32),    # ln2 gamma
                     jnp.zeros((dim,), jnp.float32),   # ln2 beta
                     jnp.zeros((mlp_dim,), jnp.float32),  # b1
                     jnp.zeros((dim,), jnp.float32)]   # b2
    w = dict(wqkv=jnp.stack(wqkv), wout=jnp.stack(wout),
             w1=jnp.stack(w1), w2=jnp.stack(w2))
    return w, vec_rows


def init_params(key):
    ks = jax.random.split(key, 8)
    nrm = lambda k, s: 0.02 * jax.random.normal(k, s, jnp.float32)

    patch_w = nrm(ks[0], (PATCH_DIM, ENC_DIM))
    patch_b = jnp.zeros((ENC_DIM,), jnp.float32)
    pos_embedding = nrm(ks[1], (1, POS_LEN, ENC_DIM))
    enc_w, enc_vec = _make_transformer_weights(ks[2], ENC_DIM, ENC_DEPTH, ENC_HEADS,
                                               ENC_DIM_HEAD, ENC_MLP_DIM)
    e2d_w = nrm(ks[3], (ENC_DIM, DEC_DIM))
    e2d_b = jnp.zeros((DEC_DIM,), jnp.float32)
    mask_token = jax.random.normal(ks[4], (DEC_DIM,), jnp.float32)
    dec_pos_emb = jax.random.normal(ks[5], (NUM_PATCHES, DEC_DIM), jnp.float32)
    dec_w, dec_vec = _make_transformer_weights(ks[6], DEC_DIM, DEC_DEPTH, DEC_HEADS,
                                               DEC_DIM_HEAD, DEC_MLP_DIM)
    pix_w = nrm(ks[7], (DEC_DIM, PATCH_DIM))
    pix_b = jnp.zeros((PATCH_DIM,), jnp.float32)

    # pack all 1-row params into a single slab (one DMA instead of ~18)
    rows = [patch_b, e2d_b, pix_b, mask_token] + enc_vec + dec_vec
    assert len(rows) == N_VEC_ROWS
    vecs = jnp.stack([jnp.pad(r, (0, PACK_W - r.shape[0])) for r in rows])

    return dict(
        pos_tbl=pos_embedding[0, 1:NUM_PATCHES + 1],    # (N, ENC_DIM)
        dec_pos_tbl=dec_pos_emb,                        # (N, DEC_DIM)
        patch_w=patch_w, e2d_w=e2d_w, pix_w=pix_w,
        enc_wqkv=enc_w['wqkv'], enc_wout=enc_w['wout'],
        enc_w1=enc_w['w1'], enc_w2=enc_w['w2'],
        dec_wqkv=dec_w['wqkv'], dec_wout=dec_w['wout'],
        dec_w1=dec_w['w1'], dec_w2=dec_w['w2'],
        vecs=vecs,
    )


# ------------------------------- MAE forward -------------------------------
def mae_forward(params, img, mask_key):
    B = img.shape[0]
    p = PATCH_SIZE
    h = w = IMAGE_SIZE // p
    n = NUM_PATCHES

    # to_patch: 'b c (h p1) (w p2) -> b (h w) (p1 p2 c)'   (layout glue stays in JAX)
    x = img.reshape(B, CHANNELS, h, p, w, p)
    patches = x.transpose(0, 2, 4, 3, 5, 1).reshape(B, h * w, p * p * CHANNELS)

    # random masking (torch.rand(...).argsort equivalent) -- index generation in JAX
    rand_indices = jnp.argsort(jax.random.uniform(mask_key, (B, n)),
                               axis=-1).astype(jnp.int32)
    inv_indices = jnp.argsort(rand_indices, axis=-1).astype(jnp.int32)
    # NOTE: `weight_patches` in the reference forward is dead (never used) -> skipped.

    patches_flat = patches.reshape(B * n, PATCH_DIM)
    rand_col = rand_indices.reshape(B * n, 1)
    inv_col = inv_indices.reshape(B * n, 1)

    # ---- single fused pallas_call: everything VMEM resident, one launch ----
    recon_flat, loss = pl.pallas_call(
        _mae_kernel,
        out_shape=(jax.ShapeDtypeStruct((B * n, PATCH_DIM), jnp.float32),
                   jax.ShapeDtypeStruct((1, 1), jnp.float32)),
    )(patches_flat, rand_col, inv_col,
      params['pos_tbl'], params['dec_pos_tbl'],
      params['patch_w'], params['e2d_w'], params['pix_w'],
      params['enc_wqkv'], params['enc_wout'], params['enc_w1'], params['enc_w2'],
      params['dec_wqkv'], params['dec_wout'], params['dec_w1'], params['dec_w2'],
      params['vecs'])

    # reverse patchify: 'b (h w) (p1 p2 c) -> b c (h p1) (w p2)'
    r = recon_flat.reshape(B, h, w, p, p, CHANNELS)
    reconstructed_pixels = r.transpose(0, 5, 1, 3, 2, 4).reshape(
        B, CHANNELS, h * p, w * p)

    return loss[0, 0], reconstructed_pixels


# ----------------------------------- main -----------------------------------
if __name__ == "__main__":
    key = jax.random.PRNGKey(0)
    pkey, ikey, mkey = jax.random.split(key, 3)

    params = init_params(pkey)
    img = jax.random.normal(ikey, (BATCH, CHANNELS, IMAGE_SIZE, IMAGE_SIZE), jnp.float32)

    loss, recon = jax.jit(mae_forward)(params, img, mkey)
    loss, recon = jax.block_until_ready((loss, recon))

    assert loss.shape == () and bool(jnp.isfinite(loss))
    assert recon.shape == (BATCH, CHANNELS, IMAGE_SIZE, IMAGE_SIZE)
    print("KERNEL_OK")
</pallas_src>

<mosaic_0001>
module attributes {stable_mosaic.version = 11 : i64} {
  func.func @_mae_kernel(%arg0: memref<32x48xf32, #tpu.memory_space<vmem>>, %arg1: memref<32x1xi32, #tpu.memory_space<vmem>>, %arg2: memref<32x1xi32, #tpu.memory_space<vmem>>, %arg3: memref<16x32xf32, #tpu.memory_space<vmem>>, %arg4: memref<16x48xf32, #tpu.memory_space<vmem>>, %arg5: memref<48x32xf32, #tpu.memory_space<vmem>>, %arg6: memref<32x48xf32, #tpu.memory_space<vmem>>, %arg7: memref<48x48xf32, #tpu.memory_space<vmem>>, %arg8: memref<1x32x96xf32, #tpu.memory_space<vmem>>, %arg9: memref<1x32x32xf32, #tpu.memory_space<vmem>>, %arg10: memref<1x32x64xf32, #tpu.memory_space<vmem>>, %arg11: memref<1x64x32xf32, #tpu.memory_space<vmem>>, %arg12: memref<1x48x192xf32, #tpu.memory_space<vmem>>, %arg13: memref<1x64x48xf32, #tpu.memory_space<vmem>>, %arg14: memref<1x48x192xf32, #tpu.memory_space<vmem>>, %arg15: memref<1x192x48xf32, #tpu.memory_space<vmem>>, %arg16: memref<18x192xf32, #tpu.memory_space<vmem>>, %arg17: memref<32x48xf32, #tpu.memory_space<vmem>>, %arg18: memref<1x1xf32, #tpu.memory_space<vmem>>) attributes {dimension_semantics = [], scalar_prefetch = 0 : i64, scratch_operands = 0 : i64, tpu.core_type = #tpu.core_type<tc>} {
    %c0 = arith.constant 0 : index
    %c0_0 = arith.constant 0 : index
    %0 = vector.load %arg16[%c0, %c0_0] : memref<18x192xf32, #tpu.memory_space<vmem>>, vector<1x32xf32>
    %c1 = arith.constant 1 : index
    %c0_1 = arith.constant 0 : index
    %1 = vector.load %arg16[%c1, %c0_1] : memref<18x192xf32, #tpu.memory_space<vmem>>, vector<1x48xf32>
    %c2 = arith.constant 2 : index
    %c0_2 = arith.constant 0 : index
    %2 = vector.load %arg16[%c2, %c0_2] : memref<18x192xf32, #tpu.memory_space<vmem>>, vector<1x48xf32>
    %c3 = arith.constant 3 : index
    %c0_3 = arith.constant 0 : index
    %3 = vector.load %arg16[%c3, %c0_3] : memref<18x192xf32, #tpu.memory_space<vmem>>, vector<1x48xf32>
    %c0_4 = arith.constant 0 : index
    %c0_5 = arith.constant 0 : index
    %4 = vector.load %arg3[%c0_4, %c0_5] : memref<16x32xf32, #tpu.memory_space<vmem>>, vector<16x32xf32>
    %c0_6 = arith.constant 0 : index
    %c0_7 = arith.constant 0 : index
    %5 = vector.load %arg4[%c0_6, %c0_7] : memref<16x48xf32, #tpu.memory_space<vmem>>, vector<16x48xf32>
    %c0_8 = arith.constant 0 : index
    %c0_9 = arith.constant 0 : index
    %6 = vector.load %arg0[%c0_8, %c0_9] : memref<32x48xf32, #tpu.memory_space<vmem>>, vector<32x48xf32>
    %7 = tpu.iota {dimensions = array<i32: 1>} : vector<16x16xi32>
    %c0_10 = arith.constant 0 : index
    %c0_11 = arith.constant 0 : index
    %8 = vector.load %arg1[%c0_10, %c0_11] : memref<32x1xi32, #tpu.memory_space<vmem>>, vector<16x1xi32>
    %9 = vector.broadcast %8 : vector<16x1xi32> to vector<16x16xi32>
    %10 = arith.cmpi eq, %9, %7 : vector<16x16xi32>
    %cst = arith.constant 1.000000e+00 : f32
    %cst_12 = arith.constant 0.000000e+00 : f32
    %11 = vector.broadcast %cst : f32 to vector<16x16xf32>
    %12 = vector.broadcast %cst_12 : f32 to vector<16x16xf32>
    %13 = arith.select %10, %11, %12 : vector<16x16xi1>, vector<16x16xf32>
    %c0_13 = arith.constant 0 : index
    %c0_14 = arith.constant 0 : index
    %14 = vector.load %arg2[%c0_13, %c0_14] : memref<32x1xi32, #tpu.memory_space<vmem>>, vector<16x1xi32>
    %15 = vector.broadcast %14 : vector<16x1xi32> to vector<16x16xi32>
    %16 = arith.cmpi eq, %15, %7 : vector<16x16xi32>
    %cst_15 = arith.constant 1.000000e+00 : f32
    %cst_16 = arith.constant 0.000000e+00 : f32
    %17 = vector.broadcast %cst_15 : f32 to vector<16x16xf32>
    %18 = vector.broadcast %cst_16 : f32 to vector<16x16xf32>
    %19 = arith.select %16, %17, %18 : vector<16x16xi1>, vector<16x16xf32>
    %c16 = arith.constant 16 : index
    %c0_17 = arith.constant 0 : index
    %20 = vector.load %arg1[%c16, %c0_17] : memref<32x1xi32, #tpu.memory_space<vmem>>, vector<16x1xi32>
    %21 = vector.broadcast %20 : vector<16x1xi32> to vector<16x16xi32>
    %22 = arith.cmpi eq, %21, %7 : vector<16x16xi32>
    %cst_18 = arith.constant 1.000000e+00 : f32
    %cst_19 = arith.constant 0.000000e+00 : f32
    %23 = vector.broadcast %cst_18 : f32 to vector<16x16xf32>
    %24 = vector.broadcast %cst_19 : f32 to vector<16x16xf32>
    %25 = arith.select %22, %23, %24 : vector<16x16xi1>, vector<16x16xf32>
    %c16_20 = arith.constant 16 : index
    %c0_21 = arith.constant 0 : index
    %26 = vector.load %arg2[%c16_20, %c0_21] : memref<32x1xi32, #tpu.memory_space<vmem>>, vector<16x1xi32>
    %27 = vector.broadcast %26 : vector<16x1xi32> to vector<16x16xi32>
    %28 = arith.cmpi eq, %27, %7 : vector<16x16xi32>
    %cst_22 = arith.constant 1.000000e+00 : f32
    %cst_23 = arith.constant 0.000000e+00 : f32
    %29 = vector.broadcast %cst_22 : f32 to vector<16x16xf32>
    %30 = vector.broadcast %cst_23 : f32 to vector<16x16xf32>
    %31 = arith.select %28, %29, %30 : vector<16x16xi1>, vector<16x16xf32>
    %c0_24 = arith.constant 0 : index
    %c0_25 = arith.constant 0 : index
    %32 = vector.load %arg5[%c0_24, %c0_25] : memref<48x32xf32, #tpu.memory_space<vmem>>, vector<48x32xf32>
    %cst_26 = arith.constant dense<0.000000e+00> : vector<32x32xf32>
    %33 = tpu.matmul %6, %32, %cst_26 {dimension_numbers = #tpu.dot_dimension_numbers<[1], [0], [0], [1], [0, 0, 1, 1], [], []>} : vector<32x48xf32>, vector<48x32xf32>, vector<32x32xf32> -> vector<32x32xf32>
    %34 = vector.broadcast %0 : vector<1x32xf32> to vector<32x32xf32>
    %35 = arith.addf %33, %34 : vector<32x32xf32>
    %36 = vector.extract_strided_slice %35 {offsets = [0, 0], sizes = [16, 32], strides = [1, 1]} : vector<32x32xf32> to vector<16x32xf32>
    %37 = arith.addf %36, %4 : vector<16x32xf32>
    %cst_27 = arith.constant dense<0.000000e+00> : vector<16x32xf32>
    %38 = tpu.matmul %13, %37, %cst_27 {dimension_numbers = #tpu.dot_dimension_numbers<[1], [0], [0], [1], [0, 0, 1, 1], [], []>} : vector<16x16xf32>, vector<16x32xf32>, vector<16x32xf32> -> vector<16x32xf32>
    %39 = vector.extract_strided_slice %38 {offsets = [12, 0], sizes = [4, 32], strides = [1, 1]} : vector<16x32xf32> to vector<4x32xf32>
    %40 = vector.extract_strided_slice %6 {offsets = [0, 0], sizes = [16, 48], strides = [1, 1]} : vector<32x48xf32> to vector<16x48xf32>
    %cst_28 = arith.constant dense<0.000000e+00> : vector<16x48xf32>
    %41 = tpu.matmul %13, %40, %cst_28 {dimension_numbers = #tpu.dot_dimension_numbers<[1], [0], [0], [1], [0, 0, 1, 1], [], []>} : vector<16x16xf32>, vector<16x48xf32>, vector<16x48xf32> -> vector<16x48xf32>
    %42 = vector.extract_strided_slice %41 {offsets = [0, 0], sizes = [12, 48], strides = [1, 1]} : vector<16x48xf32> to vector<12x48xf32>
    %cst_29 = arith.constant dense<0.000000e+00> : vector<16x48xf32>
    %43 = tpu.matmul %13, %5, %cst_29 {dimension_numbers = #tpu.dot_dimension_numbers<[1], [0], [0], [1], [0, 0, 1, 1], [], []>} : vector<16x16xf32>, vector<16x48xf32>, vector<16x48xf32> -> vector<16x48xf32>
    %44 = vector.extract_strided_slice %43 {offsets = [0, 0], sizes = [12, 48], strides = [1, 1]} : vector<16x48xf32> to vector<12x48xf32>
    %45 = vector.extract_strided_slice %35 {offsets = [16, 0], sizes = [16, 32], strides = [1, 1]} : vector<32x32xf32> to vector<16x32xf32>
    %46 = arith.addf %45, %4 : vector<16x32xf32>
    %cst_30 = arith.constant dense<0.000000e+00> : vector<16x32xf32>
    %47 = tpu.matmul %25, %46, %cst_30 {dimension_numbers = #tpu.dot_dimension_numbers<[1], [0], [0], [1], [0, 0, 1, 1], [], []>} : vector<16x16xf32>, vector<16x32xf32>, vector<16x32xf32> -> vector<16x32xf32>
    %48 = vector.extract_strided_slice %47 {offsets = [12, 0], sizes = [4, 32], strides = [1, 1]} : vector<16x32xf32> to vector<4x32xf32>
    %49 = vector.extract_strided_slice %6 {offsets = [16, 0], sizes = [16, 48], strides = [1, 1]} : vector<32x48xf32> to vector<16x48xf32>
    %cst_31 = arith.constant dense<0.000000e+00> : vector<16x48xf32>
    %50 = tpu.matmul %25, %49, %cst_31 {dimension_numbers = #tpu.dot_dimension_numbers<[1], [0], [0], [1], [0, 0, 1, 1], [], []>} : vector<16x16xf32>, vector<16x48xf32>, vector<16x48xf32> -> vector<16x48xf32>
    %51 = vector.extract_strided_slice %50 {offsets = [0, 0], sizes = [12, 48], strides = [1, 1]} : vector<16x48xf32> to vector<12x48xf32>
    %cst_32 = arith.constant dense<0.000000e+00> : vector<16x48xf32>
    %52 = tpu.matmul %25, %5, %cst_32 {dimension_numbers = #tpu.dot_dimension_numbers<[1], [0], [0], [1], [0, 0, 1, 1], [], []>} : vector<16x16xf32>, vector<16x48xf32>, vector<16x48xf32> -> vector<16x48xf32>
    %53 = vector.extract_strided_slice %52 {offsets = [0, 0], sizes = [12, 48], strides = [1, 1]} : vector<16x48xf32> to vector<12x48xf32>
    %54 = tpu.concatenate %39, %48 in 0 : vector<4x32xf32>, vector<4x32xf32> -> vector<8x32xf32>
    %c4 = arith.constant 4 : index
    %c0_33 = arith.constant 0 : index
    %55 = vector.load %arg16[%c4, %c0_33] : memref<18x192xf32, #tpu.memory_space<vmem>>, vector<1x32xf32>
    %c5 = arith.constant 5 : index
    %c0_34 = arith.constant 0 : index
    %56 = vector.load %arg16[%c5, %c0_34] : memref<18x192xf32, #tpu.memory_space<vmem>>, vector<1x32xf32>
    %c6 = arith.constant 6 : index
    %c0_35 = arith.constant 0 : index
    %57 = vector.load %arg16[%c6, %c0_35] : memref<18x192xf32, #tpu.memory_space<vmem>>, vector<1x32xf32>
    %c7 = arith.constant 7 : index
    %c0_36 = arith.constant 0 : index
    %58 = vector.load %arg16[%c7, %c0_36] : memref<18x192xf32, #tpu.memory_space<vmem>>, vector<1x32xf32>
    %c8 = arith.constant 8 : index
    %c0_37 = arith.constant 0 : index
    %59 = vector.load %arg16[%c8, %c0_37] : memref<18x192xf32, #tpu.memory_space<vmem>>, vector<1x32xf32>
    %c9 = arith.constant 9 : index
    %c0_38 = arith.constant 0 : index
    %60 = vector.load %arg16[%c9, %c0_38] : memref<18x192xf32, #tpu.memory_space<vmem>>, vector<1x64xf32>
    %c10 = arith.constant 10 : index
    %c0_39 = arith.constant 0 : index
    %61 = vector.load %arg16[%c10, %c0_39] : memref<18x192xf32, #tpu.memory_space<vmem>>, vector<1x32xf32>
    %c0_40 = arith.constant 0 : index
    %c0_41 = arith.constant 0 : index
    %c0_42 = arith.constant 0 : index
    %62 = vector.load %arg8[%c0_40, %c0_41, %c0_42] : memref<1x32x96xf32, #tpu.memory_space<vmem>>, vector<1x32x96xf32>
    %63 = vector.shape_cast %62 : vector<1x32x96xf32> to vector<32x96xf32>
    %c0_43 = arith.constant 0 : index
    %c0_44 = arith.constant 0 : index
    %c0_45 = arith.constant 0 : index
    %64 = vector.load %arg9[%c0_43, %c0_44, %c0_45] : memref<1x32x32xf32, #tpu.memory_space<vmem>>, vector<1x32x32xf32>
    %65 = vector.shape_cast %64 : vector<1x32x32xf32> to vector<32x32xf32>
    %c0_46 = arith.constant 0 : index
    %c0_47 = arith.constant 0 : index
    %c0_48 = arith.constant 0 : index
    %66 = vector.load %arg10[%c0_46, %c0_47, %c0_48] : memref<1x32x64xf32, #tpu.memory_space<vmem>>, vector<1x32x64xf32>
    %67 = vector.shape_cast %66 : vector<1x32x64xf32> to vector<32x64xf32>
    %c0_49 = arith.constant 0 : index
    %c0_50 = arith.constant 0 : index
    %c0_51 = arith.constant 0 : index
    %68 = vector.load %arg11[%c0_49, %c0_50, %c0_51] : memref<1x64x32xf32, #tpu.memory_space<vmem>>, vector<1x64x32xf32>
    %69 = vector.shape_cast %68 : vector<1x64x32xf32> to vector<64x32xf32>
    %cst_52 = arith.constant dense<0.000000e+00> : vector<8xf32>
    %70 = vector.multi_reduction <add>, %54, %cst_52 [1] : vector<8x32xf32> to vector<8xf32>
    %71 = vector.shape_cast %70 : vector<8xf32> to vector<8x1xf32>
    %cst_53 = arith.constant 3.200000e+01 : f32
    %72 = vector.broadcast %cst_53 : f32 to vector<8x1xf32>
    %73 = arith.divf %71, %72 : vector<8x1xf32>
    %74 = vector.broadcast %73 : vector<8x1xf32> to vector<8x32xf32>
    %75 = arith.subf %54, %74 : vector<8x32xf32>
    %76 = arith.mulf %75, %75 : vector<8x32xf32>
    %cst_54 = arith.constant dense<0.000000e+00> : vector<8xf32>
    %77 = vector.multi_reduction <add>, %76, %cst_54 [1] : vector<8x32xf32> to vector<8xf32>
    %78 = vector.shape_cast %77 : vector<8xf32> to vector<8x1xf32>
    %cst_55 = arith.constant 3.200000e+01 : f32
    %79 = vector.broadcast %cst_55 : f32 to vector<8x1xf32>
    %80 = arith.divf %78, %79 : vector<8x1xf32>
    %cst_56 = arith.constant 9.99999974E-6 : f32
    %81 = vector.broadcast %cst_56 : f32 to vector<8x1xf32>
    %82 = arith.addf %80, %81 : vector<8x1xf32>
    %83 = math.rsqrt %82 : vector<8x1xf32>
    %84 = vector.broadcast %83 : vector<8x1xf32> to vector<8x32xf32>
    %85 = arith.mulf %75, %84 : vector<8x32xf32>
    %86 = vector.broadcast %55 : vector<1x32xf32> to vector<8x32xf32>
    %87 = arith.mulf %85, %86 : vector<8x32xf32>
    %88 = vector.broadcast %56 : vector<1x32xf32> to vector<8x32xf32>
    %89 = arith.addf %87, %88 : vector<8x32xf32>
    %cst_57 = arith.constant dense<0.000000e+00> : vector<8x96xf32>
    %90 = tpu.matmul %89, %63, %cst_57 {dimension_numbers = #tpu.dot_dimension_numbers<[1], [0], [0], [1], [0, 0, 1, 1], [], []>} : vector<8x32xf32>, vector<32x96xf32>, vector<8x96xf32> -> vector<8x96xf32>
    %91 = vector.extract_strided_slice %90 {offsets = [0, 0], sizes = [4, 96], strides = [1, 1]} : vector<8x96xf32> to vector<4x96xf32>
    %92 = vector.extract_strided_slice %91 {offsets = [0, 0], sizes = [4, 8], strides = [1, 1]} : vector<4x96xf32> to vector<4x8xf32>
    %93 = vector.extract_strided_slice %91 {offsets = [0, 32], sizes = [4, 8], strides = [1, 1]} : vector<4x96xf32> to vector<4x8xf32>
    %94 = vector.extract_strided_slice %91 {offsets = [0, 64], sizes = [4, 8], strides = [1, 1]} : vector<4x96xf32> to vector<4x8xf32>
    %cst_58 = arith.constant dense<0.000000e+00> : vector<4x4xf32>
    %95 = tpu.matmul %92, %93, %cst_58 {dimension_numbers = #tpu.dot_dimension_numbers<[1], [1], [0], [0], [0, 0, 1, 0], [], []>} : vector<4x8xf32>, vector<4x8xf32>, vector<4x4xf32> -> vector<4x4xf32>
    %cst_59 = arith.constant 0.353553385 : f32
    %96 = vector.broadcast %cst_59 : f32 to vector<4x4xf32>
    %97 = arith.mulf %95, %96 : vector<4x4xf32>
    %cst_60 = arith.constant dense<0xFF800000> : vector<4xf32>
    %98 = vector.multi_reduction <maximumf>, %97, %cst_60 [1] : vector<4x4xf32> to vector<4xf32>
    %99 = vector.shape_cast %98 : vector<4xf32> to vector<4x1xf32>
    %100 = vector.broadcast %99 : vector<4x1xf32> to vector<4x4xf32>
    %101 = arith.subf %97, %100 : vector<4x4xf32>
    %102 = math.exp %101 : vector<4x4xf32>
    %cst_61 = arith.constant dense<0.000000e+00> : vector<4xf32>
    %103 = vector.multi_reduction <add>, %102, %cst_61 [1] : vector<4x4xf32> to vector<4xf32>
    %104 = vector.shape_cast %103 : vector<4xf32> to vector<4x1xf32>
    %105 = tpu.reciprocal %104 {approx = true} : vector<4x1xf32> -> vector<4x1xf32>
    %106 = vector.broadcast %105 : vector<4x1xf32> to vector<4x4xf32>
    %107 = arith.mulf %102, %106 : vector<4x4xf32>
    %cst_62 = arith.constant dense<0.000000e+00> : vector<4x8xf32>
    %108 = tpu.matmul %107, %94, %cst_62 {dimension_numbers = #tpu.dot_dimension_numbers<[1], [0], [0], [1], [0, 0, 1, 1], [], []>} : vector<4x4xf32>, vector<4x8xf32>, vector<4x8xf32> -> vector<4x8xf32>
    %109 = vector.extract_strided_slice %91 {offsets = [0, 8], sizes = [4, 8], strides = [1, 1]} : vector<4x96xf32> to vector<4x8xf32>
    %110 = vector.extract_strided_slice %91 {offsets = [0, 40], sizes = [4, 8], strides = [1, 1]} : vector<4x96xf32> to vector<4x8xf32>
    %111 = vector.extract_strided_slice %91 {offsets = [0, 72], sizes = [4, 8], strides = [1, 1]} : vector<4x96xf32> to vector<4x8xf32>
    %cst_63 = arith.constant dense<0.000000e+00> : vector<4x4xf32>
    %112 = tpu.matmul %109, %110, %cst_63 {dimension_numbers = #tpu.dot_dimension_numbers<[1], [1], [0], [0], [0, 0, 1, 0], [], []>} : vector<4x8xf32>, vector<4x8xf32>, vector<4x4xf32> -> vector<4x4xf32>
    %cst_64 = arith.constant 0.353553385 : f32
    %113 = vector.broadcast %cst_64 : f32 to vector<4x4xf32>
    %114 = arith.mulf %112, %113 : vector<4x4xf32>
    %cst_65 = arith.constant dense<0xFF800000> : vector<4xf32>
    %115 = vector.multi_reduction <maximumf>, %114, %cst_65 [1] : vector<4x4xf32> to vector<4xf32>
    %116 = vector.shape_cast %115 : vector<4xf32> to vector<4x1xf32>
    %117 = vector.broadcast %116 : vector<4x1xf32> to vector<4x4xf32>
    %118 = arith.subf %114, %117 : vector<4x4xf32>
    %119 = math.exp %118 : vector<4x4xf32>
    %cst_66 = arith.constant dense<0.000000e+00> : vector<4xf32>
    %120 = vector.multi_reduction <add>, %119, %cst_66 [1] : vector<4x4xf32> to vector<4xf32>
    %121 = vector.shape_cast %120 : vector<4xf32> to vector<4x1xf32>
    %122 = tpu.reciprocal %121 {approx = true} : vector<4x1xf32> -> vector<4x1xf32>
    %123 = vector.broadcast %122 : vector<4x1xf32> to vector<4x4xf32>
    %124 = arith.mulf %119, %123 : vector<4x4xf32>
    %cst_67 = arith.constant dense<0.000000e+00> : vector<4x8xf32>
    %125 = tpu.matmul %124, %111, %cst_67 {dimension_numbers = #tpu.dot_dimension_numbers<[1], [0], [0], [1], [0, 0, 1, 1], [], []>} : vector<4x4xf32>, vector<4x8xf32>, vector<4x8xf32> -> vector<4x8xf32>
    %126 = vector.extract_strided_slice %91 {offsets = [0, 16], sizes = [4, 8], strides = [1, 1]} : vector<4x96xf32> to vector<4x8xf32>
    %127 = vector.extract_strided_slice %91 {offsets = [0, 48], sizes = [4, 8], strides = [1, 1]} : vector<4x96xf32> to vector<4x8xf32>
    %128 = vector.extract_strided_slice %91 {offsets = [0, 80], sizes = [4, 8], strides = [1, 1]} : vector<4x96xf32> to vector<4x8xf32>
    %cst_68 = arith.constant dense<0.000000e+00> : vector<4x4xf32>
    %129 = tpu.matmul %126, %127, %cst_68 {dimension_numbers = #tpu.dot_dimension_numbers<[1], [1], [0], [0], [0, 0, 1, 0], [], []>} : vector<4x8xf32>, vector<4x8xf32>, vector<4x4xf32> -> vector<4x4xf32>
    %cst_69 = arith.constant 0.353553385 : f32
    %130 = vector.broadcast %cst_69 : f32 to vector<4x4xf32>
    %131 = arith.mulf %129, %130 : vector<4x4xf32>
    %cst_70 = arith.constant dense<0xFF800000> : vector<4xf32>
    %132 = vector.multi_reduction <maximumf>, %131, %cst_70 [1] : vector<4x4xf32> to vector<4xf32>
    %133 = vector.shape_cast %132 : vector<4xf32> to vector<4x1xf32>
    %134 = vector.broadcast %133 : vector<4x1xf32> to vector<4x4xf32>
    %135 = arith.subf %131, %134 : vector<4x4xf32>
    %136 = math.exp %135 : vector<4x4xf32>
    %cst_71 = arith.constant dense<0.000000e+00> : vector<4xf32>
    %137 = vector.multi_reduction <add>, %136, %cst_71 [1] : vector<4x4xf32> to vector<4xf32>
    %138 = vector.shape_cast %137 : vector<4xf32> to vector<4x1xf32>
    %139 = tpu.reciprocal %138 {approx = true} : vector<4x1xf32> -> vector<4x1xf32>
    %140 = vector.broadcast %139 : vector<4x1xf32> to vector<4x4xf32>
    %141 = arith.mulf %136, %140 : vector<4x4xf32>
    %cst_72 = arith.constant dense<0.000000e+00> : vector<4x8xf32>
    %142 = tpu.matmul %141, %128, %cst_72 {dimension_numbers = #tpu.dot_dimension_numbers<[1], [0], [0], [1], [0, 0, 1, 1], [], []>} : vector<4x4xf32>, vector<4x8xf32>, vector<4x8xf32> -> vector<4x8xf32>
    %143 = vector.extract_strided_slice %91 {offsets = [0, 24], sizes = [4, 8], strides = [1, 1]} : vector<4x96xf32> to vector<4x8xf32>
    %144 = vector.extract_strided_slice %91 {offsets = [0, 56], sizes = [4, 8], strides = [1, 1]} : vector<4x96xf32> to vector<4x8xf32>
    %145 = vector.extract_strided_slice %91 {offsets = [0, 88], sizes = [4, 8], strides = [1, 1]} : vector<4x96xf32> to vector<4x8xf32>
    %cst_73 = arith.constant dense<0.000000e+00> : vector<4x4xf32>
    %146 = tpu.matmul %143, %144, %cst_73 {dimension_numbers = #tpu.dot_dimension_numbers<[1], [1], [0], [0], [0, 0, 1, 0], [], []>} : vector<4x8xf32>, vector<4x8xf32>, vector<4x4xf32> -> vector<4x4xf32>
    %cst_74 = arith.constant 0.353553385 : f32
    %147 = vector.broadcast %cst_74 : f32 to vector<4x4xf32>
    %148 = arith.mulf %146, %147 : vector<4x4xf32>
    %cst_75 = arith.constant dense<0xFF800000> : vector<4xf32>
    %149 = vector.multi_reduction <maximumf>, %148, %cst_75 [1] : vector<4x4xf32> to vector<4xf32>
    %150 = vector.shape_cast %149 : vector<4xf32> to vector<4x1xf32>
    %151 = vector.broadcast %150 : vector<4x1xf32> to vector<4x4xf32>
    %152 = arith.subf %148, %151 : vector<4x4xf32>
    %153 = math.exp %152 : vector<4x4xf32>
    %cst_76 = arith.constant dense<0.000000e+00> : vector<4xf32>
    %154 = vector.multi_reduction <add>, %153, %cst_76 [1] : vector<4x4xf32> to vector<4xf32>
    %155 = vector.shape_cast %154 : vector<4xf32> to vector<4x1xf32>
    %156 = tpu.reciprocal %155 {approx = true} : vector<4x1xf32> -> vector<4x1xf32>
    %157 = vector.broadcast %156 : vector<4x1xf32> to vector<4x4xf32>
    %158 = arith.mulf %153, %157 : vector<4x4xf32>
    %cst_77 = arith.constant dense<0.000000e+00> : vector<4x8xf32>
    %159 = tpu.matmul %158, %145, %cst_77 {dimension_numbers = #tpu.dot_dimension_numbers<[1], [0], [0], [1], [0, 0, 1, 1], [], []>} : vector<4x4xf32>, vector<4x8xf32>, vector<4x8xf32> -> vector<4x8xf32>
    %160 = tpu.concatenate %108, %125, %142, %159 in 1 : vector<4x8xf32>, vector<4x8xf32>, vector<4x8xf32>, vector<4x8xf32> -> vector<4x32xf32>
    %161 = vector.extract_strided_slice %90 {offsets = [4, 0], sizes = [4, 96], strides = [1, 1]} : vector<8x96xf32> to vector<4x96xf32>
    %162 = vector.extract_strided_slice %161 {offsets = [0, 0], sizes = [4, 8], strides = [1, 1]} : vector<4x96xf32> to vector<4x8xf32>
    %163 = vector.extract_strided_slice %161 {offsets = [0, 32], sizes = [4, 8], strides = [1, 1]} : vector<4x96xf32> to vector<4x8xf32>
    %164 = vector.extract_strided_slice %161 {offsets = [0, 64], sizes = [4, 8], strides = [1, 1]} : vector<4x96xf32> to vector<4x8xf32>
    %cst_78 = arith.constant dense<0.000000e+00> : vector<4x4xf32>
    %165 = tpu.matmul %162, %163, %cst_78 {dimension_numbers = #tpu.dot_dimension_numbers<[1], [1], [0], [0], [0, 0, 1, 0], [], []>} : vector<4x8xf32>, vector<4x8xf32>, vector<4x4xf32> -> vector<4x4xf32>
    %cst_79 = arith.constant 0.353553385 : f32
    %166 = vector.broadcast %cst_79 : f32 to vector<4x4xf32>
    %167 = arith.mulf %165, %166 : vector<4x4xf32>
    %cst_80 = arith.constant dense<0xFF800000> : vector<4xf32>
    %168 = vector.multi_reduction <maximumf>, %167, %cst_80 [1] : vector<4x4xf32> to vector<4xf32>
    %169 = vector.shape_cast %168 : vector<4xf32> to vector<4x1xf32>
    %170 = vector.broadcast %169 : vector<4x1xf32> to vector<4x4xf32>
    %171 = arith.subf %167, %170 : vector<4x4xf32>
    %172 = math.exp %171 : vector<4x4xf32>
    %cst_81 = arith.constant dense<0.000000e+00> : vector<4xf32>
    %173 = vector.multi_reduction <add>, %172, %cst_81 [1] : vector<4x4xf32> to vector<4xf32>
    %174 = vector.shape_cast %173 : vector<4xf32> to vector<4x1xf32>
    %175 = tpu.reciprocal %174 {approx = true} : vector<4x1xf32> -> vector<4x1xf32>
    %176 = vector.broadcast %175 : vector<4x1xf32> to vector<4x4xf32>
    %177 = arith.mulf %172, %176 : vector<4x4xf32>
    %cst_82 = arith.constant dense<0.000000e+00> : vector<4x8xf32>
    %178 = tpu.matmul %177, %164, %cst_82 {dimension_numbers = #tpu.dot_dimension_numbers<[1], [0], [0], [1], [0, 0, 1, 1], [], []>} : vector<4x4xf32>, vector<4x8xf32>, vector<4x8xf32> -> vector<4x8xf32>
    %179 = vector.extract_strided_slice %161 {offsets = [0, 8], sizes = [4, 8], strides = [1, 1]} : vector<4x96xf32> to vector<4x8xf32>
    %180 = vector.extract_strided_slice %161 {offsets = [0, 40], sizes = [4, 8], strides = [1, 1]} : vector<4x96xf32> to vector<4x8xf32>
    %181 = vector.extract_strided_slice %161 {offsets = [0, 72], sizes = [4, 8], strides = [1, 1]} : vector<4x96xf32> to vector<4x8xf32>
    %cst_83 = arith.constant dense<0.000000e+00> : vector<4x4xf32>
    %182 = tpu.matmul %179, %180, %cst_83 {dimension_numbers = #tpu.dot_dimension_numbers<[1], [1], [0], [0], [0, 0, 1, 0], [], []>} : vector<4x8xf32>, vector<4x8xf32>, vector<4x4xf32> -> vector<4x4xf32>
    %cst_84 = arith.constant 0.353553385 : f32
    %183 = vector.broadcast %cst_84 : f32 to vector<4x4xf32>
    %184 = arith.mulf %182, %183 : vector<4x4xf32>
    %cst_85 = arith.constant dense<0xFF800000> : vector<4xf32>
    %185 = vector.multi_reduction <maximumf>, %184, %cst_85 [1] : vector<4x4xf32> to vector<4xf32>
    %186 = vector.shape_cast %185 : vector<4xf32> to vector<4x1xf32>
    %187 = vector.broadcast %186 : vector<4x1xf32> to vector<4x4xf32>
    %188 = arith.subf %184, %187 : vector<4x4xf32>
    %189 = math.exp %188 : vector<4x4xf32>
    %cst_86 = arith.constant dense<0.000000e+00> : vector<4xf32>
    %190 = vector.multi_reduction <add>, %189, %cst_86 [1] : vector<4x4xf32> to vector<4xf32>
    %191 = vector.shape_cast %190 : vector<4xf32> to vector<4x1xf32>
    %192 = tpu.reciprocal %191 {approx = true} : vector<4x1xf32> -> vector<4x1xf32>
    %193 = vector.broadcast %192 : vector<4x1xf32> to vector<4x4xf32>
    %194 = arith.mulf %189, %193 : vector<4x4xf32>
    %cst_87 = arith.constant dense<0.000000e+00> : vector<4x8xf32>
    %195 = tpu.matmul %194, %181, %cst_87 {dimension_numbers = #tpu.dot_dimension_numbers<[1], [0], [0], [1], [0, 0, 1, 1], [], []>} : vector<4x4xf32>, vector<4x8xf32>, vector<4x8xf32> -> vector<4x8xf32>
    %196 = vector.extract_strided_slice %161 {offsets = [0, 16], sizes = [4, 8], strides = [1, 1]} : vector<4x96xf32> to vector<4x8xf32>
    %197 = vector.extract_strided_slice %161 {offsets = [0, 48], sizes = [4, 8], strides = [1, 1]} : vector<4x96xf32> to vector<4x8xf32>
    %198 = vector.extract_strided_slice %161 {offsets = [0, 80], sizes = [4, 8], strides = [1, 1]} : vector<4x96xf32> to vector<4x8xf32>
    %cst_88 = arith.constant dense<0.000000e+00> : vector<4x4xf32>
    %199 = tpu.matmul %196, %197, %cst_88 {dimension_numbers = #tpu.dot_dimension_numbers<[1], [1], [0], [0], [0, 0, 1, 0], [], []>} : vector<4x8xf32>, vector<4x8xf32>, vector<4x4xf32> -> vector<4x4xf32>
    %cst_89 = arith.constant 0.353553385 : f32
    %200 = vector.broadcast %cst_89 : f32 to vector<4x4xf32>
    %201 = arith.mulf %199, %200 : vector<4x4xf32>
    %cst_90 = arith.constant dense<0xFF800000> : vector<4xf32>
    %202 = vector.multi_reduction <maximumf>, %201, %cst_90 [1] : vector<4x4xf32> to vector<4xf32>
    %203 = vector.shape_cast %202 : vector<4xf32> to vector<4x1xf32>
    %204 = vector.broadcast %203 : vector<4x1xf32> to vector<4x4xf32>
    %205 = arith.subf %201, %204 : vector<4x4xf32>
    %206 = math.exp %205 : vector<4x4xf32>
    %cst_91 = arith.constant dense<0.000000e+00> : vector<4xf32>
    %207 = vector.multi_reduction <add>, %206, %cst_91 [1] : vector<4x4xf32> to vector<4xf32>
    %208 = vector.shape_cast %207 : vector<4xf32> to vector<4x1xf32>
    %209 = tpu.reciprocal %208 {approx = true} : vector<4x1xf32> -> vector<4x1xf32>
    %210 = vector.broadcast %209 : vector<4x1xf32> to vector<4x4xf32>
    %211 = arith.mulf %206, %210 : vector<4x4xf32>
    %cst_92 = arith.constant dense<0.000000e+00> : vector<4x8xf32>
    %212 = tpu.matmul %211, %198, %cst_92 {dimension_numbers = #tpu.dot_dimension_numbers<[1], [0], [0], [1], [0, 0, 1, 1], [], []>} : vector<4x4xf32>, vector<4x8xf32>, vector<4x8xf32> -> vector<4x8xf32>
    %213 = vector.extract_strided_slice %161 {offsets = [0, 24], sizes = [4, 8], strides = [1, 1]} : vector<4x96xf32> to vector<4x8xf32>
    %214 = vector.extract_strided_slice %161 {offsets = [0, 56], sizes = [4, 8], strides = [1, 1]} : vector<4x96xf32> to vector<4x8xf32>
    %215 = vector.extract_strided_slice %161 {offsets = [0, 88], sizes = [4, 8], strides = [1, 1]} : vector<4x96xf32> to vector<4x8xf32>
    %cst_93 = arith.constant dense<0.000000e+00> : vector<4x4xf32>
    %216 = tpu.matmul %213, %214, %cst_93 {dimension_numbers = #tpu.dot_dimension_numbers<[1], [1], [0], [0], [0, 0, 1, 0], [], []>} : vector<4x8xf32>, vector<4x8xf32>, vector<4x4xf32> -> vector<4x4xf32>
    %cst_94 = arith.constant 0.353553385 : f32
    %217 = vector.broadcast %cst_94 : f32 to vector<4x4xf32>
    %218 = arith.mulf %216, %217 : vector<4x4xf32>
    %cst_95 = arith.constant dense<0xFF800000> : vector<4xf32>
    %219 = vector.multi_reduction <maximumf>, %218, %cst_95 [1] : vector<4x4xf32> to vector<4xf32>
    %220 = vector.shape_cast %219 : vector<4xf32> to vector<4x1xf32>
    %221 = vector.broadcast %220 : vector<4x1xf32> to vector<4x4xf32>
    %222 = arith.subf %218, %221 : vector<4x4xf32>
    %223 = math.exp %222 : vector<4x4xf32>
    %cst_96 = arith.constant dense<0.000000e+00> : vector<4xf32>
    %224 = vector.multi_reduction <add>, %223, %cst_96 [1] : vector<4x4xf32> to vector<4xf32>
    %225 = vector.shape_cast %224 : vector<4xf32> to vector<4x1xf32>
    %226 = tpu.reciprocal %225 {approx = true} : vector<4x1xf32> -> vector<4x1xf32>
    %227 = vector.broadcast %226 : vector<4x1xf32> to vector<4x4xf32>
    %228 = arith.mulf %223, %227 : vector<4x4xf32>
    %cst_97 = arith.constant dense<0.000000e+00> : vector<4x8xf32>
    %229 = tpu.matmul %228, %215, %cst_97 {dimension_numbers = #tpu.dot_dimension_numbers<[1], [0], [0], [1], [0, 0, 1, 1], [], []>} : vector<4x4xf32>, vector<4x8xf32>, vector<4x8xf32> -> vector<4x8xf32>
    %230 = tpu.concatenate %178, %195, %212, %229 in 1 : vector<4x8xf32>, vector<4x8xf32>, vector<4x8xf32>, vector<4x8xf32> -> vector<4x32xf32>
    %231 = tpu.concatenate %160, %230 in 0 : vector<4x32xf32>, vector<4x32xf32> -> vector<8x32xf32>
    %cst_98 = arith.constant dense<0.000000e+00> : vector<8x32xf32>
    %232 = tpu.matmul %231, %65, %cst_98 {dimension_numbers = #tpu.dot_dimension_numbers<[1], [0], [0], [1], [0, 0, 1, 1], [], []>} : vector<8x32xf32>, vector<32x32xf32>, vector<8x32xf32> -> vector<8x32xf32>
    %233 = vector.broadcast %57 : vector<1x32xf32> to vector<8x32xf32>
    %234 = arith.addf %232, %233 : vector<8x32xf32>
    %235 = arith.addf %234, %54 : vector<8x32xf32>
    %cst_99 = arith.constant dense<0.000000e+00> : vector<8xf32>
    %236 = vector.multi_reduction <add>, %235, %cst_99 [1] : vector<8x32xf32> to vector<8xf32>
    %237 = vector.shape_cast %236 : vector<8xf32> to vector<8x1xf32>
    %cst_100 = arith.constant 3.200000e+01 : f32
    %238 = vector.broadcast %cst_100 : f32 to vector<8x1xf32>
    %239 = arith.divf %237, %238 : vector<8x1xf32>
    %240 = vector.broadcast %239 : vector<8x1xf32> to vector<8x32xf32>
    %241 = arith.subf %235, %240 : vector<8x32xf32>
    %242 = arith.mulf %241, %241 : vector<8x32xf32>
    %cst_101 = arith.constant dense<0.000000e+00> : vector<8xf32>
    %243 = vector.multi_reduction <add>, %242, %cst_101 [1] : vector<8x32xf32> to vector<8xf32>
    %244 = vector.shape_cast %243 : vector<8xf32> to vector<8x1xf32>
    %cst_102 = arith.constant 3.200000e+01 : f32
    %245 = vector.broadcast %cst_102 : f32 to vector<8x1xf32>
    %246 = arith.divf %244, %245 : vector<8x1xf32>
    %cst_103 = arith.constant 9.99999974E-6 : f32
    %247 = vector.broadcast %cst_103 : f32 to vector<8x1xf32>
    %248 = arith.addf %246, %247 : vector<8x1xf32>
    %249 = math.rsqrt %248 : vector<8x1xf32>
    %250 = vector.broadcast %249 : vector<8x1xf32> to vector<8x32xf32>
    %251 = arith.mulf %241, %250 : vector<8x32xf32>
    %252 = vector.broadcast %58 : vector<1x32xf32> to vector<8x32xf32>
    %253 = arith.mulf %251, %252 : vector<8x32xf32>
    %254 = vector.broadcast %59 : vector<1x32xf32> to vector<8x32xf32>
    %255 = arith.addf %253, %254 : vector<8x32xf32>
    %cst_104 = arith.constant dense<0.000000e+00> : vector<8x64xf32>
    %256 = tpu.matmul %255, %67, %cst_104 {dimension_numbers = #tpu.dot_dimension_numbers<[1], [0], [0], [1], [0, 0, 1, 1], [], []>} : vector<8x32xf32>, vector<32x64xf32>, vector<8x64xf32> -> vector<8x64xf32>
    %257 = vector.broadcast %60 : vector<1x64xf32> to vector<8x64xf32>
    %258 = arith.addf %256, %257 : vector<8x64xf32>
    %cst_105 = arith.constant 5.000000e-01 : f32
    %259 = vector.broadcast %cst_105 : f32 to vector<8x64xf32>
    %260 = arith.mulf %259, %258 : vector<8x64xf32>
    %cst_106 = arith.constant 0.707106769 : f32
    %261 = vector.broadcast %cst_106 : f32 to vector<8x64xf32>
    %262 = arith.mulf %258, %261 : vector<8x64xf32>
    %263 = math.erf %262 : vector<8x64xf32>
    %cst_107 = arith.constant 1.000000e+00 : f32
    %264 = vector.broadcast %cst_107 : f32 to vector<8x64xf32>
    %265 = arith.addf %264, %263 : vector<8x64xf32>
    %266 = arith.mulf %260, %265 : vector<8x64xf32>
    %cst_108 = arith.constant dense<0.000000e+00> : vector<8x32xf32>
    %267 = tpu.matmul %266, %69, %cst_108 {dimension_numbers = #tpu.dot_dimension_numbers<[1], [0], [0], [1], [0, 0, 1, 1], [], []>} : vector<8x64xf32>, vector<64x32xf32>, vector<8x32xf32> -> vector<8x32xf32>
    %268 = vector.broadcast %61 : vector<1x32xf32> to vector<8x32xf32>
    %269 = arith.addf %267, %268 : vector<8x32xf32>
    %270 = arith.addf %269, %235 : vector<8x32xf32>
    %c0_109 = arith.constant 0 : index
    %c0_110 = arith.constant 0 : index
    %271 = vector.load %arg6[%c0_109, %c0_110] : memref<32x48xf32, #tpu.memory_space<vmem>>, vector<32x48xf32>
    %cst_111 = arith.constant dense<0.000000e+00> : vector<8x48xf32>
    %272 = tpu.matmul %270, %271, %cst_111 {dimension_numbers = #tpu.dot_dimension_numbers<[1], [0], [0], [1], [0, 0, 1, 1], [], []>} : vector<8x32xf32>, vector<32x48xf32>, vector<8x48xf32> -> vector<8x48xf32>
    %273 = vector.broadcast %1 : vector<1x48xf32> to vector<8x48xf32>
    %274 = arith.addf %272, %273 : vector<8x48xf32>
    %cst_112 = arith.constant dense<0.000000e+00> : vector<8x48xf32>
    %275 = tpu.matmul %54, %271, %cst_112 {dimension_numbers = #tpu.dot_dimension_numbers<[1], [0], [0], [1], [0, 0, 1, 1], [], []>} : vector<8x32xf32>, vector<32x48xf32>, vector<8x48xf32> -> vector<8x48xf32>
    %276 = vector.broadcast %1 : vector<1x48xf32> to vector<8x48xf32>
    %277 = arith.addf %275, %276 : vector<8x48xf32>
    %278 = vector.broadcast %3 : vector<1x48xf32> to vector<12x48xf32>
    %279 = arith.addf %278, %44 : vector<12x48xf32>
    %280 = vector.extract_strided_slice %274 {offsets = [0, 0], sizes = [4, 48], strides = [1, 1]} : vector<8x48xf32> to vector<4x48xf32>
    %281 = tpu.concatenate %279, %280 in 0 : vector<12x48xf32>, vector<4x48xf32> -> vector<16x48xf32>
    %282 = vector.broadcast %3 : vector<1x48xf32> to vector<12x48xf32>
    %283 = arith.addf %282, %53 : vector<12x48xf32>
    %284 = vector.extract_strided_slice %274 {offsets = [4, 0], sizes = [4, 48], strides = [1, 1]} : vector<8x48xf32> to vector<4x48xf32>
    %285 = tpu.concatenate %283, %284 in 0 : vector<12x48xf32>, vector<4x48xf32> -> vector<16x48xf32>
    %286 = tpu.concatenate %281, %285 in 0 : vector<16x48xf32>, vector<16x48xf32> -> vector<32x48xf32>
    %c11 = arith.constant 11 : index
    %c0_113 = arith.constant 0 : index
    %287 = vector.load %arg16[%c11, %c0_113] : memref<18x192xf32, #tpu.memory_space<vmem>>, vector<1x48xf32>
    %c12 = arith.constant 12 : index
    %c0_114 = arith.constant 0 : index
    %288 = vector.load %arg16[%c12, %c0_114] : memref<18x192xf32, #tpu.memory_space<vmem>>, vector<1x48xf32>
    %c13 = arith.constant 13 : index
    %c0_115 = arith.constant 0 : index
    %289 = vector.load %arg16[%c13, %c0_115] : memref<18x192xf32, #tpu.memory_space<vmem>>, vector<1x48xf32>
    %c14 = arith.constant 14 : index
    %c0_116 = arith.constant 0 : index
    %290 = vector.load %arg16[%c14, %c0_116] : memref<18x192xf32, #tpu.memory_space<vmem>>, vector<1x48xf32>
    %c15 = arith.constant 15 : index
    %c0_117 = arith.constant 0 : index
    %291 = vector.load %arg16[%c15, %c0_117] : memref<18x192xf32, #tpu.memory_space<vmem>>, vector<1x48xf32>
    %c16_118 = arith.constant 16 : index
    %c0_119 = arith.constant 0 : index
    %292 = vector.load %arg16[%c16_118, %c0_119] : memref<18x192xf32, #tpu.memory_space<vmem>>, vector<1x192xf32>
    %c17 = arith.constant 17 : index
    %c0_120 = arith.constant 0 : index
    %293 = vector.load %arg16[%c17, %c0_120] : memref<18x192xf32, #tpu.memory_space<vmem>>, vector<1x48xf32>
    %c0_121 = arith.constant 0 : index
    %c0_122 = arith.constant 0 : index
    %c0_123 = arith.constant 0 : index
    %294 = vector.load %arg12[%c0_121, %c0_122, %c0_123] : memref<1x48x192xf32, #tpu.memory_space<vmem>>, vector<1x48x192xf32>
    %295 = vector.shape_cast %294 : vector<1x48x192xf32> to vector<48x192xf32>
    %c0_124 = arith.constant 0 : index
    %c0_125 = arith.constant 0 : index
    %c0_126 = arith.constant 0 : index
    %296 = vector.load %arg13[%c0_124, %c0_125, %c0_126] : memref<1x64x48xf32, #tpu.memory_space<vmem>>, vector<1x64x48xf32>
    %297 = vector.shape_cast %296 : vector<1x64x48xf32> to vector<64x48xf32>
    %c0_127 = arith.constant 0 : index
    %c0_128 = arith.constant 0 : index
    %c0_129 = arith.constant 0 : index
    %298 = vector.load %arg14[%c0_127, %c0_128, %c0_129] : memref<1x48x192xf32, #tpu.memory_space<vmem>>, vector<1x48x192xf32>
    %299 = vector.shape_cast %298 : vector<1x48x192xf32> to vector<48x192xf32>
    %c0_130 = arith.constant 0 : index
    %c0_131 = arith.constant 0 : index
    %c0_132 = arith.constant 0 : index
    %300 = vector.load %arg15[%c0_130, %c0_131, %c0_132] : memref<1x192x48xf32, #tpu.memory_space<vmem>>, vector<1x192x48xf32>
    %301 = vector.shape_cast %300 : vector<1x192x48xf32> to vector<192x48xf32>
    %cst_133 = arith.constant dense<0.000000e+00> : vector<32xf32>
    %302 = vector.multi_reduction <add>, %286, %cst_133 [1] : vector<32x48xf32> to vector<32xf32>
    %303 = vector.shape_cast %302 : vector<32xf32> to vector<32x1xf32>
    %cst_134 = arith.constant 4.800000e+01 : f32
    %304 = vector.broadcast %cst_134 : f32 to vector<32x1xf32>
    %305 = arith.divf %303, %304 : vector<32x1xf32>
    %306 = vector.broadcast %305 : vector<32x1xf32> to vector<32x48xf32>
    %307 = arith.subf %286, %306 : vector<32x48xf32>
    %308 = arith.mulf %307, %307 : vector<32x48xf32>
    %cst_135 = arith.constant dense<0.000000e+00> : vector<32xf32>
    %309 = vector.multi_reduction <add>, %308, %cst_135 [1] : vector<32x48xf32> to vector<32xf32>
    %310 = vector.shape_cast %309 : vector<32xf32> to vector<32x1xf32>
    %cst_136 = arith.constant 4.800000e+01 : f32
    %311 = vector.broadcast %cst_136 : f32 to vector<32x1xf32>
    %312 = arith.divf %310, %311 : vector<32x1xf32>
    %cst_137 = arith.constant 9.99999974E-6 : f32
    %313 = vector.broadcast %cst_137 : f32 to vector<32x1xf32>
    %314 = arith.addf %312, %313 : vector<32x1xf32>
    %315 = math.rsqrt %314 : vector<32x1xf32>
    %316 = vector.broadcast %315 : vector<32x1xf32> to vector<32x48xf32>
    %317 = arith.mulf %307, %316 : vector<32x48xf32>
    %318 = vector.broadcast %287 : vector<1x48xf32> to vector<32x48xf32>
    %319 = arith.mulf %317, %318 : vector<32x48xf32>
    %320 = vector.broadcast %288 : vector<1x48xf32> to vector<32x48xf32>
    %321 = arith.addf %319, %320 : vector<32x48xf32>
    %cst_138 = arith.constant dense<0.000000e+00> : vector<32x192xf32>
    %322 = tpu.matmul %321, %295, %cst_138 {dimension_numbers = #tpu.dot_dimension_numbers<[1], [0], [0], [1], [0, 0, 1, 1], [], []>} : vector<32x48xf32>, vector<48x192xf32>, vector<32x192xf32> -> vector<32x192xf32>
    %323 = vector.extract_strided_slice %322 {offsets = [0, 0], sizes = [16, 192], strides = [1, 1]} : vector<32x192xf32> to vector<16x192xf32>
    %324 = vector.extract_strided_slice %323 {offsets = [0, 0], sizes = [16, 16], strides = [1, 1]} : vector<16x192xf32> to vector<16x16xf32>
    %325 = vector.extract_strided_slice %323 {offsets = [0, 64], sizes = [16, 16], strides = [1, 1]} : vector<16x192xf32> to vector<16x16xf32>
    %326 = vector.extract_strided_slice %323 {offsets = [0, 128], sizes = [16, 16], strides = [1, 1]} : vector<16x192xf32> to vector<16x16xf32>
    %cst_139 = arith.constant dense<0.000000e+00> : vector<16x16xf32>
    %327 = tpu.matmul %324, %325, %cst_139 {dimension_numbers = #tpu.dot_dimension_numbers<[1], [1], [0], [0], [0, 0, 1, 0], [], []>} : vector<16x16xf32>, vector<16x16xf32>, vector<16x16xf32> -> vector<16x16xf32>
    %cst_140 = arith.constant 2.500000e-01 : f32
    %328 = vector.broadcast %cst_140 : f32 to vector<16x16xf32>
    %329 = arith.mulf %327, %328 : vector<16x16xf32>
    %cst_141 = arith.constant dense<0xFF800000> : vector<16xf32>
    %330 = vector.multi_reduction <maximumf>, %329, %cst_141 [1] : vector<16x16xf32> to vector<16xf32>
    %331 = vector.shape_cast %330 : vector<16xf32> to vector<16x1xf32>
    %332 = vector.broadcast %331 : vector<16x1xf32> to vector<16x16xf32>
    %333 = arith.subf %329, %332 : vector<16x16xf32>
    %334 = math.exp %333 : vector<16x16xf32>
    %cst_142 = arith.constant dense<0.000000e+00> : vector<16xf32>
    %335 = vector.multi_reduction <add>, %334, %cst_142 [1] : vector<16x16xf32> to vector<16xf32>
    %336 = vector.shape_cast %335 : vector<16xf32> to vector<16x1xf32>
    %337 = tpu.reciprocal %336 {approx = true} : vector<16x1xf32> -> vector<16x1xf32>
    %338 = vector.broadcast %337 : vector<16x1xf32> to vector<16x16xf32>
    %339 = arith.mulf %334, %338 : vector<16x16xf32>
    %cst_143 = arith.constant dense<0.000000e+00> : vector<16x16xf32>
    %340 = tpu.matmul %339, %326, %cst_143 {dimension_numbers = #tpu.dot_dimension_numbers<[1], [0], [0], [1], [0, 0, 1, 1], [], []>} : vector<16x16xf32>, vector<16x16xf32>, vector<16x16xf32> -> vector<16x16xf32>
    %341 = vector.extract_strided_slice %323 {offsets = [0, 16], sizes = [16, 16], strides = [1, 1]} : vector<16x192xf32> to vector<16x16xf32>
    %342 = vector.extract_strided_slice %323 {offsets = [0, 80], sizes = [16, 16], strides = [1, 1]} : vector<16x192xf32> to vector<16x16xf32>
    %343 = vector.extract_strided_slice %323 {offsets = [0, 144], sizes = [16, 16], strides = [1, 1]} : vector<16x192xf32> to vector<16x16xf32>
    %cst_144 = arith.constant dense<0.000000e+00> : vector<16x16xf32>
    %344 = tpu.matmul %341, %342, %cst_144 {dimension_numbers = #tpu.dot_dimension_numbers<[1], [1], [0], [0], [0, 0, 1, 0], [], []>} : vector<16x16xf32>, vector<16x16xf32>, vector<16x16xf32> -> vector<16x16xf32>
    %cst_145 = arith.constant 2.500000e-01 : f32
    %345 = vector.broadcast %cst_145 : f32 to vector<16x16xf32>
    %346 = arith.mulf %344, %345 : vector<16x16xf32>
    %cst_146 = arith.constant dense<0xFF800000> : vector<16xf32>
    %347 = vector.multi_reduction <maximumf>, %346, %cst_146 [1] : vector<16x16xf32> to vector<16xf32>
    %348 = vector.shape_cast %347 : vector<16xf32> to vector<16x1xf32>
    %349 = vector.broadcast %348 : vector<16x1xf32> to vector<16x16xf32>
    %350 = arith.subf %346, %349 : vector<16x16xf32>
    %351 = math.exp %350 : vector<16x16xf32>
    %cst_147 = arith.constant dense<0.000000e+00> : vector<16xf32>
    %352 = vector.multi_reduction <add>, %351, %cst_147 [1] : vector<16x16xf32> to vector<16xf32>
    %353 = vector.shape_cast %352 : vector<16xf32> to vector<16x1xf32>
    %354 = tpu.reciprocal %353 {approx = true} : vector<16x1xf32> -> vector<16x1xf32>
    %355 = vector.broadcast %354 : vector<16x1xf32> to vector<16x16xf32>
    %356 = arith.mulf %351, %355 : vector<16x16xf32>
    %cst_148 = arith.constant dense<0.000000e+00> : vector<16x16xf32>
    %357 = tpu.matmul %356, %343, %cst_148 {dimension_numbers = #tpu.dot_dimension_numbers<[1], [0], [0], [1], [0, 0, 1, 1], [], []>} : vector<16x16xf32>, vector<16x16xf32>, vector<16x16xf32> -> vector<16x16xf32>
    %358 = vector.extract_strided_slice %323 {offsets = [0, 32], sizes = [16, 16], strides = [1, 1]} : vector<16x192xf32> to vector<16x16xf32>
    %359 = vector.extract_strided_slice %323 {offsets = [0, 96], sizes = [16, 16], strides = [1, 1]} : vector<16x192xf32> to vector<16x16xf32>
    %360 = vector.extract_strided_slice %323 {offsets = [0, 160], sizes = [16, 16], strides = [1, 1]} : vector<16x192xf32> to vector<16x16xf32>
    %cst_149 = arith.constant dense<0.000000e+00> : vector<16x16xf32>
    %361 = tpu.matmul %358, %359, %cst_149 {dimension_numbers = #tpu.dot_dimension_numbers<[1], [1], [0], [0], [0, 0, 1, 0], [], []>} : vector<16x16xf32>, vector<16x16xf32>, vector<16x16xf32> -> vector<16x16xf32>
    %cst_150 = arith.constant 2.500000e-01 : f32
    %362 = vector.broadcast %cst_150 : f32 to vector<16x16xf32>
    %363 = arith.mulf %361, %362 : vector<16x16xf32>
    %cst_151 = arith.constant dense<0xFF800000> : vector<16xf32>
    %364 = vector.multi_reduction <maximumf>, %363, %cst_151 [1] : vector<16x16xf32> to vector<16xf32>
    %365 = vector.shape_cast %364 : vector<16xf32> to vector<16x1xf32>
    %366 = vector.broadcast %365 : vector<16x1xf32> to vector<16x16xf32>
    %367 = arith.subf %363, %366 : vector<16x16xf32>
    %368 = math.exp %367 : vector<16x16xf32>
    %cst_152 = arith.constant dense<0.000000e+00> : vector<16xf32>
    %369 = vector.multi_reduction <add>, %368, %cst_152 [1] : vector<16x16xf32> to vector<16xf32>
    %370 = vector.shape_cast %369 : vector<16xf32> to vector<16x1xf32>
    %371 = tpu.reciprocal %370 {approx = true} : vector<16x1xf32> -> vector<16x1xf32>
    %372 = vector.broadcast %371 : vector<16x1xf32> to vector<16x16xf32>
    %373 = arith.mulf %368, %372 : vector<16x16xf32>
    %cst_153 = arith.constant dense<0.000000e+00> : vector<16x16xf32>
    %374 = tpu.matmul %373, %360, %cst_153 {dimension_numbers = #tpu.dot_dimension_numbers<[1], [0], [0], [1], [0, 0, 1, 1], [], []>} : vector<16x16xf32>, vector<16x16xf32>, vector<16x16xf32> -> vector<16x16xf32>
    %375 = vector.extract_strided_slice %323 {offsets = [0, 48], sizes = [16, 16], strides = [1, 1]} : vector<16x192xf32> to vector<16x16xf32>
    %376 = vector.extract_strided_slice %323 {offsets = [0, 112], sizes = [16, 16], strides = [1, 1]} : vector<16x192xf32> to vector<16x16xf32>
    %377 = vector.extract_strided_slice %323 {offsets = [0, 176], sizes = [16, 16], strides = [1, 1]} : vector<16x192xf32> to vector<16x16xf32>
    %cst_154 = arith.constant dense<0.000000e+00> : vector<16x16xf32>
    %378 = tpu.matmul %375, %376, %cst_154 {dimension_numbers = #tpu.dot_dimension_numbers<[1], [1], [0], [0], [0, 0, 1, 0], [], []>} : vector<16x16xf32>, vector<16x16xf32>, vector<16x16xf32> -> vector<16x16xf32>
    %cst_155 = arith.constant 2.500000e-01 : f32
    %379 = vector.broadcast %cst_155 : f32 to vector<16x16xf32>
    %380 = arith.mulf %378, %379 : vector<16x16xf32>
    %cst_156 = arith.constant dense<0xFF800000> : vector<16xf32>
    %381 = vector.multi_reduction <maximumf>, %380, %cst_156 [1] : vector<16x16xf32> to vector<16xf32>
    %382 = vector.shape_cast %381 : vector<16xf32> to vector<16x1xf32>
    %383 = vector.broadcast %382 : vector<16x1xf32> to vector<16x16xf32>
    %384 = arith.subf %380, %383 : vector<16x16xf32>
    %385 = math.exp %384 : vector<16x16xf32>
    %cst_157 = arith.constant dense<0.000000e+00> : vector<16xf32>
    %386 = vector.multi_reduction <add>, %385, %cst_157 [1] : vector<16x16xf32> to vector<16xf32>
    %387 = vector.shape_cast %386 : vector<16xf32> to vector<16x1xf32>
    %388 = tpu.reciprocal %387 {approx = true} : vector<16x1xf32> -> vector<16x1xf32>
    %389 = vector.broadcast %388 : vector<16x1xf32> to vector<16x16xf32>
    %390 = arith.mulf %385, %389 : vector<16x16xf32>
    %cst_158 = arith.constant dense<0.000000e+00> : vector<16x16xf32>
    %391 = tpu.matmul %390, %377, %cst_158 {dimension_numbers = #tpu.dot_dimension_numbers<[1], [0], [0], [1], [0, 0, 1, 1], [], []>} : vector<16x16xf32>, vector<16x16xf32>, vector<16x16xf32> -> vector<16x16xf32>
    %392 = tpu.concatenate %340, %357, %374, %391 in 1 : vector<16x16xf32>, vector<16x16xf32>, vector<16x16xf32>, vector<16x16xf32> -> vector<16x64xf32>
    %393 = vector.extract_strided_slice %322 {offsets = [16, 0], sizes = [16, 192], strides = [1, 1]} : vector<32x192xf32> to vector<16x192xf32>
    %394 = vector.extract_strided_slice %393 {offsets = [0, 0], sizes = [16, 16], strides = [1, 1]} : vector<16x192xf32> to vector<16x16xf32>
    %395 = vector.extract_strided_slice %393 {offsets = [0, 64], sizes = [16, 16], strides = [1, 1]} : vector<16x192xf32> to vector<16x16xf32>
    %396 = vector.extract_strided_slice %393 {offsets = [0, 128], sizes = [16, 16], strides = [1, 1]} : vector<16x192xf32> to vector<16x16xf32>
    %cst_159 = arith.constant dense<0.000000e+00> : vector<16x16xf32>
    %397 = tpu.matmul %394, %395, %cst_159 {dimension_numbers = #tpu.dot_dimension_numbers<[1], [1], [0], [0], [0, 0, 1, 0], [], []>} : vector<16x16xf32>, vector<16x16xf32>, vector<16x16xf32> -> vector<16x16xf32>
    %cst_160 = arith.constant 2.500000e-01 : f32
    %398 = vector.broadcast %cst_160 : f32 to vector<16x16xf32>
    %399 = arith.mulf %397, %398 : vector<16x16xf32>
    %cst_161 = arith.constant dense<0xFF800000> : vector<16xf32>
    %400 = vector.multi_reduction <maximumf>, %399, %cst_161 [1] : vector<16x16xf32> to vector<16xf32>
    %401 = vector.shape_cast %400 : vector<16xf32> to vector<16x1xf32>
    %402 = vector.broadcast %401 : vector<16x1xf32> to vector<16x16xf32>
    %403 = arith.subf %399, %402 : vector<16x16xf32>
    %404 = math.exp %403 : vector<16x16xf32>
    %cst_162 = arith.constant dense<0.000000e+00> : vector<16xf32>
    %405 = vector.multi_reduction <add>, %404, %cst_162 [1] : vector<16x16xf32> to vector<16xf32>
    %406 = vector.shape_cast %405 : vector<16xf32> to vector<16x1xf32>
    %407 = tpu.reciprocal %406 {approx = true} : vector<16x1xf32> -> vector<16x1xf32>
    %408 = vector.broadcast %407 : vector<16x1xf32> to vector<16x16xf32>
    %409 = arith.mulf %404, %408 : vector<16x16xf32>
    %cst_163 = arith.constant dense<0.000000e+00> : vector<16x16xf32>
    %410 = tpu.matmul %409, %396, %cst_163 {dimension_numbers = #tpu.dot_dimension_numbers<[1], [0], [0], [1], [0, 0, 1, 1], [], []>} : vector<16x16xf32>, vector<16x16xf32>, vector<16x16xf32> -> vector<16x16xf32>
    %411 = vector.extract_strided_slice %393 {offsets = [0, 16], sizes = [16, 16], strides = [1, 1]} : vector<16x192xf32> to vector<16x16xf32>
    %412 = vector.extract_strided_slice %393 {offsets = [0, 80], sizes = [16, 16], strides = [1, 1]} : vector<16x192xf32> to vector<16x16xf32>
    %413 = vector.extract_strided_slice %393 {offsets = [0, 144], sizes = [16, 16], strides = [1, 1]} : vector<16x192xf32> to vector<16x16xf32>
    %cst_164 = arith.constant dense<0.000000e+00> : vector<16x16xf32>
    %414 = tpu.matmul %411, %412, %cst_164 {dimension_numbers = #tpu.dot_dimension_numbers<[1], [1], [0], [0], [0, 0, 1, 0], [], []>} : vector<16x16xf32>, vector<16x16xf32>, vector<16x16xf32> -> vector<16x16xf32>
    %cst_165 = arith.constant 2.500000e-01 : f32
    %415 = vector.broadcast %cst_165 : f32 to vector<16x16xf32>
    %416 = arith.mulf %414, %415 : vector<16x16xf32>
    %cst_166 = arith.constant dense<0xFF800000> : vector<16xf32>
    %417 = vector.multi_reduction <maximumf>, %416, %cst_166 [1] : vector<16x16xf32> to vector<16xf32>
    %418 = vector.shape_cast %417 : vector<16xf32> to vector<16x1xf32>
    %419 = vector.broadcast %418 : vector<16x1xf32> to vector<16x16xf32>
    %420 = arith.subf %416, %419 : vector<16x16xf32>
    %421 = math.exp %420 : vector<16x16xf32>
    %cst_167 = arith.constant dense<0.000000e+00> : vector<16xf32>
    %422 = vector.multi_reduction <add>, %421, %cst_167 [1] : vector<16x16xf32> to vector<16xf32>
    %423 = vector.shape_cast %422 : vector<16xf32> to vector<16x1xf32>
    %424 = tpu.reciprocal %423 {approx = true} : vector<16x1xf32> -> vector<16x1xf32>
    %425 = vector.broadcast %424 : vector<16x1xf32> to vector<16x16xf32>
    %426 = arith.mulf %421, %425 : vector<16x16xf32>
    %cst_168 = arith.constant dense<0.000000e+00> : vector<16x16xf32>
    %427 = tpu.matmul %426, %413, %cst_168 {dimension_numbers = #tpu.dot_dimension_numbers<[1], [0], [0], [1], [0, 0, 1, 1], [], []>} : vector<16x16xf32>, vector<16x16xf32>, vector<16x16xf32> -> vector<16x16xf32>
    %428 = vector.extract_strided_slice %393 {offsets = [0, 32], sizes = [16, 16], strides = [1, 1]} : vector<16x192xf32> to vector<16x16xf32>
    %429 = vector.extract_strided_slice %393 {offsets = [0, 96], sizes = [16, 16], strides = [1, 1]} : vector<16x192xf32> to vector<16x16xf32>
    %430 = vector.extract_strided_slice %393 {offsets = [0, 160], sizes = [16, 16], strides = [1, 1]} : vector<16x192xf32> to vector<16x16xf32>
    %cst_169 = arith.constant dense<0.000000e+00> : vector<16x16xf32>
    %431 = tpu.matmul %428, %429, %cst_169 {dimension_numbers = #tpu.dot_dimension_numbers<[1], [1], [0], [0], [0, 0, 1, 0], [], []>} : vector<16x16xf32>, vector<16x16xf32>, vector<16x16xf32> -> vector<16x16xf32>
    %cst_170 = arith.constant 2.500000e-01 : f32
    %432 = vector.broadcast %cst_170 : f32 to vector<16x16xf32>
    %433 = arith.mulf %431, %432 : vector<16x16xf32>
    %cst_171 = arith.constant dense<0xFF800000> : vector<16xf32>
    %434 = vector.multi_reduction <maximumf>, %433, %cst_171 [1] : vector<16x16xf32> to vector<16xf32>
    %435 = vector.shape_cast %434 : vector<16xf32> to vector<16x1xf32>
    %436 = vector.broadcast %435 : vector<16x1xf32> to vector<16x16xf32>
    %437 = arith.subf %433, %436 : vector<16x16xf32>
    %438 = math.exp %437 : vector<16x16xf32>
    %cst_172 = arith.constant dense<0.000000e+00> : vector<16xf32>
    %439 = vector.multi_reduction <add>, %438, %cst_172 [1] : vector<16x16xf32> to vector<16xf32>
    %440 = vector.shape_cast %439 : vector<16xf32> to vector<16x1xf32>
    %441 = tpu.reciprocal %440 {approx = true} : vector<16x1xf32> -> vector<16x1xf32>
    %442 = vector.broadcast %441 : vector<16x1xf32> to vector<16x16xf32>
    %443 = arith.mulf %438, %442 : vector<16x16xf32>
    %cst_173 = arith.constant dense<0.000000e+00> : vector<16x16xf32>
    %444 = tpu.matmul %443, %430, %cst_173 {dimension_numbers = #tpu.dot_dimension_numbers<[1], [0], [0], [1], [0, 0, 1, 1], [], []>} : vector<16x16xf32>, vector<16x16xf32>, vector<16x16xf32> -> vector<16x16xf32>
    %445 = vector.extract_strided_slice %393 {offsets = [0, 48], sizes = [16, 16], strides = [1, 1]} : vector<16x192xf32> to vector<16x16xf32>
    %446 = vector.extract_strided_slice %393 {offsets = [0, 112], sizes = [16, 16], strides = [1, 1]} : vector<16x192xf32> to vector<16x16xf32>
    %447 = vector.extract_strided_slice %393 {offsets = [0, 176], sizes = [16, 16], strides = [1, 1]} : vector<16x192xf32> to vector<16x16xf32>
    %cst_174 = arith.constant dense<0.000000e+00> : vector<16x16xf32>
    %448 = tpu.matmul %445, %446, %cst_174 {dimension_numbers = #tpu.dot_dimension_numbers<[1], [1], [0], [0], [0, 0, 1, 0], [], []>} : vector<16x16xf32>, vector<16x16xf32>, vector<16x16xf32> -> vector<16x16xf32>
    %cst_175 = arith.constant 2.500000e-01 : f32
    %449 = vector.broadcast %cst_175 : f32 to vector<16x16xf32>
    %450 = arith.mulf %448, %449 : vector<16x16xf32>
    %cst_176 = arith.constant dense<0xFF800000> : vector<16xf32>
    %451 = vector.multi_reduction <maximumf>, %450, %cst_176 [1] : vector<16x16xf32> to vector<16xf32>
    %452 = vector.shape_cast %451 : vector<16xf32> to vector<16x1xf32>
    %453 = vector.broadcast %452 : vector<16x1xf32> to vector<16x16xf32>
    %454 = arith.subf %450, %453 : vector<16x16xf32>
    %455 = math.exp %454 : vector<16x16xf32>
    %cst_177 = arith.constant dense<0.000000e+00> : vector<16xf32>
    %456 = vector.multi_reduction <add>, %455, %cst_177 [1] : vector<16x16xf32> to vector<16xf32>
    %457 = vector.shape_cast %456 : vector<16xf32> to vector<16x1xf32>
    %458 = tpu.reciprocal %457 {approx = true} : vector<16x1xf32> -> vector<16x1xf32>
    %459 = vector.broadcast %458 : vector<16x1xf32> to vector<16x16xf32>
    %460 = arith.mulf %455, %459 : vector<16x16xf32>
    %cst_178 = arith.constant dense<0.000000e+00> : vector<16x16xf32>
    %461 = tpu.matmul %460, %447, %cst_178 {dimension_numbers = #tpu.dot_dimension_numbers<[1], [0], [0], [1], [0, 0, 1, 1], [], []>} : vector<16x16xf32>, vector<16x16xf32>, vector<16x16xf32> -> vector<16x16xf32>
    %462 = tpu.concatenate %410, %427, %444, %461 in 1 : vector<16x16xf32>, vector<16x16xf32>, vector<16x16xf32>, vector<16x16xf32> -> vector<16x64xf32>
    %463 = tpu.concatenate %392, %462 in 0 : vector<16x64xf32>, vector<16x64xf32> -> vector<32x64xf32>
    %cst_179 = arith.constant dense<0.000000e+00> : vector<32x48xf32>
    %464 = tpu.matmul %463, %297, %cst_179 {dimension_numbers = #tpu.dot_dimension_numbers<[1], [0], [0], [1], [0, 0, 1, 1], [], []>} : vector<32x64xf32>, vector<64x48xf32>, vector<32x48xf32> -> vector<32x48xf32>
    %465 = vector.broadcast %289 : vector<1x48xf32> to vector<32x48xf32>
    %466 = arith.addf %464, %465 : vector<32x48xf32>
    %467 = arith.addf %466, %286 : vector<32x48xf32>
    %cst_180 = arith.constant dense<0.000000e+00> : vector<32xf32>
    %468 = vector.multi_reduction <add>, %467, %cst_180 [1] : vector<32x48xf32> to vector<32xf32>
    %469 = vector.shape_cast %468 : vector<32xf32> to vector<32x1xf32>
    %cst_181 = arith.constant 4.800000e+01 : f32
    %470 = vector.broadcast %cst_181 : f32 to vector<32x1xf32>
    %471 = arith.divf %469, %470 : vector<32x1xf32>
    %472 = vector.broadcast %471 : vector<32x1xf32> to vector<32x48xf32>
    %473 = arith.subf %467, %472 : vector<32x48xf32>
    %474 = arith.mulf %473, %473 : vector<32x48xf32>
    %cst_182 = arith.constant dense<0.000000e+00> : vector<32xf32>
    %475 = vector.multi_reduction <add>, %474, %cst_182 [1] : vector<32x48xf32> to vector<32xf32>
    %476 = vector.shape_cast %475 : vector<32xf32> to vector<32x1xf32>
    %cst_183 = arith.constant 4.800000e+01 : f32
    %477 = vector.broadcast %cst_183 : f32 to vector<32x1xf32>
    %478 = arith.divf %476, %477 : vector<32x1xf32>
    %cst_184 = arith.constant 9.99999974E-6 : f32
    %479 = vector.broadcast %cst_184 : f32 to vector<32x1xf32>
    %480 = arith.addf %478, %479 : vector<32x1xf32>
    %481 = math.rsqrt %480 : vector<32x1xf32>
    %482 = vector.broadcast %481 : vector<32x1xf32> to vector<32x48xf32>
    %483 = arith.mulf %473, %482 : vector<32x48xf32>
    %484 = vector.broadcast %290 : vector<1x48xf32> to vector<32x48xf32>
    %485 = arith.mulf %483, %484 : vector<32x48xf32>
    %486 = vector.broadcast %291 : vector<1x48xf32> to vector<32x48xf32>
    %487 = arith.addf %485, %486 : vector<32x48xf32>
    %cst_185 = arith.constant dense<0.000000e+00> : vector<32x192xf32>
    %488 = tpu.matmul %487, %299, %cst_185 {dimension_numbers = #tpu.dot_dimension_numbers<[1], [0], [0], [1], [0, 0, 1, 1], [], []>} : vector<32x48xf32>, vector<48x192xf32>, vector<32x192xf32> -> vector<32x192xf32>
    %489 = vector.broadcast %292 : vector<1x192xf32> to vector<32x192xf32>
    %490 = arith.addf %488, %489 : vector<32x192xf32>
    %cst_186 = arith.constant 5.000000e-01 : f32
    %491 = vector.broadcast %cst_186 : f32 to vector<32x192xf32>
    %492 = arith.mulf %491, %490 : vector<32x192xf32>
    %cst_187 = arith.constant 0.707106769 : f32
    %493 = vector.broadcast %cst_187 : f32 to vector<32x192xf32>
    %494 = arith.mulf %490, %493 : vector<32x192xf32>
    %495 = math.erf %494 : vector<32x192xf32>
    %cst_188 = arith.constant 1.000000e+00 : f32
    %496 = vector.broadcast %cst_188 : f32 to vector<32x192xf32>
    %497 = arith.addf %496, %495 : vector<32x192xf32>
    %498 = arith.mulf %492, %497 : vector<32x192xf32>
    %cst_189 = arith.constant dense<0.000000e+00> : vector<32x48xf32>
    %499 = tpu.matmul %498, %301, %cst_189 {dimension_numbers = #tpu.dot_dimension_numbers<[1], [0], [0], [1], [0, 0, 1, 1], [], []>} : vector<32x192xf32>, vector<192x48xf32>, vector<32x48xf32> -> vector<32x48xf32>
    %500 = vector.broadcast %293 : vector<1x48xf32> to vector<32x48xf32>
    %501 = arith.addf %499, %500 : vector<32x48xf32>
    %502 = arith.addf %501, %467 : vector<32x48xf32>
    %503 = vector.extract_strided_slice %502 {offsets = [0, 0], sizes = [12, 48], strides = [1, 1]} : vector<32x48xf32> to vector<12x48xf32>
    %504 = vector.extract_strided_slice %277 {offsets = [0, 0], sizes = [4, 48], strides = [1, 1]} : vector<8x48xf32> to vector<4x48xf32>
    %505 = tpu.concatenate %503, %504 in 0 : vector<12x48xf32>, vector<4x48xf32> -> vector<16x48xf32>
    %506 = vector.extract_strided_slice %502 {offsets = [16, 0], sizes = [12, 48], strides = [1, 1]} : vector<32x48xf32> to vector<12x48xf32>
    %507 = vector.extract_strided_slice %277 {offsets = [4, 0], sizes = [4, 48], strides = [1, 1]} : vector<8x48xf32> to vector<4x48xf32>
    %508 = tpu.concatenate %506, %507 in 0 : vector<12x48xf32>, vector<4x48xf32> -> vector<16x48xf32>
    %509 = tpu.concatenate %505, %508 in 0 : vector<16x48xf32>, vector<16x48xf32> -> vector<32x48xf32>
    %c0_190 = arith.constant 0 : index
    %c0_191 = arith.constant 0 : index
    %510 = vector.load %arg7[%c0_190, %c0_191] : memref<48x48xf32, #tpu.memory_space<vmem>>, vector<48x48xf32>
    %cst_192 = arith.constant dense<0.000000e+00> : vector<32x48xf32>
    %511 = tpu.matmul %509, %510, %cst_192 {dimension_numbers = #tpu.dot_dimension_numbers<[1], [0], [0], [1], [0, 0, 1, 1], [], []>} : vector<32x48xf32>, vector<48x48xf32>, vector<32x48xf32> -> vector<32x48xf32>
    %512 = vector.broadcast %2 : vector<1x48xf32> to vector<32x48xf32>
    %513 = arith.addf %511, %512 : vector<32x48xf32>
    %514 = vector.extract_strided_slice %513 {offsets = [0, 0], sizes = [16, 48], strides = [1, 1]} : vector<32x48xf32> to vector<16x48xf32>
    %cst_193 = arith.constant dense<0.000000e+00> : vector<16x48xf32>
    %515 = tpu.matmul %19, %514, %cst_193 {dimension_numbers = #tpu.dot_dimension_numbers<[1], [0], [0], [1], [0, 0, 1, 1], [], []>} : vector<16x16xf32>, vector<16x48xf32>, vector<16x48xf32> -> vector<16x48xf32>
    %516 = vector.extract_strided_slice %513 {offsets = [16, 0], sizes = [16, 48], strides = [1, 1]} : vector<32x48xf32> to vector<16x48xf32>
    %cst_194 = arith.constant dense<0.000000e+00> : vector<16x48xf32>
    %517 = tpu.matmul %31, %516, %cst_194 {dimension_numbers = #tpu.dot_dimension_numbers<[1], [0], [0], [1], [0, 0, 1, 1], [], []>} : vector<16x16xf32>, vector<16x48xf32>, vector<16x48xf32> -> vector<16x48xf32>
    %518 = tpu.concatenate %515, %517 in 0 : vector<16x48xf32>, vector<16x48xf32> -> vector<32x48xf32>
    %c0_195 = arith.constant 0 : index
    %c0_196 = arith.constant 0 : index
    %519 = vector.load %arg17[%c0_195, %c0_196] : memref<32x48xf32, #tpu.memory_space<vmem>>, vector<32x48xf32>
    tpu.vector_store %arg17[%c0_195, %c0_196], %518 {strides = array<i32>} : memref<32x48xf32, #tpu.memory_space<vmem>>, vector<32x48xf32>,
    %520 = vector.extract_strided_slice %513 {offsets = [0, 0], sizes = [12, 48], strides = [1, 1]} : vector<32x48xf32> to vector<12x48xf32>
    %521 = vector.extract_strided_slice %513 {offsets = [16, 0], sizes = [12, 48], strides = [1, 1]} : vector<32x48xf32> to vector<12x48xf32>
    %522 = tpu.concatenate %520, %521 in 0 : vector<12x48xf32>, vector<12x48xf32> -> vector<24x48xf32>
    %523 = tpu.concatenate %42, %51 in 0 : vector<12x48xf32>, vector<12x48xf32> -> vector<24x48xf32>
    %524 = arith.subf %522, %523 : vector<24x48xf32>
    %525 = arith.mulf %524, %524 : vector<24x48xf32>
    %526 = vector.shape_cast %525 : vector<24x48xf32> to vector<1x24x48xf32>
    %cst_197 = arith.constant dense<0.000000e+00> : vector<1xf32>
    %527 = vector.multi_reduction <add>, %526, %cst_197 [1, 2] : vector<1x24x48xf32> to vector<1xf32>
    %528 = vector.shape_cast %527 : vector<1xf32> to vector<1x1x1xf32>
    %529 = vector.extract %528[0, 0, 0] : f32 from vector<1x1x1xf32>
    %530 = vector.broadcast %529 : f32 to vector<1x1xf32>
    %cst_198 = arith.constant 8.68055562E-4 : f32
    %531 = vector.broadcast %cst_198 : f32 to vector<1x1xf32>
    %532 = arith.mulf %530, %531 : vector<1x1xf32>
    %c0_199 = arith.constant 0 : index
    %c0_200 = arith.constant 0 : index
    %533 = vector.load %arg18[%c0_199, %c0_200] : memref<1x1xf32, #tpu.memory_space<vmem>>, vector<1x1xf32>
    tpu.vector_store %arg18[%c0_199, %c0_200], %532 {strides = array<i32>} : memref<1x1xf32, #tpu.memory_space<vmem>>, vector<1x1xf32>,
    return
  }
}

</mosaic_0001>

<llo_original>
// kernel: mae_forward.1
$region0: #{mae_forward.1}
  #allocation0 [shape = 'u32[]', space=smem, size = 0x4, offset = 0x4, fixed_abs, tag = 'smem constant byte address 0x4 - core index']
  #allocation1 [shape = 'u32[144,128]{1,0:T(1,128)}', space=vmem, size = 0x12000, scoped, tag = 'internal scratch']
  %s0 = inlined_call_operand.vmem [shape: f32[32,48], index: 0, kind: input, shape index: {}]
  %s1 = inlined_call_operand.vmem [shape: s32[32,1], index: 1, kind: input, shape index: {}]
  %s2 = inlined_call_operand.vmem [shape: s32[32,1], index: 2, kind: input, shape index: {}]
  %s3 = inlined_call_operand.vmem [shape: f32[16,32], index: 3, kind: input, shape index: {}]
  %s4 = inlined_call_operand.vmem [shape: f32[16,48], index: 4, kind: input, shape index: {}]
  %s5 = inlined_call_operand.vmem [shape: f32[48,32], index: 5, kind: input, shape index: {}]
  %s6 = inlined_call_operand.vmem [shape: f32[32,48], index: 6, kind: input, shape index: {}]
  %s7 = inlined_call_operand.vmem [shape: f32[48,48], index: 7, kind: input, shape index: {}]
  %s8 = inlined_call_operand.vmem [shape: f32[1,32,96], index: 8, kind: input, shape index: {}]
  %s9 = inlined_call_operand.vmem [shape: f32[1,32,32], index: 9, kind: input, shape index: {}]
  %s10 = inlined_call_operand.vmem [shape: f32[1,32,64], index: 10, kind: input, shape index: {}]
  %s11 = inlined_call_operand.vmem [shape: f32[1,64,32], index: 11, kind: input, shape index: {}]
  %s12 = inlined_call_operand.vmem [shape: f32[1,48,192], index: 12, kind: input, shape index: {}]
  %s13 = inlined_call_operand.vmem [shape: f32[1,64,48], index: 13, kind: input, shape index: {}]
  %s14 = inlined_call_operand.vmem [shape: f32[1,48,192], index: 14, kind: input, shape index: {}]
  %s15 = inlined_call_operand.vmem [shape: f32[1,192,48], index: 15, kind: input, shape index: {}]
  %s16 = inlined_call_operand.vmem [shape: f32[18,192], index: 16, kind: input, shape index: {}]
  %s17 = inlined_call_operand.vmem [shape: f32[32,48], index: 17, kind: output, shape index: {0}]
  %s18 = inlined_call_operand.hbm [shape: f32[1,1], index: 18, kind: output, shape index: {1}]
  %19 = xla_tuple %s17, %s18
  %s20 = sld [smem:[#allocation0]]
  $region86: #{mae_forward.1} parent=0
    _
  %s22 = ssub.s32 1, %s20
  %s23 = scalar_select 0, %s22, %s20
  $region1: #{mae_forward.1} parent=0
    #allocation2 [shape = 'u8[512]{0}', space=vmem, size = 0x400, scoped, tag = 'output window, operand 1, single buffered']
    #allocation3 [shape = 's32[1]{0}', space=sflag, size = 0x4, scoped, tag = 'scoped memory for mae_forward.1']
    %24 = vsyncpa [#allocation3], 0
    // Predicated region
    $region2: #{mae_forward.1} parent=1 // pred_check
      _
    $region3: #{mae_forward.1} parent=1 // pred_check_branch
      %26 = sbr.rel (0) target = $region5
    $region4: #{mae_forward.1} parent=1 // pred_region
      _
    $region5: #{mae_forward.1} parent=1 // pred_fallthru
      _
    // Predicated region
    $region6: #{mae_forward.1} parent=1 // pred_check
      _
    $region7: #{mae_forward.1} parent=1 // pred_check_branch
      %28 = sbr.rel (0) target = $region9
    $region8: #{mae_forward.1} parent=1 // pred_region
      _
    $region9: #{mae_forward.1} parent=1 // pred_fallthru
      _
    // Predicated region
    $region10: #{mae_forward.1} parent=1 // pred_check
      _
    $region11: #{mae_forward.1} parent=1 // pred_check_branch
      %30 = sbr.rel (0) target = $region13
    $region12: #{mae_forward.1} parent=1 // pred_region
      _
    $region13: #{mae_forward.1} parent=1 // pred_fallthru
      _
    // Predicated region
    $region14: #{mae_forward.1} parent=1 // pred_check
      _
    $region15: #{mae_forward.1} parent=1 // pred_check_branch
      %32 = sbr.rel (0) target = $region17
    $region16: #{mae_forward.1} parent=1 // pred_region
      _
    $region17: #{mae_forward.1} parent=1 // pred_fallthru
      _
    // Predicated region
    $region18: #{mae_forward.1} parent=1 // pred_check
      _
    $region19: #{mae_forward.1} parent=1 // pred_check_branch
      %34 = sbr.rel (0) target = $region21
    $region20: #{mae_forward.1} parent=1 // pred_region
      _
    $region21: #{mae_forward.1} parent=1 // pred_fallthru
      _
    // Predicated region
    $region22: #{mae_forward.1} parent=1 // pred_check
      _
    $region23: #{mae_forward.1} parent=1 // pred_check_branch
      %36 = sbr.rel (0) target = $region25
    $region24: #{mae_forward.1} parent=1 // pred_region
      _
    $region25: #{mae_forward.1} parent=1 // pred_fallthru
      _
    // Predicated region
    $region26: #{mae_forward.1} parent=1 // pred_check
      _
    $region27: #{mae_forward.1} parent=1 // pred_check_branch
      %38 = sbr.rel (0) target = $region29
    $region28: #{mae_forward.1} parent=1 // pred_region
      _
    $region29: #{mae_forward.1} parent=1 // pred_fallthru
      _
    // Predicated region
    $region30: #{mae_forward.1} parent=1 // pred_check
      _
    $region31: #{mae_forward.1} parent=1 // pred_check_branch
      %40 = sbr.rel (0) target = $region33
    $region32: #{mae_forward.1} parent=1 // pred_region
      _
    $region33: #{mae_forward.1} parent=1 // pred_fallthru
      _
    // Predicated region
    $region34: #{mae_forward.1} parent=1 // pred_check
      _
    $region35: #{mae_forward.1} parent=1 // pred_check_branch
      %42 = sbr.rel (0) target = $region37
    $region36: #{mae_forward.1} parent=1 // pred_region
      _
    $region37: #{mae_forward.1} parent=1 // pred_fallthru
      _
    // Predicated region
    $region38: #{mae_forward.1} parent=1 // pred_check
      _
    $region39: #{mae_forward.1} parent=1 // pred_check_branch
      %44 = sbr.rel (0) target = $region41
    $region40: #{mae_forward.1} parent=1 // pred_region
      _
    $region41: #{mae_forward.1} parent=1 // pred_fallthru
      _
    // Predicated region
    $region42: #{mae_forward.1} parent=1 // pred_check
      _
    $region43: #{mae_forward.1} parent=1 // pred_check_branch
      %46 = sbr.rel (0) target = $region45
    $region44: #{mae_forward.1} parent=1 // pred_region
      _
    $region45: #{mae_forward.1} parent=1 // pred_fallthru
      _
    // Predicated region
    $region46: #{mae_forward.1} parent=1 // pred_check
      _
    $region47: #{mae_forward.1} parent=1 // pred_check_branch
      %48 = sbr.rel (0) target = $region49
    $region48: #{mae_forward.1} parent=1 // pred_region
      _
    $region49: #{mae_forward.1} parent=1 // pred_fallthru
      _
    // Predicated region
    $region50: #{mae_forward.1} parent=1 // pred_check
      _
    $region51: #{mae_forward.1} parent=1 // pred_check_branch
      %50 = sbr.rel (0) target = $region53
    $region52: #{mae_forward.1} parent=1 // pred_region
      _
    $region53: #{mae_forward.1} parent=1 // pred_fallthru
      _
    // Predicated region
    $region54: #{mae_forward.1} parent=1 // pred_check
      _
    $region55: #{mae_forward.1} parent=1 // pred_check_branch
      %52 = sbr.rel (0) target = $region57
    $region56: #{mae_forward.1} parent=1 // pred_region
      _
    $region57: #{mae_forward.1} parent=1 // pred_fallthru
      _
    // Predicated region
    $region58: #{mae_forward.1} parent=1 // pred_check
      _
    $region59: #{mae_forward.1} parent=1 // pred_check_branch
      %54 = sbr.rel (0) target = $region61
    $region60: #{mae_forward.1} parent=1 // pred_region
      _
    $region61: #{mae_forward.1} parent=1 // pred_fallthru
      _
    // Predicated region
    $region62: #{mae_forward.1} parent=1 // pred_check
      _
    $region63: #{mae_forward.1} parent=1 // pred_check_branch
      %56 = sbr.rel (0) target = $region65
    $region64: #{mae_forward.1} parent=1 // pred_region
      _
    $region65: #{mae_forward.1} parent=1 // pred_fallthru
      _
    // Predicated region
    $region66: #{mae_forward.1} parent=1 // pred_check
      _
    $region67: #{mae_forward.1} parent=1 // pred_check_branch
      %58 = sbr.rel (0) target = $region69
    $region68: #{mae_forward.1} parent=1 // pred_region
      _
    $region69: #{mae_forward.1} parent=1 // pred_fallthru
      _
    %v59 = vld [vmem:[%s16] ss:$0 sm:$0xff]
    %v60 = vld [vmem:[%s16 + $0x1] ss:$0 sm:$0xff]
    %v61 = vld [vmem:[%s16 + $0x2] ss:$0 sm:$0xff]
    %v62 = vld [vmem:[%s16 + $0x3] ss:$0 sm:$0xff]
    %v63 = vld [vmem:[%s3] sm:$0xff]
    %v64 = vld [vmem:[%s3 + $0x8] sm:$0xff]
    %v65 = vld [vmem:[%s4] sm:$0xff]
    %v66 = vld [vmem:[%s4 + $0x8] sm:$0xff]
    %v67 = vld [vmem:[%s0] sm:$0xff]
    %v68 = vld [vmem:[%s0 + $0x8] sm:$0xff]
    %v69 = vld [vmem:[%s0 + $0x10] sm:$0xff]
    %v70 = vld [vmem:[%s0 + $0x18] sm:$0xff]
    %v71 = vlaneseq
    %v72 = vand.u32 %v71, 127
    %v73 = vld [vmem:[%s1] sm:$0xff]
    %v74 = vld [vmem:[%s1 + $0x8] sm:$0xff]
    %75 = vset.pattern.permute.xlu0 0
    %76 = vperm.xlu0 %75, %v73
    %v77 = vpop.permute.xlu0 %76
    %78 = vset.pattern.permute.xlu0 0
    %79 = vperm.xlu0 %78, %v74
    %v80 = vpop.permute.xlu0 %79
    %vm81 = vcmp.eq.s32.totalorder %v77, %v72
    %vm82 = vcmp.eq.s32.totalorder %v80, %v72
    %v83 = vsel %vm81, 1.0, 0.0
    %v84 = vsel %vm82, 1.0, 0.0
    %v85 = vld [vmem:[%s2] sm:$0xff]
    %v86 = vld [vmem:[%s2 + $0x8] sm:$0xff]
    %87 = vset.pattern.permute.xlu0 0
    %88 = vperm.xlu0 %87, %v85
    %v89 = vpop.permute.xlu0 %88
    %90 = vset.pattern.permute.xlu0 0
    %91 = vperm.xlu0 %90, %v86
    %v92 = vpop.permute.xlu0 %91
    %vm93 = vcmp.eq.s32.totalorder %v89, %v72
    %vm94 = vcmp.eq.s32.totalorder %v92, %v72
    %v95 = vsel %vm93, 1.0, 0.0
    %v96 = vsel %vm94, 1.0, 0.0
    %v97 = vld [vmem:[%s1 + $0x10] sm:$0xff]
    %v98 = vld [vmem:[%s1 + $0x18] sm:$0xff]
    %99 = vset.pattern.permute.xlu0 0
    %100 = vperm.xlu0 %99, %v97
    %v101 = vpop.permute.xlu0 %100
    %102 = vset.pattern.permute.xlu0 0
    %103 = vperm.xlu0 %102, %v98
    %v104 = vpop.permute.xlu0 %103
    %vm105 = vcmp.eq.s32.totalorder %v101, %v72
    %vm106 = vcmp.eq.s32.totalorder %v104, %v72
    %v107 = vsel %vm105, 1.0, 0.0
    %v108 = vsel %vm106, 1.0, 0.0
    %v109 = vld [vmem:[%s2 + $0x10] sm:$0xff]
    %v110 = vld [vmem:[%s2 + $0x18] sm:$0xff]
    %111 = vset.pattern.permute.xlu0 0
    %112 = vperm.xlu0 %111, %v109
    %v113 = vpop.permute.xlu0 %112
    %114 = vset.pattern.permute.xlu0 0
    %115 = vperm.xlu0 %114, %v110
    %v116 = vpop.permute.xlu0 %115
    %vm117 = vcmp.eq.s32.totalorder %v113, %v72
    %vm118 = vcmp.eq.s32.totalorder %v116, %v72
    %v119 = vsel %vm117, 1.0, 0.0
    %v120 = vsel %vm118, 1.0, 0.0
    %v121 = vld [vmem:[%s5] sm:$0xff]
    %v122 = vld [vmem:[%s5 + $0x8] sm:$0xff]
    %v123 = vld [vmem:[%s5 + $0x10] sm:$0xff]
    %v124 = vld [vmem:[%s5 + $0x18] sm:$0xff]
    %v125 = vld [vmem:[%s5 + $0x20] sm:$0xff]
    %v126 = vld [vmem:[%s5 + $0x28] sm:$0xff]
    %vm127 = vcmask 392192
    %v129 = vsel %vm127, %v67, 0
    %v132 = vsel %vm127, %v68, 0
    %v135 = vsel %vm127, %v69, 0
    %v138 = vsel %vm127, %v70, 0
    %140 = vmatprep.subr.mxu0 0.0
    %141 = vmatpush1.msra.mxu0 0.0
    %142 = vmatprep.subr.mxu0 0.0
    %143 = vmatpush1.msra.mxu0 0.0
    %144 = vmatprep.subr.mxu0 0.0
    %145 = vmatpush1.msra.mxu0 0.0
    %146 = vmatprep.subr.mxu0 0.0
    %147 = vmatpush1.msra.mxu0 0.0
    %148 = vmatprep.subr.mxu0 0.0
    %149 = vmatpush1.msra.mxu0 0.0
    %150 = vmatprep.subr.mxu0 0.0
    %151 = vmatpush1.msra.mxu0 0.0
    %152 = vmatprep.subr.mxu0 0.0
    %153 = vmatpush1.msra.mxu0 0.0
    %154 = vmatprep.subr.mxu0 0.0
    %155 = vmatpush1.msra.mxu0 0.0
    %156 = vmatprep.subr.mxu0 0.0
    %157 = vmatpush1.msra.mxu0 0.0
    %158 = vmatprep.subr.mxu0 0.0
    %159 = vmatpush1.msra.mxu0 0.0
    %160 = vmatprep.subr.mxu0 0.0
    %161 = vmatpush1.msra.mxu0 %v126
    %162 = vmatprep.subr.mxu0 0.0
    %163 = vmatpush1.msra.mxu0 %v125
    %164 = vmatprep.subr.mxu0 0.0
    %165 = vmatpush1.msra.mxu0 %v124
    %166 = vmatprep.subr.mxu0 0.0
    %167 = vmatpush1.msra.mxu0 %v123
    %168 = vmatprep.subr.mxu0 0.0
    %169 = vmatpush1.msra.mxu0 %v122
    %170 = vmatprep.subr.mxu0 0.0
    %171 = vmatpush1.msra.mxu0 %v121
    %172 = vmatprep.subr.mxu0 0.0
    %173 = vmatpush2.msra.mxu0 0.0
    %174 = vmatprep.subr.mxu0 0.0
    %175 = vmatpush2.msra.mxu0 0.0
    %176 = vmatprep.subr.mxu0 0.0
    %177 = vmatpush2.msra.mxu0 0.0
    %178 = vmatprep.subr.mxu0 0.0
    %179 = vmatpush2.msra.mxu0 0.0
    %180 = vmatprep.subr.mxu0 0.0
    %181 = vmatpush2.msra.mxu0 0.0
    %182 = vmatprep.subr.mxu0 0.0
    %183 = vmatpush2.msra.mxu0 0.0
    %184 = vmatprep.subr.mxu0 0.0
    %185 = vmatpush2.msra.mxu0 0.0
    %186 = vmatprep.subr.mxu0 0.0
    %187 = vmatpush2.msra.mxu0 0.0
    %188 = vmatprep.subr.mxu0 0.0
    %189 = vmatpush2.msra.mxu0 0.0
    %190 = vmatprep.subr.mxu0 0.0
    %191 = vmatpush2.msra.mxu0 0.0
    %192 = vmatprep.subr.mxu0 0.0
    %193 = vmatpush2.msra.mxu0 0.0
    %194 = vmatprep.subr.mxu0 0.0
    %195 = vmatpush2.msra.mxu0 0.0
    %196 = vmatprep.subr.mxu0 0.0
    %197 = vmatpush2.msra.mxu0 0.0
    %198 = vmatprep.subr.mxu0 0.0
    %199 = vmatpush2.msra.mxu0 0.0
    %200 = vmatprep.subr.mxu0 0.0
    %201 = vmatpush2.msra.mxu0 0.0
    %202 = vmatprep.subr.mxu0 0.0
    %203 = vmatpush2.msra.mxu0 0.0
    %204 = vmatprep.mubr.f32.mxu0 0.0
    %205 = vmatmul.mubr.f32.gmra.mxu0 %v129
    %v206 = vpop.f32.mrf.mxu0
    %v207 = vadd.f32 %v59, %v206
    %v208 = vpop.f32.mrf.mxu0
    %209 = vmatprep.mubr.f32.mxu0 0.0
    %210 = vmatmul.mubr.f32.gmra.mxu0 %v132
    %v211 = vpop.f32.mrf.mxu0
    %v212 = vadd.f32 %v59, %v211
    %v213 = vpop.f32.mrf.mxu0
    %214 = vmatprep.mubr.f32.mxu0 0.0
    %215 = vmatmul.mubr.f32.gmra.mxu0 %v135
    %v216 = vpop.f32.mrf.mxu0
    %v217 = vadd.f32 %v59, %v216
    %v218 = vpop.f32.mrf.mxu0
    %219 = vmatprep.mubr.f32.mxu0 0.0
    %220 = vmatmul.mubr.f32.gmra.mxu0 %v138
    %v221 = vpop.f32.mrf.mxu0
    %v222 = vadd.f32 %v59, %v221
    %v223 = vpop.f32.mrf.mxu0
    %224 = vdwg.mxu0
    %v225 = vadd.f32 %v207, %v63
    %v226 = vadd.f32 %v212, %v64
    %vm227 = vcmask 130048
    %v229 = vsel %vm227, %v83, 0
    %v232 = vsel %vm227, %v84, 0
    %234 = vmatprep.subr.mxu0 0.0
    %235 = vmatpush1.msra.mxu0 0.0
    %236 = vmatprep.subr.mxu0 0.0
    %237 = vmatpush1.msra.mxu0 0.0
    %238 = vmatprep.subr.mxu0 0.0
    %239 = vmatpush1.msra.mxu0 0.0
    %240 = vmatprep.subr.mxu0 0.0
    %241 = vmatpush1.msra.mxu0 0.0
    %242 = vmatprep.subr.mxu0 0.0
    %243 = vmatpush1.msra.mxu0 0.0
    %244 = vmatprep.subr.mxu0 0.0
    %245 = vmatpush1.msra.mxu0 0.0
    %246 = vmatprep.subr.mxu0 0.0
    %247 = vmatpush1.msra.mxu0 0.0
    %248 = vmatprep.subr.mxu0 0.0
    %249 = vmatpush1.msra.mxu0 0.0
    %250 = vmatprep.subr.mxu0 0.0
    %251 = vmatpush1.msra.mxu0 0.0
    %252 = vmatprep.subr.mxu0 0.0
    %253 = vmatpush1.msra.mxu0 0.0
    %254 = vmatprep.subr.mxu0 0.0
    %255 = vmatpush1.msra.mxu0 0.0
    %256 = vmatprep.subr.mxu0 0.0
    %257 = vmatpush1.msra.mxu0 0.0
    %258 = vmatprep.subr.mxu0 0.0
    %259 = vmatpush1.msra.mxu0 0.0
    %260 = vmatprep.subr.mxu0 0.0
    %261 = vmatpush1.msra.mxu0 0.0
    %262 = vmatprep.subr.mxu0 0.0
    %263 = vmatpush1.msra.mxu0 %v226
    %264 = vmatprep.subr.mxu0 0.0
    %265 = vmatpush1.msra.mxu0 %v225
    %266 = vmatprep.subr.mxu0 0.0
    %267 = vmatpush2.msra.mxu0 0.0
    %268 = vmatprep.subr.mxu0 0.0
    %269 = vmatpush2.msra.mxu0 0.0
    %270 = vmatprep.subr.mxu0 0.0
    %271 = vmatpush2.msra.mxu0 0.0
    %272 = vmatprep.subr.mxu0 0.0
    %273 = vmatpush2.msra.mxu0 0.0
    %274 = vmatprep.subr.mxu0 0.0
    %275 = vmatpush2.msra.mxu0 0.0
    %276 = vmatprep.subr.mxu0 0.0
    %277 = vmatpush2.msra.mxu0 0.0
    %278 = vmatprep.subr.mxu0 0.0
    %279 = vmatpush2.msra.mxu0 0.0
    %280 = vmatprep.subr.mxu0 0.0
    %281 = vmatpush2.msra.mxu0 0.0
    %282 = vmatprep.subr.mxu0 0.0
    %283 = vmatpush2.msra.mxu0 0.0
    %284 = vmatprep.subr.mxu0 0.0
    %285 = vmatpush2.msra.mxu0 0.0
    %286 = vmatprep.subr.mxu0 0.0
    %287 = vmatpush2.msra.mxu0 0.0
    %288 = vmatprep.subr.mxu0 0.0
    %289 = vmatpush2.msra.mxu0 0.0
    %290 = vmatprep.subr.mxu0 0.0
    %291 = vmatpush2.msra.mxu0 0.0
    %292 = vmatprep.subr.mxu0 0.0
    %293 = vmatpush2.msra.mxu0 0.0
    %294 = vmatprep.subr.mxu0 0.0
    %295 = vmatpush2.msra.mxu0 0.0
    %296 = vmatprep.subr.mxu0 0.0
    %297 = vmatpush2.msra.mxu0 0.0
    %298 = vmatprep.mubr.f32.mxu0 0.0
    %299 = vmatmul.mubr.f32.gmra.mxu0 %v229
    %v300 = vpop.f32.mrf.mxu0
    %v301 = vpop.f32.mrf.mxu0
    %302 = vmatprep.mubr.f32.mxu0 0.0
    %303 = vmatmul.mubr.f32.gmra.mxu0 %v232
    %v304 = vpop.f32.mrf.mxu0
    %v305 = vadd.f32 0.0, %v304
    %v306 = vpop.f32.mrf.mxu0
    %307 = vdwg.mxu0
    %308 = vmatprep.subr.mxu0 0.0
    %309 = vmatpush1.msra.mxu0 0.0
    %310 = vmatprep.subr.mxu0 0.0
    %311 = vmatpush1.msra.mxu0 0.0
    %312 = vmatprep.subr.mxu0 0.0
    %313 = vmatpush1.msra.mxu0 0.0
    %314 = vmatprep.subr.mxu0 0.0
    %315 = vmatpush1.msra.mxu0 0.0
    %316 = vmatprep.subr.mxu0 0.0
    %317 = vmatpush1.msra.mxu0 0.0
    %318 = vmatprep.subr.mxu0 0.0
    %319 = vmatpush1.msra.mxu0 0.0
    %320 = vmatprep.subr.mxu0 0.0
    %321 = vmatpush1.msra.mxu0 0.0
    %322 = vmatprep.subr.mxu0 0.0
    %323 = vmatpush1.msra.mxu0 0.0
    %324 = vmatprep.subr.mxu0 0.0
    %325 = vmatpush1.msra.mxu0 0.0
    %326 = vmatprep.subr.mxu0 0.0
    %327 = vmatpush1.msra.mxu0 0.0
    %328 = vmatprep.subr.mxu0 0.0
    %329 = vmatpush1.msra.mxu0 0.0
    %330 = vmatprep.subr.mxu0 0.0
    %331 = vmatpush1.msra.mxu0 0.0
    %332 = vmatprep.subr.mxu0 0.0
    %333 = vmatpush1.msra.mxu0 0.0
    %334 = vmatprep.subr.mxu0 0.0
    %335 = vmatpush1.msra.mxu0 0.0
    %336 = vmatprep.subr.mxu0 0.0
    %337 = vmatpush1.msra.mxu0 %v68
    %338 = vmatprep.subr.mxu0 0.0
    %339 = vmatpush1.msra.mxu0 %v67
    %340 = vmatprep.subr.mxu0 0.0
    %341 = vmatpush2.msra.mxu0 0.0
    %342 = vmatprep.subr.mxu0 0.0
    %343 = vmatpush2.msra.mxu0 0.0
    %344 = vmatprep.subr.mxu0 0.0
    %345 = vmatpush2.msra.mxu0 0.0
    %346 = vmatprep.subr.mxu0 0.0
    %347 = vmatpush2.msra.mxu0 0.0
    %348 = vmatprep.subr.mxu0 0.0
    %349 = vmatpush2.msra.mxu0 0.0
    %350 = vmatprep.subr.mxu0 0.0
    %351 = vmatpush2.msra.mxu0 0.0
    %352 = vmatprep.subr.mxu0 0.0
    %353 = vmatpush2.msra.mxu0 0.0
    %354 = vmatprep.subr.mxu0 0.0
    %355 = vmatpush2.msra.mxu0 0.0
    %356 = vmatprep.subr.mxu0 0.0
    %357 = vmatpush2.msra.mxu0 0.0
    %358 = vmatprep.subr.mxu0 0.0
    %359 = vmatpush2.msra.mxu0 0.0
    %360 = vmatprep.subr.mxu0 0.0
    %361 = vmatpush2.msra.mxu0 0.0
    %362 = vmatprep.subr.mxu0 0.0
    %363 = vmatpush2.msra.mxu0 0.0
    %364 = vmatprep.subr.mxu0 0.0
    %365 = vmatpush2.msra.mxu0 0.0
    %366 = vmatprep.subr.mxu0 0.0
    %367 = vmatpush2.msra.mxu0 0.0
    %368 = vmatprep.subr.mxu0 0.0
    %369 = vmatpush2.msra.mxu0 0.0
    %370 = vmatprep.subr.mxu0 0.0
    %371 = vmatpush2.msra.mxu0 0.0
    %372 = vmatprep.mubr.f32.mxu0 0.0
    %373 = vmatmul.mubr.f32.gmra.mxu0 %v229
    %v374 = vpop.f32.mrf.mxu0
    %v375 = vadd.f32 0.0, %v374
    %v376 = vpop.f32.mrf.mxu0
    %377 = vmatprep.mubr.f32.mxu0 0.0
    %378 = vmatmul.mubr.f32.gmra.mxu0 %v232
    %v379 = vpop.f32.mrf.mxu0
    %v380 = vadd.f32 0.0, %v379
    %v381 = vpop.f32.mrf.mxu0
    %382 = vdwg.mxu0
    %383 = vmatprep.subr.mxu0 0.0
    %384 = vmatpush1.msra.mxu0 0.0
    %385 = vmatprep.subr.mxu0 0.0
    %386 = vmatpush1.msra.mxu0 0.0
    %387 = vmatprep.subr.mxu0 0.0
    %388 = vmatpush1.msra.mxu0 0.0
    %389 = vmatprep.subr.mxu0 0.0
    %390 = vmatpush1.msra.mxu0 0.0
    %391 = vmatprep.subr.mxu0 0.0
    %392 = vmatpush1.msra.mxu0 0.0
    %393 = vmatprep.subr.mxu0 0.0
    %394 = vmatpush1.msra.mxu0 0.0
    %395 = vmatprep.subr.mxu0 0.0
    %396 = vmatpush1.msra.mxu0 0.0
    %397 = vmatprep.subr.mxu0 0.0
    %398 = vmatpush1.msra.mxu0 0.0
    %399 = vmatprep.subr.mxu0 0.0
    %400 = vmatpush1.msra.mxu0 0.0
    %401 = vmatprep.subr.mxu0 0.0
    %402 = vmatpush1.msra.mxu0 0.0
    %403 = vmatprep.subr.mxu0 0.0
    %404 = vmatpush1.msra.mxu0 0.0
    %405 = vmatprep.subr.mxu0 0.0
    %406 = vmatpush1.msra.mxu0 0.0
    %407 = vmatprep.subr.mxu0 0.0
    %408 = vmatpush1.msra.mxu0 0.0
    %409 = vmatprep.subr.mxu0 0.0
    %410 = vmatpush1.msra.mxu0 0.0
    %411 = vmatprep.subr.mxu0 0.0
    %412 = vmatpush1.msra.mxu0 %v66
    %413 = vmatprep.subr.mxu0 0.0
    %414 = vmatpush1.msra.mxu0 %v65
    %415 = vmatprep.subr.mxu0 0.0
    %416 = vmatpush2.msra.mxu0 0.0
    %417 = vmatprep.subr.mxu0 0.0
    %418 = vmatpush2.msra.mxu0 0.0
    %419 = vmatprep.subr.mxu0 0.0
    %420 = vmatpush2.msra.mxu0 0.0
    %421 = vmatprep.subr.mxu0 0.0
    %422 = vmatpush2.msra.mxu0 0.0
    %423 = vmatprep.subr.mxu0 0.0
    %424 = vmatpush2.msra.mxu0 0.0
    %425 = vmatprep.subr.mxu0 0.0
    %426 = vmatpush2.msra.mxu0 0.0
    %427 = vmatprep.subr.mxu0 0.0
    %428 = vmatpush2.msra.mxu0 0.0
    %429 = vmatprep.subr.mxu0 0.0
    %430 = vmatpush2.msra.mxu0 0.0
    %431 = vmatprep.subr.mxu0 0.0
    %432 = vmatpush2.msra.mxu0 0.0
    %433 = vmatprep.subr.mxu0 0.0
    %434 = vmatpush2.msra.mxu0 0.0
    %435 = vmatprep.subr.mxu0 0.0
    %436 = vmatpush2.msra.mxu0 0.0
    %437 = vmatprep.subr.mxu0 0.0
    %438 = vmatpush2.msra.mxu0 0.0
    %439 = vmatprep.subr.mxu0 0.0
    %440 = vmatpush2.msra.mxu0 0.0
    %441 = vmatprep.subr.mxu0 0.0
    %442 = vmatpush2.msra.mxu0 0.0
    %443 = vmatprep.subr.mxu0 0.0
    %444 = vmatpush2.msra.mxu0 0.0
    %445 = vmatprep.subr.mxu0 0.0
    %446 = vmatpush2.msra.mxu0 0.0
    %447 = vmatprep.mubr.f32.mxu0 0.0
    %448 = vmatmul.mubr.f32.gmra.mxu0 %v229
    %v449 = vpop.f32.mrf.mxu0
    %v450 = vadd.f32 0.0, %v449
    %v451 = vpop.f32.mrf.mxu0
    %452 = vmatprep.mubr.f32.mxu0 0.0
    %453 = vmatmul.mubr.f32.gmra.mxu0 %v232
    %v454 = vpop.f32.mrf.mxu0
    %v455 = vadd.f32 0.0, %v454
    %v456 = vpop.f32.mrf.mxu0
    %457 = vdwg.mxu0
    %v458 = vadd.f32 %v217, %v63
    %v459 = vadd.f32 %v222, %v64
    %v461 = vsel %vm227, %v107, 0
    %v464 = vsel %vm227, %v108, 0
    %466 = vmatprep.subr.mxu0 0.0
    %467 = vmatpush1.msra.mxu0 0.0
    %468 = vmatprep.subr.mxu0 0.0
    %469 = vmatpush1.msra.mxu0 0.0
    %470 = vmatprep.subr.mxu0 0.0
    %471 = vmatpush1.msra.mxu0 0.0
    %472 = vmatprep.subr.mxu0 0.0
    %473 = vmatpush1.msra.mxu0 0.0
    %474 = vmatprep.subr.mxu0 0.0
    %475 = vmatpush1.msra.mxu0 0.0
    %476 = vmatprep.subr.mxu0 0.0
    %477 = vmatpush1.msra.mxu0 0.0
    %478 = vmatprep.subr.mxu0 0.0
    %479 = vmatpush1.msra.mxu0 0.0
    %480 = vmatprep.subr.mxu0 0.0
    %481 = vmatpush1.msra.mxu0 0.0
    %482 = vmatprep.subr.mxu0 0.0
    %483 = vmatpush1.msra.mxu0 0.0
    %484 = vmatprep.subr.mxu0 0.0
    %485 = vmatpush1.msra.mxu0 0.0
    %486 = vmatprep.subr.mxu0 0.0
    %487 = vmatpush1.msra.mxu0 0.0
    %488 = vmatprep.subr.mxu0 0.0
    %489 = vmatpush1.msra.mxu0 0.0
    %490 = vmatprep.subr.mxu0 0.0
    %491 = vmatpush1.msra.mxu0 0.0
    %492 = vmatprep.subr.mxu0 0.0
    %493 = vmatpush1.msra.mxu0 0.0
    %494 = vmatprep.subr.mxu0 0.0
    %495 = vmatpush1.msra.mxu0 %v459
    %496 = vmatprep.subr.mxu0 0.0
    %497 = vmatpush1.msra.mxu0 %v458
    %498 = vmatprep.subr.mxu0 0.0
    %499 = vmatpush2.msra.mxu0 0.0
    %500 = vmatprep.subr.mxu0 0.0
    %501 = vmatpush2.msra.mxu0 0.0
    %502 = vmatprep.subr.mxu0 0.0
    %503 = vmatpush2.msra.mxu0 0.0
    %504 = vmatprep.subr.mxu0 0.0
    %505 = vmatpush2.msra.mxu0 0.0
    %506 = vmatprep.subr.mxu0 0.0
    %507 = vmatpush2.msra.mxu0 0.0
    %508 = vmatprep.subr.mxu0 0.0
    %509 = vmatpush2.msra.mxu0 0.0
    %510 = vmatprep.subr.mxu0 0.0
    %511 = vmatpush2.msra.mxu0 0.0
    %512 = vmatprep.subr.mxu0 0.0
    %513 = vmatpush2.msra.mxu0 0.0
    %514 = vmatprep.subr.mxu0 0.0
    %515 = vmatpush2.msra.mxu0 0.0
    %516 = vmatprep.subr.mxu0 0.0
    %517 = vmatpush2.msra.mxu0 0.0
    %518 = vmatprep.subr.mxu0 0.0
    %519 = vmatpush2.msra.mxu0 0.0
    %520 = vmatprep.subr.mxu0 0.0
    %521 = vmatpush2.msra.mxu0 0.0
    %522 = vmatprep.subr.mxu0 0.0
    %523 = vmatpush2.msra.mxu0 0.0
    %524 = vmatprep.subr.mxu0 0.0
    %525 = vmatpush2.msra.mxu0 0.0
    %526 = vmatprep.subr.mxu0 0.0
    %527 = vmatpush2.msra.mxu0 0.0
    %528 = vmatprep.subr.mxu0 0.0
    %529 = vmatpush2.msra.mxu0 0.0
    %530 = vmatprep.mubr.f32.mxu0 0.0
    %531 = vmatmul.mubr.f32.gmra.mxu0 %v461
    %v532 = vpop.f32.mrf.mxu0
    %v533 = vpop.f32.mrf.mxu0
    %534 = vmatprep.mubr.f32.mxu0 0.0
    %535 = vmatmul.mubr.f32.gmra.mxu0 %v464
    %v536 = vpop.f32.mrf.mxu0
    %v537 = vadd.f32 0.0, %v536
    %v538 = vpop.f32.mrf.mxu0
    %539 = vdwg.mxu0
    %540 = vmatprep.subr.mxu0 0.0
    %541 = vmatpush1.msra.mxu0 0.0
    %542 = vmatprep.subr.mxu0 0.0
    %543 = vmatpush1.msra.mxu0 0.0
    %544 = vmatprep.subr.mxu0 0.0
    %545 = vmatpush1.msra.mxu0 0.0
    %546 = vmatprep.subr.mxu0 0.0
    %547 = vmatpush1.msra.mxu0 0.0
    %548 = vmatprep.subr.mxu0 0.0
    %549 = vmatpush1.msra.mxu0 0.0
    %550 = vmatprep.subr.mxu0 0.0
    %551 = vmatpush1.msra.mxu0 0.0
    %552 = vmatprep.subr.mxu0 0.0
    %553 = vmatpush1.msra.mxu0 0.0
    %554 = vmatprep.subr.mxu0 0.0
    %555 = vmatpush1.msra.mxu0 0.0
    %556 = vmatprep.subr.mxu0 0.0
    %557 = vmatpush1.msra.mxu0 0.0
    %558 = vmatprep.subr.mxu0 0.0
    %559 = vmatpush1.msra.mxu0 0.0
    %560 = vmatprep.subr.mxu0 0.0
    %561 = vmatpush1.msra.mxu0 0.0
    %562 = vmatprep.subr.mxu0 0.0
    %563 = vmatpush1.msra.mxu0 0.0
    %564 = vmatprep.subr.mxu0 0.0
    %565 = vmatpush1.msra.mxu0 0.0
    %566 = vmatprep.subr.mxu0 0.0
    %567 = vmatpush1.msra.mxu0 0.0
    %568 = vmatprep.subr.mxu0 0.0
    %569 = vmatpush1.msra.mxu0 %v70
    %570 = vmatprep.subr.mxu0 0.0
    %571 = vmatpush1.msra.mxu0 %v69
    %572 = vmatprep.subr.mxu0 0.0
    %573 = vmatpush2.msra.mxu0 0.0
    %574 = vmatprep.subr.mxu0 0.0
    %575 = vmatpush2.msra.mxu0 0.0
    %576 = vmatprep.subr.mxu0 0.0
    %577 = vmatpush2.msra.mxu0 0.0
    %578 = vmatprep.subr.mxu0 0.0
    %579 = vmatpush2.msra.mxu0 0.0
    %580 = vmatprep.subr.mxu0 0.0
    %581 = vmatpush2.msra.mxu0 0.0
    %582 = vmatprep.subr.mxu0 0.0
    %583 = vmatpush2.msra.mxu0 0.0
    %584 = vmatprep.subr.mxu0 0.0
    %585 = vmatpush2.msra.mxu0 0.0
    %586 = vmatprep.subr.mxu0 0.0
    %587 = vmatpush2.msra.mxu0 0.0
    %588 = vmatprep.subr.mxu0 0.0
    %589 = vmatpush2.msra.mxu0 0.0
    %590 = vmatprep.subr.mxu0 0.0
    %591 = vmatpush2.msra.mxu0 0.0
    %592 = vmatprep.subr.mxu0 0.0
    %593 = vmatpush2.msra.mxu0 0.0
    %594 = vmatprep.subr.mxu0 0.0
    %595 = vmatpush2.msra.mxu0 0.0
    %596 = vmatprep.subr.mxu0 0.0
    %597 = vmatpush2.msra.mxu0 0.0
    %598 = vmatprep.subr.mxu0 0.0
    %599 = vmatpush2.msra.mxu0 0.0
    %600 = vmatprep.subr.mxu0 0.0
    %601 = vmatpush2.msra.mxu0 0.0
    %602 = vmatprep.subr.mxu0 0.0
    %603 = vmatpush2.msra.mxu0 0.0
    %604 = vmatprep.mubr.f32.mxu0 0.0
    %605 = vmatmul.mubr.f32.gmra.mxu0 %v461
    %v606 = vpop.f32.mrf.mxu0
    %v607 = vadd.f32 0.0, %v606
    %v608 = vpop.f32.mrf.mxu0
    %609 = vmatprep.mubr.f32.mxu0 0.0
    %610 = vmatmul.mubr.f32.gmra.mxu0 %v464
    %v611 = vpop.f32.mrf.mxu0
    %v612 = vadd.f32 0.0, %v611
    %v613 = vpop.f32.mrf.mxu0
    %614 = vdwg.mxu0
    %615 = vmatprep.subr.mxu0 0.0
    %616 = vmatpush1.msra.mxu0 0.0
    %617 = vmatprep.subr.mxu0 0.0
    %618 = vmatpush1.msra.mxu0 0.0
    %619 = vmatprep.subr.mxu0 0.0
    %620 = vmatpush1.msra.mxu0 0.0
    %621 = vmatprep.subr.mxu0 0.0
    %622 = vmatpush1.msra.mxu0 0.0
    %623 = vmatprep.subr.mxu0 0.0
    %624 = vmatpush1.msra.mxu0 0.0
    %625 = vmatprep.subr.mxu0 0.0
    %626 = vmatpush1.msra.mxu0 0.0
    %627 = vmatprep.subr.mxu0 0.0
    %628 = vmatpush1.msra.mxu0 0.0
    %629 = vmatprep.subr.mxu0 0.0
    %630 = vmatpush1.msra.mxu0 0.0
    %631 = vmatprep.subr.mxu0 0.0
    %632 = vmatpush1.msra.mxu0 0.0
    %633 = vmatprep.subr.mxu0 0.0
    %634 = vmatpush1.msra.mxu0 0.0
    %635 = vmatprep.subr.mxu0 0.0
    %636 = vmatpush1.msra.mxu0 0.0
    %637 = vmatprep.subr.mxu0 0.0
    %638 = vmatpush1.msra.mxu0 0.0
    %639 = vmatprep.subr.mxu0 0.0
    %640 = vmatpush1.msra.mxu0 0.0
    %641 = vmatprep.subr.mxu0 0.0
    %642 = vmatpush1.msra.mxu0 0.0
    %643 = vmatprep.subr.mxu0 0.0
    %644 = vmatpush1.msra.mxu0 %v66
    %645 = vmatprep.subr.mxu0 0.0
    %646 = vmatpush1.msra.mxu0 %v65
    %647 = vmatprep.subr.mxu0 0.0
    %648 = vmatpush2.msra.mxu0 0.0
    %649 = vmatprep.subr.mxu0 0.0
    %650 = vmatpush2.msra.mxu0 0.0
    %651 = vmatprep.subr.mxu0 0.0
    %652 = vmatpush2.msra.mxu0 0.0
    %653 = vmatprep.subr.mxu0 0.0
    %654 = vmatpush2.msra.mxu0 0.0
    %655 = vmatprep.subr.mxu0 0.0
    %656 = vmatpush2.msra.mxu0 0.0
    %657 = vmatprep.subr.mxu0 0.0
    %658 = vmatpush2.msra.mxu0 0.0
    %659 = vmatprep.subr.mxu0 0.0
    %660 = vmatpush2.msra.mxu0 0.0
    %661 = vmatprep.subr.mxu0 0.0
    %662 = vmatpush2.msra.mxu0 0.0
    %663 = vmatprep.subr.mxu0 0.0
    %664 = vmatpush2.msra.mxu0 0.0
    %665 = vmatprep.subr.mxu0 0.0
    %666 = vmatpush2.msra.mxu0 0.0
    %667 = vmatprep.subr.mxu0 0.0
    %668 = vmatpush2.msra.mxu0 0.0
    %669 = vmatprep.subr.mxu0 0.0
    %670 = vmatpush2.msra.mxu0 0.0
    %671 = vmatprep.subr.mxu0 0.0
    %672 = vmatpush2.msra.mxu0 0.0
    %673 = vmatprep.subr.mxu0 0.0
    %674 = vmatpush2.msra.mxu0 0.0
    %675 = vmatprep.subr.mxu0 0.0
    %676 = vmatpush2.msra.mxu0 0.0
    %677 = vmatprep.subr.mxu0 0.0
    %678 = vmatpush2.msra.mxu0 0.0
    %679 = vmatprep.mubr.f32.mxu0 0.0
    %680 = vmatmul.mubr.f32.gmra.mxu0 %v461
    %v681 = vpop.f32.mrf.mxu0
    %v682 = vadd.f32 0.0, %v681
    %v683 = vpop.f32.mrf.mxu0
    %684 = vmatprep.mubr.f32.mxu0 0.0
    %685 = vmatmul.mubr.f32.gmra.mxu0 %v464
    %v686 = vpop.f32.mrf.mxu0
    %v687 = vadd.f32 0.0, %v686
    %v688 = vpop.f32.mrf.mxu0
    %689 = vdwg.mxu0
    %v691 = vrot.slane %v305, 4
    %vm693 = vcmask 1043456
    %v694 = vsel %vm693, %v691, %v537
    %v695 = vld [vmem:[%s16 + $0x4] ss:$0 sm:$0xff]
    %v696 = vld [vmem:[%s16 + $0x5] ss:$0 sm:$0xff]
    %v697 = vld [vmem:[%s16 + $0x6] ss:$0 sm:$0xff]
    %v698 = vld [vmem:[%s16 + $0x7] ss:$0 sm:$0xff]
    %v699 = vld [vmem:[%s16 + $0x10] ss:$0 sm:$0xff]
    %v700 = vld [vmem:[%s16 + $0x11] ss:$0 sm:$0xff]
    %v701 = vld [vmem:[%s16 + $0x12] ss:$0 sm:$0xff]
    %v702 = vld [vmem:[%s8] sm:$0xff]
    %v703 = vld [vmem:[%s8 + $0x8] sm:$0xff]
    %v704 = vld [vmem:[%s8 + $0x10] sm:$0xff]
    %v705 = vld [vmem:[%s8 + $0x18] sm:$0xff]
    %v706 = vld [vmem:[%s9] sm:$0xff]
    %v707 = vld [vmem:[%s9 + $0x8] sm:$0xff]
    %v708 = vld [vmem:[%s9 + $0x10] sm:$0xff]
    %v709 = vld [vmem:[%s9 + $0x18] sm:$0xff]
    %v710 = vld [vmem:[%s10] sm:$0xff]
    %v711 = vld [vmem:[%s10 + $0x8] sm:$0xff]
    %v712 = vld [vmem:[%s10 + $0x10] sm:$0xff]
    %v713 = vld [vmem:[%s10 + $0x18] sm:$0xff]
    %v714 = vld [vmem:[%s11] sm:$0xff]
    %v715 = vld [vmem:[%s11 + $0x8] sm:$0xff]
    %v716 = vld [vmem:[%s11 + $0x10] sm:$0xff]
    %v717 = vld [vmem:[%s11 + $0x18] sm:$0xff]
    %v718 = vld [vmem:[%s11 + $0x20] sm:$0xff]
    %v719 = vld [vmem:[%s11 + $0x28] sm:$0xff]
    %v720 = vld [vmem:[%s11 + $0x30] sm:$0xff]
    %v721 = vld [vmem:[%s11 + $0x38] sm:$0xff]
    %vm722 = vcmask 261120
    %v723 = vsel %vm722, %v694, 0.0
    %724 = vadd.xlane.f32.xlu0 %v723
    %v725 = vpop.xlane.xlu0 %724
    %v726 = vrcp.pop 32.0
    %v727 = vmul.f32 %v725, %v726
    %v728 = vsub.f32 %v694, %v727
    %v729 = vmul.f32 %v728, %v728
    %v730 = vsel %vm722, %v729, 0.0
    %731 = vadd.xlane.f32.xlu0 %v730
    %v732 = vpop.xlane.xlu0 %731
    %v733 = vmul.f32 %v732, %v726
    %v734 = vadd.f32 %v733, 1e-05
    %v735 = vrsqrt.pop %v734
    %v736 = vmul.f32 %v728, %v735
    %v737 = vmul.f32 %v736, %v695
    %v738 = vadd.f32 %v737, %v696
    %v740 = vsel %vm722, %v738, 0
    %742 = vmatprep.subr.mxu0 0.0
    %743 = vmatpush1.msra.mxu0 0.0
    %744 = vmatprep.subr.mxu0 0.0
    %745 = vmatpush1.msra.mxu0 0.0
    %746 = vmatprep.subr.mxu0 0.0
    %747 = vmatpush1.msra.mxu0 0.0
    %748 = vmatprep.subr.mxu0 0.0
    %749 = vmatpush1.msra.mxu0 0.0
    %750 = vmatprep.subr.mxu0 0.0
    %751 = vmatpush1.msra.mxu0 0.0
    %752 = vmatprep.subr.mxu0 0.0
    %753 = vmatpush1.msra.mxu0 0.0
    %754 = vmatprep.subr.mxu0 0.0
    %755 = vmatpush1.msra.mxu0 0.0
    %756 = vmatprep.subr.mxu0 0.0
    %757 = vmatpush1.msra.mxu0 0.0
    %758 = vmatprep.subr.mxu0 0.0
    %759 = vmatpush1.msra.mxu0 0.0
    %760 = vmatprep.subr.mxu0 0.0
    %761 = vmatpush1.msra.mxu0 0.0
    %762 = vmatprep.subr.mxu0 0.0
    %763 = vmatpush1.msra.mxu0 0.0
    %764 = vmatprep.subr.mxu0 0.0
    %765 = vmatpush1.msra.mxu0 0.0
    %766 = vmatprep.subr.mxu0 0.0
    %767 = vmatpush1.msra.mxu0 %v705
    %768 = vmatprep.subr.mxu0 0.0
    %769 = vmatpush1.msra.mxu0 %v704
    %770 = vmatprep.subr.mxu0 0.0
    %771 = vmatpush1.msra.mxu0 %v703
    %772 = vmatprep.subr.mxu0 0.0
    %773 = vmatpush1.msra.mxu0 %v702
    %774 = vmatprep.subr.mxu0 0.0
    %775 = vmatpush2.msra.mxu0 0.0
    %776 = vmatprep.subr.mxu0 0.0
    %777 = vmatpush2.msra.mxu0 0.0
    %778 = vmatprep.subr.mxu0 0.0
    %779 = vmatpush2.msra.mxu0 0.0
    %780 = vmatprep.subr.mxu0 0.0
    %781 = vmatpush2.msra.mxu0 0.0
    %782 = vmatprep.subr.mxu0 0.0
    %783 = vmatpush2.msra.mxu0 0.0
    %784 = vmatprep.subr.mxu0 0.0
    %785 = vmatpush2.msra.mxu0 0.0
    %786 = vmatprep.subr.mxu0 0.0
    %787 = vmatpush2.msra.mxu0 0.0
    %788 = vmatprep.subr.mxu0 0.0
    %789 = vmatpush2.msra.mxu0 0.0
    %790 = vmatprep.subr.mxu0 0.0
    %791 = vmatpush2.msra.mxu0 0.0
    %792 = vmatprep.subr.mxu0 0.0
    %793 = vmatpush2.msra.mxu0 0.0
    %794 = vmatprep.subr.mxu0 0.0
    %795 = vmatpush2.msra.mxu0 0.0
    %796 = vmatprep.subr.mxu0 0.0
    %797 = vmatpush2.msra.mxu0 0.0
    %798 = vmatprep.subr.mxu0 0.0
    %799 = vmatpush2.msra.mxu0 0.0
    %800 = vmatprep.subr.mxu0 0.0
    %801 = vmatpush2.msra.mxu0 0.0
    %802 = vmatprep.subr.mxu0 0.0
    %803 = vmatpush2.msra.mxu0 0.0
    %804 = vmatprep.subr.mxu0 0.0
    %805 = vmatpush2.msra.mxu0 0.0
    %806 = vmatprep.mubr.f32.mxu0 0.0
    %807 = vmatmul.mubr.f32.gmra.mxu0 %v740
    %v808 = vpop.f32.mrf.mxu0
    %v809 = vadd.f32 0.0, %v808
    %v810 = vpop.f32.mrf.mxu0
    %811 = vdwg.mxu0
    %813 = vrot.lane.b32.xlu0 %v809, 96
    %v814 = vpop.permute.xlu0 %813
    %vm815 = vcmask 64512
    %v816 = vsel %vm815, %v809, 0
    %v818 = vsel %vm815, %v814, 0
    %820 = vmatprep.subr.mxu0 0.0
    %821 = vmatpush1.xpose.msra.mxu0 0.0
    %822 = vmatprep.subr.mxu0 0.0
    %823 = vmatpush1.xpose.msra.mxu0 0.0
    %824 = vmatprep.subr.mxu0 0.0
    %825 = vmatpush1.xpose.msra.mxu0 0.0
    %826 = vmatprep.subr.mxu0 0.0
    %827 = vmatpush1.xpose.msra.mxu0 0.0
    %828 = vmatprep.subr.mxu0 0.0
    %829 = vmatpush1.xpose.msra.mxu0 0.0
    %830 = vmatprep.subr.mxu0 0.0
    %831 = vmatpush1.xpose.msra.mxu0 0.0
    %832 = vmatprep.subr.mxu0 0.0
    %833 = vmatpush1.xpose.msra.mxu0 0.0
    %834 = vmatprep.subr.mxu0 0.0
    %835 = vmatpush1.xpose.msra.mxu0 0.0
    %836 = vmatprep.subr.mxu0 0.0
    %837 = vmatpush1.xpose.msra.mxu0 0.0
    %838 = vmatprep.subr.mxu0 0.0
    %839 = vmatpush1.xpose.msra.mxu0 0.0
    %840 = vmatprep.subr.mxu0 0.0
    %841 = vmatpush1.xpose.msra.mxu0 0.0
    %842 = vmatprep.subr.mxu0 0.0
    %843 = vmatpush1.xpose.msra.mxu0 0.0
    %844 = vmatprep.subr.mxu0 0.0
    %845 = vmatpush1.xpose.msra.mxu0 0.0
    %846 = vmatprep.subr.mxu0 0.0
    %847 = vmatpush1.xpose.msra.mxu0 0.0
    %848 = vmatprep.subr.mxu0 0.0
    %849 = vmatpush1.xpose.msra.mxu0 0.0
    %850 = vmatprep.subr.mxu0 0.0
    %851 = vmatpush1.xpose.msra.mxu0 %v818
    %852 = vmatprep.subr.mxu0 0.0
    %853 = vmatpush2.xpose.msra.mxu0 0.0
    %854 = vmatprep.subr.mxu0 0.0
    %855 = vmatpush2.xpose.msra.mxu0 0.0
    %856 = vmatprep.subr.mxu0 0.0
    %857 = vmatpush2.xpose.msra.mxu0 0.0
    %858 = vmatprep.subr.mxu0 0.0
    %859 = vmatpush2.xpose.msra.mxu0 0.0
    %860 = vmatprep.subr.mxu0 0.0
    %861 = vmatpush2.xpose.msra.mxu0 0.0
    %862 = vmatprep.subr.mxu0 0.0
    %863 = vmatpush2.xpose.msra.mxu0 0.0
    %864 = vmatprep.subr.mxu0 0.0
    %865 = vmatpush2.xpose.msra.mxu0 0.0
    %866 = vmatprep.subr.mxu0 0.0
    %867 = vmatpush2.xpose.msra.mxu0 0.0
    %868 = vmatprep.subr.mxu0 0.0
    %869 = vmatpush2.xpose.msra.mxu0 0.0
    %870 = vmatprep.subr.mxu0 0.0
    %871 = vmatpush2.xpose.msra.mxu0 0.0
    %872 = vmatprep.subr.mxu0 0.0
    %873 = vmatpush2.xpose.msra.mxu0 0.0
    %874 = vmatprep.subr.mxu0 0.0
    %875 = vmatpush2.xpose.msra.mxu0 0.0
    %876 = vmatprep.subr.mxu0 0.0
    %877 = vmatpush2.xpose.msra.mxu0 0.0
    %878 = vmatprep.subr.mxu0 0.0
    %879 = vmatpush2.xpose.msra.mxu0 0.0
    %880 = vmatprep.subr.mxu0 0.0
    %881 = vmatpush2.xpose.msra.mxu0 0.0
    %882 = vmatprep.subr.mxu0 0.0
    %883 = vmatpush2.xpose.msra.mxu0 0.0
    %884 = vmatprep.mubr.f32.mxu0 0.0
    %885 = vmatmul.mubr.f32.gmra.mxu0 %v816
    %v886 = vpop.f32.mrf.mxu0
    %v887 = vadd.f32 0.0, %v886
    %v888 = vpop.f32.mrf.mxu0
    %889 = vdwg.mxu0
    %v890 = vmul.f32 %v887, 0.35355338
    %vm891 = vcmask 27648
    %v892 = vsel %vm891, %v890, -inf
    %893 = vmax.xlane.f32.xlu0 %v892
    %v894 = vpop.xlane.xlu0 %893
    %v895 = vsub.f32 %v890, %v894
    %v896 = vmul.f32 %v895, 1.442695
    %v897 = vpow.pop %v896
    %v898 = vsel %vm891, %v897, 0.0
    %899 = vadd.xlane.f32.xlu0 %v898
    %v900 = vpop.xlane.xlu0 %899
    %v901 = vrcp.pop %v900
    %v902 = vmul.f32 %v897, %v901
    %903 = vrot.lane.b32.xlu0 %v809, 64
    %v904 = vpop.permute.xlu0 %903
    %vm905 = vcmask 31744
    %v907 = vsel %vm905, %v902, 0
    %v909 = vsel %vm693, %v904, 0
    %911 = vmatprep.subr.mxu0 0.0
    %912 = vmatpush1.msra.mxu0 0.0
    %913 = vmatprep.subr.mxu0 0.0
    %914 = vmatpush1.msra.mxu0 0.0
    %915 = vmatprep.subr.mxu0 0.0
    %916 = vmatpush1.msra.mxu0 0.0
    %917 = vmatprep.subr.mxu0 0.0
    %918 = vmatpush1.msra.mxu0 0.0
    %919 = vmatprep.subr.mxu0 0.0
    %920 = vmatpush1.msra.mxu0 0.0
    %921 = vmatprep.subr.mxu0 0.0
    %922 = vmatpush1.msra.mxu0 0.0
    %923 = vmatprep.subr.mxu0 0.0
    %924 = vmatpush1.msra.mxu0 0.0
    %925 = vmatprep.subr.mxu0 0.0
    %926 = vmatpush1.msra.mxu0 0.0
    %927 = vmatprep.subr.mxu0 0.0
    %928 = vmatpush1.msra.mxu0 0.0
    %929 = vmatprep.subr.mxu0 0.0
    %930 = vmatpush1.msra.mxu0 0.0
    %931 = vmatprep.subr.mxu0 0.0
    %932 = vmatpush1.msra.mxu0 0.0
    %933 = vmatprep.subr.mxu0 0.0
    %934 = vmatpush1.msra.mxu0 0.0
    %935 = vmatprep.subr.mxu0 0.0
    %936 = vmatpush1.msra.mxu0 0.0
    %937 = vmatprep.subr.mxu0 0.0
    %938 = vmatpush1.msra.mxu0 0.0
    %939 = vmatprep.subr.mxu0 0.0
    %940 = vmatpush1.msra.mxu0 0.0
    %941 = vmatprep.subr.mxu0 0.0
    %942 = vmatpush1.msra.mxu0 %v909
    %943 = vmatprep.subr.mxu0 0.0
    %944 = vmatpush2.msra.mxu0 0.0
    %945 = vmatprep.subr.mxu0 0.0
    %946 = vmatpush2.msra.mxu0 0.0
    %947 = vmatprep.subr.mxu0 0.0
    %948 = vmatpush2.msra.mxu0 0.0
    %949 = vmatprep.subr.mxu0 0.0
    %950 = vmatpush2.msra.mxu0 0.0
    %951 = vmatprep.subr.mxu0 0.0
    %952 = vmatpush2.msra.mxu0 0.0
    %953 = vmatprep.subr.mxu0 0.0
    %954 = vmatpush2.msra.mxu0 0.0
    %955 = vmatprep.subr.mxu0 0.0
    %956 = vmatpush2.msra.mxu0 0.0
    %957 = vmatprep.subr.mxu0 0.0
    %958 = vmatpush2.msra.mxu0 0.0
    %959 = vmatprep.subr.mxu0 0.0
    %960 = vmatpush2.msra.mxu0 0.0
    %961 = vmatprep.subr.mxu0 0.0
    %962 = vmatpush2.msra.mxu0 0.0
    %963 = vmatprep.subr.mxu0 0.0
    %964 = vmatpush2.msra.mxu0 0.0
    %965 = vmatprep.subr.mxu0 0.0
    %966 = vmatpush2.msra.mxu0 0.0
    %967 = vmatprep.subr.mxu0 0.0
    %968 = vmatpush2.msra.mxu0 0.0
    %969 = vmatprep.subr.mxu0 0.0
    %970 = vmatpush2.msra.mxu0 0.0
    %971 = vmatprep.subr.mxu0 0.0
    %972 = vmatpush2.msra.mxu0 0.0
    %973 = vmatprep.subr.mxu0 0.0
    %974 = vmatpush2.msra.mxu0 0.0
    %975 = vmatprep.mubr.f32.mxu0 0.0
    %976 = vmatmul.mubr.f32.gmra.mxu0 %v907
    %v977 = vpop.f32.mrf.mxu0
    %v978 = vadd.f32 0.0, %v977
    %v979 = vpop.f32.mrf.mxu0
    %980 = vdwg.mxu0
    %981 = vrot.lane.b32.xlu0 %v809, 120
    %v982 = vpop.permute.xlu0 %981
    %983 = vrot.lane.b32.xlu0 %v809, 88
    %v984 = vpop.permute.xlu0 %983
    %v985 = vsel %vm815, %v982, 0
    %v987 = vsel %vm815, %v984, 0
    %989 = vmatprep.subr.mxu0 0.0
    %990 = vmatpush1.xpose.msra.mxu0 0.0
    %991 = vmatprep.subr.mxu0 0.0
    %992 = vmatpush1.xpose.msra.mxu0 0.0
    %993 = vmatprep.subr.mxu0 0.0
    %994 = vmatpush1.xpose.msra.mxu0 0.0
    %995 = vmatprep.subr.mxu0 0.0
    %996 = vmatpush1.xpose.msra.mxu0 0.0
    %997 = vmatprep.subr.mxu0 0.0
    %998 = vmatpush1.xpose.msra.mxu0 0.0
    %999 = vmatprep.subr.mxu0 0.0
    %1000 = vmatpush1.xpose.msra.mxu0 0.0
    %1001 = vmatprep.subr.mxu0 0.0
    %1002 = vmatpush1.xpose.msra.mxu0 0.0
    %1003 = vmatprep.subr.mxu0 0.0
    %1004 = vmatpush1.xpose.msra.mxu0 0.0
    %1005 = vmatprep.subr.mxu0 0.0
    %1006 = vmatpush1.xpose.msra.mxu0 0.0
    %1007 = vmatprep.subr.mxu0 0.0
    %1008 = vmatpush1.xpose.msra.mxu0 0.0
    %1009 = vmatprep.subr.mxu0 0.0
    %1010 = vmatpush1.xpose.msra.mxu0 0.0
    %1011 = vmatprep.subr.mxu0 0.0
    %1012 = vmatpush1.xpose.msra.mxu0 0.0
    %1013 = vmatprep.subr.mxu0 0.0
    %1014 = vmatpush1.xpose.msra.mxu0 0.0
    %1015 = vmatprep.subr.mxu0 0.0
    %1016 = vmatpush1.xpose.msra.mxu0 0.0
    %1017 = vmatprep.subr.mxu0 0.0
    %1018 = vmatpush1.xpose.msra.mxu0 0.0
    %1019 = vmatprep.subr.mxu0 0.0
    %1020 = vmatpush1.xpose.msra.mxu0 %v987
    %1021 = vmatprep.subr.mxu0 0.0
    %1022 = vmatpush2.xpose.msra.mxu0 0.0
    %1023 = vmatprep.subr.mxu0 0.0
    %1024 = vmatpush2.xpose.msra.mxu0 0.0
    %1025 = vmatprep.subr.mxu0 0.0
    %1026 = vmatpush2.xpose.msra.mxu0 0.0
    %1027 = vmatprep.subr.mxu0 0.0
    %1028 = vmatpush2.xpose.msra.mxu0 0.0
    %1029 = vmatprep.subr.mxu0 0.0
    %1030 = vmatpush2.xpose.msra.mxu0 0.0
    %1031 = vmatprep.subr.mxu0 0.0
    %1032 = vmatpush2.xpose.msra.mxu0 0.0
    %1033 = vmatprep.subr.mxu0 0.0
    %1034 = vmatpush2.xpose.msra.mxu0 0.0
    %1035 = vmatprep.subr.mxu0 0.0
    %1036 = vmatpush2.xpose.msra.mxu0 0.0
    %1037 = vmatprep.subr.mxu0 0.0
    %1038 = vmatpush2.xpose.msra.mxu0 0.0
    %1039 = vmatprep.subr.mxu0 0.0
    %1040 = vmatpush2.xpose.msra.mxu0 0.0
    %1041 = vmatprep.subr.mxu0 0.0
    %1042 = vmatpush2.xpose.msra.mxu0 0.0
    %1043 = vmatprep.subr.mxu0 0.0
    %1044 = vmatpush2.xpose.msra.mxu0 0.0
    %1045 = vmatprep.subr.mxu0 0.0
    %1046 = vmatpush2.xpose.msra.mxu0 0.0
    %1047 = vmatprep.subr.mxu0 0.0
    %1048 = vmatpush2.xpose.msra.mxu0 0.0
    %1049 = vmatprep.subr.mxu0 0.0
    %1050 = vmatpush2.xpose.msra.mxu0 0.0
    %1051 = vmatprep.subr.mxu0 0.0
    %1052 = vmatpush2.xpose.msra.mxu0 0.0
    %1053 = vmatprep.mubr.f32.mxu0 0.0
    %1054 = vmatmul.mubr.f32.gmra.mxu0 %v985
    %v1055 = vpop.f32.mrf.mxu0
    %v1056 = vadd.f32 0.0, %v1055
    %v1057 = vpop.f32.mrf.mxu0
    %1058 = vdwg.mxu0
    %v1059 = vmul.f32 %v1056, 0.35355338
    %v1060 = vsel %vm891, %v1059, -inf
    %1061 = vmax.xlane.f32.xlu0 %v1060
    %v1062 = vpop.xlane.xlu0 %1061
    %v1063 = vsub.f32 %v1059, %v1062
    %v1064 = vmul.f32 %v1063, 1.442695
    %v1065 = vpow.pop %v1064
    %v1066 = vsel %vm891, %v1065, 0.0
    %1067 = vadd.xlane.f32.xlu0 %v1066
    %v1068 = vpop.xlane.xlu0 %1067
    %v1069 = vrcp.pop %v1068
    %v1070 = vmul.f32 %v1065, %v1069
    %1071 = vrot.lane.b32.xlu0 %v809, 56
    %v1072 = vpop.permute.xlu0 %1071
    %v1074 = vsel %vm905, %v1070, 0
    %v1076 = vsel %vm693, %v1072, 0
    %1078 = vmatprep.subr.mxu0 0.0
    %1079 = vmatpush1.msra.mxu0 0.0
    %1080 = vmatprep.subr.mxu0 0.0
    %1081 = vmatpush1.msra.mxu0 0.0
    %1082 = vmatprep.subr.mxu0 0.0
    %1083 = vmatpush1.msra.mxu0 0.0
    %1084 = vmatprep.subr.mxu0 0.0
    %1085 = vmatpush1.msra.mxu0 0.0
    %1086 = vmatprep.subr.mxu0 0.0
    %1087 = vmatpush1.msra.mxu0 0.0
    %1088 = vmatprep.subr.mxu0 0.0
    %1089 = vmatpush1.msra.mxu0 0.0
    %1090 = vmatprep.subr.mxu0 0.0
    %1091 = vmatpush1.msra.mxu0 0.0
    %1092 = vmatprep.subr.mxu0 0.0
    %1093 = vmatpush1.msra.mxu0 0.0
    %1094 = vmatprep.subr.mxu0 0.0
    %1095 = vmatpush1.msra.mxu0 0.0
    %1096 = vmatprep.subr.mxu0 0.0
    %1097 = vmatpush1.msra.mxu0 0.0
    %1098 = vmatprep.subr.mxu0 0.0
    %1099 = vmatpush1.msra.mxu0 0.0
    %1100 = vmatprep.subr.mxu0 0.0
    %1101 = vmatpush1.msra.mxu0 0.0
    %1102 = vmatprep.subr.mxu0 0.0
    %1103 = vmatpush1.msra.mxu0 0.0
    %1104 = vmatprep.subr.mxu0 0.0
    %1105 = vmatpush1.msra.mxu0 0.0
    %1106 = vmatprep.subr.mxu0 0.0
    %1107 = vmatpush1.msra.mxu0 0.0
    %1108 = vmatprep.subr.mxu0 0.0
    %1109 = vmatpush1.msra.mxu0 %v1076
    %1110 = vmatprep.subr.mxu0 0.0
    %1111 = vmatpush2.msra.mxu0 0.0
    %1112 = vmatprep.subr.mxu0 0.0
    %1113 = vmatpush2.msra.mxu0 0.0
    %1114 = vmatprep.subr.mxu0 0.0
    %1115 = vmatpush2.msra.mxu0 0.0
    %1116 = vmatprep.subr.mxu0 0.0
    %1117 = vmatpush2.msra.mxu0 0.0
    %1118 = vmatprep.subr.mxu0 0.0
    %1119 = vmatpush2.msra.mxu0 0.0
    %1120 = vmatprep.subr.mxu0 0.0
    %1121 = vmatpush2.msra.mxu0 0.0
    %1122 = vmatprep.subr.mxu0 0.0
    %1123 = vmatpush2.msra.mxu0 0.0
    %1124 = vmatprep.subr.mxu0 0.0
    %1125 = vmatpush2.msra.mxu0 0.0
    %1126 = vmatprep.subr.mxu0 0.0
    %1127 = vmatpush2.msra.mxu0 0.0
    %1128 = vmatprep.subr.mxu0 0.0
    %1129 = vmatpush2.msra.mxu0 0.0
    %1130 = vmatprep.subr.mxu0 0.0
    %1131 = vmatpush2.msra.mxu0 0.0
    %1132 = vmatprep.subr.mxu0 0.0
    %1133 = vmatpush2.msra.mxu0 0.0
    %1134 = vmatprep.subr.mxu0 0.0
    %1135 = vmatpush2.msra.mxu0 0.0
    %1136 = vmatprep.subr.mxu0 0.0
    %1137 = vmatpush2.msra.mxu0 0.0
    %1138 = vmatprep.subr.mxu0 0.0
    %1139 = vmatpush2.msra.mxu0 0.0
    %1140 = vmatprep.subr.mxu0 0.0
    %1141 = vmatpush2.msra.mxu0 0.0
    %1142 = vmatprep.mubr.f32.mxu0 0.0
    %1143 = vmatmul.mubr.f32.gmra.mxu0 %v1074
    %v1144 = vpop.f32.mrf.mxu0
    %v1145 = vadd.f32 0.0, %v1144
    %v1146 = vpop.f32.mrf.mxu0
    %1147 = vdwg.mxu0
    %1148 = vrot.lane.b32.xlu0 %v809, 112
    %v1149 = vpop.permute.xlu0 %1148
    %1150 = vrot.lane.b32.xlu0 %v809, 80
    %v1151 = vpop.permute.xlu0 %1150
    %v1152 = vsel %vm815, %v1149, 0
    %v1154 = vsel %vm815, %v1151, 0
    %1156 = vmatprep.subr.mxu0 0.0
    %1157 = vmatpush1.xpose.msra.mxu0 0.0
    %1158 = vmatprep.subr.mxu0 0.0
    %1159 = vmatpush1.xpose.msra.mxu0 0.0
    %1160 = vmatprep.subr.mxu0 0.0
    %1161 = vmatpush1.xpose.msra.mxu0 0.0
    %1162 = vmatprep.subr.mxu0 0.0
    %1163 = vmatpush1.xpose.msra.mxu0 0.0
    %1164 = vmatprep.subr.mxu0 0.0
    %1165 = vmatpush1.xpose.msra.mxu0 0.0
    %1166 = vmatprep.subr.mxu0 0.0
    %1167 = vmatpush1.xpose.msra.mxu0 0.0
    %1168 = vmatprep.subr.mxu0 0.0
    %1169 = vmatpush1.xpose.msra.mxu0 0.0
    %1170 = vmatprep.subr.mxu0 0.0
    %1171 = vmatpush1.xpose.msra.mxu0 0.0
    %1172 = vmatprep.subr.mxu0 0.0
    %1173 = vmatpush1.xpose.msra.mxu0 0.0
    %1174 = vmatprep.subr.mxu0 0.0
    %1175 = vmatpush1.xpose.msra.mxu0 0.0
    %1176 = vmatprep.subr.mxu0 0.0
    %1177 = vmatpush1.xpose.msra.mxu0 0.0
    %1178 = vmatprep.subr.mxu0 0.0
    %1179 = vmatpush1.xpose.msra.mxu0 0.0
    %1180 = vmatprep.subr.mxu0 0.0
    %1181 = vmatpush1.xpose.msra.mxu0 0.0
    %1182 = vmatprep.subr.mxu0 0.0
    %1183 = vmatpush1.xpose.msra.mxu0 0.0
    %1184 = vmatprep.subr.mxu0 0.0
    %1185 = vmatpush1.xpose.msra.mxu0 0.0
    %1186 = vmatprep.subr.mxu0 0.0
    %1187 = vmatpush1.xpose.msra.mxu0 %v1154
    %1188 = vmatprep.subr.mxu0 0.0
    %1189 = vmatpush2.xpose.msra.mxu0 0.0
    %1190 = vmatprep.subr.mxu0 0.0
    %1191 = vmatpush2.xpose.msra.mxu0 0.0
    %1192 = vmatprep.subr.mxu0 0.0
    %1193 = vmatpush2.xpose.msra.mxu0 0.0
    %1194 = vmatprep.subr.mxu0 0.0
    %1195 = vmatpush2.xpose.msra.mxu0 0.0
    %1196 = vmatprep.subr.mxu0 0.0
    %1197 = vmatpush2.xpose.msra.mxu0 0.0
    %1198 = vmatprep.subr.mxu0 0.0
    %1199 = vmatpush2.xpose.msra.mxu0 0.0
    %1200 = vmatprep.subr.mxu0 0.0
    %1201 = vmatpush2.xpose.msra.mxu0 0.0
    %1202 = vmatprep.subr.mxu0 0.0
    %1203 = vmatpush2.xpose.msra.mxu0 0.0
    %1204 = vmatprep.subr.mxu0 0.0
    %1205 = vmatpush2.xpose.msra.mxu0 0.0
    %1206 = vmatprep.subr.mxu0 0.0
    %1207 = vmatpush2.xpose.msra.mxu0 0.0
    %1208 = vmatprep.subr.mxu0 0.0
    %1209 = vmatpush2.xpose.msra.mxu0 0.0
    %1210 = vmatprep.subr.mxu0 0.0
    %1211 = vmatpush2.xpose.msra.mxu0 0.0
    %1212 = vmatprep.subr.mxu0 0.0
    %1213 = vmatpush2.xpose.msra.mxu0 0.0
    %1214 = vmatprep.subr.mxu0 0.0
    %1215 = vmatpush2.xpose.msra.mxu0 0.0
    %1216 = vmatprep.subr.mxu0 0.0
    %1217 = vmatpush2.xpose.msra.mxu0 0.0
    %1218 = vmatprep.subr.mxu0 0.0
    %1219 = vmatpush2.xpose.msra.mxu0 0.0
    %1220 = vmatprep.mubr.f32.mxu0 0.0
    %1221 = vmatmul.mubr.f32.gmra.mxu0 %v1152
    %v1222 = vpop.f32.mrf.mxu0
    %v1223 = vadd.f32 0.0, %v1222
    %v1224 = vpop.f32.mrf.mxu0
    %1225 = vdwg.mxu0
    %v1226 = vmul.f32 %v1223, 0.35355338
    %v1227 = vsel %vm891, %v1226, -inf
    %1228 = vmax.xlane.f32.xlu0 %v1227
    %v1229 = vpop.xlane.xlu0 %1228
    %v1230 = vsub.f32 %v1226, %v1229
    %v1231 = vmul.f32 %v1230, 1.442695
    %v1232 = vpow.pop %v1231
    %v1233 = vsel %vm891, %v1232, 0.0
    %1234 = vadd.xlane.f32.xlu0 %v1233
    %v1235 = vpop.xlane.xlu0 %1234
    %v1236 = vrcp.pop %v1235
    %v1237 = vmul.f32 %v1232, %v1236
    %1238 = vrot.lane.b32.xlu0 %v809, 48
    %v1239 = vpop.permute.xlu0 %1238
    %v1241 = vsel %vm905, %v1237, 0
    %v1243 = vsel %vm693, %v1239, 0
    %1245 = vmatprep.subr.mxu0 0.0
    %1246 = vmatpush1.msra.mxu0 0.0
    %1247 = vmatprep.subr.mxu0 0.0
    %1248 = vmatpush1.msra.mxu0 0.0
    %1249 = vmatprep.subr.mxu0 0.0
    %1250 = vmatpush1.msra.mxu0 0.0
    %1251 = vmatprep.subr.mxu0 0.0
    %1252 = vmatpush1.msra.mxu0 0.0
    %1253 = vmatprep.subr.mxu0 0.0
    %1254 = vmatpush1.msra.mxu0 0.0
    %1255 = vmatprep.subr.mxu0 0.0
    %1256 = vmatpush1.msra.mxu0 0.0
    %1257 = vmatprep.subr.mxu0 0.0
    %1258 = vmatpush1.msra.mxu0 0.0
    %1259 = vmatprep.subr.mxu0 0.0
    %1260 = vmatpush1.msra.mxu0 0.0
    %1261 = vmatprep.subr.mxu0 0.0
    %1262 = vmatpush1.msra.mxu0 0.0
    %1263 = vmatprep.subr.mxu0 0.0
    %1264 = vmatpush1.msra.mxu0 0.0
    %1265 = vmatprep.subr.mxu0 0.0
    %1266 = vmatpush1.msra.mxu0 0.0
    %1267 = vmatprep.subr.mxu0 0.0
    %1268 = vmatpush1.msra.mxu0 0.0
    %1269 = vmatprep.subr.mxu0 0.0
    %1270 = vmatpush1.msra.mxu0 0.0
    %1271 = vmatprep.subr.mxu0 0.0
    %1272 = vmatpush1.msra.mxu0 0.0
    %1273 = vmatprep.subr.mxu0 0.0
    %1274 = vmatpush1.msra.mxu0 0.0
    %1275 = vmatprep.subr.mxu0 0.0
    %1276 = vmatpush1.msra.mxu0 %v1243
    %1277 = vmatprep.subr.mxu0 0.0
    %1278 = vmatpush2.msra.mxu0 0.0
    %1279 = vmatprep.subr.mxu0 0.0
    %1280 = vmatpush2.msra.mxu0 0.0
    %1281 = vmatprep.subr.mxu0 0.0
    %1282 = vmatpush2.msra.mxu0 0.0
    %1283 = vmatprep.subr.mxu0 0.0
    %1284 = vmatpush2.msra.mxu0 0.0
    %1285 = vmatprep.subr.mxu0 0.0
    %1286 = vmatpush2.msra.mxu0 0.0
    %1287 = vmatprep.subr.mxu0 0.0
    %1288 = vmatpush2.msra.mxu0 0.0
    %1289 = vmatprep.subr.mxu0 0.0
    %1290 = vmatpush2.msra.mxu0 0.0
    %1291 = vmatprep.subr.mxu0 0.0
    %1292 = vmatpush2.msra.mxu0 0.0
    %1293 = vmatprep.subr.mxu0 0.0
    %1294 = vmatpush2.msra.mxu0 0.0
    %1295 = vmatprep.subr.mxu0 0.0
    %1296 = vmatpush2.msra.mxu0 0.0
    %1297 = vmatprep.subr.mxu0 0.0
    %1298 = vmatpush2.msra.mxu0 0.0
    %1299 = vmatprep.subr.mxu0 0.0
    %1300 = vmatpush2.msra.mxu0 0.0
    %1301 = vmatprep.subr.mxu0 0.0
    %1302 = vmatpush2.msra.mxu0 0.0
    %1303 = vmatprep.subr.mxu0 0.0
    %1304 = vmatpush2.msra.mxu0 0.0
    %1305 = vmatprep.subr.mxu0 0.0
    %1306 = vmatpush2.msra.mxu0 0.0
    %1307 = vmatprep.subr.mxu0 0.0
    %1308 = vmatpush2.msra.mxu0 0.0
    %1309 = vmatprep.mubr.f32.mxu0 0.0
    %1310 = vmatmul.mubr.f32.gmra.mxu0 %v1241
    %v1311 = vpop.f32.mrf.mxu0
    %v1312 = vadd.f32 0.0, %v1311
    %v1313 = vpop.f32.mrf.mxu0
    %1314 = vdwg.mxu0
    %1315 = vrot.lane.b32.xlu0 %v809, 104
    %v1316 = vpop.permute.xlu0 %1315
    %1317 = vrot.lane.b32.xlu0 %v809, 72
    %v1318 = vpop.permute.xlu0 %1317
    %v1319 = vsel %vm815, %v1316, 0
    %v1321 = vsel %vm815, %v1318, 0
    %1323 = vmatprep.subr.mxu0 0.0
    %1324 = vmatpush1.xpose.msra.mxu0 0.0
    %1325 = vmatprep.subr.mxu0 0.0
    %1326 = vmatpush1.xpose.msra.mxu0 0.0
    %1327 = vmatprep.subr.mxu0 0.0
    %1328 = vmatpush1.xpose.msra.mxu0 0.0
    %1329 = vmatprep.subr.mxu0 0.0
    %1330 = vmatpush1.xpose.msra.mxu0 0.0
    %1331 = vmatprep.subr.mxu0 0.0
    %1332 = vmatpush1.xpose.msra.mxu0 0.0
    %1333 = vmatprep.subr.mxu0 0.0
    %1334 = vmatpush1.xpose.msra.mxu0 0.0
    %1335 = vmatprep.subr.mxu0 0.0
    %1336 = vmatpush1.xpose.msra.mxu0 0.0
    %1337 = vmatprep.subr.mxu0 0.0
    %1338 = vmatpush1.xpose.msra.mxu0 0.0
    %1339 = vmatprep.subr.mxu0 0.0
    %1340 = vmatpush1.xpose.msra.mxu0 0.0
    %1341 = vmatprep.subr.mxu0 0.0
    %1342 = vmatpush1.xpose.msra.mxu0 0.0
    %1343 = vmatprep.subr.mxu0 0.0
    %1344 = vmatpush1.xpose.msra.mxu0 0.0
    %1345 = vmatprep.subr.mxu0 0.0
    %1346 = vmatpush1.xpose.msra.mxu0 0.0
    %1347 = vmatprep.subr.mxu0 0.0
    %1348 = vmatpush1.xpose.msra.mxu0 0.0
    %1349 = vmatprep.subr.mxu0 0.0
    %1350 = vmatpush1.xpose.msra.mxu0 0.0
    %1351 = vmatprep.subr.mxu0 0.0
    %1352 = vmatpush1.xpose.msra.mxu0 0.0
    %1353 = vmatprep.subr.mxu0 0.0
    %1354 = vmatpush1.xpose.msra.mxu0 %v1321
    %1355 = vmatprep.subr.mxu0 0.0
    %1356 = vmatpush2.xpose.msra.mxu0 0.0
    %1357 = vmatprep.subr.mxu0 0.0
    %1358 = vmatpush2.xpose.msra.mxu0 0.0
    %1359 = vmatprep.subr.mxu0 0.0
    %1360 = vmatpush2.xpose.msra.mxu0 0.0
    %1361 = vmatprep.subr.mxu0 0.0
    %1362 = vmatpush2.xpose.msra.mxu0 0.0
    %1363 = vmatprep.subr.mxu0 0.0
    %1364 = vmatpush2.xpose.msra.mxu0 0.0
    %1365 = vmatprep.subr.mxu0 0.0
    %1366 = vmatpush2.xpose.msra.mxu0 0.0
    %1367 = vmatprep.subr.mxu0 0.0
    %1368 = vmatpush2.xpose.msra.mxu0 0.0
    %1369 = vmatprep.subr.mxu0 0.0
    %1370 = vmatpush2.xpose.msra.mxu0 0.0
    %1371 = vmatprep.subr.mxu0 0.0
    %1372 = vmatpush2.xpose.msra.mxu0 0.0
    %1373 = vmatprep.subr.mxu0 0.0
    %1374 = vmatpush2.xpose.msra.mxu0 0.0
    %1375 = vmatprep.subr.mxu0 0.0
    %1376 = vmatpush2.xpose.msra.mxu0 0.0
    %1377 = vmatprep.subr.mxu0 0.0
    %1378 = vmatpush2.xpose.msra.mxu0 0.0
    %1379 = vmatprep.subr.mxu0 0.0
    %1380 = vmatpush2.xpose.msra.mxu0 0.0
    %1381 = vmatprep.subr.mxu0 0.0
    %1382 = vmatpush2.xpose.msra.mxu0 0.0
    %1383 = vmatprep.subr.mxu0 0.0
    %1384 = vmatpush2.xpose.msra.mxu0 0.0
    %1385 = vmatprep.subr.mxu0 0.0
    %1386 = vmatpush2.xpose.msra.mxu0 0.0
    %1387 = vmatprep.mubr.f32.mxu0 0.0
    %1388 = vmatmul.mubr.f32.gmra.mxu0 %v1319
    %v1389 = vpop.f32.mrf.mxu0
    %v1390 = vadd.f32 0.0, %v1389
    %v1391 = vpop.f32.mrf.mxu0
    %1392 = vdwg.mxu0
    %v1393 = vmul.f32 %v1390, 0.35355338
    %v1394 = vsel %vm891, %v1393, -inf
    %1395 = vmax.xlane.f32.xlu0 %v1394
    %v1396 = vpop.xlane.xlu0 %1395
    %v1397 = vsub.f32 %v1393, %v1396
    %v1398 = vmul.f32 %v1397, 1.442695
    %v1399 = vpow.pop %v1398
    %v1400 = vsel %vm891, %v1399, 0.0
    %1401 = vadd.xlane.f32.xlu0 %v1400
    %v1402 = vpop.xlane.xlu0 %1401
    %v1403 = vrcp.pop %v1402
    %v1404 = vmul.f32 %v1399, %v1403
    %1405 = vrot.lane.b32.xlu0 %v809, 40
    %v1406 = vpop.permute.xlu0 %1405
    %v1408 = vsel %vm905, %v1404, 0
    %v1410 = vsel %vm693, %v1406, 0
    %1412 = vmatprep.subr.mxu0 0.0
    %1413 = vmatpush1.msra.mxu0 0.0
    %1414 = vmatprep.subr.mxu0 0.0
    %1415 = vmatpush1.msra.mxu0 0.0
    %1416 = vmatprep.subr.mxu0 0.0
    %1417 = vmatpush1.msra.mxu0 0.0
    %1418 = vmatprep.subr.mxu0 0.0
    %1419 = vmatpush1.msra.mxu0 0.0
    %1420 = vmatprep.subr.mxu0 0.0
    %1421 = vmatpush1.msra.mxu0 0.0
    %1422 = vmatprep.subr.mxu0 0.0
    %1423 = vmatpush1.msra.mxu0 0.0
    %1424 = vmatprep.subr.mxu0 0.0
    %1425 = vmatpush1.msra.mxu0 0.0
    %1426 = vmatprep.subr.mxu0 0.0
    %1427 = vmatpush1.msra.mxu0 0.0
    %1428 = vmatprep.subr.mxu0 0.0
    %1429 = vmatpush1.msra.mxu0 0.0
    %1430 = vmatprep.subr.mxu0 0.0
    %1431 = vmatpush1.msra.mxu0 0.0
    %1432 = vmatprep.subr.mxu0 0.0
    %1433 = vmatpush1.msra.mxu0 0.0
    %1434 = vmatprep.subr.mxu0 0.0
    %1435 = vmatpush1.msra.mxu0 0.0
    %1436 = vmatprep.subr.mxu0 0.0
    %1437 = vmatpush1.msra.mxu0 0.0
    %1438 = vmatprep.subr.mxu0 0.0
    %1439 = vmatpush1.msra.mxu0 0.0
    %1440 = vmatprep.subr.mxu0 0.0
    %1441 = vmatpush1.msra.mxu0 0.0
    %1442 = vmatprep.subr.mxu0 0.0
    %1443 = vmatpush1.msra.mxu0 %v1410
    %1444 = vmatprep.subr.mxu0 0.0
    %1445 = vmatpush2.msra.mxu0 0.0
    %1446 = vmatprep.subr.mxu0 0.0
    %1447 = vmatpush2.msra.mxu0 0.0
    %1448 = vmatprep.subr.mxu0 0.0
    %1449 = vmatpush2.msra.mxu0 0.0
    %1450 = vmatprep.subr.mxu0 0.0
    %1451 = vmatpush2.msra.mxu0 0.0
    %1452 = vmatprep.subr.mxu0 0.0
    %1453 = vmatpush2.msra.mxu0 0.0
    %1454 = vmatprep.subr.mxu0 0.0
    %1455 = vmatpush2.msra.mxu0 0.0
    %1456 = vmatprep.subr.mxu0 0.0
    %1457 = vmatpush2.msra.mxu0 0.0
    %1458 = vmatprep.subr.mxu0 0.0
    %1459 = vmatpush2.msra.mxu0 0.0
    %1460 = vmatprep.subr.mxu0 0.0
    %1461 = vmatpush2.msra.mxu0 0.0
    %1462 = vmatprep.subr.mxu0 0.0
    %1463 = vmatpush2.msra.mxu0 0.0
    %1464 = vmatprep.subr.mxu0 0.0
    %1465 = vmatpush2.msra.mxu0 0.0
    %1466 = vmatprep.subr.mxu0 0.0
    %1467 = vmatpush2.msra.mxu0 0.0
    %1468 = vmatprep.subr.mxu0 0.0
    %1469 = vmatpush2.msra.mxu0 0.0
    %1470 = vmatprep.subr.mxu0 0.0
    %1471 = vmatpush2.msra.mxu0 0.0
    %1472 = vmatprep.subr.mxu0 0.0
    %1473 = vmatpush2.msra.mxu0 0.0
    %1474 = vmatprep.subr.mxu0 0.0
    %1475 = vmatpush2.msra.mxu0 0.0
    %1476 = vmatprep.mubr.f32.mxu0 0.0
    %1477 = vmatmul.mubr.f32.gmra.mxu0 %v1408
    %v1478 = vpop.f32.mrf.mxu0
    %v1479 = vadd.f32 0.0, %v1478
    %v1480 = vpop.f32.mrf.mxu0
    %1481 = vdwg.mxu0
    %1483 = vrot.lane.b32.xlu0 %v1145, 8
    %v1484 = vpop.permute.xlu0 %1483
    %1487 = vrot.lane.b32.xlu0 %v1312, 16
    %v1488 = vpop.permute.xlu0 %1487
    %1491 = vrot.lane.b32.xlu0 %v1479, 24
    %v1492 = vpop.permute.xlu0 %1491
    %v1494 = vsel %vm815, %v978, %v1484
    %v1495 = vsel %vm227, %v1494, %v1488
    %vm1496 = vcmask 195584
    %v1497 = vsel %vm1496, %v1495, %v1492
    %v1498 = vrot.slane %v809, 4
    %1499 = vrot.lane.b32.xlu0 %v1498, 96
    %v1500 = vpop.permute.xlu0 %1499
    %v1501 = vsel %vm815, %v1498, 0
    %v1503 = vsel %vm815, %v1500, 0
    %1505 = vmatprep.subr.mxu0 0.0
    %1506 = vmatpush1.xpose.msra.mxu0 0.0
    %1507 = vmatprep.subr.mxu0 0.0
    %1508 = vmatpush1.xpose.msra.mxu0 0.0
    %1509 = vmatprep.subr.mxu0 0.0
    %1510 = vmatpush1.xpose.msra.mxu0 0.0
    %1511 = vmatprep.subr.mxu0 0.0
    %1512 = vmatpush1.xpose.msra.mxu0 0.0
    %1513 = vmatprep.subr.mxu0 0.0
    %1514 = vmatpush1.xpose.msra.mxu0 0.0
    %1515 = vmatprep.subr.mxu0 0.0
    %1516 = vmatpush1.xpose.msra.mxu0 0.0
    %1517 = vmatprep.subr.mxu0 0.0
    %1518 = vmatpush1.xpose.msra.mxu0 0.0
    %1519 = vmatprep.subr.mxu0 0.0
    %1520 = vmatpush1.xpose.msra.mxu0 0.0
    %1521 = vmatprep.subr.mxu0 0.0
    %1522 = vmatpush1.xpose.msra.mxu0 0.0
    %1523 = vmatprep.subr.mxu0 0.0
    %1524 = vmatpush1.xpose.msra.mxu0 0.0
    %1525 = vmatprep.subr.mxu0 0.0
    %1526 = vmatpush1.xpose.msra.mxu0 0.0
    %1527 = vmatprep.subr.mxu0 0.0
    %1528 = vmatpush1.xpose.msra.mxu0 0.0
    %1529 = vmatprep.subr.mxu0 0.0
    %1530 = vmatpush1.xpose.msra.mxu0 0.0
    %1531 = vmatprep.subr.mxu0 0.0
    %1532 = vmatpush1.xpose.msra.mxu0 0.0
    %1533 = vmatprep.subr.mxu0 0.0
    %1534 = vmatpush1.xpose.msra.mxu0 0.0
    %1535 = vmatprep.subr.mxu0 0.0
    %1536 = vmatpush1.xpose.msra.mxu0 %v1503
    %1537 = vmatprep.subr.mxu0 0.0
    %1538 = vmatpush2.xpose.msra.mxu0 0.0
    %1539 = vmatprep.subr.mxu0 0.0
    %1540 = vmatpush2.xpose.msra.mxu0 0.0
    %1541 = vmatprep.subr.mxu0 0.0
    %1542 = vmatpush2.xpose.msra.mxu0 0.0
    %1543 = vmatprep.subr.mxu0 0.0
    %1544 = vmatpush2.xpose.msra.mxu0 0.0
    %1545 = vmatprep.subr.mxu0 0.0
    %1546 = vmatpush2.xpose.msra.mxu0 0.0
    %1547 = vmatprep.subr.mxu0 0.0
    %1548 = vmatpush2.xpose.msra.mxu0 0.0
    %1549 = vmatprep.subr.mxu0 0.0
    %1550 = vmatpush2.xpose.msra.mxu0 0.0
    %1551 = vmatprep.subr.mxu0 0.0
    %1552 = vmatpush2.xpose.msra.mxu0 0.0
    %1553 = vmatprep.subr.mxu0 0.0
    %1554 = vmatpush2.xpose.msra.mxu0 0.0
    %1555 = vmatprep.subr.mxu0 0.0
    %1556 = vmatpush2.xpose.msra.mxu0 0.0
    %1557 = vmatprep.subr.mxu0 0.0
    %1558 = vmatpush2.xpose.msra.mxu0 0.0
    %1559 = vmatprep.subr.mxu0 0.0
    %1560 = vmatpush2.xpose.msra.mxu0 0.0
    %1561 = vmatprep.subr.mxu0 0.0
    %1562 = vmatpush2.xpose.msra.mxu0 0.0
    %1563 = vmatprep.subr.mxu0 0.0
    %1564 = vmatpush2.xpose.msra.mxu0 0.0
    %1565 = vmatprep.subr.mxu0 0.0
    %1566 = vmatpush2.xpose.msra.mxu0 0.0
    %1567 = vmatprep.subr.mxu0 0.0
    %1568 = vmatpush2.xpose.msra.mxu0 0.0
    %1569 = vmatprep.mubr.f32.mxu0 0.0
    %1570 = vmatmul.mubr.f32.gmra.mxu0 %v1501
    %v1571 = vpop.f32.mrf.mxu0
    %v1572 = vadd.f32 0.0, %v1571
    %v1573 = vpop.f32.mrf.mxu0
    %1574 = vdwg.mxu0
    %v1575 = vmul.f32 %v1572, 0.35355338
    %v1576 = vsel %vm891, %v1575, -inf
    %1577 = vmax.xlane.f32.xlu0 %v1576
    %v1578 = vpop.xlane.xlu0 %1577
    %v1579 = vsub.f32 %v1575, %v1578
    %v1580 = vmul.f32 %v1579, 1.442695
    %v1581 = vpow.pop %v1580
    %v1582 = vsel %vm891, %v1581, 0.0
    %1583 = vadd.xlane.f32.xlu0 %v1582
    %v1584 = vpop.xlane.xlu0 %1583
    %v1585 = vrcp.pop %v1584
    %v1586 = vmul.f32 %v1581, %v1585
    %1587 = vrot.lane.b32.xlu0 %v1498, 64
    %v1588 = vpop.permute.xlu0 %1587
    %v1590 = vsel %vm905, %v1586, 0
    %v1592 = vsel %vm693, %v1588, 0
    %1594 = vmatprep.subr.mxu0 0.0
    %1595 = vmatpush1.msra.mxu0 0.0
    %1596 = vmatprep.subr.mxu0 0.0
    %1597 = vmatpush1.msra.mxu0 0.0
    %1598 = vmatprep.subr.mxu0 0.0
    %1599 = vmatpush1.msra.mxu0 0.0
    %1600 = vmatprep.subr.mxu0 0.0
    %1601 = vmatpush1.msra.mxu0 0.0
    %1602 = vmatprep.subr.mxu0 0.0
    %1603 = vmatpush1.msra.mxu0 0.0
    %1604 = vmatprep.subr.mxu0 0.0
    %1605 = vmatpush1.msra.mxu0 0.0
    %1606 = vmatprep.subr.mxu0 0.0
    %1607 = vmatpush1.msra.mxu0 0.0
    %1608 = vmatprep.subr.mxu0 0.0
    %1609 = vmatpush1.msra.mxu0 0.0
    %1610 = vmatprep.subr.mxu0 0.0
    %1611 = vmatpush1.msra.mxu0 0.0
    %1612 = vmatprep.subr.mxu0 0.0
    %1613 = vmatpush1.msra.mxu0 0.0
    %1614 = vmatprep.subr.mxu0 0.0
    %1615 = vmatpush1.msra.mxu0 0.0
    %1616 = vmatprep.subr.mxu0 0.0
    %1617 = vmatpush1.msra.mxu0 0.0
    %1618 = vmatprep.subr.mxu0 0.0
    %1619 = vmatpush1.msra.mxu0 0.0
    %1620 = vmatprep.subr.mxu0 0.0
    %1621 = vmatpush1.msra.mxu0 0.0
    %1622 = vmatprep.subr.mxu0 0.0
    %1623 = vmatpush1.msra.mxu0 0.0
    %1624 = vmatprep.subr.mxu0 0.0
    %1625 = vmatpush1.msra.mxu0 %v1592
    %1626 = vmatprep.subr.mxu0 0.0
    %1627 = vmatpush2.msra.mxu0 0.0
    %1628 = vmatprep.subr.mxu0 0.0
    %1629 = vmatpush2.msra.mxu0 0.0
    %1630 = vmatprep.subr.mxu0 0.0
    %1631 = vmatpush2.msra.mxu0 0.0
    %1632 = vmatprep.subr.mxu0 0.0
    %1633 = vmatpush2.msra.mxu0 0.0
    %1634 = vmatprep.subr.mxu0 0.0
    %1635 = vmatpush2.msra.mxu0 0.0
    %1636 = vmatprep.subr.mxu0 0.0
    %1637 = vmatpush2.msra.mxu0 0.0
    %1638 = vmatprep.subr.mxu0 0.0
    %1639 = vmatpush2.msra.mxu0 0.0
    %1640 = vmatprep.subr.mxu0 0.0
    %1641 = vmatpush2.msra.mxu0 0.0
    %1642 = vmatprep.subr.mxu0 0.0
    %1643 = vmatpush2.msra.mxu0 0.0
    %1644 = vmatprep.subr.mxu0 0.0
    %1645 = vmatpush2.msra.mxu0 0.0
    %1646 = vmatprep.subr.mxu0 0.0
    %1647 = vmatpush2.msra.mxu0 0.0
    %1648 = vmatprep.subr.mxu0 0.0
    %1649 = vmatpush2.msra.mxu0 0.0
    %1650 = vmatprep.subr.mxu0 0.0
    %1651 = vmatpush2.msra.mxu0 0.0
    %1652 = vmatprep.subr.mxu0 0.0
    %1653 = vmatpush2.msra.mxu0 0.0
    %1654 = vmatprep.subr.mxu0 0.0
    %1655 = vmatpush2.msra.mxu0 0.0
    %1656 = vmatprep.subr.mxu0 0.0
    %1657 = vmatpush2.msra.mxu0 0.0
    %1658 = vmatprep.mubr.f32.mxu0 0.0
    %1659 = vmatmul.mubr.f32.gmra.mxu0 %v1590
    %v1660 = vpop.f32.mrf.mxu0
    %v1661 = vadd.f32 0.0, %v1660
    %v1662 = vpop.f32.mrf.mxu0
    %1663 = vdwg.mxu0
    %1664 = vrot.lane.b32.xlu0 %v1498, 120
    %v1665 = vpop.permute.xlu0 %1664
    %1666 = vrot.lane.b32.xlu0 %v1498, 88
    %v1667 = vpop.permute.xlu0 %1666
    %v1668 = vsel %vm815, %v1665, 0
    %v1670 = vsel %vm815, %v1667, 0
    %1672 = vmatprep.subr.mxu0 0.0
    %1673 = vmatpush1.xpose.msra.mxu0 0.0
    %1674 = vmatprep.subr.mxu0 0.0
    %1675 = vmatpush1.xpose.msra.mxu0 0.0
    %1676 = vmatprep.subr.mxu0 0.0
    %1677 = vmatpush1.xpose.msra.mxu0 0.0
    %1678 = vmatprep.subr.mxu0 0.0
    %1679 = vmatpush1.xpose.msra.mxu0 0.0
    %1680 = vmatprep.subr.mxu0 0.0
    %1681 = vmatpush1.xpose.msra.mxu0 0.0
    %1682 = vmatprep.subr.mxu0 0.0
    %1683 = vmatpush1.xpose.msra.mxu0 0.0
    %1684 = vmatprep.subr.mxu0 0.0
    %1685 = vmatpush1.xpose.msra.mxu0 0.0
    %1686 = vmatprep.subr.mxu0 0.0
    %1687 = vmatpush1.xpose.msra.mxu0 0.0
    %1688 = vmatprep.subr.mxu0 0.0
    %1689 = vmatpush1.xpose.msra.mxu0 0.0
    %1690 = vmatprep.subr.mxu0 0.0
    %1691 = vmatpush1.xpose.msra.mxu0 0.0
    %1692 = vmatprep.subr.mxu0 0.0
    %1693 = vmatpush1.xpose.msra.mxu0 0.0
    %1694 = vmatprep.subr.mxu0 0.0
    %1695 = vmatpush1.xpose.msra.mxu0 0.0
    %1696 = vmatprep.subr.mxu0 0.0
    %1697 = vmatpush1.xpose.msra.mxu0 0.0
    %1698 = vmatprep.subr.mxu0 0.0
    %1699 = vmatpush1.xpose.msra.mxu0 0.0
    %1700 = vmatprep.subr.mxu0 0.0
    %1701 = vmatpush1.xpose.msra.mxu0 0.0
    %1702 = vmatprep.subr.mxu0 0.0
    %1703 = vmatpush1.xpose.msra.mxu0 %v1670
    %1704 = vmatprep.subr.mxu0 0.0
    %1705 = vmatpush2.xpose.msra.mxu0 0.0
    %1706 = vmatprep.subr.mxu0 0.0
    %1707 = vmatpush2.xpose.msra.mxu0 0.0
    %1708 = vmatprep.subr.mxu0 0.0
    %1709 = vmatpush2.xpose.msra.mxu0 0.0
    %1710 = vmatprep.subr.mxu0 0.0
    %1711 = vmatpush2.xpose.msra.mxu0 0.0
    %1712 = vmatprep.subr.mxu0 0.0
    %1713 = vmatpush2.xpose.msra.mxu0 0.0
    %1714 = vmatprep.subr.mxu0 0.0
    %1715 = vmatpush2.xpose.msra.mxu0 0.0
    %1716 = vmatprep.subr.mxu0 0.0
    %1717 = vmatpush2.xpose.msra.mxu0 0.0
    %1718 = vmatprep.subr.mxu0 0.0
    %1719 = vmatpush2.xpose.msra.mxu0 0.0
    %1720 = vmatprep.subr.mxu0 0.0
    %1721 = vmatpush2.xpose.msra.mxu0 0.0
    %1722 = vmatprep.subr.mxu0 0.0
    %1723 = vmatpush2.xpose.msra.mxu0 0.0
    %1724 = vmatprep.subr.mxu0 0.0
    %1725 = vmatpush2.xpose.msra.mxu0 0.0
    %1726 = vmatprep.subr.mxu0 0.0
    %1727 = vmatpush2.xpose.msra.mxu0 0.0
    %1728 = vmatprep.subr.mxu0 0.0
    %1729 = vmatpush2.xpose.msra.mxu0 0.0
    %1730 = vmatprep.subr.mxu0 0.0
    %1731 = vmatpush2.xpose.msra.mxu0 0.0
    %1732 = vmatprep.subr.mxu0 0.0
    %1733 = vmatpush2.xpose.msra.mxu0 0.0
    %1734 = vmatprep.subr.mxu0 0.0
    %1735 = vmatpush2.xpose.msra.mxu0 0.0
    %1736 = vmatprep.mubr.f32.mxu0 0.0
    %1737 = vmatmul.mubr.f32.gmra.mxu0 %v1668
    %v1738 = vpop.f32.mrf.mxu0
    %v1739 = vadd.f32 0.0, %v1738
    %v1740 = vpop.f32.mrf.mxu0
    %1741 = vdwg.mxu0
    %v1742 = vmul.f32 %v1739, 0.35355338
    %v1743 = vsel %vm891, %v1742, -inf
    %1744 = vmax.xlane.f32.xlu0 %v1743
    %v1745 = vpop.xlane.xlu0 %1744
    %v1746 = vsub.f32 %v1742, %v1745
    %v1747 = vmul.f32 %v1746, 1.442695
    %v1748 = vpow.pop %v1747
    %v1749 = vsel %vm891, %v1748, 0.0
    %1750 = vadd.xlane.f32.xlu0 %v1749
    %v1751 = vpop.xlane.xlu0 %1750
    %v1752 = vrcp.pop %v1751
    %v1753 = vmul.f32 %v1748, %v1752
    %1754 = vrot.lane.b32.xlu0 %v1498, 56
    %v1755 = vpop.permute.xlu0 %1754
    %v1757 = vsel %vm905, %v1753, 0
    %v1759 = vsel %vm693, %v1755, 0
    %1761 = vmatprep.subr.mxu0 0.0
    %1762 = vmatpush1.msra.mxu0 0.0
    %1763 = vmatprep.subr.mxu0 0.0
    %1764 = vmatpush1.msra.mxu0 0.0
    %1765 = vmatprep.subr.mxu0 0.0
    %1766 = vmatpush1.msra.mxu0 0.0
    %1767 = vmatprep.subr.mxu0 0.0
    %1768 = vmatpush1.msra.mxu0 0.0
    %1769 = vmatprep.subr.mxu0 0.0
    %1770 = vmatpush1.msra.mxu0 0.0
    %1771 = vmatprep.subr.mxu0 0.0
    %1772 = vmatpush1.msra.mxu0 0.0
    %1773 = vmatprep.subr.mxu0 0.0
    %1774 = vmatpush1.msra.mxu0 0.0
    %1775 = vmatprep.subr.mxu0 0.0
    %1776 = vmatpush1.msra.mxu0 0.0
    %1777 = vmatprep.subr.mxu0 0.0
    %1778 = vmatpush1.msra.mxu0 0.0
    %1779 = vmatprep.subr.mxu0 0.0
    %1780 = vmatpush1.msra.mxu0 0.0
    %1781 = vmatprep.subr.mxu0 0.0
    %1782 = vmatpush1.msra.mxu0 0.0
    %1783 = vmatprep.subr.mxu0 0.0
    %1784 = vmatpush1.msra.mxu0 0.0
    %1785 = vmatprep.subr.mxu0 0.0
    %1786 = vmatpush1.msra.mxu0 0.0
    %1787 = vmatprep.subr.mxu0 0.0
    %1788 = vmatpush1.msra.mxu0 0.0
    %1789 = vmatprep.subr.mxu0 0.0
    %1790 = vmatpush1.msra.mxu0 0.0
    %1791 = vmatprep.subr.mxu0 0.0
    %1792 = vmatpush1.msra.mxu0 %v1759
    %1793 = vmatprep.subr.mxu0 0.0
    %1794 = vmatpush2.msra.mxu0 0.0
    %1795 = vmatprep.subr.mxu0 0.0
    %1796 = vmatpush2.msra.mxu0 0.0
    %1797 = vmatprep.subr.mxu0 0.0
    %1798 = vmatpush2.msra.mxu0 0.0
    %1799 = vmatprep.subr.mxu0 0.0
    %1800 = vmatpush2.msra.mxu0 0.0
    %1801 = vmatprep.subr.mxu0 0.0
    %1802 = vmatpush2.msra.mxu0 0.0
    %1803 = vmatprep.subr.mxu0 0.0
    %1804 = vmatpush2.msra.mxu0 0.0
    %1805 = vmatprep.subr.mxu0 0.0
    %1806 = vmatpush2.msra.mxu0 0.0
    %1807 = vmatprep.subr.mxu0 0.0
    %1808 = vmatpush2.msra.mxu0 0.0
    %1809 = vmatprep.subr.mxu0 0.0
    %1810 = vmatpush2.msra.mxu0 0.0
    %1811 = vmatprep.subr.mxu0 0.0
    %1812 = vmatpush2.msra.mxu0 0.0
    %1813 = vmatprep.subr.mxu0 0.0
    %1814 = vmatpush2.msra.mxu0 0.0
    %1815 = vmatprep.subr.mxu0 0.0
    %1816 = vmatpush2.msra.mxu0 0.0
    %1817 = vmatprep.subr.mxu0 0.0
    %1818 = vmatpush2.msra.mxu0 0.0
    %1819 = vmatprep.subr.mxu0 0.0
    %1820 = vmatpush2.msra.mxu0 0.0
    %1821 = vmatprep.subr.mxu0 0.0
    %1822 = vmatpush2.msra.mxu0 0.0
    %1823 = vmatprep.subr.mxu0 0.0
    %1824 = vmatpush2.msra.mxu0 0.0
    %1825 = vmatprep.mubr.f32.mxu0 0.0
    %1826 = vmatmul.mubr.f32.gmra.mxu0 %v1757
    %v1827 = vpop.f32.mrf.mxu0
    %v1828 = vadd.f32 0.0, %v1827
    %v1829 = vpop.f32.mrf.mxu0
    %1830 = vdwg.mxu0
    %1831 = vrot.lane.b32.xlu0 %v1498, 112
    %v1832 = vpop.permute.xlu0 %1831
    %1833 = vrot.lane.b32.xlu0 %v1498, 80
    %v1834 = vpop.permute.xlu0 %1833
    %v1835 = vsel %vm815, %v1832, 0
    %v1837 = vsel %vm815, %v1834, 0
    %1839 = vmatprep.subr.mxu0 0.0
    %1840 = vmatpush1.xpose.msra.mxu0 0.0
    %1841 = vmatprep.subr.mxu0 0.0
    %1842 = vmatpush1.xpose.msra.mxu0 0.0
    %1843 = vmatprep.subr.mxu0 0.0
    %1844 = vmatpush1.xpose.msra.mxu0 0.0
    %1845 = vmatprep.subr.mxu0 0.0
    %1846 = vmatpush1.xpose.msra.mxu0 0.0
    %1847 = vmatprep.subr.mxu0 0.0
    %1848 = vmatpush1.xpose.msra.mxu0 0.0
    %1849 = vmatprep.subr.mxu0 0.0
    %1850 = vmatpush1.xpose.msra.mxu0 0.0
    %1851 = vmatprep.subr.mxu0 0.0
    %1852 = vmatpush1.xpose.msra.mxu0 0.0
    %1853 = vmatprep.subr.mxu0 0.0
    %1854 = vmatpush1.xpose.msra.mxu0 0.0
    %1855 = vmatprep.subr.mxu0 0.0
    %1856 = vmatpush1.xpose.msra.mxu0 0.0
    %1857 = vmatprep.subr.mxu0 0.0
    %1858 = vmatpush1.xpose.msra.mxu0 0.0
    %1859 = vmatprep.subr.mxu0 0.0
    %1860 = vmatpush1.xpose.msra.mxu0 0.0
    %1861 = vmatprep.subr.mxu0 0.0
    %1862 = vmatpush1.xpose.msra.mxu0 0.0
    %1863 = vmatprep.subr.mxu0 0.0
    %1864 = vmatpush1.xpose.msra.mxu0 0.0
    %1865 = vmatprep.subr.mxu0 0.0
    %1866 = vmatpush1.xpose.msra.mxu0 0.0
    %1867 = vmatprep.subr.mxu0 0.0
    %1868 = vmatpush1.xpose.msra.mxu0 0.0
    %1869 = vmatprep.subr.mxu0 0.0
    %1870 = vmatpush1.xpose.msra.mxu0 %v1837
    %1871 = vmatprep.subr.mxu0 0.0
    %1872 = vmatpush2.xpose.msra.mxu0 0.0
    %1873 = vmatprep.subr.mxu0 0.0
    %1874 = vmatpush2.xpose.msra.mxu0 0.0
    %1875 = vmatprep.subr.mxu0 0.0
    %1876 = vmatpush2.xpose.msra.mxu0 0.0
    %1877 = vmatprep.subr.mxu0 0.0
    %1878 = vmatpush2.xpose.msra.mxu0 0.0
    %1879 = vmatprep.subr.mxu0 0.0
    %1880 = vmatpush2.xpose.msra.mxu0 0.0
    %1881 = vmatprep.subr.mxu0 0.0
    %1882 = vmatpush2.xpose.msra.mxu0 0.0
    %1883 = vmatprep.subr.mxu0 0.0
    %1884 = vmatpush2.xpose.msra.mxu0 0.0
    %1885 = vmatprep.subr.mxu0 0.0
    %1886 = vmatpush2.xpose.msra.mxu0 0.0
    %1887 = vmatprep.subr.mxu0 0.0
    %1888 = vmatpush2.xpose.msra.mxu0 0.0
    %1889 = vmatprep.subr.mxu0 0.0
    %1890 = vmatpush2.xpose.msra.mxu0 0.0
    %1891 = vmatprep.subr.mxu0 0.0
    %1892 = vmatpush2.xpose.msra.mxu0 0.0
    %1893 = vmatprep.subr.mxu0 0.0
    %1894 = vmatpush2.xpose.msra.mxu0 0.0
    %1895 = vmatprep.subr.mxu0 0.0
    %1896 = vmatpush2.xpose.msra.mxu0 0.0
    %1897 = vmatprep.subr.mxu0 0.0
    %1898 = vmatpush2.xpose.msra.mxu0 0.0
    %1899 = vmatprep.subr.mxu0 0.0
    %1900 = vmatpush2.xpose.msra.mxu0 0.0
    %1901 = vmatprep.subr.mxu0 0.0
    %1902 = vmatpush2.xpose.msra.mxu0 0.0
    %1903 = vmatprep.mubr.f32.mxu0 0.0
    %1904 = vmatmul.mubr.f32.gmra.mxu0 %v1835
    %v1905 = vpop.f32.mrf.mxu0
    %v1906 = vadd.f32 0.0, %v1905
    %v1907 = vpop.f32.mrf.mxu0
    %1908 = vdwg.mxu0
    %v1909 = vmul.f32 %v1906, 0.35355338
    %v1910 = vsel %vm891, %v1909, -inf
    %1911 = vmax.xlane.f32.xlu0 %v1910
    %v1912 = vpop.xlane.xlu0 %1911
    %v1913 = vsub.f32 %v1909, %v1912
    %v1914 = vmul.f32 %v1913, 1.442695
    %v1915 = vpow.pop %v1914
    %v1916 = vsel %vm891, %v1915, 0.0
    %1917 = vadd.xlane.f32.xlu0 %v1916
    %v1918 = vpop.xlane.xlu0 %1917
    %v1919 = vrcp.pop %v1918
    %v1920 = vmul.f32 %v1915, %v1919
    %1921 = vrot.lane.b32.xlu0 %v1498, 48
    %v1922 = vpop.permute.xlu0 %1921
    %v1924 = vsel %vm905, %v1920, 0
    %v1926 = vsel %vm693, %v1922, 0
    %1928 = vmatprep.subr.mxu0 0.0
    %1929 = vmatpush1.msra.mxu0 0.0
    %1930 = vmatprep.subr.mxu0 0.0
    %1931 = vmatpush1.msra.mxu0 0.0
    %1932 = vmatprep.subr.mxu0 0.0
    %1933 = vmatpush1.msra.mxu0 0.0
    %1934 = vmatprep.subr.mxu0 0.0
    %1935 = vmatpush1.msra.mxu0 0.0
    %1936 = vmatprep.subr.mxu0 0.0
    %1937 = vmatpush1.msra.mxu0 0.0
    %1938 = vmatprep.subr.mxu0 0.0
    %1939 = vmatpush1.msra.mxu0 0.0
    %1940 = vmatprep.subr.mxu0 0.0
    %1941 = vmatpush1.msra.mxu0 0.0
    %1942 = vmatprep.subr.mxu0 0.0
    %1943 = vmatpush1.msra.mxu0 0.0
    %1944 = vmatprep.subr.mxu0 0.0
    %1945 = vmatpush1.msra.mxu0 0.0
    %1946 = vmatprep.subr.mxu0 0.0
    %1947 = vmatpush1.msra.mxu0 0.0
    %1948 = vmatprep.subr.mxu0 0.0
    %1949 = vmatpush1.msra.mxu0 0.0
    %1950 = vmatprep.subr.mxu0 0.0
    %1951 = vmatpush1.msra.mxu0 0.0
    %1952 = vmatprep.subr.mxu0 0.0
    %1953 = vmatpush1.msra.mxu0 0.0
    %1954 = vmatprep.subr.mxu0 0.0
    %1955 = vmatpush1.msra.mxu0 0.0
    %1956 = vmatprep.subr.mxu0 0.0
    %1957 = vmatpush1.msra.mxu0 0.0
    %1958 = vmatprep.subr.mxu0 0.0
    %1959 = vmatpush1.msra.mxu0 %v1926
    %1960 = vmatprep.subr.mxu0 0.0
    %1961 = vmatpush2.msra.mxu0 0.0
    %1962 = vmatprep.subr.mxu0 0.0
    %1963 = vmatpush2.msra.mxu0 0.0
    %1964 = vmatprep.subr.mxu0 0.0
    %1965 = vmatpush2.msra.mxu0 0.0
    %1966 = vmatprep.subr.mxu0 0.0
    %1967 = vmatpush2.msra.mxu0 0.0
    %1968 = vmatprep.subr.mxu0 0.0
    %1969 = vmatpush2.msra.mxu0 0.0
    %1970 = vmatprep.subr.mxu0 0.0
    %1971 = vmatpush2.msra.mxu0 0.0
    %1972 = vmatprep.subr.mxu0 0.0
    %1973 = vmatpush2.msra.mxu0 0.0
    %1974 = vmatprep.subr.mxu0 0.0
    %1975 = vmatpush2.msra.mxu0 0.0
    %1976 = vmatprep.subr.mxu0 0.0
    %1977 = vmatpush2.msra.mxu0 0.0
    %1978 = vmatprep.subr.mxu0 0.0
    %1979 = vmatpush2.msra.mxu0 0.0
    %1980 = vmatprep.subr.mxu0 0.0
    %1981 = vmatpush2.msra.mxu0 0.0
    %1982 = vmatprep.subr.mxu0 0.0
    %1983 = vmatpush2.msra.mxu0 0.0
    %1984 = vmatprep.subr.mxu0 0.0
    %1985 = vmatpush2.msra.mxu0 0.0
    %1986 = vmatprep.subr.mxu0 0.0
    %1987 = vmatpush2.msra.mxu0 0.0
    %1988 = vmatprep.subr.mxu0 0.0
    %1989 = vmatpush2.msra.mxu0 0.0
    %1990 = vmatprep.subr.mxu0 0.0
    %1991 = vmatpush2.msra.mxu0 0.0
    %1992 = vmatprep.mubr.f32.mxu0 0.0
    %1993 = vmatmul.mubr.f32.gmra.mxu0 %v1924
    %v1994 = vpop.f32.mrf.mxu0
    %v1995 = vadd.f32 0.0, %v1994
    %v1996 = vpop.f32.mrf.mxu0
    %1997 = vdwg.mxu0
    %1998 = vrot.lane.b32.xlu0 %v1498, 104
    %v1999 = vpop.permute.xlu0 %1998
    %2000 = vrot.lane.b32.xlu0 %v1498, 72
    %v2001 = vpop.permute.xlu0 %2000
    %v2002 = vsel %vm815, %v1999, 0
    %v2004 = vsel %vm815, %v2001, 0
    %2006 = vmatprep.subr.mxu0 0.0
    %2007 = vmatpush1.xpose.msra.mxu0 0.0
    %2008 = vmatprep.subr.mxu0 0.0
    %2009 = vmatpush1.xpose.msra.mxu0 0.0
    %2010 = vmatprep.subr.mxu0 0.0
    %2011 = vmatpush1.xpose.msra.mxu0 0.0
    %2012 = vmatprep.subr.mxu0 0.0
    %2013 = vmatpush1.xpose.msra.mxu0 0.0
    %2014 = vmatprep.subr.mxu0 0.0
    %2015 = vmatpush1.xpose.msra.mxu0 0.0
    %2016 = vmatprep.subr.mxu0 0.0
    %2017 = vmatpush1.xpose.msra.mxu0 0.0
    %2018 = vmatprep.subr.mxu0 0.0
    %2019 = vmatpush1.xpose.msra.mxu0 0.0
    %2020 = vmatprep.subr.mxu0 0.0
    %2021 = vmatpush1.xpose.msra.mxu0 0.0
    %2022 = vmatprep.subr.mxu0 0.0
    %2023 = vmatpush1.xpose.msra.mxu0 0.0
    %2024 = vmatprep.subr.mxu0 0.0
    %2025 = vmatpush1.xpose.msra.mxu0 0.0
    %2026 = vmatprep.subr.mxu0 0.0
    %2027 = vmatpush1.xpose.msra.mxu0 0.0
    %2028 = vmatprep.subr.mxu0 0.0
    %2029 = vmatpush1.xpose.msra.mxu0 0.0
    %2030 = vmatprep.subr.mxu0 0.0
    %2031 = vmatpush1.xpose.msra.mxu0 0.0
    %2032 = vmatprep.subr.mxu0 0.0
    %2033 = vmatpush1.xpose.msra.mxu0 0.0
    %2034 = vmatprep.subr.mxu0 0.0
    %2035 = vmatpush1.xpose.msra.mxu0 0.0
    %2036 = vmatprep.subr.mxu0 0.0
    %2037 = vmatpush1.xpose.msra.mxu0 %v2004
    %2038 = vmatprep.subr.mxu0 0.0
    %2039 = vmatpush2.xpose.msra.mxu0 0.0
    %2040 = vmatprep.subr.mxu0 0.0
    %2041 = vmatpush2.xpose.msra.mxu0 0.0
    %2042 = vmatprep.subr.mxu0 0.0
    %2043 = vmatpush2.xpose.msra.mxu0 0.0
    %2044 = vmatprep.subr.mxu0 0.0
    %2045 = vmatpush2.xpose.msra.mxu0 0.0
    %2046 = vmatprep.subr.mxu0 0.0
    %2047 = vmatpush2.xpose.msra.mxu0 0.0
    %2048 = vmatprep.subr.mxu0 0.0
    %2049 = vmatpush2.xpose.msra.mxu0 0.0
    %2050 = vmatprep.subr.mxu0 0.0
    %2051 = vmatpush2.xpose.msra.mxu0 0.0
    %2052 = vmatprep.subr.mxu0 0.0
    %2053 = vmatpush2.xpose.msra.mxu0 0.0
    %2054 = vmatprep.subr.mxu0 0.0
    %2055 = vmatpush2.xpose.msra.mxu0 0.0
    %2056 = vmatprep.subr.mxu0 0.0
    %2057 = vmatpush2.xpose.msra.mxu0 0.0
    %2058 = vmatprep.subr.mxu0 0.0
    %2059 = vmatpush2.xpose.msra.mxu0 0.0
    %2060 = vmatprep.subr.mxu0 0.0
    %2061 = vmatpush2.xpose.msra.mxu0 0.0
    %2062 = vmatprep.subr.mxu0 0.0
    %2063 = vmatpush2.xpose.msra.mxu0 0.0
    %2064 = vmatprep.subr.mxu0 0.0
    %2065 = vmatpush2.xpose.msra.mxu0 0.0
    %2066 = vmatprep.subr.mxu0 0.0
    %2067 = vmatpush2.xpose.msra.mxu0 0.0
    %2068 = vmatprep.subr.mxu0 0.0
    %2069 = vmatpush2.xpose.msra.mxu0 0.0
    %2070 = vmatprep.mubr.f32.mxu0 0.0
    %2071 = vmatmul.mubr.f32.gmra.mxu0 %v2002
    %v2072 = vpop.f32.mrf.mxu0
    %v2073 = vadd.f32 0.0, %v2072
    %v2074 = vpop.f32.mrf.mxu0
    %2075 = vdwg.mxu0
    %v2076 = vmul.f32 %v2073, 0.35355338
    %v2077 = vsel %vm891, %v2076, -inf
    %2078 = vmax.xlane.f32.xlu0 %v2077
    %v2079 = vpop.xlane.xlu0 %2078
    %v2080 = vsub.f32 %v2076, %v2079
    %v2081 = vmul.f32 %v2080, 1.442695
    %v2082 = vpow.pop %v2081
    %v2083 = vsel %vm891, %v2082, 0.0
    %2084 = vadd.xlane.f32.xlu0 %v2083
    %v2085 = vpop.xlane.xlu0 %2084
    %v2086 = vrcp.pop %v2085
    %v2087 = vmul.f32 %v2082, %v2086
    %2088 = vrot.lane.b32.xlu0 %v1498, 40
    %v2089 = vpop.permute.xlu0 %2088
    %v2091 = vsel %vm905, %v2087, 0
    %v2093 = vsel %vm693, %v2089, 0
    %2095 = vmatprep.subr.mxu0 0.0
    %2096 = vmatpush1.msra.mxu0 0.0
    %2097 = vmatprep.subr.mxu0 0.0
    %2098 = vmatpush1.msra.mxu0 0.0
    %2099 = vmatprep.subr.mxu0 0.0
    %2100 = vmatpush1.msra.mxu0 0.0
    %2101 = vmatprep.subr.mxu0 0.0
    %2102 = vmatpush1.msra.mxu0 0.0
    %2103 = vmatprep.subr.mxu0 0.0
    %2104 = vmatpush1.msra.mxu0 0.0
    %2105 = vmatprep.subr.mxu0 0.0
    %2106 = vmatpush1.msra.mxu0 0.0
    %2107 = vmatprep.subr.mxu0 0.0
    %2108 = vmatpush1.msra.mxu0 0.0
    %2109 = vmatprep.subr.mxu0 0.0
    %2110 = vmatpush1.msra.mxu0 0.0
    %2111 = vmatprep.subr.mxu0 0.0
    %2112 = vmatpush1.msra.mxu0 0.0
    %2113 = vmatprep.subr.mxu0 0.0
    %2114 = vmatpush1.msra.mxu0 0.0
    %2115 = vmatprep.subr.mxu0 0.0
    %2116 = vmatpush1.msra.mxu0 0.0
    %2117 = vmatprep.subr.mxu0 0.0
    %2118 = vmatpush1.msra.mxu0 0.0
    %2119 = vmatprep.subr.mxu0 0.0
    %2120 = vmatpush1.msra.mxu0 0.0
    %2121 = vmatprep.subr.mxu0 0.0
    %2122 = vmatpush1.msra.mxu0 0.0
    %2123 = vmatprep.subr.mxu0 0.0
    %2124 = vmatpush1.msra.mxu0 0.0
    %2125 = vmatprep.subr.mxu0 0.0
    %2126 = vmatpush1.msra.mxu0 %v2093
    %2127 = vmatprep.subr.mxu0 0.0
    %2128 = vmatpush2.msra.mxu0 0.0
    %2129 = vmatprep.subr.mxu0 0.0
    %2130 = vmatpush2.msra.mxu0 0.0
    %2131 = vmatprep.subr.mxu0 0.0
    %2132 = vmatpush2.msra.mxu0 0.0
    %2133 = vmatprep.subr.mxu0 0.0
    %2134 = vmatpush2.msra.mxu0 0.0
    %2135 = vmatprep.subr.mxu0 0.0
    %2136 = vmatpush2.msra.mxu0 0.0
    %2137 = vmatprep.subr.mxu0 0.0
    %2138 = vmatpush2.msra.mxu0 0.0
    %2139 = vmatprep.subr.mxu0 0.0
    %2140 = vmatpush2.msra.mxu0 0.0
    %2141 = vmatprep.subr.mxu0 0.0
    %2142 = vmatpush2.msra.mxu0 0.0
    %2143 = vmatprep.subr.mxu0 0.0
    %2144 = vmatpush2.msra.mxu0 0.0
    %2145 = vmatprep.subr.mxu0 0.0
    %2146 = vmatpush2.msra.mxu0 0.0
    %2147 = vmatprep.subr.mxu0 0.0
    %2148 = vmatpush2.msra.mxu0 0.0
    %2149 = vmatprep.subr.mxu0 0.0
    %2150 = vmatpush2.msra.mxu0 0.0
    %2151 = vmatprep.subr.mxu0 0.0
    %2152 = vmatpush2.msra.mxu0 0.0
    %2153 = vmatprep.subr.mxu0 0.0
    %2154 = vmatpush2.msra.mxu0 0.0
    %2155 = vmatprep.subr.mxu0 0.0
    %2156 = vmatpush2.msra.mxu0 0.0
    %2157 = vmatprep.subr.mxu0 0.0
    %2158 = vmatpush2.msra.mxu0 0.0
    %2159 = vmatprep.mubr.f32.mxu0 0.0
    %2160 = vmatmul.mubr.f32.gmra.mxu0 %v2091
    %v2161 = vpop.f32.mrf.mxu0
    %v2162 = vadd.f32 0.0, %v2161
    %v2163 = vpop.f32.mrf.mxu0
    %2164 = vdwg.mxu0
    %2166 = vrot.lane.b32.xlu0 %v1828, 8
    %v2167 = vpop.permute.xlu0 %2166
    %2170 = vrot.lane.b32.xlu0 %v1995, 16
    %v2171 = vpop.permute.xlu0 %2170
    %2174 = vrot.lane.b32.xlu0 %v2162, 24
    %v2175 = vpop.permute.xlu0 %2174
    %v2177 = vsel %vm815, %v1661, %v2167
    %v2178 = vsel %vm227, %v2177, %v2171
    %v2179 = vsel %vm1496, %v2178, %v2175
    %v2181 = vrot.slane %v2179, 4
    %v2183 = vsel %vm693, %v1497, %v2181
    %v2185 = vsel %vm722, %v2183, 0
    %2187 = vmatprep.subr.mxu0 0.0
    %2188 = vmatpush1.msra.mxu0 0.0
    %2189 = vmatprep.subr.mxu0 0.0
    %2190 = vmatpush1.msra.mxu0 0.0
    %2191 = vmatprep.subr.mxu0 0.0
    %2192 = vmatpush1.msra.mxu0 0.0
    %2193 = vmatprep.subr.mxu0 0.0
    %2194 = vmatpush1.msra.mxu0 0.0
    %2195 = vmatprep.subr.mxu0 0.0
    %2196 = vmatpush1.msra.mxu0 0.0
    %2197 = vmatprep.subr.mxu0 0.0
    %2198 = vmatpush1.msra.mxu0 0.0
    %2199 = vmatprep.subr.mxu0 0.0
    %2200 = vmatpush1.msra.mxu0 0.0
    %2201 = vmatprep.subr.mxu0 0.0
    %2202 = vmatpush1.msra.mxu0 0.0
    %2203 = vmatprep.subr.mxu0 0.0
    %2204 = vmatpush1.msra.mxu0 0.0
    %2205 = vmatprep.subr.mxu0 0.0
    %2206 = vmatpush1.msra.mxu0 0.0
    %2207 = vmatprep.subr.mxu0 0.0
    %2208 = vmatpush1.msra.mxu0 0.0
    %2209 = vmatprep.subr.mxu0 0.0
    %2210 = vmatpush1.msra.mxu0 0.0
    %2211 = vmatprep.subr.mxu0 0.0
    %2212 = vmatpush1.msra.mxu0 %v709
    %2213 = vmatprep.subr.mxu0 0.0
    %2214 = vmatpush1.msra.mxu0 %v708
    %2215 = vmatprep.subr.mxu0 0.0
    %2216 = vmatpush1.msra.mxu0 %v707
    %2217 = vmatprep.subr.mxu0 0.0
    %2218 = vmatpush1.msra.mxu0 %v706
    %2219 = vmatprep.subr.mxu0 0.0
    %2220 = vmatpush2.msra.mxu0 0.0
    %2221 = vmatprep.subr.mxu0 0.0
    %2222 = vmatpush2.msra.mxu0 0.0
    %2223 = vmatprep.subr.mxu0 0.0
    %2224 = vmatpush2.msra.mxu0 0.0
    %2225 = vmatprep.subr.mxu0 0.0
    %2226 = vmatpush2.msra.mxu0 0.0
    %2227 = vmatprep.subr.mxu0 0.0
    %2228 = vmatpush2.msra.mxu0 0.0
    %2229 = vmatprep.subr.mxu0 0.0
    %2230 = vmatpush2.msra.mxu0 0.0
    %2231 = vmatprep.subr.mxu0 0.0
    %2232 = vmatpush2.msra.mxu0 0.0
    %2233 = vmatprep.subr.mxu0 0.0
    %2234 = vmatpush2.msra.mxu0 0.0
    %2235 = vmatprep.subr.mxu0 0.0
    %2236 = vmatpush2.msra.mxu0 0.0
    %2237 = vmatprep.subr.mxu0 0.0
    %2238 = vmatpush2.msra.mxu0 0.0
    %2239 = vmatprep.subr.mxu0 0.0
    %2240 = vmatpush2.msra.mxu0 0.0
    %2241 = vmatprep.subr.mxu0 0.0
    %2242 = vmatpush2.msra.mxu0 0.0
    %2243 = vmatprep.subr.mxu0 0.0
    %2244 = vmatpush2.msra.mxu0 0.0
    %2245 = vmatprep.subr.mxu0 0.0
    %2246 = vmatpush2.msra.mxu0 0.0
    %2247 = vmatprep.subr.mxu0 0.0
    %2248 = vmatpush2.msra.mxu0 0.0
    %2249 = vmatprep.subr.mxu0 0.0
    %2250 = vmatpush2.msra.mxu0 0.0
    %2251 = vmatprep.mubr.f32.mxu0 0.0
    %2252 = vmatmul.mubr.f32.gmra.mxu0 %v2185
    %v2253 = vpop.f32.mrf.mxu0
    %v2254 = vadd.f32 %v697, %v2253
    %v2255 = vpop.f32.mrf.mxu0
    %2256 = vdwg.mxu0
    %v2257 = vadd.f32 %v2254, %v694
    %v2258 = vsel %vm722, %v2257, 0.0
    %2259 = vadd.xlane.f32.xlu0 %v2258
    %v2260 = vpop.xlane.xlu0 %2259
    %v2261 = vmul.f32 %v2260, %v726
    %v2262 = vsub.f32 %v2257, %v2261
    %v2263 = vmul.f32 %v2262, %v2262
    %v2264 = vsel %vm722, %v2263, 0.0
    %2265 = vadd.xlane.f32.xlu0 %v2264
    %v2266 = vpop.xlane.xlu0 %2265
    %v2267 = vmul.f32 %v2266, %v726
    %v2268 = vadd.f32 %v2267, 1e-05
    %v2269 = vrsqrt.pop %v2268
    %v2270 = vmul.f32 %v2262, %v2269
    %v2271 = vmul.f32 %v2270, %v698
    %v2272 = vadd.f32 %v2271, %v699
    %v2274 = vsel %vm722, %v2272, 0
    %2276 = vmatprep.subr.mxu0 0.0
    %2277 = vmatpush1.msra.mxu0 0.0
    %2278 = vmatprep.subr.mxu0 0.0
    %2279 = vmatpush1.msra.mxu0 0.0
    %2280 = vmatprep.subr.mxu0 0.0
    %2281 = vmatpush1.msra.mxu0 0.0
    %2282 = vmatprep.subr.mxu0 0.0
    %2283 = vmatpush1.msra.mxu0 0.0
    %2284 = vmatprep.subr.mxu0 0.0
    %2285 = vmatpush1.msra.mxu0 0.0
    %2286 = vmatprep.subr.mxu0 0.0
    %2287 = vmatpush1.msra.mxu0 0.0
    %2288 = vmatprep.subr.mxu0 0.0
    %2289 = vmatpush1.msra.mxu0 0.0
    %2290 = vmatprep.subr.mxu0 0.0
    %2291 = vmatpush1.msra.mxu0 0.0
    %2292 = vmatprep.subr.mxu0 0.0
    %2293 = vmatpush1.msra.mxu0 0.0
    %2294 = vmatprep.subr.mxu0 0.0
    %2295 = vmatpush1.msra.mxu0 0.0
    %2296 = vmatprep.subr.mxu0 0.0
    %2297 = vmatpush1.msra.mxu0 0.0
    %2298 = vmatprep.subr.mxu0 0.0
    %2299 = vmatpush1.msra.mxu0 0.0
    %2300 = vmatprep.subr.mxu0 0.0
    %2301 = vmatpush1.msra.mxu0 %v713
    %2302 = vmatprep.subr.mxu0 0.0
    %2303 = vmatpush1.msra.mxu0 %v712
    %2304 = vmatprep.subr.mxu0 0.0
    %2305 = vmatpush1.msra.mxu0 %v711
    %2306 = vmatprep.subr.mxu0 0.0
    %2307 = vmatpush1.msra.mxu0 %v710
    %2308 = vmatprep.subr.mxu0 0.0
    %2309 = vmatpush2.msra.mxu0 0.0
    %2310 = vmatprep.subr.mxu0 0.0
    %2311 = vmatpush2.msra.mxu0 0.0
    %2312 = vmatprep.subr.mxu0 0.0
    %2313 = vmatpush2.msra.mxu0 0.0
    %2314 = vmatprep.subr.mxu0 0.0
    %2315 = vmatpush2.msra.mxu0 0.0
    %2316 = vmatprep.subr.mxu0 0.0
    %2317 = vmatpush2.msra.mxu0 0.0
    %2318 = vmatprep.subr.mxu0 0.0
    %2319 = vmatpush2.msra.mxu0 0.0
    %2320 = vmatprep.subr.mxu0 0.0
    %2321 = vmatpush2.msra.mxu0 0.0
    %2322 = vmatprep.subr.mxu0 0.0
    %2323 = vmatpush2.msra.mxu0 0.0
    %2324 = vmatprep.subr.mxu0 0.0
    %2325 = vmatpush2.msra.mxu0 0.0
    %2326 = vmatprep.subr.mxu0 0.0
    %2327 = vmatpush2.msra.mxu0 0.0
    %2328 = vmatprep.subr.mxu0 0.0
    %2329 = vmatpush2.msra.mxu0 0.0
    %2330 = vmatprep.subr.mxu0 0.0
    %2331 = vmatpush2.msra.mxu0 0.0
    %2332 = vmatprep.subr.mxu0 0.0
    %2333 = vmatpush2.msra.mxu0 0.0
    %2334 = vmatprep.subr.mxu0 0.0
    %2335 = vmatpush2.msra.mxu0 0.0
    %2336 = vmatprep.subr.mxu0 0.0
    %2337 = vmatpush2.msra.mxu0 0.0
    %2338 = vmatprep.subr.mxu0 0.0
    %2339 = vmatpush2.msra.mxu0 0.0
    %2340 = vmatprep.mubr.f32.mxu0 0.0
    %2341 = vmatmul.mubr.f32.gmra.mxu0 %v2274
    %v2342 = vpop.f32.mrf.mxu0
    %v2343 = vadd.f32 %v700, %v2342
    %v2344 = vpop.f32.mrf.mxu0
    %2345 = vdwg.mxu0
    %v2346 = vmul.f32 %v2343, 0.5
    %v2347 = vmul.f32 %v2343, 0.70710677
    %v2348 = verf.f32.pop %v2347
    %v2349 = vadd.f32 %v2348, 1.0
    %v2350 = vmul.f32 %v2346, %v2349
    %vm2351 = vcmask 523264
    %v2353 = vsel %vm2351, %v2350, 0
    %2355 = vmatprep.subr.mxu0 0.0
    %2356 = vmatpush1.msra.mxu0 0.0
    %2357 = vmatprep.subr.mxu0 0.0
    %2358 = vmatpush1.msra.mxu0 0.0
    %2359 = vmatprep.subr.mxu0 0.0
    %2360 = vmatpush1.msra.mxu0 0.0
    %2361 = vmatprep.subr.mxu0 0.0
    %2362 = vmatpush1.msra.mxu0 0.0
    %2363 = vmatprep.subr.mxu0 0.0
    %2364 = vmatpush1.msra.mxu0 0.0
    %2365 = vmatprep.subr.mxu0 0.0
    %2366 = vmatpush1.msra.mxu0 0.0
    %2367 = vmatprep.subr.mxu0 0.0
    %2368 = vmatpush1.msra.mxu0 0.0
    %2369 = vmatprep.subr.mxu0 0.0
    %2370 = vmatpush1.msra.mxu0 0.0
    %2371 = vmatprep.subr.mxu0 0.0
    %2372 = vmatpush1.msra.mxu0 %v721
    %2373 = vmatprep.subr.mxu0 0.0
    %2374 = vmatpush1.msra.mxu0 %v720
    %2375 = vmatprep.subr.mxu0 0.0
    %2376 = vmatpush1.msra.mxu0 %v719
    %2377 = vmatprep.subr.mxu0 0.0
    %2378 = vmatpush1.msra.mxu0 %v718
    %2379 = vmatprep.subr.mxu0 0.0
    %2380 = vmatpush1.msra.mxu0 %v717
    %2381 = vmatprep.subr.mxu0 0.0
    %2382 = vmatpush1.msra.mxu0 %v716
    %2383 = vmatprep.subr.mxu0 0.0
    %2384 = vmatpush1.msra.mxu0 %v715
    %2385 = vmatprep.subr.mxu0 0.0
    %2386 = vmatpush1.msra.mxu0 %v714
    %2387 = vmatprep.subr.mxu0 0.0
    %2388 = vmatpush2.msra.mxu0 0.0
    %2389 = vmatprep.subr.mxu0 0.0
    %2390 = vmatpush2.msra.mxu0 0.0
    %2391 = vmatprep.subr.mxu0 0.0
    %2392 = vmatpush2.msra.mxu0 0.0
    %2393 = vmatprep.subr.mxu0 0.0
    %2394 = vmatpush2.msra.mxu0 0.0
    %2395 = vmatprep.subr.mxu0 0.0
    %2396 = vmatpush2.msra.mxu0 0.0
    %2397 = vmatprep.subr.mxu0 0.0
    %2398 = vmatpush2.msra.mxu0 0.0
    %2399 = vmatprep.subr.mxu0 0.0
    %2400 = vmatpush2.msra.mxu0 0.0
    %2401 = vmatprep.subr.mxu0 0.0
    %2402 = vmatpush2.msra.mxu0 0.0
    %2403 = vmatprep.subr.mxu0 0.0
    %2404 = vmatpush2.msra.mxu0 0.0
    %2405 = vmatprep.subr.mxu0 0.0
    %2406 = vmatpush2.msra.mxu0 0.0
    %2407 = vmatprep.subr.mxu0 0.0
    %2408 = vmatpush2.msra.mxu0 0.0
    %2409 = vmatprep.subr.mxu0 0.0
    %2410 = vmatpush2.msra.mxu0 0.0
    %2411 = vmatprep.subr.mxu0 0.0
    %2412 = vmatpush2.msra.mxu0 0.0
    %2413 = vmatprep.subr.mxu0 0.0
    %2414 = vmatpush2.msra.mxu0 0.0
    %2415 = vmatprep.subr.mxu0 0.0
    %2416 = vmatpush2.msra.mxu0 0.0
    %2417 = vmatprep.subr.mxu0 0.0
    %2418 = vmatpush2.msra.mxu0 0.0
    %2419 = vmatprep.mubr.f32.mxu0 0.0
    %2420 = vmatmul.mubr.f32.gmra.mxu0 %v2353
    %v2421 = vpop.f32.mrf.mxu0
    %v2422 = vadd.f32 %v701, %v2421
    %v2423 = vpop.f32.mrf.mxu0
    %2424 = vdwg.mxu0
    %v2425 = vadd.f32 %v2422, %v2257
    %v2426 = vld [vmem:[%s6] sm:$0xff]
    %v2427 = vld [vmem:[%s6 + $0x8] sm:$0xff]
    %v2428 = vld [vmem:[%s6 + $0x10] sm:$0xff]
    %v2429 = vld [vmem:[%s6 + $0x18] sm:$0xff]
    %v2431 = vsel %vm722, %v2425, 0
    %2433 = vmatprep.subr.mxu0 0.0
    %2434 = vmatpush1.msra.mxu0 0.0
    %2435 = vmatprep.subr.mxu0 0.0
    %2436 = vmatpush1.msra.mxu0 0.0
    %2437 = vmatprep.subr.mxu0 0.0
    %2438 = vmatpush1.msra.mxu0 0.0
    %2439 = vmatprep.subr.mxu0 0.0
    %2440 = vmatpush1.msra.mxu0 0.0
    %2441 = vmatprep.subr.mxu0 0.0
    %2442 = vmatpush1.msra.mxu0 0.0
    %2443 = vmatprep.subr.mxu0 0.0
    %2444 = vmatpush1.msra.mxu0 0.0
    %2445 = vmatprep.subr.mxu0 0.0
    %2446 = vmatpush1.msra.mxu0 0.0
    %2447 = vmatprep.subr.mxu0 0.0
    %2448 = vmatpush1.msra.mxu0 0.0
    %2449 = vmatprep.subr.mxu0 0.0
    %2450 = vmatpush1.msra.mxu0 0.0
    %2451 = vmatprep.subr.mxu0 0.0
    %2452 = vmatpush1.msra.mxu0 0.0
    %2453 = vmatprep.subr.mxu0 0.0
    %2454 = vmatpush1.msra.mxu0 0.0
    %2455 = vmatprep.subr.mxu0 0.0
    %2456 = vmatpush1.msra.mxu0 0.0
    %2457 = vmatprep.subr.mxu0 0.0
    %2458 = vmatpush1.msra.mxu0 %v2429
    %2459 = vmatprep.subr.mxu0 0.0
    %2460 = vmatpush1.msra.mxu0 %v2428
    %2461 = vmatprep.subr.mxu0 0.0
    %2462 = vmatpush1.msra.mxu0 %v2427
    %2463 = vmatprep.subr.mxu0 0.0
    %2464 = vmatpush1.msra.mxu0 %v2426
    %2465 = vmatprep.subr.mxu0 0.0
    %2466 = vmatpush2.msra.mxu0 0.0
    %2467 = vmatprep.subr.mxu0 0.0
    %2468 = vmatpush2.msra.mxu0 0.0
    %2469 = vmatprep.subr.mxu0 0.0
    %2470 = vmatpush2.msra.mxu0 0.0
    %2471 = vmatprep.subr.mxu0 0.0
    %2472 = vmatpush2.msra.mxu0 0.0
    %2473 = vmatprep.subr.mxu0 0.0
    %2474 = vmatpush2.msra.mxu0 0.0
    %2475 = vmatprep.subr.mxu0 0.0
    %2476 = vmatpush2.msra.mxu0 0.0
    %2477 = vmatprep.subr.mxu0 0.0
    %2478 = vmatpush2.msra.mxu0 0.0
    %2479 = vmatprep.subr.mxu0 0.0
    %2480 = vmatpush2.msra.mxu0 0.0
    %2481 = vmatprep.subr.mxu0 0.0
    %2482 = vmatpush2.msra.mxu0 0.0
    %2483 = vmatprep.subr.mxu0 0.0
    %2484 = vmatpush2.msra.mxu0 0.0
    %2485 = vmatprep.subr.mxu0 0.0
    %2486 = vmatpush2.msra.mxu0 0.0
    %2487 = vmatprep.subr.mxu0 0.0
    %2488 = vmatpush2.msra.mxu0 0.0
    %2489 = vmatprep.subr.mxu0 0.0
    %2490 = vmatpush2.msra.mxu0 0.0
    %2491 = vmatprep.subr.mxu0 0.0
    %2492 = vmatpush2.msra.mxu0 0.0
    %2493 = vmatprep.subr.mxu0 0.0
    %2494 = vmatpush2.msra.mxu0 0.0
    %2495 = vmatprep.subr.mxu0 0.0
    %2496 = vmatpush2.msra.mxu0 0.0
    %2497 = vmatprep.mubr.f32.mxu0 0.0
    %2498 = vmatmul.mubr.f32.gmra.mxu0 %v2431
    %v2499 = vpop.f32.mrf.mxu0
    %v2500 = vadd.f32 %v60, %v2499
    %v2501 = vpop.f32.mrf.mxu0
    %2502 = vdwg.mxu0
    %v2504 = vsel %vm722, %v694, 0
    %2506 = vmatprep.subr.mxu0 0.0
    %2507 = vmatpush1.msra.mxu0 0.0
    %2508 = vmatprep.subr.mxu0 0.0
    %2509 = vmatpush1.msra.mxu0 0.0
    %2510 = vmatprep.subr.mxu0 0.0
    %2511 = vmatpush1.msra.mxu0 0.0
    %2512 = vmatprep.subr.mxu0 0.0
    %2513 = vmatpush1.msra.mxu0 0.0
    %2514 = vmatprep.subr.mxu0 0.0
    %2515 = vmatpush1.msra.mxu0 0.0
    %2516 = vmatprep.subr.mxu0 0.0
    %2517 = vmatpush1.msra.mxu0 0.0
    %2518 = vmatprep.subr.mxu0 0.0
    %2519 = vmatpush1.msra.mxu0 0.0
    %2520 = vmatprep.subr.mxu0 0.0
    %2521 = vmatpush1.msra.mxu0 0.0
    %2522 = vmatprep.subr.mxu0 0.0
    %2523 = vmatpush1.msra.mxu0 0.0
    %2524 = vmatprep.subr.mxu0 0.0
    %2525 = vmatpush1.msra.mxu0 0.0
    %2526 = vmatprep.subr.mxu0 0.0
    %2527 = vmatpush1.msra.mxu0 0.0
    %2528 = vmatprep.subr.mxu0 0.0
    %2529 = vmatpush1.msra.mxu0 0.0
    %2530 = vmatprep.subr.mxu0 0.0
    %2531 = vmatpush1.msra.mxu0 %v2429
    %2532 = vmatprep.subr.mxu0 0.0
    %2533 = vmatpush1.msra.mxu0 %v2428
    %2534 = vmatprep.subr.mxu0 0.0
    %2535 = vmatpush1.msra.mxu0 %v2427
    %2536 = vmatprep.subr.mxu0 0.0
    %2537 = vmatpush1.msra.mxu0 %v2426
    %2538 = vmatprep.subr.mxu0 0.0
    %2539 = vmatpush2.msra.mxu0 0.0
    %2540 = vmatprep.subr.mxu0 0.0
    %2541 = vmatpush2.msra.mxu0 0.0
    %2542 = vmatprep.subr.mxu0 0.0
    %2543 = vmatpush2.msra.mxu0 0.0
    %2544 = vmatprep.subr.mxu0 0.0
    %2545 = vmatpush2.msra.mxu0 0.0
    %2546 = vmatprep.subr.mxu0 0.0
    %2547 = vmatpush2.msra.mxu0 0.0
    %2548 = vmatprep.subr.mxu0 0.0
    %2549 = vmatpush2.msra.mxu0 0.0
    %2550 = vmatprep.subr.mxu0 0.0
    %2551 = vmatpush2.msra.mxu0 0.0
    %2552 = vmatprep.subr.mxu0 0.0
    %2553 = vmatpush2.msra.mxu0 0.0
    %2554 = vmatprep.subr.mxu0 0.0
    %2555 = vmatpush2.msra.mxu0 0.0
    %2556 = vmatprep.subr.mxu0 0.0
    %2557 = vmatpush2.msra.mxu0 0.0
    %2558 = vmatprep.subr.mxu0 0.0
    %2559 = vmatpush2.msra.mxu0 0.0
    %2560 = vmatprep.subr.mxu0 0.0
    %2561 = vmatpush2.msra.mxu0 0.0
    %2562 = vmatprep.subr.mxu0 0.0
    %2563 = vmatpush2.msra.mxu0 0.0
    %2564 = vmatprep.subr.mxu0 0.0
    %2565 = vmatpush2.msra.mxu0 0.0
    %2566 = vmatprep.subr.mxu0 0.0
    %2567 = vmatpush2.msra.mxu0 0.0
    %2568 = vmatprep.subr.mxu0 0.0
    %2569 = vmatpush2.msra.mxu0 0.0
    %2570 = vmatprep.mubr.f32.mxu0 0.0
    %2571 = vmatmul.mubr.f32.gmra.mxu0 %v2504
    %v2572 = vpop.f32.mrf.mxu0
    %v2573 = vadd.f32 %v60, %v2572
    %v2574 = vpop.f32.mrf.mxu0
    %2575 = vdwg.mxu0
    %v2576 = vadd.f32 %v62, %v450
    %v2577 = vadd.f32 %v62, %v455
    %v2579 = vrot.slane %v2500, 4
    %v2581 = vsel %vm693, %v2577, %v2579
    %v2582 = vadd.f32 %v62, %v682
    %v2583 = vadd.f32 %v62, %v687
    %v2584 = vsel %vm693, %v2583, %v2500
    %v2585 = vld [vmem:[%s16 + $0x13] ss:$0 sm:$0xff]
    %v2586 = vld [vmem:[%s16 + $0x14] ss:$0 sm:$0xff]
    %v2587 = vld [vmem:[%s16 + $0x15] ss:$0 sm:$0xff]
    %v2588 = vld [vmem:[%s16 + $0x16] ss:$0 sm:$0xff]
    %v2589 = vld [vmem:[%s16 + $0x17] ss:$0 sm:$0xff]
    %s2590 = scalar_lea.vmem %s16, 32
    %v2591 = vld [vmem:[%s2590] ss:$8 sm:$0x3]
    %v2592 = vld [vmem:[%s16 + $0x21] ss:$0 sm:$0xff]
    %v2593 = vld [vmem:[%s12] sm:$0xff]
    %v2594 = vld [vmem:[%s12 + $0x8] sm:$0xff]
    %v2595 = vld [vmem:[%s12 + $0x10] sm:$0xff]
    %v2596 = vld [vmem:[%s12 + $0x18] sm:$0xff]
    %v2597 = vld [vmem:[%s12 + $0x20] sm:$0xff]
    %v2598 = vld [vmem:[%s12 + $0x28] sm:$0xff]
    %v2599 = vld [vmem:[%s12 + $0x30] sm:$0xff]
    %v2600 = vld [vmem:[%s12 + $0x38] sm:$0xff]
    %v2601 = vld [vmem:[%s12 + $0x40] sm:$0xff]
    %v2602 = vld [vmem:[%s12 + $0x48] sm:$0xff]
    %v2603 = vld [vmem:[%s12 + $0x50] sm:$0xff]
    %v2604 = vld [vmem:[%s12 + $0x58] sm:$0xff]
    %v2605 = vld [vmem:[%s13] sm:$0xff]
    %v2606 = vld [vmem:[%s13 + $0x8] sm:$0xff]
    %v2607 = vld [vmem:[%s13 + $0x10] sm:$0xff]
    %v2608 = vld [vmem:[%s13 + $0x18] sm:$0xff]
    %v2609 = vld [vmem:[%s13 + $0x20] sm:$0xff]
    %v2610 = vld [vmem:[%s13 + $0x28] sm:$0xff]
    %v2611 = vld [vmem:[%s13 + $0x30] sm:$0xff]
    %v2612 = vld [vmem:[%s13 + $0x38] sm:$0xff]
    %v2613 = vld [vmem:[%s14] sm:$0xff]
    %v2614 = vld [vmem:[%s14 + $0x8] sm:$0xff]
    %v2615 = vld [vmem:[%s14 + $0x10] sm:$0xff]
    %v2616 = vld [vmem:[%s14 + $0x18] sm:$0xff]
    %v2617 = vld [vmem:[%s14 + $0x20] sm:$0xff]
    %v2618 = vld [vmem:[%s14 + $0x28] sm:$0xff]
    %v2619 = vld [vmem:[%s14 + $0x30] sm:$0xff]
    %v2620 = vld [vmem:[%s14 + $0x38] sm:$0xff]
    %v2621 = vld [vmem:[%s14 + $0x40] sm:$0xff]
    %v2622 = vld [vmem:[%s14 + $0x48] sm:$0xff]
    %v2623 = vld [vmem:[%s14 + $0x50] sm:$0xff]
    %v2624 = vld [vmem:[%s14 + $0x58] sm:$0xff]
    %v2625 = vld [vmem:[%s15] sm:$0xff]
    %v2626 = vld [vmem:[%s15 + $0x8] sm:$0xff]
    %v2627 = vld [vmem:[%s15 + $0x10] sm:$0xff]
    %v2628 = vld [vmem:[%s15 + $0x18] sm:$0xff]
    %v2629 = vld [vmem:[%s15 + $0x20] sm:$0xff]
    %v2630 = vld [vmem:[%s15 + $0x28] sm:$0xff]
    %v2631 = vld [vmem:[%s15 + $0x30] sm:$0xff]
    %v2632 = vld [vmem:[%s15 + $0x38] sm:$0xff]
    %v2633 = vld [vmem:[%s15 + $0x40] sm:$0xff]
    %v2634 = vld [vmem:[%s15 + $0x48] sm:$0xff]
    %v2635 = vld [vmem:[%s15 + $0x50] sm:$0xff]
    %v2636 = vld [vmem:[%s15 + $0x58] sm:$0xff]
    %v2637 = vld [vmem:[%s15 + $0x60] sm:$0xff]
    %v2638 = vld [vmem:[%s15 + $0x68] sm:$0xff]
    %v2639 = vld [vmem:[%s15 + $0x70] sm:$0xff]
    %v2640 = vld [vmem:[%s15 + $0x78] sm:$0xff]
    %v2641 = vld [vmem:[%s15 + $0x80] sm:$0xff]
    %v2642 = vld [vmem:[%s15 + $0x88] sm:$0xff]
    %v2643 = vld [vmem:[%s15 + $0x90] sm:$0xff]
    %v2644 = vld [vmem:[%s15 + $0x98] sm:$0xff]
    %v2645 = vld [vmem:[%s15 + $0xa0] sm:$0xff]
    %v2646 = vld [vmem:[%s15 + $0xa8] sm:$0xff]
    %v2647 = vld [vmem:[%s15 + $0xb0] sm:$0xff]
    %v2648 = vld [vmem:[%s15 + $0xb8] sm:$0xff]
    %v2649 = vsel %vm127, %v2576, 0.0
    %2650 = vadd.xlane.f32.xlu0 %v2649
    %v2651 = vpop.xlane.xlu0 %2650
    %v2652 = vsel %vm127, %v2581, 0.0
    %2653 = vadd.xlane.f32.xlu0 %v2652
    %v2654 = vpop.xlane.xlu0 %2653
    %v2655 = vsel %vm127, %v2582, 0.0
    %2656 = vadd.xlane.f32.xlu0 %v2655
    %v2657 = vpop.xlane.xlu0 %2656
    %v2658 = vsel %vm127, %v2584, 0.0
    %2659 = vadd.xlane.f32.xlu0 %v2658
    %v2660 = vpop.xlane.xlu0 %2659
    %v2661 = vrcp.pop 48.0
    %v2662 = vmul.f32 %v2651, %v2661
    %v2663 = vmul.f32 %v2654, %v2661
    %v2664 = vmul.f32 %v2657, %v2661
    %v2665 = vmul.f32 %v2660, %v2661
    %v2666 = vsub.f32 %v2576, %v2662
    %v2667 = vsub.f32 %v2581, %v2663
    %v2668 = vsub.f32 %v2582, %v2664
    %v2669 = vsub.f32 %v2584, %v2665
    %v2670 = vmul.f32 %v2666, %v2666
    %v2671 = vmul.f32 %v2667, %v2667
    %v2672 = vmul.f32 %v2668, %v2668
    %v2673 = vmul.f32 %v2669, %v2669
    %v2674 = vsel %vm127, %v2670, 0.0
    %2675 = vadd.xlane.f32.xlu0 %v2674
    %v2676 = vpop.xlane.xlu0 %2675
    %v2677 = vsel %vm127, %v2671, 0.0
    %2678 = vadd.xlane.f32.xlu0 %v2677
    %v2679 = vpop.xlane.xlu0 %2678
    %v2680 = vsel %vm127, %v2672, 0.0
    %2681 = vadd.xlane.f32.xlu0 %v2680
    %v2682 = vpop.xlane.xlu0 %2681
    %v2683 = vsel %vm127, %v2673, 0.0
    %2684 = vadd.xlane.f32.xlu0 %v2683
    %v2685 = vpop.xlane.xlu0 %2684
    %v2686 = vmul.f32 %v2676, %v2661
    %v2687 = vmul.f32 %v2679, %v2661
    %v2688 = vmul.f32 %v2682, %v2661
    %v2689 = vmul.f32 %v2685, %v2661
    %v2690 = vadd.f32 %v2686, 1e-05
    %v2691 = vadd.f32 %v2687, 1e-05
    %v2692 = vadd.f32 %v2688, 1e-05
    %v2693 = vadd.f32 %v2689, 1e-05
    %v2694 = vrsqrt.pop %v2690
    %v2695 = vrsqrt.pop %v2691
    %v2696 = vrsqrt.pop %v2692
    %v2697 = vrsqrt.pop %v2693
    %v2698 = vmul.f32 %v2666, %v2694
    %v2699 = vmul.f32 %v2667, %v2695
    %v2700 = vmul.f32 %v2668, %v2696
    %v2701 = vmul.f32 %v2669, %v2697
    %v2702 = vmul.f32 %v2698, %v2585
    %v2703 = vmul.f32 %v2699, %v2585
    %v2704 = vmul.f32 %v2700, %v2585
    %v2705 = vmul.f32 %v2701, %v2585
    %v2706 = vadd.f32 %v2702, %v2586
    %v2707 = vadd.f32 %v2703, %v2586
    %v2708 = vadd.f32 %v2704, %v2586
    %v2709 = vadd.f32 %v2705, %v2586
    %v2711 = vsel %vm127, %v2706, 0
    %v2714 = vsel %vm127, %v2707, 0
    %v2717 = vsel %vm127, %v2708, 0
    %v2720 = vsel %vm127, %v2709, 0
    %2722 = vmatprep.subr.mxu0 0.0
    %2723 = vmatpush1.msra.mxu0 0.0
    %2724 = vmatprep.subr.mxu0 0.0
    %2725 = vmatpush1.msra.mxu0 0.0
    %2726 = vmatprep.subr.mxu0 0.0
    %2727 = vmatpush1.msra.mxu0 0.0
    %2728 = vmatprep.subr.mxu0 0.0
    %2729 = vmatpush1.msra.mxu0 0.0
    %2730 = vmatprep.subr.mxu0 0.0
    %2731 = vmatpush1.msra.mxu0 0.0
    %2732 = vmatprep.subr.mxu0 0.0
    %2733 = vmatpush1.msra.mxu0 0.0
    %2734 = vmatprep.subr.mxu0 0.0
    %2735 = vmatpush1.msra.mxu0 0.0
    %2736 = vmatprep.subr.mxu0 0.0
    %2737 = vmatpush1.msra.mxu0 0.0
    %2738 = vmatprep.subr.mxu0 0.0
    %2739 = vmatpush1.msra.mxu0 0.0
    %2740 = vmatprep.subr.mxu0 0.0
    %2741 = vmatpush1.msra.mxu0 0.0
    %2742 = vmatprep.subr.mxu0 %v2604
    %2743 = vmatpush1.msra.mxu0 %v2603
    %2744 = vmatprep.subr.mxu0 %v2602
    %2745 = vmatpush1.msra.mxu0 %v2601
    %2746 = vmatprep.subr.mxu0 %v2600
    %2747 = vmatpush1.msra.mxu0 %v2599
    %2748 = vmatprep.subr.mxu0 %v2598
    %2749 = vmatpush1.msra.mxu0 %v2597
    %2750 = vmatprep.subr.mxu0 %v2596
    %2751 = vmatpush1.msra.mxu0 %v2595
    %2752 = vmatprep.subr.mxu0 %v2594
    %2753 = vmatpush1.msra.mxu0 %v2593
    %2754 = vmatprep.subr.mxu0 0.0
    %2755 = vmatpush2.msra.mxu0 0.0
    %2756 = vmatprep.subr.mxu0 0.0
    %2757 = vmatpush2.msra.mxu0 0.0
    %2758 = vmatprep.subr.mxu0 0.0
    %2759 = vmatpush2.msra.mxu0 0.0
    %2760 = vmatprep.subr.mxu0 0.0
    %2761 = vmatpush2.msra.mxu0 0.0
    %2762 = vmatprep.subr.mxu0 0.0
    %2763 = vmatpush2.msra.mxu0 0.0
    %2764 = vmatprep.subr.mxu0 0.0
    %2765 = vmatpush2.msra.mxu0 0.0
    %2766 = vmatprep.subr.mxu0 0.0
    %2767 = vmatpush2.msra.mxu0 0.0
    %2768 = vmatprep.subr.mxu0 0.0
    %2769 = vmatpush2.msra.mxu0 0.0
    %2770 = vmatprep.subr.mxu0 0.0
    %2771 = vmatpush2.msra.mxu0 0.0
    %2772 = vmatprep.subr.mxu0 0.0
    %2773 = vmatpush2.msra.mxu0 0.0
    %2774 = vmatprep.subr.mxu0 0.0
    %2775 = vmatpush2.msra.mxu0 0.0
    %2776 = vmatprep.subr.mxu0 0.0
    %2777 = vmatpush2.msra.mxu0 0.0
    %2778 = vmatprep.subr.mxu0 0.0
    %2779 = vmatpush2.msra.mxu0 0.0
    %2780 = vmatprep.subr.mxu0 0.0
    %2781 = vmatpush2.msra.mxu0 0.0
    %2782 = vmatprep.subr.mxu0 0.0
    %2783 = vmatpush2.msra.mxu0 0.0
    %2784 = vmatprep.subr.mxu0 0.0
    %2785 = vmatpush2.msra.mxu0 0.0
    %2786 = vmatprep.mubr.f32.mxu0 0.0
    %2787 = vmatmul.mubr.f32.gmra.mxu0 %v2711
    %v2788 = vpop.f32.mrf.mxu0
    %v2789 = vadd.f32 0.0, %v2788
    %v2790 = vpop.f32.mrf.mxu0
    %v2791 = vadd.f32 0.0, %v2790
    %2792 = vmatprep.mubr.f32.mxu0 0.0
    %2793 = vmatmul.mubr.f32.gmra.mxu0 %v2714
    %v2794 = vpop.f32.mrf.mxu0
    %v2795 = vadd.f32 0.0, %v2794
    %v2796 = vpop.f32.mrf.mxu0
    %v2797 = vadd.f32 0.0, %v2796
    %2798 = vmatprep.mubr.f32.mxu0 0.0
    %2799 = vmatmul.mubr.f32.gmra.mxu0 %v2717
    %v2800 = vpop.f32.mrf.mxu0
    %v2801 = vadd.f32 0.0, %v2800
    %v2802 = vpop.f32.mrf.mxu0
    %v2803 = vadd.f32 0.0, %v2802
    %2804 = vmatprep.mubr.f32.mxu0 0.0
    %2805 = vmatmul.mubr.f32.gmra.mxu0 %v2720
    %v2806 = vpop.f32.mrf.mxu0
    %v2807 = vadd.f32 0.0, %v2806
    %v2808 = vpop.f32.mrf.mxu0
    %v2809 = vadd.f32 0.0, %v2808
    %2810 = vdwg.mxu0
    %2813 = vrot.lane.b32.xlu0 %v2789, 64
    %v2814 = vpop.permute.xlu0 %2813
    %2815 = vrot.lane.b32.xlu0 %v2795, 64
    %v2816 = vpop.permute.xlu0 %2815
    %v2817 = vsel %vm227, %v2789, 0
    %v2819 = vsel %vm227, %v2795, 0
    %v2821 = vsel %vm227, %v2814, 0
    %v2823 = vsel %vm227, %v2816, 0
    %2825 = vmatprep.subr.mxu0 0.0
    %2826 = vmatpush1.xpose.msra.mxu0 0.0
    %2827 = vmatprep.subr.mxu0 0.0
    %2828 = vmatpush1.xpose.msra.mxu0 0.0
    %2829 = vmatprep.subr.mxu0 0.0
    %2830 = vmatpush1.xpose.msra.mxu0 0.0
    %2831 = vmatprep.subr.mxu0 0.0
    %2832 = vmatpush1.xpose.msra.mxu0 0.0
    %2833 = vmatprep.subr.mxu0 0.0
    %2834 = vmatpush1.xpose.msra.mxu0 0.0
    %2835 = vmatprep.subr.mxu0 0.0
    %2836 = vmatpush1.xpose.msra.mxu0 0.0
    %2837 = vmatprep.subr.mxu0 0.0
    %2838 = vmatpush1.xpose.msra.mxu0 0.0
    %2839 = vmatprep.subr.mxu0 0.0
    %2840 = vmatpush1.xpose.msra.mxu0 0.0
    %2841 = vmatprep.subr.mxu0 0.0
    %2842 = vmatpush1.xpose.msra.mxu0 0.0
    %2843 = vmatprep.subr.mxu0 0.0
    %2844 = vmatpush1.xpose.msra.mxu0 0.0
    %2845 = vmatprep.subr.mxu0 0.0
    %2846 = vmatpush1.xpose.msra.mxu0 0.0
    %2847 = vmatprep.subr.mxu0 0.0
    %2848 = vmatpush1.xpose.msra.mxu0 0.0
    %2849 = vmatprep.subr.mxu0 0.0
    %2850 = vmatpush1.xpose.msra.mxu0 0.0
    %2851 = vmatprep.subr.mxu0 0.0
    %2852 = vmatpush1.xpose.msra.mxu0 0.0
    %2853 = vmatprep.subr.mxu0 0.0
    %2854 = vmatpush1.xpose.msra.mxu0 %v2823
    %2855 = vmatprep.subr.mxu0 0.0
    %2856 = vmatpush1.xpose.msra.mxu0 %v2821
    %2857 = vmatprep.subr.mxu0 0.0
    %2858 = vmatpush2.xpose.msra.mxu0 0.0
    %2859 = vmatprep.subr.mxu0 0.0
    %2860 = vmatpush2.xpose.msra.mxu0 0.0
    %2861 = vmatprep.subr.mxu0 0.0
    %2862 = vmatpush2.xpose.msra.mxu0 0.0
    %2863 = vmatprep.subr.mxu0 0.0
    %2864 = vmatpush2.xpose.msra.mxu0 0.0
    %2865 = vmatprep.subr.mxu0 0.0
    %2866 = vmatpush2.xpose.msra.mxu0 0.0
    %2867 = vmatprep.subr.mxu0 0.0
    %2868 = vmatpush2.xpose.msra.mxu0 0.0
    %2869 = vmatprep.subr.mxu0 0.0
    %2870 = vmatpush2.xpose.msra.mxu0 0.0
    %2871 = vmatprep.subr.mxu0 0.0
    %2872 = vmatpush2.xpose.msra.mxu0 0.0
    %2873 = vmatprep.subr.mxu0 0.0
    %2874 = vmatpush2.xpose.msra.mxu0 0.0
    %2875 = vmatprep.subr.mxu0 0.0
    %2876 = vmatpush2.xpose.msra.mxu0 0.0
    %2877 = vmatprep.subr.mxu0 0.0
    %2878 = vmatpush2.xpose.msra.mxu0 0.0
    %2879 = vmatprep.subr.mxu0 0.0
    %2880 = vmatpush2.xpose.msra.mxu0 0.0
    %2881 = vmatprep.subr.mxu0 0.0
    %2882 = vmatpush2.xpose.msra.mxu0 0.0
    %2883 = vmatprep.subr.mxu0 0.0
    %2884 = vmatpush2.xpose.msra.mxu0 0.0
    %2885 = vmatprep.subr.mxu0 0.0
    %2886 = vmatpush2.xpose.msra.mxu0 0.0
    %2887 = vmatprep.subr.mxu0 0.0
    %2888 = vmatpush2.xpose.msra.mxu0 0.0
    %2889 = vmatprep.mubr.f32.mxu0 0.0
    %2890 = vmatmul.mubr.f32.gmra.mxu0 %v2817
    %v2891 = vpop.f32.mrf.mxu0
    %v2892 = vadd.f32 0.0, %v2891
    %v2893 = vpop.f32.mrf.mxu0
    %2894 = vmatprep.mubr.f32.mxu0 0.0
    %2895 = vmatmul.mubr.f32.gmra.mxu0 %v2819
    %v2896 = vpop.f32.mrf.mxu0
    %v2897 = vadd.f32 0.0, %v2896
    %v2898 = vpop.f32.mrf.mxu0
    %2899 = vdwg.mxu0
    %v2900 = vmul.f32 %v2892, 0.25
    %v2901 = vmul.f32 %v2897, 0.25
    %v2902 = vsel %vm227, %v2900, -inf
    %2903 = vmax.xlane.f32.xlu0 %v2902
    %v2904 = vpop.xlane.xlu0 %2903
    %v2905 = vsel %vm227, %v2901, -inf
    %2906 = vmax.xlane.f32.xlu0 %v2905
    %v2907 = vpop.xlane.xlu0 %2906
    %v2908 = vsub.f32 %v2900, %v2904
    %v2909 = vsub.f32 %v2901, %v2907
    %v2910 = vmul.f32 %v2908, 1.442695
    %v2911 = vpow.pop %v2910
    %v2912 = vmul.f32 %v2909, 1.442695
    %v2913 = vpow.pop %v2912
    %v2914 = vsel %vm227, %v2911, 0.0
    %2915 = vadd.xlane.f32.xlu0 %v2914
    %v2916 = vpop.xlane.xlu0 %2915
    %v2917 = vsel %vm227, %v2913, 0.0
    %2918 = vadd.xlane.f32.xlu0 %v2917
    %v2919 = vpop.xlane.xlu0 %2918
    %v2920 = vrcp.pop %v2916
    %v2921 = vrcp.pop %v2919
    %v2922 = vmul.f32 %v2911, %v2920
    %v2923 = vmul.f32 %v2913, %v2921
    %v2925 = vsel %vm227, %v2922, 0
    %v2928 = vsel %vm227, %v2923, 0
    %2930 = vmatprep.subr.mxu0 0.0
    %2931 = vmatpush1.msra.mxu0 0.0
    %2932 = vmatprep.subr.mxu0 0.0
    %2933 = vmatpush1.msra.mxu0 0.0
    %2934 = vmatprep.subr.mxu0 0.0
    %2935 = vmatpush1.msra.mxu0 0.0
    %2936 = vmatprep.subr.mxu0 0.0
    %2937 = vmatpush1.msra.mxu0 0.0
    %2938 = vmatprep.subr.mxu0 0.0
    %2939 = vmatpush1.msra.mxu0 0.0
    %2940 = vmatprep.subr.mxu0 0.0
    %2941 = vmatpush1.msra.mxu0 0.0
    %2942 = vmatprep.subr.mxu0 0.0
    %2943 = vmatpush1.msra.mxu0 0.0
    %2944 = vmatprep.subr.mxu0 0.0
    %2945 = vmatpush1.msra.mxu0 0.0
    %2946 = vmatprep.subr.mxu0 0.0
    %2947 = vmatpush1.msra.mxu0 0.0
    %2948 = vmatprep.subr.mxu0 0.0
    %2949 = vmatpush1.msra.mxu0 0.0
    %2950 = vmatprep.subr.mxu0 0.0
    %2951 = vmatpush1.msra.mxu0 0.0
    %2952 = vmatprep.subr.mxu0 0.0
    %2953 = vmatpush1.msra.mxu0 0.0
    %2954 = vmatprep.subr.mxu0 0.0
    %2955 = vmatpush1.msra.mxu0 0.0
    %2956 = vmatprep.subr.mxu0 0.0
    %2957 = vmatpush1.msra.mxu0 0.0
    %2958 = vmatprep.subr.mxu0 0.0
    %2959 = vmatpush1.msra.mxu0 %v2797
    %2960 = vmatprep.subr.mxu0 0.0
    %2961 = vmatpush1.msra.mxu0 %v2791
    %2962 = vmatprep.subr.mxu0 0.0
    %2963 = vmatpush2.msra.mxu0 0.0
    %2964 = vmatprep.subr.mxu0 0.0
    %2965 = vmatpush2.msra.mxu0 0.0
    %2966 = vmatprep.subr.mxu0 0.0
    %2967 = vmatpush2.msra.mxu0 0.0
    %2968 = vmatprep.subr.mxu0 0.0
    %2969 = vmatpush2.msra.mxu0 0.0
    %2970 = vmatprep.subr.mxu0 0.0
    %2971 = vmatpush2.msra.mxu0 0.0
    %2972 = vmatprep.subr.mxu0 0.0
    %2973 = vmatpush2.msra.mxu0 0.0
    %2974 = vmatprep.subr.mxu0 0.0
    %2975 = vmatpush2.msra.mxu0 0.0
    %2976 = vmatprep.subr.mxu0 0.0
    %2977 = vmatpush2.msra.mxu0 0.0
    %2978 = vmatprep.subr.mxu0 0.0
    %2979 = vmatpush2.msra.mxu0 0.0
    %2980 = vmatprep.subr.mxu0 0.0
    %2981 = vmatpush2.msra.mxu0 0.0
    %2982 = vmatprep.subr.mxu0 0.0
    %2983 = vmatpush2.msra.mxu0 0.0
    %2984 = vmatprep.subr.mxu0 0.0
    %2985 = vmatpush2.msra.mxu0 0.0
    %2986 = vmatprep.subr.mxu0 0.0
    %2987 = vmatpush2.msra.mxu0 0.0
    %2988 = vmatprep.subr.mxu0 0.0
    %2989 = vmatpush2.msra.mxu0 0.0
    %2990 = vmatprep.subr.mxu0 0.0
    %2991 = vmatpush2.msra.mxu0 0.0
    %2992 = vmatprep.subr.mxu0 0.0
    %2993 = vmatpush2.msra.mxu0 0.0
    %2994 = vmatprep.mubr.f32.mxu0 0.0
    %2995 = vmatmul.mubr.f32.gmra.mxu0 %v2925
    %v2996 = vpop.f32.mrf.mxu0
    %v2997 = vadd.f32 0.0, %v2996
    %v2998 = vpop.f32.mrf.mxu0
    %2999 = vmatprep.mubr.f32.mxu0 0.0
    %3000 = vmatmul.mubr.f32.gmra.mxu0 %v2928
    %v3001 = vpop.f32.mrf.mxu0
    %v3002 = vadd.f32 0.0, %v3001
    %v3003 = vpop.f32.mrf.mxu0
    %3004 = vdwg.mxu0
    %3005 = vrot.lane.b32.xlu0 %v2789, 112
    %v3006 = vpop.permute.xlu0 %3005
    %3007 = vrot.lane.b32.xlu0 %v2795, 112
    %v3008 = vpop.permute.xlu0 %3007
    %3009 = vrot.lane.b32.xlu0 %v2789, 48
    %v3010 = vpop.permute.xlu0 %3009
    %3011 = vrot.lane.b32.xlu0 %v2795, 48
    %v3012 = vpop.permute.xlu0 %3011
    %v3013 = vsel %vm227, %v3006, 0
    %v3015 = vsel %vm227, %v3008, 0
    %v3017 = vsel %vm227, %v3010, 0
    %v3019 = vsel %vm227, %v3012, 0
    %3021 = vmatprep.subr.mxu0 0.0
    %3022 = vmatpush1.xpose.msra.mxu0 0.0
    %3023 = vmatprep.subr.mxu0 0.0
    %3024 = vmatpush1.xpose.msra.mxu0 0.0
    %3025 = vmatprep.subr.mxu0 0.0
    %3026 = vmatpush1.xpose.msra.mxu0 0.0
    %3027 = vmatprep.subr.mxu0 0.0
    %3028 = vmatpush1.xpose.msra.mxu0 0.0
    %3029 = vmatprep.subr.mxu0 0.0
    %3030 = vmatpush1.xpose.msra.mxu0 0.0
    %3031 = vmatprep.subr.mxu0 0.0
    %3032 = vmatpush1.xpose.msra.mxu0 0.0
    %3033 = vmatprep.subr.mxu0 0.0
    %3034 = vmatpush1.xpose.msra.mxu0 0.0
    %3035 = vmatprep.subr.mxu0 0.0
    %3036 = vmatpush1.xpose.msra.mxu0 0.0
    %3037 = vmatprep.subr.mxu0 0.0
    %3038 = vmatpush1.xpose.msra.mxu0 0.0
    %3039 = vmatprep.subr.mxu0 0.0
    %3040 = vmatpush1.xpose.msra.mxu0 0.0
    %3041 = vmatprep.subr.mxu0 0.0
    %3042 = vmatpush1.xpose.msra.mxu0 0.0
    %3043 = vmatprep.subr.mxu0 0.0
    %3044 = vmatpush1.xpose.msra.mxu0 0.0
    %3045 = vmatprep.subr.mxu0 0.0
    %3046 = vmatpush1.xpose.msra.mxu0 0.0
    %3047 = vmatprep.subr.mxu0 0.0
    %3048 = vmatpush1.xpose.msra.mxu0 0.0
    %3049 = vmatprep.subr.mxu0 0.0
    %3050 = vmatpush1.xpose.msra.mxu0 %v3019
    %3051 = vmatprep.subr.mxu0 0.0
    %3052 = vmatpush1.xpose.msra.mxu0 %v3017
    %3053 = vmatprep.subr.mxu0 0.0
    %3054 = vmatpush2.xpose.msra.mxu0 0.0
    %3055 = vmatprep.subr.mxu0 0.0
    %3056 = vmatpush2.xpose.msra.mxu0 0.0
    %3057 = vmatprep.subr.mxu0 0.0
    %3058 = vmatpush2.xpose.msra.mxu0 0.0
    %3059 = vmatprep.subr.mxu0 0.0
    %3060 = vmatpush2.xpose.msra.mxu0 0.0
    %3061 = vmatprep.subr.mxu0 0.0
    %3062 = vmatpush2.xpose.msra.mxu0 0.0
    %3063 = vmatprep.subr.mxu0 0.0
    %3064 = vmatpush2.xpose.msra.mxu0 0.0
    %3065 = vmatprep.subr.mxu0 0.0
    %3066 = vmatpush2.xpose.msra.mxu0 0.0
    %3067 = vmatprep.subr.mxu0 0.0
    %3068 = vmatpush2.xpose.msra.mxu0 0.0
    %3069 = vmatprep.subr.mxu0 0.0
    %3070 = vmatpush2.xpose.msra.mxu0 0.0
    %3071 = vmatprep.subr.mxu0 0.0
    %3072 = vmatpush2.xpose.msra.mxu0 0.0
    %3073 = vmatprep.subr.mxu0 0.0
    %3074 = vmatpush2.xpose.msra.mxu0 0.0
    %3075 = vmatprep.subr.mxu0 0.0
    %3076 = vmatpush2.xpose.msra.mxu0 0.0
    %3077 = vmatprep.subr.mxu0 0.0
    %3078 = vmatpush2.xpose.msra.mxu0 0.0
    %3079 = vmatprep.subr.mxu0 0.0
    %3080 = vmatpush2.xpose.msra.mxu0 0.0
    %3081 = vmatprep.subr.mxu0 0.0
    %3082 = vmatpush2.xpose.msra.mxu0 0.0
    %3083 = vmatprep.subr.mxu0 0.0
    %3084 = vmatpush2.xpose.msra.mxu0 0.0
    %3085 = vmatprep.mubr.f32.mxu0 0.0
    %3086 = vmatmul.mubr.f32.gmra.mxu0 %v3013
    %v3087 = vpop.f32.mrf.mxu0
    %v3088 = vadd.f32 0.0, %v3087
    %v3089 = vpop.f32.mrf.mxu0
    %3090 = vmatprep.mubr.f32.mxu0 0.0
    %3091 = vmatmul.mubr.f32.gmra.mxu0 %v3015
    %v3092 = vpop.f32.mrf.mxu0
    %v3093 = vadd.f32 0.0, %v3092
    %v3094 = vpop.f32.mrf.mxu0
    %3095 = vdwg.mxu0
    %v3096 = vmul.f32 %v3088, 0.25
    %v3097 = vmul.f32 %v3093, 0.25
    %v3098 = vsel %vm227, %v3096, -inf
    %3099 = vmax.xlane.f32.xlu0 %v3098
    %v3100 = vpop.xlane.xlu0 %3099
    %v3101 = vsel %vm227, %v3097, -inf
    %3102 = vmax.xlane.f32.xlu0 %v3101
    %v3103 = vpop.xlane.xlu0 %3102
    %v3104 = vsub.f32 %v3096, %v3100
    %v3105 = vsub.f32 %v3097, %v3103
    %v3106 = vmul.f32 %v3104, 1.442695
    %v3107 = vpow.pop %v3106
    %v3108 = vmul.f32 %v3105, 1.442695
    %v3109 = vpow.pop %v3108
    %v3110 = vsel %vm227, %v3107, 0.0
    %3111 = vadd.xlane.f32.xlu0 %v3110
    %v3112 = vpop.xlane.xlu0 %3111
    %v3113 = vsel %vm227, %v3109, 0.0
    %3114 = vadd.xlane.f32.xlu0 %v3113
    %v3115 = vpop.xlane.xlu0 %3114
    %v3116 = vrcp.pop %v3112
    %v3117 = vrcp.pop %v3115
    %v3118 = vmul.f32 %v3107, %v3116
    %v3119 = vmul.f32 %v3109, %v3117
    %3122 = vrot.lane.b32.xlu0 %v2791, 112
    %v3123 = vpop.permute.xlu0 %3122
    %3124 = vrot.lane.b32.xlu0 %v2797, 112
    %v3125 = vpop.permute.xlu0 %3124
    %v3129 = vsel %vm227, %v3118, 0
    %v3132 = vsel %vm227, %v3119, 0
    %3134 = vmatprep.subr.mxu0 0.0
    %3135 = vmatpush1.msra.mxu0 0.0
    %3136 = vmatprep.subr.mxu0 0.0
    %3137 = vmatpush1.msra.mxu0 0.0
    %3138 = vmatprep.subr.mxu0 0.0
    %3139 = vmatpush1.msra.mxu0 0.0
    %3140 = vmatprep.subr.mxu0 0.0
    %3141 = vmatpush1.msra.mxu0 0.0
    %3142 = vmatprep.subr.mxu0 0.0
    %3143 = vmatpush1.msra.mxu0 0.0
    %3144 = vmatprep.subr.mxu0 0.0
    %3145 = vmatpush1.msra.mxu0 0.0
    %3146 = vmatprep.subr.mxu0 0.0
    %3147 = vmatpush1.msra.mxu0 0.0
    %3148 = vmatprep.subr.mxu0 0.0
    %3149 = vmatpush1.msra.mxu0 0.0
    %3150 = vmatprep.subr.mxu0 0.0
    %3151 = vmatpush1.msra.mxu0 0.0
    %3152 = vmatprep.subr.mxu0 0.0
    %3153 = vmatpush1.msra.mxu0 0.0
    %3154 = vmatprep.subr.mxu0 0.0
    %3155 = vmatpush1.msra.mxu0 0.0
    %3156 = vmatprep.subr.mxu0 0.0
    %3157 = vmatpush1.msra.mxu0 0.0
    %3158 = vmatprep.subr.mxu0 0.0
    %3159 = vmatpush1.msra.mxu0 0.0
    %3160 = vmatprep.subr.mxu0 0.0
    %3161 = vmatpush1.msra.mxu0 0.0
    %3162 = vmatprep.subr.mxu0 0.0
    %3163 = vmatpush1.msra.mxu0 %v3125
    %3164 = vmatprep.subr.mxu0 0.0
    %3165 = vmatpush1.msra.mxu0 %v3123
    %3166 = vmatprep.subr.mxu0 0.0
    %3167 = vmatpush2.msra.mxu0 0.0
    %3168 = vmatprep.subr.mxu0 0.0
    %3169 = vmatpush2.msra.mxu0 0.0
    %3170 = vmatprep.subr.mxu0 0.0
    %3171 = vmatpush2.msra.mxu0 0.0
    %3172 = vmatprep.subr.mxu0 0.0
    %3173 = vmatpush2.msra.mxu0 0.0
    %3174 = vmatprep.subr.mxu0 0.0
    %3175 = vmatpush2.msra.mxu0 0.0
    %3176 = vmatprep.subr.mxu0 0.0
    %3177 = vmatpush2.msra.mxu0 0.0
    %3178 = vmatprep.subr.mxu0 0.0
    %3179 = vmatpush2.msra.mxu0 0.0
    %3180 = vmatprep.subr.mxu0 0.0
    %3181 = vmatpush2.msra.mxu0 0.0
    %3182 = vmatprep.subr.mxu0 0.0
    %3183 = vmatpush2.msra.mxu0 0.0
    %3184 = vmatprep.subr.mxu0 0.0
    %3185 = vmatpush2.msra.mxu0 0.0
    %3186 = vmatprep.subr.mxu0 0.0
    %3187 = vmatpush2.msra.mxu0 0.0
    %3188 = vmatprep.subr.mxu0 0.0
    %3189 = vmatpush2.msra.mxu0 0.0
    %3190 = vmatprep.subr.mxu0 0.0
    %3191 = vmatpush2.msra.mxu0 0.0
    %3192 = vmatprep.subr.mxu0 0.0
    %3193 = vmatpush2.msra.mxu0 0.0
    %3194 = vmatprep.subr.mxu0 0.0
    %3195 = vmatpush2.msra.mxu0 0.0
    %3196 = vmatprep.subr.mxu0 0.0
    %3197 = vmatpush2.msra.mxu0 0.0
    %3198 = vmatprep.mubr.f32.mxu0 0.0
    %3199 = vmatmul.mubr.f32.gmra.mxu0 %v3129
    %v3200 = vpop.f32.mrf.mxu0
    %v3201 = vadd.f32 0.0, %v3200
    %v3202 = vpop.f32.mrf.mxu0
    %3203 = vmatprep.mubr.f32.mxu0 0.0
    %3204 = vmatmul.mubr.f32.gmra.mxu0 %v3132
    %v3205 = vpop.f32.mrf.mxu0
    %v3206 = vadd.f32 0.0, %v3205
    %v3207 = vpop.f32.mrf.mxu0
    %3208 = vdwg.mxu0
    %3209 = vrot.lane.b32.xlu0 %v2789, 96
    %v3210 = vpop.permute.xlu0 %3209
    %3211 = vrot.lane.b32.xlu0 %v2795, 96
    %v3212 = vpop.permute.xlu0 %3211
    %3213 = vrot.lane.b32.xlu0 %v2789, 32
    %v3214 = vpop.permute.xlu0 %3213
    %3215 = vrot.lane.b32.xlu0 %v2795, 32
    %v3216 = vpop.permute.xlu0 %3215
    %v3217 = vsel %vm227, %v3210, 0
    %v3219 = vsel %vm227, %v3212, 0
    %v3221 = vsel %vm227, %v3214, 0
    %v3223 = vsel %vm227, %v3216, 0
    %3225 = vmatprep.subr.mxu0 0.0
    %3226 = vmatpush1.xpose.msra.mxu0 0.0
    %3227 = vmatprep.subr.mxu0 0.0
    %3228 = vmatpush1.xpose.msra.mxu0 0.0
    %3229 = vmatprep.subr.mxu0 0.0
    %3230 = vmatpush1.xpose.msra.mxu0 0.0
    %3231 = vmatprep.subr.mxu0 0.0
    %3232 = vmatpush1.xpose.msra.mxu0 0.0
    %3233 = vmatprep.subr.mxu0 0.0
    %3234 = vmatpush1.xpose.msra.mxu0 0.0
    %3235 = vmatprep.subr.mxu0 0.0
    %3236 = vmatpush1.xpose.msra.mxu0 0.0
    %3237 = vmatprep.subr.mxu0 0.0
    %3238 = vmatpush1.xpose.msra.mxu0 0.0
    %3239 = vmatprep.subr.mxu0 0.0
    %3240 = vmatpush1.xpose.msra.mxu0 0.0
    %3241 = vmatprep.subr.mxu0 0.0
    %3242 = vmatpush1.xpose.msra.mxu0 0.0
    %3243 = vmatprep.subr.mxu0 0.0
    %3244 = vmatpush1.xpose.msra.mxu0 0.0
    %3245 = vmatprep.subr.mxu0 0.0
    %3246 = vmatpush1.xpose.msra.mxu0 0.0
    %3247 = vmatprep.subr.mxu0 0.0
    %3248 = vmatpush1.xpose.msra.mxu0 0.0
    %3249 = vmatprep.subr.mxu0 0.0
    %3250 = vmatpush1.xpose.msra.mxu0 0.0
    %3251 = vmatprep.subr.mxu0 0.0
    %3252 = vmatpush1.xpose.msra.mxu0 0.0
    %3253 = vmatprep.subr.mxu0 0.0
    %3254 = vmatpush1.xpose.msra.mxu0 %v3223
    %3255 = vmatprep.subr.mxu0 0.0
    %3256 = vmatpush1.xpose.msra.mxu0 %v3221
    %3257 = vmatprep.subr.mxu0 0.0
    %3258 = vmatpush2.xpose.msra.mxu0 0.0
    %3259 = vmatprep.subr.mxu0 0.0
    %3260 = vmatpush2.xpose.msra.mxu0 0.0
    %3261 = vmatprep.subr.mxu0 0.0
    %3262 = vmatpush2.xpose.msra.mxu0 0.0
    %3263 = vmatprep.subr.mxu0 0.0
    %3264 = vmatpush2.xpose.msra.mxu0 0.0
    %3265 = vmatprep.subr.mxu0 0.0
    %3266 = vmatpush2.xpose.msra.mxu0 0.0
    %3267 = vmatprep.subr.mxu0 0.0
    %3268 = vmatpush2.xpose.msra.mxu0 0.0
    %3269 = vmatprep.subr.mxu0 0.0
    %3270 = vmatpush2.xpose.msra.mxu0 0.0
    %3271 = vmatprep.subr.mxu0 0.0
    %3272 = vmatpush2.xpose.msra.mxu0 0.0
    %3273 = vmatprep.subr.mxu0 0.0
    %3274 = vmatpush2.xpose.msra.mxu0 0.0
    %3275 = vmatprep.subr.mxu0 0.0
    %3276 = vmatpush2.xpose.msra.mxu0 0.0
    %3277 = vmatprep.subr.mxu0 0.0
    %3278 = vmatpush2.xpose.msra.mxu0 0.0
    %3279 = vmatprep.subr.mxu0 0.0
    %3280 = vmatpush2.xpose.msra.mxu0 0.0
    %3281 = vmatprep.subr.mxu0 0.0
    %3282 = vmatpush2.xpose.msra.mxu0 0.0
    %3283 = vmatprep.subr.mxu0 0.0
    %3284 = vmatpush2.xpose.msra.mxu0 0.0
    %3285 = vmatprep.subr.mxu0 0.0
    %3286 = vmatpush2.xpose.msra.mxu0 0.0
    %3287 = vmatprep.subr.mxu0 0.0
    %3288 = vmatpush2.xpose.msra.mxu0 0.0
    %3289 = vmatprep.mubr.f32.mxu0 0.0
    %3290 = vmatmul.mubr.f32.gmra.mxu0 %v3217
    %v3291 = vpop.f32.mrf.mxu0
    %v3292 = vadd.f32 0.0, %v3291
    %v3293 = vpop.f32.mrf.mxu0
    %3294 = vmatprep.mubr.f32.mxu0 0.0
    %3295 = vmatmul.mubr.f32.gmra.mxu0 %v3219
    %v3296 = vpop.f32.mrf.mxu0
    %v3297 = vadd.f32 0.0, %v3296
    %v3298 = vpop.f32.mrf.mxu0
    %3299 = vdwg.mxu0
    %v3300 = vmul.f32 %v3292, 0.25
    %v3301 = vmul.f32 %v3297, 0.25
    %v3302 = vsel %vm227, %v3300, -inf
    %3303 = vmax.xlane.f32.xlu0 %v3302
    %v3304 = vpop.xlane.xlu0 %3303
    %v3305 = vsel %vm227, %v3301, -inf
    %3306 = vmax.xlane.f32.xlu0 %v3305
    %v3307 = vpop.xlane.xlu0 %3306
    %v3308 = vsub.f32 %v3300, %v3304
    %v3309 = vsub.f32 %v3301, %v3307
    %v3310 = vmul.f32 %v3308, 1.442695
    %v3311 = vpow.pop %v3310
    %v3312 = vmul.f32 %v3309, 1.442695
    %v3313 = vpow.pop %v3312
    %v3314 = vsel %vm227, %v3311, 0.0
    %3315 = vadd.xlane.f32.xlu0 %v3314
    %v3316 = vpop.xlane.xlu0 %3315
    %v3317 = vsel %vm227, %v3313, 0.0
    %3318 = vadd.xlane.f32.xlu0 %v3317
    %v3319 = vpop.xlane.xlu0 %3318
    %v3320 = vrcp.pop %v3316
    %v3321 = vrcp.pop %v3319
    %v3322 = vmul.f32 %v3311, %v3320
    %v3323 = vmul.f32 %v3313, %v3321
    %3324 = vrot.lane.b32.xlu0 %v2791, 96
    %v3325 = vpop.permute.xlu0 %3324
    %3326 = vrot.lane.b32.xlu0 %v2797, 96
    %v3327 = vpop.permute.xlu0 %3326
    %v3331 = vsel %vm227, %v3322, 0
    %v3334 = vsel %vm227, %v3323, 0
    %3336 = vmatprep.subr.mxu0 0.0
    %3337 = vmatpush1.msra.mxu0 0.0
    %3338 = vmatprep.subr.mxu0 0.0
    %3339 = vmatpush1.msra.mxu0 0.0
    %3340 = vmatprep.subr.mxu0 0.0
    %3341 = vmatpush1.msra.mxu0 0.0
    %3342 = vmatprep.subr.mxu0 0.0
    %3343 = vmatpush1.msra.mxu0 0.0
    %3344 = vmatprep.subr.mxu0 0.0
    %3345 = vmatpush1.msra.mxu0 0.0
    %3346 = vmatprep.subr.mxu0 0.0
    %3347 = vmatpush1.msra.mxu0 0.0
    %3348 = vmatprep.subr.mxu0 0.0
    %3349 = vmatpush1.msra.mxu0 0.0
    %3350 = vmatprep.subr.mxu0 0.0
    %3351 = vmatpush1.msra.mxu0 0.0
    %3352 = vmatprep.subr.mxu0 0.0
    %3353 = vmatpush1.msra.mxu0 0.0
    %3354 = vmatprep.subr.mxu0 0.0
    %3355 = vmatpush1.msra.mxu0 0.0
    %3356 = vmatprep.subr.mxu0 0.0
    %3357 = vmatpush1.msra.mxu0 0.0
    %3358 = vmatprep.subr.mxu0 0.0
    %3359 = vmatpush1.msra.mxu0 0.0
    %3360 = vmatprep.subr.mxu0 0.0
    %3361 = vmatpush1.msra.mxu0 0.0
    %3362 = vmatprep.subr.mxu0 0.0
    %3363 = vmatpush1.msra.mxu0 0.0
    %3364 = vmatprep.subr.mxu0 0.0
    %3365 = vmatpush1.msra.mxu0 %v3327
    %3366 = vmatprep.subr.mxu0 0.0
    %3367 = vmatpush1.msra.mxu0 %v3325
    %3368 = vmatprep.subr.mxu0 0.0
    %3369 = vmatpush2.msra.mxu0 0.0
    %3370 = vmatprep.subr.mxu0 0.0
    %3371 = vmatpush2.msra.mxu0 0.0
    %3372 = vmatprep.subr.mxu0 0.0
    %3373 = vmatpush2.msra.mxu0 0.0
    %3374 = vmatprep.subr.mxu0 0.0
    %3375 = vmatpush2.msra.mxu0 0.0
    %3376 = vmatprep.subr.mxu0 0.0
    %3377 = vmatpush2.msra.mxu0 0.0
    %3378 = vmatprep.subr.mxu0 0.0
    %3379 = vmatpush2.msra.mxu0 0.0
    %3380 = vmatprep.subr.mxu0 0.0
    %3381 = vmatpush2.msra.mxu0 0.0
    %3382 = vmatprep.subr.mxu0 0.0
    %3383 = vmatpush2.msra.mxu0 0.0
    %3384 = vmatprep.subr.mxu0 0.0
    %3385 = vmatpush2.msra.mxu0 0.0
    %3386 = vmatprep.subr.mxu0 0.0
    %3387 = vmatpush2.msra.mxu0 0.0
    %3388 = vmatprep.subr.mxu0 0.0
    %3389 = vmatpush2.msra.mxu0 0.0
    %3390 = vmatprep.subr.mxu0 0.0
    %3391 = vmatpush2.msra.mxu0 0.0
    %3392 = vmatprep.subr.mxu0 0.0
    %3393 = vmatpush2.msra.mxu0 0.0
    %3394 = vmatprep.subr.mxu0 0.0
    %3395 = vmatpush2.msra.mxu0 0.0
    %3396 = vmatprep.subr.mxu0 0.0
    %3397 = vmatpush2.msra.mxu0 0.0
    %3398 = vmatprep.subr.mxu0 0.0
    %3399 = vmatpush2.msra.mxu0 0.0
    %3400 = vmatprep.mubr.f32.mxu0 0.0
    %3401 = vmatmul.mubr.f32.gmra.mxu0 %v3331
    %v3402 = vpop.f32.mrf.mxu0
    %v3403 = vadd.f32 0.0, %v3402
    %v3404 = vpop.f32.mrf.mxu0
    %3405 = vmatprep.mubr.f32.mxu0 0.0
    %3406 = vmatmul.mubr.f32.gmra.mxu0 %v3334
    %v3407 = vpop.f32.mrf.mxu0
    %v3408 = vadd.f32 0.0, %v3407
    %v3409 = vpop.f32.mrf.mxu0
    %3410 = vdwg.mxu0
    %3411 = vrot.lane.b32.xlu0 %v2789, 80
    %v3412 = vpop.permute.xlu0 %3411
    %3413 = vrot.lane.b32.xlu0 %v2795, 80
    %v3414 = vpop.permute.xlu0 %3413
    %3415 = vrot.lane.b32.xlu0 %v2789, 16
    %v3416 = vpop.permute.xlu0 %3415
    %3417 = vrot.lane.b32.xlu0 %v2795, 16
    %v3418 = vpop.permute.xlu0 %3417
    %v3419 = vsel %vm227, %v3412, 0
    %v3421 = vsel %vm227, %v3414, 0
    %v3423 = vsel %vm227, %v3416, 0
    %v3425 = vsel %vm227, %v3418, 0
    %3427 = vmatprep.subr.mxu0 0.0
    %3428 = vmatpush1.xpose.msra.mxu0 0.0
    %3429 = vmatprep.subr.mxu0 0.0
    %3430 = vmatpush1.xpose.msra.mxu0 0.0
    %3431 = vmatprep.subr.mxu0 0.0
    %3432 = vmatpush1.xpose.msra.mxu0 0.0
    %3433 = vmatprep.subr.mxu0 0.0
    %3434 = vmatpush1.xpose.msra.mxu0 0.0
    %3435 = vmatprep.subr.mxu0 0.0
    %3436 = vmatpush1.xpose.msra.mxu0 0.0
    %3437 = vmatprep.subr.mxu0 0.0
    %3438 = vmatpush1.xpose.msra.mxu0 0.0
    %3439 = vmatprep.subr.mxu0 0.0
    %3440 = vmatpush1.xpose.msra.mxu0 0.0
    %3441 = vmatprep.subr.mxu0 0.0
    %3442 = vmatpush1.xpose.msra.mxu0 0.0
    %3443 = vmatprep.subr.mxu0 0.0
    %3444 = vmatpush1.xpose.msra.mxu0 0.0
    %3445 = vmatprep.subr.mxu0 0.0
    %3446 = vmatpush1.xpose.msra.mxu0 0.0
    %3447 = vmatprep.subr.mxu0 0.0
    %3448 = vmatpush1.xpose.msra.mxu0 0.0
    %3449 = vmatprep.subr.mxu0 0.0
    %3450 = vmatpush1.xpose.msra.mxu0 0.0
    %3451 = vmatprep.subr.mxu0 0.0
    %3452 = vmatpush1.xpose.msra.mxu0 0.0
    %3453 = vmatprep.subr.mxu0 0.0
    %3454 = vmatpush1.xpose.msra.mxu0 0.0
    %3455 = vmatprep.subr.mxu0 0.0
    %3456 = vmatpush1.xpose.msra.mxu0 %v3425
    %3457 = vmatprep.subr.mxu0 0.0
    %3458 = vmatpush1.xpose.msra.mxu0 %v3423
    %3459 = vmatprep.subr.mxu0 0.0
    %3460 = vmatpush2.xpose.msra.mxu0 0.0
    %3461 = vmatprep.subr.mxu0 0.0
    %3462 = vmatpush2.xpose.msra.mxu0 0.0
    %3463 = vmatprep.subr.mxu0 0.0
    %3464 = vmatpush2.xpose.msra.mxu0 0.0
    %3465 = vmatprep.subr.mxu0 0.0
    %3466 = vmatpush2.xpose.msra.mxu0 0.0
    %3467 = vmatprep.subr.mxu0 0.0
    %3468 = vmatpush2.xpose.msra.mxu0 0.0
    %3469 = vmatprep.subr.mxu0 0.0
    %3470 = vmatpush2.xpose.msra.mxu0 0.0
    %3471 = vmatprep.subr.mxu0 0.0
    %3472 = vmatpush2.xpose.msra.mxu0 0.0
    %3473 = vmatprep.subr.mxu0 0.0
    %3474 = vmatpush2.xpose.msra.mxu0 0.0
    %3475 = vmatprep.subr.mxu0 0.0
    %3476 = vmatpush2.xpose.msra.mxu0 0.0
    %3477 = vmatprep.subr.mxu0 0.0
    %3478 = vmatpush2.xpose.msra.mxu0 0.0
    %3479 = vmatprep.subr.mxu0 0.0
    %3480 = vmatpush2.xpose.msra.mxu0 0.0
    %3481 = vmatprep.subr.mxu0 0.0
    %3482 = vmatpush2.xpose.msra.mxu0 0.0
    %3483 = vmatprep.subr.mxu0 0.0
    %3484 = vmatpush2.xpose.msra.mxu0 0.0
    %3485 = vmatprep.subr.mxu0 0.0
    %3486 = vmatpush2.xpose.msra.mxu0 0.0
    %3487 = vmatprep.subr.mxu0 0.0
    %3488 = vmatpush2.xpose.msra.mxu0 0.0
    %3489 = vmatprep.subr.mxu0 0.0
    %3490 = vmatpush2.xpose.msra.mxu0 0.0
    %3491 = vmatprep.mubr.f32.mxu0 0.0
    %3492 = vmatmul.mubr.f32.gmra.mxu0 %v3419
    %v3493 = vpop.f32.mrf.mxu0
    %v3494 = vadd.f32 0.0, %v3493
    %v3495 = vpop.f32.mrf.mxu0
    %3496 = vmatprep.mubr.f32.mxu0 0.0
    %3497 = vmatmul.mubr.f32.gmra.mxu0 %v3421
    %v3498 = vpop.f32.mrf.mxu0
    %v3499 = vadd.f32 0.0, %v3498
    %v3500 = vpop.f32.mrf.mxu0
    %3501 = vdwg.mxu0
    %v3502 = vmul.f32 %v3494, 0.25
    %v3503 = vmul.f32 %v3499, 0.25
    %v3504 = vsel %vm227, %v3502, -inf
    %3505 = vmax.xlane.f32.xlu0 %v3504
    %v3506 = vpop.xlane.xlu0 %3505
    %v3507 = vsel %vm227, %v3503, -inf
    %3508 = vmax.xlane.f32.xlu0 %v3507
    %v3509 = vpop.xlane.xlu0 %3508
    %v3510 = vsub.f32 %v3502, %v3506
    %v3511 = vsub.f32 %v3503, %v3509
    %v3512 = vmul.f32 %v3510, 1.442695
    %v3513 = vpow.pop %v3512
    %v3514 = vmul.f32 %v3511, 1.442695
    %v3515 = vpow.pop %v3514
    %v3516 = vsel %vm227, %v3513, 0.0
    %3517 = vadd.xlane.f32.xlu0 %v3516
    %v3518 = vpop.xlane.xlu0 %3517
    %v3519 = vsel %vm227, %v3515, 0.0
    %3520 = vadd.xlane.f32.xlu0 %v3519
    %v3521 = vpop.xlane.xlu0 %3520
    %v3522 = vrcp.pop %v3518
    %v3523 = vrcp.pop %v3521
    %v3524 = vmul.f32 %v3513, %v3522
    %v3525 = vmul.f32 %v3515, %v3523
    %3526 = vrot.lane.b32.xlu0 %v2791, 80
    %v3527 = vpop.permute.xlu0 %3526
    %3528 = vrot.lane.b32.xlu0 %v2797, 80
    %v3529 = vpop.permute.xlu0 %3528
    %v3533 = vsel %vm227, %v3524, 0
    %v3536 = vsel %vm227, %v3525, 0
    %3538 = vmatprep.subr.mxu0 0.0
    %3539 = vmatpush1.msra.mxu0 0.0
    %3540 = vmatprep.subr.mxu0 0.0
    %3541 = vmatpush1.msra.mxu0 0.0
    %3542 = vmatprep.subr.mxu0 0.0
    %3543 = vmatpush1.msra.mxu0 0.0
    %3544 = vmatprep.subr.mxu0 0.0
    %3545 = vmatpush1.msra.mxu0 0.0
    %3546 = vmatprep.subr.mxu0 0.0
    %3547 = vmatpush1.msra.mxu0 0.0
    %3548 = vmatprep.subr.mxu0 0.0
    %3549 = vmatpush1.msra.mxu0 0.0
    %3550 = vmatprep.subr.mxu0 0.0
    %3551 = vmatpush1.msra.mxu0 0.0
    %3552 = vmatprep.subr.mxu0 0.0
    %3553 = vmatpush1.msra.mxu0 0.0
    %3554 = vmatprep.subr.mxu0 0.0
    %3555 = vmatpush1.msra.mxu0 0.0
    %3556 = vmatprep.subr.mxu0 0.0
    %3557 = vmatpush1.msra.mxu0 0.0
    %3558 = vmatprep.subr.mxu0 0.0
    %3559 = vmatpush1.msra.mxu0 0.0
    %3560 = vmatprep.subr.mxu0 0.0
    %3561 = vmatpush1.msra.mxu0 0.0
    %3562 = vmatprep.subr.mxu0 0.0
    %3563 = vmatpush1.msra.mxu0 0.0
    %3564 = vmatprep.subr.mxu0 0.0
    %3565 = vmatpush1.msra.mxu0 0.0
    %3566 = vmatprep.subr.mxu0 0.0
    %3567 = vmatpush1.msra.mxu0 %v3529
    %3568 = vmatprep.subr.mxu0 0.0
    %3569 = vmatpush1.msra.mxu0 %v3527
    %3570 = vmatprep.subr.mxu0 0.0
    %3571 = vmatpush2.msra.mxu0 0.0
    %3572 = vmatprep.subr.mxu0 0.0
    %3573 = vmatpush2.msra.mxu0 0.0
    %3574 = vmatprep.subr.mxu0 0.0
    %3575 = vmatpush2.msra.mxu0 0.0
    %3576 = vmatprep.subr.mxu0 0.0
    %3577 = vmatpush2.msra.mxu0 0.0
    %3578 = vmatprep.subr.mxu0 0.0
    %3579 = vmatpush2.msra.mxu0 0.0
    %3580 = vmatprep.subr.mxu0 0.0
    %3581 = vmatpush2.msra.mxu0 0.0
    %3582 = vmatprep.subr.mxu0 0.0
    %3583 = vmatpush2.msra.mxu0 0.0
    %3584 = vmatprep.subr.mxu0 0.0
    %3585 = vmatpush2.msra.mxu0 0.0
    %3586 = vmatprep.subr.mxu0 0.0
    %3587 = vmatpush2.msra.mxu0 0.0
    %3588 = vmatprep.subr.mxu0 0.0
    %3589 = vmatpush2.msra.mxu0 0.0
    %3590 = vmatprep.subr.mxu0 0.0
    %3591 = vmatpush2.msra.mxu0 0.0
    %3592 = vmatprep.subr.mxu0 0.0
    %3593 = vmatpush2.msra.mxu0 0.0
    %3594 = vmatprep.subr.mxu0 0.0
    %3595 = vmatpush2.msra.mxu0 0.0
    %3596 = vmatprep.subr.mxu0 0.0
    %3597 = vmatpush2.msra.mxu0 0.0
    %3598 = vmatprep.subr.mxu0 0.0
    %3599 = vmatpush2.msra.mxu0 0.0
    %3600 = vmatprep.subr.mxu0 0.0
    %3601 = vmatpush2.msra.mxu0 0.0
    %3602 = vmatprep.mubr.f32.mxu0 0.0
    %3603 = vmatmul.mubr.f32.gmra.mxu0 %v3533
    %v3604 = vpop.f32.mrf.mxu0
    %v3605 = vadd.f32 0.0, %v3604
    %v3606 = vpop.f32.mrf.mxu0
    %3607 = vmatprep.mubr.f32.mxu0 0.0
    %3608 = vmatmul.mubr.f32.gmra.mxu0 %v3536
    %v3609 = vpop.f32.mrf.mxu0
    %v3610 = vadd.f32 0.0, %v3609
    %v3611 = vpop.f32.mrf.mxu0
    %3612 = vdwg.mxu0
    %3615 = vrot.lane.b32.xlu0 %v3201, 16
    %v3616 = vpop.permute.xlu0 %3615
    %3617 = vrot.lane.b32.xlu0 %v3206, 16
    %v3618 = vpop.permute.xlu0 %3617
    %3623 = vrot.lane.b32.xlu0 %v3403, 32
    %v3624 = vpop.permute.xlu0 %3623
    %3625 = vrot.lane.b32.xlu0 %v3408, 32
    %v3626 = vpop.permute.xlu0 %3625
    %3631 = vrot.lane.b32.xlu0 %v3605, 48
    %v3632 = vpop.permute.xlu0 %3631
    %3633 = vrot.lane.b32.xlu0 %v3610, 48
    %v3634 = vpop.permute.xlu0 %3633
    %v3637 = vsel %vm227, %v2997, %v3616
    %v3638 = vsel %vm227, %v3002, %v3618
    %v3639 = vsel %vm722, %v3637, %v3624
    %v3640 = vsel %vm722, %v3638, %v3626
    %v3641 = vsel %vm127, %v3639, %v3632
    %v3642 = vsel %vm127, %v3640, %v3634
    %3645 = vrot.lane.b32.xlu0 %v2801, 64
    %v3646 = vpop.permute.xlu0 %3645
    %3647 = vrot.lane.b32.xlu0 %v2807, 64
    %v3648 = vpop.permute.xlu0 %3647
    %v3649 = vsel %vm227, %v2801, 0
    %v3651 = vsel %vm227, %v2807, 0
    %v3653 = vsel %vm227, %v3646, 0
    %v3655 = vsel %vm227, %v3648, 0
    %3657 = vmatprep.subr.mxu0 0.0
    %3658 = vmatpush1.xpose.msra.mxu0 0.0
    %3659 = vmatprep.subr.mxu0 0.0
    %3660 = vmatpush1.xpose.msra.mxu0 0.0
    %3661 = vmatprep.subr.mxu0 0.0
    %3662 = vmatpush1.xpose.msra.mxu0 0.0
    %3663 = vmatprep.subr.mxu0 0.0
    %3664 = vmatpush1.xpose.msra.mxu0 0.0
    %3665 = vmatprep.subr.mxu0 0.0
    %3666 = vmatpush1.xpose.msra.mxu0 0.0
    %3667 = vmatprep.subr.mxu0 0.0
    %3668 = vmatpush1.xpose.msra.mxu0 0.0
    %3669 = vmatprep.subr.mxu0 0.0
    %3670 = vmatpush1.xpose.msra.mxu0 0.0
    %3671 = vmatprep.subr.mxu0 0.0
    %3672 = vmatpush1.xpose.msra.mxu0 0.0
    %3673 = vmatprep.subr.mxu0 0.0
    %3674 = vmatpush1.xpose.msra.mxu0 0.0
    %3675 = vmatprep.subr.mxu0 0.0
    %3676 = vmatpush1.xpose.msra.mxu0 0.0
    %3677 = vmatprep.subr.mxu0 0.0
    %3678 = vmatpush1.xpose.msra.mxu0 0.0
    %3679 = vmatprep.subr.mxu0 0.0
    %3680 = vmatpush1.xpose.msra.mxu0 0.0
    %3681 = vmatprep.subr.mxu0 0.0
    %3682 = vmatpush1.xpose.msra.mxu0 0.0
    %3683 = vmatprep.subr.mxu0 0.0
    %3684 = vmatpush1.xpose.msra.mxu0 0.0
    %3685 = vmatprep.subr.mxu0 0.0
    %3686 = vmatpush1.xpose.msra.mxu0 %v3655
    %3687 = vmatprep.subr.mxu0 0.0
    %3688 = vmatpush1.xpose.msra.mxu0 %v3653
    %3689 = vmatprep.subr.mxu0 0.0
    %3690 = vmatpush2.xpose.msra.mxu0 0.0
    %3691 = vmatprep.subr.mxu0 0.0
    %3692 = vmatpush2.xpose.msra.mxu0 0.0
    %3693 = vmatprep.subr.mxu0 0.0
    %3694 = vmatpush2.xpose.msra.mxu0 0.0
    %3695 = vmatprep.subr.mxu0 0.0
    %3696 = vmatpush2.xpose.msra.mxu0 0.0
    %3697 = vmatprep.subr.mxu0 0.0
    %3698 = vmatpush2.xpose.msra.mxu0 0.0
    %3699 = vmatprep.subr.mxu0 0.0
    %3700 = vmatpush2.xpose.msra.mxu0 0.0
    %3701 = vmatprep.subr.mxu0 0.0
    %3702 = vmatpush2.xpose.msra.mxu0 0.0
    %3703 = vmatprep.subr.mxu0 0.0
    %3704 = vmatpush2.xpose.msra.mxu0 0.0
    %3705 = vmatprep.subr.mxu0 0.0
    %3706 = vmatpush2.xpose.msra.mxu0 0.0
    %3707 = vmatprep.subr.mxu0 0.0
    %3708 = vmatpush2.xpose.msra.mxu0 0.0
    %3709 = vmatprep.subr.mxu0 0.0
    %3710 = vmatpush2.xpose.msra.mxu0 0.0
    %3711 = vmatprep.subr.mxu0 0.0
    %3712 = vmatpush2.xpose.msra.mxu0 0.0
    %3713 = vmatprep.subr.mxu0 0.0
    %3714 = vmatpush2.xpose.msra.mxu0 0.0
    %3715 = vmatprep.subr.mxu0 0.0
    %3716 = vmatpush2.xpose.msra.mxu0 0.0
    %3717 = vmatprep.subr.mxu0 0.0
    %3718 = vmatpush2.xpose.msra.mxu0 0.0
    %3719 = vmatprep.subr.mxu0 0.0
    %3720 = vmatpush2.xpose.msra.mxu0 0.0
    %3721 = vmatprep.mubr.f32.mxu0 0.0
    %3722 = vmatmul.mubr.f32.gmra.mxu0 %v3649
    %v3723 = vpop.f32.mrf.mxu0
    %v3724 = vadd.f32 0.0, %v3723
    %v3725 = vpop.f32.mrf.mxu0
    %3726 = vmatprep.mubr.f32.mxu0 0.0
    %3727 = vmatmul.mubr.f32.gmra.mxu0 %v3651
    %v3728 = vpop.f32.mrf.mxu0
    %v3729 = vadd.f32 0.0, %v3728
    %v3730 = vpop.f32.mrf.mxu0
    %3731 = vdwg.mxu0
    %v3732 = vmul.f32 %v3724, 0.25
    %v3733 = vmul.f32 %v3729, 0.25
    %v3734 = vsel %vm227, %v3732, -inf
    %3735 = vmax.xlane.f32.xlu0 %v3734
    %v3736 = vpop.xlane.xlu0 %3735
    %v3737 = vsel %vm227, %v3733, -inf
    %3738 = vmax.xlane.f32.xlu0 %v3737
    %v3739 = vpop.xlane.xlu0 %3738
    %v3740 = vsub.f32 %v3732, %v3736
    %v3741 = vsub.f32 %v3733, %v3739
    %v3742 = vmul.f32 %v3740, 1.442695
    %v3743 = vpow.pop %v3742
    %v3744 = vmul.f32 %v3741, 1.442695
    %v3745 = vpow.pop %v3744
    %v3746 = vsel %vm227, %v3743, 0.0
    %3747 = vadd.xlane.f32.xlu0 %v3746
    %v3748 = vpop.xlane.xlu0 %3747
    %v3749 = vsel %vm227, %v3745, 0.0
    %3750 = vadd.xlane.f32.xlu0 %v3749
    %v3751 = vpop.xlane.xlu0 %3750
    %v3752 = vrcp.pop %v3748
    %v3753 = vrcp.pop %v3751
    %v3754 = vmul.f32 %v3743, %v3752
    %v3755 = vmul.f32 %v3745, %v3753
    %v3757 = vsel %vm227, %v3754, 0
    %v3760 = vsel %vm227, %v3755, 0
    %3762 = vmatprep.subr.mxu0 0.0
    %3763 = vmatpush1.msra.mxu0 0.0
    %3764 = vmatprep.subr.mxu0 0.0
    %3765 = vmatpush1.msra.mxu0 0.0
    %3766 = vmatprep.subr.mxu0 0.0
    %3767 = vmatpush1.msra.mxu0 0.0
    %3768 = vmatprep.subr.mxu0 0.0
    %3769 = vmatpush1.msra.mxu0 0.0
    %3770 = vmatprep.subr.mxu0 0.0
    %3771 = vmatpush1.msra.mxu0 0.0
    %3772 = vmatprep.subr.mxu0 0.0
    %3773 = vmatpush1.msra.mxu0 0.0
    %3774 = vmatprep.subr.mxu0 0.0
    %3775 = vmatpush1.msra.mxu0 0.0
    %3776 = vmatprep.subr.mxu0 0.0
    %3777 = vmatpush1.msra.mxu0 0.0
    %3778 = vmatprep.subr.mxu0 0.0
    %3779 = vmatpush1.msra.mxu0 0.0
    %3780 = vmatprep.subr.mxu0 0.0
    %3781 = vmatpush1.msra.mxu0 0.0
    %3782 = vmatprep.subr.mxu0 0.0
    %3783 = vmatpush1.msra.mxu0 0.0
    %3784 = vmatprep.subr.mxu0 0.0
    %3785 = vmatpush1.msra.mxu0 0.0
    %3786 = vmatprep.subr.mxu0 0.0
    %3787 = vmatpush1.msra.mxu0 0.0
    %3788 = vmatprep.subr.mxu0 0.0
    %3789 = vmatpush1.msra.mxu0 0.0
    %3790 = vmatprep.subr.mxu0 0.0
    %3791 = vmatpush1.msra.mxu0 %v2809
    %3792 = vmatprep.subr.mxu0 0.0
    %3793 = vmatpush1.msra.mxu0 %v2803
    %3794 = vmatprep.subr.mxu0 0.0
    %3795 = vmatpush2.msra.mxu0 0.0
    %3796 = vmatprep.subr.mxu0 0.0
    %3797 = vmatpush2.msra.mxu0 0.0
    %3798 = vmatprep.subr.mxu0 0.0
    %3799 = vmatpush2.msra.mxu0 0.0
    %3800 = vmatprep.subr.mxu0 0.0
    %3801 = vmatpush2.msra.mxu0 0.0
    %3802 = vmatprep.subr.mxu0 0.0
    %3803 = vmatpush2.msra.mxu0 0.0
    %3804 = vmatprep.subr.mxu0 0.0
    %3805 = vmatpush2.msra.mxu0 0.0
    %3806 = vmatprep.subr.mxu0 0.0
    %3807 = vmatpush2.msra.mxu0 0.0
    %3808 = vmatprep.subr.mxu0 0.0
    %3809 = vmatpush2.msra.mxu0 0.0
    %3810 = vmatprep.subr.mxu0 0.0
    %3811 = vmatpush2.msra.mxu0 0.0
    %3812 = vmatprep.subr.mxu0 0.0
    %3813 = vmatpush2.msra.mxu0 0.0
    %3814 = vmatprep.subr.mxu0 0.0
    %3815 = vmatpush2.msra.mxu0 0.0
    %3816 = vmatprep.subr.mxu0 0.0
    %3817 = vmatpush2.msra.mxu0 0.0
    %3818 = vmatprep.subr.mxu0 0.0
    %3819 = vmatpush2.msra.mxu0 0.0
    %3820 = vmatprep.subr.mxu0 0.0
    %3821 = vmatpush2.msra.mxu0 0.0
    %3822 = vmatprep.subr.mxu0 0.0
    %3823 = vmatpush2.msra.mxu0 0.0
    %3824 = vmatprep.subr.mxu0 0.0
    %3825 = vmatpush2.msra.mxu0 0.0
    %3826 = vmatprep.mubr.f32.mxu0 0.0
    %3827 = vmatmul.mubr.f32.gmra.mxu0 %v3757
    %v3828 = vpop.f32.mrf.mxu0
    %v3829 = vadd.f32 0.0, %v3828
    %v3830 = vpop.f32.mrf.mxu0
    %3831 = vmatprep.mubr.f32.mxu0 0.0
    %3832 = vmatmul.mubr.f32.gmra.mxu0 %v3760
    %v3833 = vpop.f32.mrf.mxu0
    %v3834 = vadd.f32 0.0, %v3833
    %v3835 = vpop.f32.mrf.mxu0
    %3836 = vdwg.mxu0
    %3837 = vrot.lane.b32.xlu0 %v2801, 112
    %v3838 = vpop.permute.xlu0 %3837
    %3839 = vrot.lane.b32.xlu0 %v2807, 112
    %v3840 = vpop.permute.xlu0 %3839
    %3841 = vrot.lane.b32.xlu0 %v2801, 48
    %v3842 = vpop.permute.xlu0 %3841
    %3843 = vrot.lane.b32.xlu0 %v2807, 48
    %v3844 = vpop.permute.xlu0 %3843
    %v3845 = vsel %vm227, %v3838, 0
    %v3847 = vsel %vm227, %v3840, 0
    %v3849 = vsel %vm227, %v3842, 0
    %v3851 = vsel %vm227, %v3844, 0
    %3853 = vmatprep.subr.mxu0 0.0
    %3854 = vmatpush1.xpose.msra.mxu0 0.0
    %3855 = vmatprep.subr.mxu0 0.0
    %3856 = vmatpush1.xpose.msra.mxu0 0.0
    %3857 = vmatprep.subr.mxu0 0.0
    %3858 = vmatpush1.xpose.msra.mxu0 0.0
    %3859 = vmatprep.subr.mxu0 0.0
    %3860 = vmatpush1.xpose.msra.mxu0 0.0
    %3861 = vmatprep.subr.mxu0 0.0
    %3862 = vmatpush1.xpose.msra.mxu0 0.0
    %3863 = vmatprep.subr.mxu0 0.0
    %3864 = vmatpush1.xpose.msra.mxu0 0.0
    %3865 = vmatprep.subr.mxu0 0.0
    %3866 = vmatpush1.xpose.msra.mxu0 0.0
    %3867 = vmatprep.subr.mxu0 0.0
    %3868 = vmatpush1.xpose.msra.mxu0 0.0
    %3869 = vmatprep.subr.mxu0 0.0
    %3870 = vmatpush1.xpose.msra.mxu0 0.0
    %3871 = vmatprep.subr.mxu0 0.0
    %3872 = vmatpush1.xpose.msra.mxu0 0.0
    %3873 = vmatprep.subr.mxu0 0.0
    %3874 = vmatpush1.xpose.msra.mxu0 0.0
    %3875 = vmatprep.subr.mxu0 0.0
    %3876 = vmatpush1.xpose.msra.mxu0 0.0
    %3877 = vmatprep.subr.mxu0 0.0
    %3878 = vmatpush1.xpose.msra.mxu0 0.0
    %3879 = vmatprep.subr.mxu0 0.0
    %3880 = vmatpush1.xpose.msra.mxu0 0.0
    %3881 = vmatprep.subr.mxu0 0.0
    %3882 = vmatpush1.xpose.msra.mxu0 %v3851
    %3883 = vmatprep.subr.mxu0 0.0
    %3884 = vmatpush1.xpose.msra.mxu0 %v3849
    %3885 = vmatprep.subr.mxu0 0.0
    %3886 = vmatpush2.xpose.msra.mxu0 0.0
    %3887 = vmatprep.subr.mxu0 0.0
    %3888 = vmatpush2.xpose.msra.mxu0 0.0
    %3889 = vmatprep.subr.mxu0 0.0
    %3890 = vmatpush2.xpose.msra.mxu0 0.0
    %3891 = vmatprep.subr.mxu0 0.0
    %3892 = vmatpush2.xpose.msra.mxu0 0.0
    %3893 = vmatprep.subr.mxu0 0.0
    %3894 = vmatpush2.xpose.msra.mxu0 0.0
    %3895 = vmatprep.subr.mxu0 0.0
    %3896 = vmatpush2.xpose.msra.mxu0 0.0
    %3897 = vmatprep.subr.mxu0 0.0
    %3898 = vmatpush2.xpose.msra.mxu0 0.0
    %3899 = vmatprep.subr.mxu0 0.0
    %3900 = vmatpush2.xpose.msra.mxu0 0.0
    %3901 = vmatprep.subr.mxu0 0.0
    %3902 = vmatpush2.xpose.msra.mxu0 0.0
    %3903 = vmatprep.subr.mxu0 0.0
    %3904 = vmatpush2.xpose.msra.mxu0 0.0
    %3905 = vmatprep.subr.mxu0 0.0
    %3906 = vmatpush2.xpose.msra.mxu0 0.0
    %3907 = vmatprep.subr.mxu0 0.0
    %3908 = vmatpush2.xpose.msra.mxu0 0.0
    %3909 = vmatprep.subr.mxu0 0.0
    %3910 = vmatpush2.xpose.msra.mxu0 0.0
    %3911 = vmatprep.subr.mxu0 0.0
    %3912 = vmatpush2.xpose.msra.mxu0 0.0
    %3913 = vmatprep.subr.mxu0 0.0
    %3914 = vmatpush2.xpose.msra.mxu0 0.0
    %3915 = vmatprep.subr.mxu0 0.0
    %3916 = vmatpush2.xpose.msra.mxu0 0.0
    %3917 = vmatprep.mubr.f32.mxu0 0.0
    %3918 = vmatmul.mubr.f32.gmra.mxu0 %v3845
    %v3919 = vpop.f32.mrf.mxu0
    %v3920 = vadd.f32 0.0, %v3919
    %v3921 = vpop.f32.mrf.mxu0
    %3922 = vmatprep.mubr.f32.mxu0 0.0
    %3923 = vmatmul.mubr.f32.gmra.mxu0 %v3847
    %v3924 = vpop.f32.mrf.mxu0
    %v3925 = vadd.f32 0.0, %v3924
    %v3926 = vpop.f32.mrf.mxu0
    %3927 = vdwg.mxu0
    %v3928 = vmul.f32 %v3920, 0.25
    %v3929 = vmul.f32 %v3925, 0.25
    %v3930 = vsel %vm227, %v3928, -inf
    %3931 = vmax.xlane.f32.xlu0 %v3930
    %v3932 = vpop.xlane.xlu0 %3931
    %v3933 = vsel %vm227, %v3929, -inf
    %3934 = vmax.xlane.f32.xlu0 %v3933
    %v3935 = vpop.xlane.xlu0 %3934
    %v3936 = vsub.f32 %v3928, %v3932
    %v3937 = vsub.f32 %v3929, %v3935
    %v3938 = vmul.f32 %v3936, 1.442695
    %v3939 = vpow.pop %v3938
    %v3940 = vmul.f32 %v3937, 1.442695
    %v3941 = vpow.pop %v3940
    %v3942 = vsel %vm227, %v3939, 0.0
    %3943 = vadd.xlane.f32.xlu0 %v3942
    %v3944 = vpop.xlane.xlu0 %3943
    %v3945 = vsel %vm227, %v3941, 0.0
    %3946 = vadd.xlane.f32.xlu0 %v3945
    %v3947 = vpop.xlane.xlu0 %3946
    %v3948 = vrcp.pop %v3944
    %v3949 = vrcp.pop %v3947
    %v3950 = vmul.f32 %v3939, %v3948
    %v3951 = vmul.f32 %v3941, %v3949
    %3954 = vrot.lane.b32.xlu0 %v2803, 112
    %v3955 = vpop.permute.xlu0 %3954
    %3956 = vrot.lane.b32.xlu0 %v2809, 112
    %v3957 = vpop.permute.xlu0 %3956
    %v3961 = vsel %vm227, %v3950, 0
    %v3964 = vsel %vm227, %v3951, 0
    %3966 = vmatprep.subr.mxu0 0.0
    %3967 = vmatpush1.msra.mxu0 0.0
    %3968 = vmatprep.subr.mxu0 0.0
    %3969 = vmatpush1.msra.mxu0 0.0
    %3970 = vmatprep.subr.mxu0 0.0
    %3971 = vmatpush1.msra.mxu0 0.0
    %3972 = vmatprep.subr.mxu0 0.0
    %3973 = vmatpush1.msra.mxu0 0.0
    %3974 = vmatprep.subr.mxu0 0.0
    %3975 = vmatpush1.msra.mxu0 0.0
    %3976 = vmatprep.subr.mxu0 0.0
    %3977 = vmatpush1.msra.mxu0 0.0
    %3978 = vmatprep.subr.mxu0 0.0
    %3979 = vmatpush1.msra.mxu0 0.0
    %3980 = vmatprep.subr.mxu0 0.0
    %3981 = vmatpush1.msra.mxu0 0.0
    %3982 = vmatprep.subr.mxu0 0.0
    %3983 = vmatpush1.msra.mxu0 0.0
    %3984 = vmatprep.subr.mxu0 0.0
    %3985 = vmatpush1.msra.mxu0 0.0
    %3986 = vmatprep.subr.mxu0 0.0
    %3987 = vmatpush1.msra.mxu0 0.0
    %3988 = vmatprep.subr.mxu0 0.0
    %3989 = vmatpush1.msra.mxu0 0.0
    %3990 = vmatprep.subr.mxu0 0.0
    %3991 = vmatpush1.msra.mxu0 0.0
    %3992 = vmatprep.subr.mxu0 0.0
    %3993 = vmatpush1.msra.mxu0 0.0
    %3994 = vmatprep.subr.mxu0 0.0
    %3995 = vmatpush1.msra.mxu0 %v3957
    %3996 = vmatprep.subr.mxu0 0.0
    %3997 = vmatpush1.msra.mxu0 %v3955
    %3998 = vmatprep.subr.mxu0 0.0
    %3999 = vmatpush2.msra.mxu0 0.0
    %4000 = vmatprep.subr.mxu0 0.0
    %4001 = vmatpush2.msra.mxu0 0.0
    %4002 = vmatprep.subr.mxu0 0.0
    %4003 = vmatpush2.msra.mxu0 0.0
    %4004 = vmatprep.subr.mxu0 0.0
    %4005 = vmatpush2.msra.mxu0 0.0
    %4006 = vmatprep.subr.mxu0 0.0
    %4007 = vmatpush2.msra.mxu0 0.0
    %4008 = vmatprep.subr.mxu0 0.0
    %4009 = vmatpush2.msra.mxu0 0.0
    %4010 = vmatprep.subr.mxu0 0.0
    %4011 = vmatpush2.msra.mxu0 0.0
    %4012 = vmatprep.subr.mxu0 0.0
    %4013 = vmatpush2.msra.mxu0 0.0
    %4014 = vmatprep.subr.mxu0 0.0
    %4015 = vmatpush2.msra.mxu0 0.0
    %4016 = vmatprep.subr.mxu0 0.0
    %4017 = vmatpush2.msra.mxu0 0.0
    %4018 = vmatprep.subr.mxu0 0.0
    %4019 = vmatpush2.msra.mxu0 0.0
    %4020 = vmatprep.subr.mxu0 0.0
    %4021 = vmatpush2.msra.mxu0 0.0
    %4022 = vmatprep.subr.mxu0 0.0
    %4023 = vmatpush2.msra.mxu0 0.0
    %4024 = vmatprep.subr.mxu0 0.0
    %4025 = vmatpush2.msra.mxu0 0.0
    %4026 = vmatprep.subr.mxu0 0.0
    %4027 = vmatpush2.msra.mxu0 0.0
    %4028 = vmatprep.subr.mxu0 0.0
    %4029 = vmatpush2.msra.mxu0 0.0
    %4030 = vmatprep.mubr.f32.mxu0 0.0
    %4031 = vmatmul.mubr.f32.gmra.mxu0 %v3961
    %v4032 = vpop.f32.mrf.mxu0
    %v4033 = vadd.f32 0.0, %v4032
    %v4034 = vpop.f32.mrf.mxu0
    %4035 = vmatprep.mubr.f32.mxu0 0.0
    %4036 = vmatmul.mubr.f32.gmra.mxu0 %v3964
    %v4037 = vpop.f32.mrf.mxu0
    %v4038 = vadd.f32 0.0, %v4037
    %v4039 = vpop.f32.mrf.mxu0
    %4040 = vdwg.mxu0
    %4041 = vrot.lane.b32.xlu0 %v2801, 96
    %v4042 = vpop.permute.xlu0 %4041
    %4043 = vrot.lane.b32.xlu0 %v2807, 96
    %v4044 = vpop.permute.xlu0 %4043
    %4045 = vrot.lane.b32.xlu0 %v2801, 32
    %v4046 = vpop.permute.xlu0 %4045
    %4047 = vrot.lane.b32.xlu0 %v2807, 32
    %v4048 = vpop.permute.xlu0 %4047
    %v4049 = vsel %vm227, %v4042, 0
    %v4051 = vsel %vm227, %v4044, 0
    %v4053 = vsel %vm227, %v4046, 0
    %v4055 = vsel %vm227, %v4048, 0
    %4057 = vmatprep.subr.mxu0 0.0
    %4058 = vmatpush1.xpose.msra.mxu0 0.0
    %4059 = vmatprep.subr.mxu0 0.0
    %4060 = vmatpush1.xpose.msra.mxu0 0.0
    %4061 = vmatprep.subr.mxu0 0.0
    %4062 = vmatpush1.xpose.msra.mxu0 0.0
    %4063 = vmatprep.subr.mxu0 0.0
    %4064 = vmatpush1.xpose.msra.mxu0 0.0
    %4065 = vmatprep.subr.mxu0 0.0
    %4066 = vmatpush1.xpose.msra.mxu0 0.0
    %4067 = vmatprep.subr.mxu0 0.0
    %4068 = vmatpush1.xpose.msra.mxu0 0.0
    %4069 = vmatprep.subr.mxu0 0.0
    %4070 = vmatpush1.xpose.msra.mxu0 0.0
    %4071 = vmatprep.subr.mxu0 0.0
    %4072 = vmatpush1.xpose.msra.mxu0 0.0
    %4073 = vmatprep.subr.mxu0 0.0
    %4074 = vmatpush1.xpose.msra.mxu0 0.0
    %4075 = vmatprep.subr.mxu0 0.0
    %4076 = vmatpush1.xpose.msra.mxu0 0.0
    %4077 = vmatprep.subr.mxu0 0.0
    %4078 = vmatpush1.xpose.msra.mxu0 0.0
    %4079 = vmatprep.subr.mxu0 0.0
    %4080 = vmatpush1.xpose.msra.mxu0 0.0
    %4081 = vmatprep.subr.mxu0 0.0
    %4082 = vmatpush1.xpose.msra.mxu0 0.0
    %4083 = vmatprep.subr.mxu0 0.0
    %4084 = vmatpush1.xpose.msra.mxu0 0.0
    %4085 = vmatprep.subr.mxu0 0.0
    %4086 = vmatpush1.xpose.msra.mxu0 %v4055
    %4087 = vmatprep.subr.mxu0 0.0
    %4088 = vmatpush1.xpose.msra.mxu0 %v4053
    %4089 = vmatprep.subr.mxu0 0.0
    %4090 = vmatpush2.xpose.msra.mxu0 0.0
    %4091 = vmatprep.subr.mxu0 0.0
    %4092 = vmatpush2.xpose.msra.mxu0 0.0
    %4093 = vmatprep.subr.mxu0 0.0
    %4094 = vmatpush2.xpose.msra.mxu0 0.0
    %4095 = vmatprep.subr.mxu0 0.0
    %4096 = vmatpush2.xpose.msra.mxu0 0.0
    %4097 = vmatprep.subr.mxu0 0.0
    %4098 = vmatpush2.xpose.msra.mxu0 0.0
    %4099 = vmatprep.subr.mxu0 0.0
    %4100 = vmatpush2.xpose.msra.mxu0 0.0
    %4101 = vmatprep.subr.mxu0 0.0
    %4102 = vmatpush2.xpose.msra.mxu0 0.0
    %4103 = vmatprep.subr.mxu0 0.0
    %4104 = vmatpush2.xpose.msra.mxu0 0.0
    %4105 = vmatprep.subr.mxu0 0.0
    %4106 = vmatpush2.xpose.msra.mxu0 0.0
    %4107 = vmatprep.subr.mxu0 0.0
    %4108 = vmatpush2.xpose.msra.mxu0 0.0
    %4109 = vmatprep.subr.mxu0 0.0
    %4110 = vmatpush2.xpose.msra.mxu0 0.0
    %4111 = vmatprep.subr.mxu0 0.0
    %4112 = vmatpush2.xpose.msra.mxu0 0.0
    %4113 = vmatprep.subr.mxu0 0.0
    %4114 = vmatpush2.xpose.msra.mxu0 0.0
    %4115 = vmatprep.subr.mxu0 0.0
    %4116 = vmatpush2.xpose.msra.mxu0 0.0
    %4117 = vmatprep.subr.mxu0 0.0
    %4118 = vmatpush2.xpose.msra.mxu0 0.0
    %4119 = vmatprep.subr.mxu0 0.0
    %4120 = vmatpush2.xpose.msra.mxu0 0.0
    %4121 = vmatprep.mubr.f32.mxu0 0.0
    %4122 = vmatmul.mubr.f32.gmra.mxu0 %v4049
    %v4123 = vpop.f32.mrf.mxu0
    %v4124 = vadd.f32 0.0, %v4123
    %v4125 = vpop.f32.mrf.mxu0
    %4126 = vmatprep.mubr.f32.mxu0 0.0
    %4127 = vmatmul.mubr.f32.gmra.mxu0 %v4051
    %v4128 = vpop.f32.mrf.mxu0
    %v4129 = vadd.f32 0.0, %v4128
    %v4130 = vpop.f32.mrf.mxu0
    %4131 = vdwg.mxu0
    %v4132 = vmul.f32 %v4124, 0.25
    %v4133 = vmul.f32 %v4129, 0.25
    %v4134 = vsel %vm227, %v4132, -inf
    %4135 = vmax.xlane.f32.xlu0 %v4134
    %v4136 = vpop.xlane.xlu0 %4135
    %v4137 = vsel %vm227, %v4133, -inf
    %4138 = vmax.xlane.f32.xlu0 %v4137
    %v4139 = vpop.xlane.xlu0 %4138
    %v4140 = vsub.f32 %v4132, %v4136
    %v4141 = vsub.f32 %v4133, %v4139
    %v4142 = vmul.f32 %v4140, 1.442695
    %v4143 = vpow.pop %v4142
    %v4144 = vmul.f32 %v4141, 1.442695
    %v4145 = vpow.pop %v4144
    %v4146 = vsel %vm227, %v4143, 0.0
    %4147 = vadd.xlane.f32.xlu0 %v4146
    %v4148 = vpop.xlane.xlu0 %4147
    %v4149 = vsel %vm227, %v4145, 0.0
    %4150 = vadd.xlane.f32.xlu0 %v4149
    %v4151 = vpop.xlane.xlu0 %4150
    %v4152 = vrcp.pop %v4148
    %v4153 = vrcp.pop %v4151
    %v4154 = vmul.f32 %v4143, %v4152
    %v4155 = vmul.f32 %v4145, %v4153
    %4156 = vrot.lane.b32.xlu0 %v2803, 96
    %v4157 = vpop.permute.xlu0 %4156
    %4158 = vrot.lane.b32.xlu0 %v2809, 96
    %v4159 = vpop.permute.xlu0 %4158
    %v4163 = vsel %vm227, %v4154, 0
    %v4166 = vsel %vm227, %v4155, 0
    %4168 = vmatprep.subr.mxu0 0.0
    %4169 = vmatpush1.msra.mxu0 0.0
    %4170 = vmatprep.subr.mxu0 0.0
    %4171 = vmatpush1.msra.mxu0 0.0
    %4172 = vmatprep.subr.mxu0 0.0
    %4173 = vmatpush1.msra.mxu0 0.0
    %4174 = vmatprep.subr.mxu0 0.0
    %4175 = vmatpush1.msra.mxu0 0.0
    %4176 = vmatprep.subr.mxu0 0.0
    %4177 = vmatpush1.msra.mxu0 0.0
    %4178 = vmatprep.subr.mxu0 0.0
    %4179 = vmatpush1.msra.mxu0 0.0
    %4180 = vmatprep.subr.mxu0 0.0
    %4181 = vmatpush1.msra.mxu0 0.0
    %4182 = vmatprep.subr.mxu0 0.0
    %4183 = vmatpush1.msra.mxu0 0.0
    %4184 = vmatprep.subr.mxu0 0.0
    %4185 = vmatpush1.msra.mxu0 0.0
    %4186 = vmatprep.subr.mxu0 0.0
    %4187 = vmatpush1.msra.mxu0 0.0
    %4188 = vmatprep.subr.mxu0 0.0
    %4189 = vmatpush1.msra.mxu0 0.0
    %4190 = vmatprep.subr.mxu0 0.0
    %4191 = vmatpush1.msra.mxu0 0.0
    %4192 = vmatprep.subr.mxu0 0.0
    %4193 = vmatpush1.msra.mxu0 0.0
    %4194 = vmatprep.subr.mxu0 0.0
    %4195 = vmatpush1.msra.mxu0 0.0
    %4196 = vmatprep.subr.mxu0 0.0
    %4197 = vmatpush1.msra.mxu0 %v4159
    %4198 = vmatprep.subr.mxu0 0.0
    %4199 = vmatpush1.msra.mxu0 %v4157
    %4200 = vmatprep.subr.mxu0 0.0
    %4201 = vmatpush2.msra.mxu0 0.0
    %4202 = vmatprep.subr.mxu0 0.0
    %4203 = vmatpush2.msra.mxu0 0.0
    %4204 = vmatprep.subr.mxu0 0.0
    %4205 = vmatpush2.msra.mxu0 0.0
    %4206 = vmatprep.subr.mxu0 0.0
    %4207 = vmatpush2.msra.mxu0 0.0
    %4208 = vmatprep.subr.mxu0 0.0
    %4209 = vmatpush2.msra.mxu0 0.0
    %4210 = vmatprep.subr.mxu0 0.0
    %4211 = vmatpush2.msra.mxu0 0.0
    %4212 = vmatprep.subr.mxu0 0.0
    %4213 = vmatpush2.msra.mxu0 0.0
    %4214 = vmatprep.subr.mxu0 0.0
    %4215 = vmatpush2.msra.mxu0 0.0
    %4216 = vmatprep.subr.mxu0 0.0
    %4217 = vmatpush2.msra.mxu0 0.0
    %4218 = vmatprep.subr.mxu0 0.0
    %4219 = vmatpush2.msra.mxu0 0.0
    %4220 = vmatprep.subr.mxu0 0.0
    %4221 = vmatpush2.msra.mxu0 0.0
    %4222 = vmatprep.subr.mxu0 0.0
    %4223 = vmatpush2.msra.mxu0 0.0
    %4224 = vmatprep.subr.mxu0 0.0
    %4225 = vmatpush2.msra.mxu0 0.0
    %4226 = vmatprep.subr.mxu0 0.0
    %4227 = vmatpush2.msra.mxu0 0.0
    %4228 = vmatprep.subr.mxu0 0.0
    %4229 = vmatpush2.msra.mxu0 0.0
    %4230 = vmatprep.subr.mxu0 0.0
    %4231 = vmatpush2.msra.mxu0 0.0
    %4232 = vmatprep.mubr.f32.mxu0 0.0
    %4233 = vmatmul.mubr.f32.gmra.mxu0 %v4163
    %v4234 = vpop.f32.mrf.mxu0
    %v4235 = vadd.f32 0.0, %v4234
    %v4236 = vpop.f32.mrf.mxu0
    %4237 = vmatprep.mubr.f32.mxu0 0.0
    %4238 = vmatmul.mubr.f32.gmra.mxu0 %v4166
    %v4239 = vpop.f32.mrf.mxu0
    %v4240 = vadd.f32 0.0, %v4239
    %v4241 = vpop.f32.mrf.mxu0
    %4242 = vdwg.mxu0
    %4243 = vrot.lane.b32.xlu0 %v2801, 80
    %v4244 = vpop.permute.xlu0 %4243
    %4245 = vrot.lane.b32.xlu0 %v2807, 80
    %v4246 = vpop.permute.xlu0 %4245
    %4247 = vrot.lane.b32.xlu0 %v2801, 16
    %v4248 = vpop.permute.xlu0 %4247
    %4249 = vrot.lane.b32.xlu0 %v2807, 16
    %v4250 = vpop.permute.xlu0 %4249
    %v4251 = vsel %vm227, %v4244, 0
    %v4253 = vsel %vm227, %v4246, 0
    %v4255 = vsel %vm227, %v4248, 0
    %v4257 = vsel %vm227, %v4250, 0
    %4259 = vmatprep.subr.mxu0 0.0
    %4260 = vmatpush1.xpose.msra.mxu0 0.0
    %4261 = vmatprep.subr.mxu0 0.0
    %4262 = vmatpush1.xpose.msra.mxu0 0.0
    %4263 = vmatprep.subr.mxu0 0.0
    %4264 = vmatpush1.xpose.msra.mxu0 0.0
    %4265 = vmatprep.subr.mxu0 0.0
    %4266 = vmatpush1.xpose.msra.mxu0 0.0
    %4267 = vmatprep.subr.mxu0 0.0
    %4268 = vmatpush1.xpose.msra.mxu0 0.0
    %4269 = vmatprep.subr.mxu0 0.0
    %4270 = vmatpush1.xpose.msra.mxu0 0.0
    %4271 = vmatprep.subr.mxu0 0.0
    %4272 = vmatpush1.xpose.msra.mxu0 0.0
    %4273 = vmatprep.subr.mxu0 0.0
    %4274 = vmatpush1.xpose.msra.mxu0 0.0
    %4275 = vmatprep.subr.mxu0 0.0
    %4276 = vmatpush1.xpose.msra.mxu0 0.0
    %4277 = vmatprep.subr.mxu0 0.0
    %4278 = vmatpush1.xpose.msra.mxu0 0.0
    %4279 = vmatprep.subr.mxu0 0.0
    %4280 = vmatpush1.xpose.msra.mxu0 0.0
    %4281 = vmatprep.subr.mxu0 0.0
    %4282 = vmatpush1.xpose.msra.mxu0 0.0
    %4283 = vmatprep.subr.mxu0 0.0
    %4284 = vmatpush1.xpose.msra.mxu0 0.0
    %4285 = vmatprep.subr.mxu0 0.0
    %4286 = vmatpush1.xpose.msra.mxu0 0.0
    %4287 = vmatprep.subr.mxu0 0.0
    %4288 = vmatpush1.xpose.msra.mxu0 %v4257
    %4289 = vmatprep.subr.mxu0 0.0
    %4290 = vmatpush1.xpose.msra.mxu0 %v4255
    %4291 = vmatprep.subr.mxu0 0.0
    %4292 = vmatpush2.xpose.msra.mxu0 0.0
    %4293 = vmatprep.subr.mxu0 0.0
    %4294 = vmatpush2.xpose.msra.mxu0 0.0
    %4295 = vmatprep.subr.mxu0 0.0
    %4296 = vmatpush2.xpose.msra.mxu0 0.0
    %4297 = vmatprep.subr.mxu0 0.0
    %4298 = vmatpush2.xpose.msra.mxu0 0.0
    %4299 = vmatprep.subr.mxu0 0.0
    %4300 = vmatpush2.xpose.msra.mxu0 0.0
    %4301 = vmatprep.subr.mxu0 0.0
    %4302 = vmatpush2.xpose.msra.mxu0 0.0
    %4303 = vmatprep.subr.mxu0 0.0
    %4304 = vmatpush2.xpose.msra.mxu0 0.0
    %4305 = vmatprep.subr.mxu0 0.0
    %4306 = vmatpush2.xpose.msra.mxu0 0.0
    %4307 = vmatprep.subr.mxu0 0.0
    %4308 = vmatpush2.xpose.msra.mxu0 0.0
    %4309 = vmatprep.subr.mxu0 0.0
    %4310 = vmatpush2.xpose.msra.mxu0 0.0
    %4311 = vmatprep.subr.mxu0 0.0
    %4312 = vmatpush2.xpose.msra.mxu0 0.0
    %4313 = vmatprep.subr.mxu0 0.0
    %4314 = vmatpush2.xpose.msra.mxu0 0.0
    %4315 = vmatprep.subr.mxu0 0.0
    %4316 = vmatpush2.xpose.msra.mxu0 0.0
    %4317 = vmatprep.subr.mxu0 0.0
    %4318 = vmatpush2.xpose.msra.mxu0 0.0
    %4319 = vmatprep.subr.mxu0 0.0
    %4320 = vmatpush2.xpose.msra.mxu0 0.0
    %4321 = vmatprep.subr.mxu0 0.0
    %4322 = vmatpush2.xpose.msra.mxu0 0.0
    %4323 = vmatprep.mubr.f32.mxu0 0.0
    %4324 = vmatmul.mubr.f32.gmra.mxu0 %v4251
    %v4325 = vpop.f32.mrf.mxu0
    %v4326 = vadd.f32 0.0, %v4325
    %v4327 = vpop.f32.mrf.mxu0
    %4328 = vmatprep.mubr.f32.mxu0 0.0
    %4329 = vmatmul.mubr.f32.gmra.mxu0 %v4253
    %v4330 = vpop.f32.mrf.mxu0
    %v4331 = vadd.f32 0.0, %v4330
    %v4332 = vpop.f32.mrf.mxu0
    %4333 = vdwg.mxu0
    %v4334 = vmul.f32 %v4326, 0.25
    %v4335 = vmul.f32 %v4331, 0.25
    %v4336 = vsel %vm227, %v4334, -inf
    %4337 = vmax.xlane.f32.xlu0 %v4336
    %v4338 = vpop.xlane.xlu0 %4337
    %v4339 = vsel %vm227, %v4335, -inf
    %4340 = vmax.xlane.f32.xlu0 %v4339
    %v4341 = vpop.xlane.xlu0 %4340
    %v4342 = vsub.f32 %v4334, %v4338
    %v4343 = vsub.f32 %v4335, %v4341
    %v4344 = vmul.f32 %v4342, 1.442695
    %v4345 = vpow.pop %v4344
    %v4346 = vmul.f32 %v4343, 1.442695
    %v4347 = vpow.pop %v4346
    %v4348 = vsel %vm227, %v4345, 0.0
    %4349 = vadd.xlane.f32.xlu0 %v4348
    %v4350 = vpop.xlane.xlu0 %4349
    %v4351 = vsel %vm227, %v4347, 0.0
    %4352 = vadd.xlane.f32.xlu0 %v4351
    %v4353 = vpop.xlane.xlu0 %4352
    %v4354 = vrcp.pop %v4350
    %v4355 = vrcp.pop %v4353
    %v4356 = vmul.f32 %v4345, %v4354
    %v4357 = vmul.f32 %v4347, %v4355
    %4358 = vrot.lane.b32.xlu0 %v2803, 80
    %v4359 = vpop.permute.xlu0 %4358
    %4360 = vrot.lane.b32.xlu0 %v2809, 80
    %v4361 = vpop.permute.xlu0 %4360
    %v4365 = vsel %vm227, %v4356, 0
    %v4368 = vsel %vm227, %v4357, 0
    %4370 = vmatprep.subr.mxu0 0.0
    %4371 = vmatpush1.msra.mxu0 0.0
    %4372 = vmatprep.subr.mxu0 0.0
    %4373 = vmatpush1.msra.mxu0 0.0
    %4374 = vmatprep.subr.mxu0 0.0
    %4375 = vmatpush1.msra.mxu0 0.0
    %4376 = vmatprep.subr.mxu0 0.0
    %4377 = vmatpush1.msra.mxu0 0.0
    %4378 = vmatprep.subr.mxu0 0.0
    %4379 = vmatpush1.msra.mxu0 0.0
    %4380 = vmatprep.subr.mxu0 0.0
    %4381 = vmatpush1.msra.mxu0 0.0
    %4382 = vmatprep.subr.mxu0 0.0
    %4383 = vmatpush1.msra.mxu0 0.0
    %4384 = vmatprep.subr.mxu0 0.0
    %4385 = vmatpush1.msra.mxu0 0.0
    %4386 = vmatprep.subr.mxu0 0.0
    %4387 = vmatpush1.msra.mxu0 0.0
    %4388 = vmatprep.subr.mxu0 0.0
    %4389 = vmatpush1.msra.mxu0 0.0
    %4390 = vmatprep.subr.mxu0 0.0
    %4391 = vmatpush1.msra.mxu0 0.0
    %4392 = vmatprep.subr.mxu0 0.0
    %4393 = vmatpush1.msra.mxu0 0.0
    %4394 = vmatprep.subr.mxu0 0.0
    %4395 = vmatpush1.msra.mxu0 0.0
    %4396 = vmatprep.subr.mxu0 0.0
    %4397 = vmatpush1.msra.mxu0 0.0
    %4398 = vmatprep.subr.mxu0 0.0
    %4399 = vmatpush1.msra.mxu0 %v4361
    %4400 = vmatprep.subr.mxu0 0.0
    %4401 = vmatpush1.msra.mxu0 %v4359
    %4402 = vmatprep.subr.mxu0 0.0
    %4403 = vmatpush2.msra.mxu0 0.0
    %4404 = vmatprep.subr.mxu0 0.0
    %4405 = vmatpush2.msra.mxu0 0.0
    %4406 = vmatprep.subr.mxu0 0.0
    %4407 = vmatpush2.msra.mxu0 0.0
    %4408 = vmatprep.subr.mxu0 0.0
    %4409 = vmatpush2.msra.mxu0 0.0
    %4410 = vmatprep.subr.mxu0 0.0
    %4411 = vmatpush2.msra.mxu0 0.0
    %4412 = vmatprep.subr.mxu0 0.0
    %4413 = vmatpush2.msra.mxu0 0.0
    %4414 = vmatprep.subr.mxu0 0.0
    %4415 = vmatpush2.msra.mxu0 0.0
    %4416 = vmatprep.subr.mxu0 0.0
    %4417 = vmatpush2.msra.mxu0 0.0
    %4418 = vmatprep.subr.mxu0 0.0
    %4419 = vmatpush2.msra.mxu0 0.0
    %4420 = vmatprep.subr.mxu0 0.0
    %4421 = vmatpush2.msra.mxu0 0.0
    %4422 = vmatprep.subr.mxu0 0.0
    %4423 = vmatpush2.msra.mxu0 0.0
    %4424 = vmatprep.subr.mxu0 0.0
    %4425 = vmatpush2.msra.mxu0 0.0
    %4426 = vmatprep.subr.mxu0 0.0
    %4427 = vmatpush2.msra.mxu0 0.0
    %4428 = vmatprep.subr.mxu0 0.0
    %4429 = vmatpush2.msra.mxu0 0.0
    %4430 = vmatprep.subr.mxu0 0.0
    %4431 = vmatpush2.msra.mxu0 0.0
    %4432 = vmatprep.subr.mxu0 0.0
    %4433 = vmatpush2.msra.mxu0 0.0
    %4434 = vmatprep.mubr.f32.mxu0 0.0
    %4435 = vmatmul.mubr.f32.gmra.mxu0 %v4365
    %v4436 = vpop.f32.mrf.mxu0
    %v4437 = vadd.f32 0.0, %v4436
    %v4438 = vpop.f32.mrf.mxu0
    %4439 = vmatprep.mubr.f32.mxu0 0.0
    %4440 = vmatmul.mubr.f32.gmra.mxu0 %v4368
    %v4441 = vpop.f32.mrf.mxu0
    %v4442 = vadd.f32 0.0, %v4441
    %v4443 = vpop.f32.mrf.mxu0
    %4444 = vdwg.mxu0
    %4447 = vrot.lane.b32.xlu0 %v4033, 16
    %v4448 = vpop.permute.xlu0 %4447
    %4449 = vrot.lane.b32.xlu0 %v4038, 16
    %v4450 = vpop.permute.xlu0 %4449
    %4455 = vrot.lane.b32.xlu0 %v4235, 32
    %v4456 = vpop.permute.xlu0 %4455
    %4457 = vrot.lane.b32.xlu0 %v4240, 32
    %v4458 = vpop.permute.xlu0 %4457
    %4463 = vrot.lane.b32.xlu0 %v4437, 48
    %v4464 = vpop.permute.xlu0 %4463
    %4465 = vrot.lane.b32.xlu0 %v4442, 48
    %v4466 = vpop.permute.xlu0 %4465
    %v4469 = vsel %vm227, %v3829, %v4448
    %v4470 = vsel %vm227, %v3834, %v4450
    %v4471 = vsel %vm722, %v4469, %v4456
    %v4472 = vsel %vm722, %v4470, %v4458
    %v4473 = vsel %vm127, %v4471, %v4464
    %v4474 = vsel %vm127, %v4472, %v4466
    %v4476 = vsel %vm2351, %v3641, 0
    %v4479 = vsel %vm2351, %v3642, 0
    %v4482 = vsel %vm2351, %v4473, 0
    %v4485 = vsel %vm2351, %v4474, 0
    %4487 = vmatprep.subr.mxu0 0.0
    %4488 = vmatpush1.msra.mxu0 0.0
    %4489 = vmatprep.subr.mxu0 0.0
    %4490 = vmatpush1.msra.mxu0 0.0
    %4491 = vmatprep.subr.mxu0 0.0
    %4492 = vmatpush1.msra.mxu0 0.0
    %4493 = vmatprep.subr.mxu0 0.0
    %4494 = vmatpush1.msra.mxu0 0.0
    %4495 = vmatprep.subr.mxu0 0.0
    %4496 = vmatpush1.msra.mxu0 0.0
    %4497 = vmatprep.subr.mxu0 0.0
    %4498 = vmatpush1.msra.mxu0 0.0
    %4499 = vmatprep.subr.mxu0 0.0
    %4500 = vmatpush1.msra.mxu0 0.0
    %4501 = vmatprep.subr.mxu0 0.0
    %4502 = vmatpush1.msra.mxu0 0.0
    %4503 = vmatprep.subr.mxu0 0.0
    %4504 = vmatpush1.msra.mxu0 %v2612
    %4505 = vmatprep.subr.mxu0 0.0
    %4506 = vmatpush1.msra.mxu0 %v2611
    %4507 = vmatprep.subr.mxu0 0.0
    %4508 = vmatpush1.msra.mxu0 %v2610
    %4509 = vmatprep.subr.mxu0 0.0
    %4510 = vmatpush1.msra.mxu0 %v2609
    %4511 = vmatprep.subr.mxu0 0.0
    %4512 = vmatpush1.msra.mxu0 %v2608
    %4513 = vmatprep.subr.mxu0 0.0
    %4514 = vmatpush1.msra.mxu0 %v2607
    %4515 = vmatprep.subr.mxu0 0.0
    %4516 = vmatpush1.msra.mxu0 %v2606
    %4517 = vmatprep.subr.mxu0 0.0
    %4518 = vmatpush1.msra.mxu0 %v2605
    %4519 = vmatprep.subr.mxu0 0.0
    %4520 = vmatpush2.msra.mxu0 0.0
    %4521 = vmatprep.subr.mxu0 0.0
    %4522 = vmatpush2.msra.mxu0 0.0
    %4523 = vmatprep.subr.mxu0 0.0
    %4524 = vmatpush2.msra.mxu0 0.0
    %4525 = vmatprep.subr.mxu0 0.0
    %4526 = vmatpush2.msra.mxu0 0.0
    %4527 = vmatprep.subr.mxu0 0.0
    %4528 = vmatpush2.msra.mxu0 0.0
    %4529 = vmatprep.subr.mxu0 0.0
    %4530 = vmatpush2.msra.mxu0 0.0
    %4531 = vmatprep.subr.mxu0 0.0
    %4532 = vmatpush2.msra.mxu0 0.0
    %4533 = vmatprep.subr.mxu0 0.0
    %4534 = vmatpush2.msra.mxu0 0.0
    %4535 = vmatprep.subr.mxu0 0.0
    %4536 = vmatpush2.msra.mxu0 0.0
    %4537 = vmatprep.subr.mxu0 0.0
    %4538 = vmatpush2.msra.mxu0 0.0
    %4539 = vmatprep.subr.mxu0 0.0
    %4540 = vmatpush2.msra.mxu0 0.0
    %4541 = vmatprep.subr.mxu0 0.0
    %4542 = vmatpush2.msra.mxu0 0.0
    %4543 = vmatprep.subr.mxu0 0.0
    %4544 = vmatpush2.msra.mxu0 0.0
    %4545 = vmatprep.subr.mxu0 0.0
    %4546 = vmatpush2.msra.mxu0 0.0
    %4547 = vmatprep.subr.mxu0 0.0
    %4548 = vmatpush2.msra.mxu0 0.0
    %4549 = vmatprep.subr.mxu0 0.0
    %4550 = vmatpush2.msra.mxu0 0.0
    %4551 = vmatprep.mubr.f32.mxu0 0.0
    %4552 = vmatmul.mubr.f32.gmra.mxu0 %v4476
    %v4553 = vpop.f32.mrf.mxu0
    %v4554 = vadd.f32 %v2587, %v4553
    %v4555 = vpop.f32.mrf.mxu0
    %4556 = vmatprep.mubr.f32.mxu0 0.0
    %4557 = vmatmul.mubr.f32.gmra.mxu0 %v4479
    %v4558 = vpop.f32.mrf.mxu0
    %v4559 = vadd.f32 %v2587, %v4558
    %v4560 = vpop.f32.mrf.mxu0
    %4561 = vmatprep.mubr.f32.mxu0 0.0
    %4562 = vmatmul.mubr.f32.gmra.mxu0 %v4482
    %v4563 = vpop.f32.mrf.mxu0
    %v4564 = vadd.f32 %v2587, %v4563
    %v4565 = vpop.f32.mrf.mxu0
    %4566 = vmatprep.mubr.f32.mxu0 0.0
    %4567 = vmatmul.mubr.f32.gmra.mxu0 %v4485
    %v4568 = vpop.f32.mrf.mxu0
    %v4569 = vadd.f32 %v2587, %v4568
    %v4570 = vpop.f32.mrf.mxu0
    %4571 = vdwg.mxu0
    %v4572 = vadd.f32 %v4554, %v2576
    %v4573 = vadd.f32 %v4559, %v2581
    %v4574 = vadd.f32 %v4564, %v2582
    %v4575 = vadd.f32 %v4569, %v2584
    %v4576 = vsel %vm127, %v4572, 0.0
    %4577 = vadd.xlane.f32.xlu0 %v4576
    %v4578 = vpop.xlane.xlu0 %4577
    %v4579 = vsel %vm127, %v4573, 0.0
    %4580 = vadd.xlane.f32.xlu0 %v4579
    %v4581 = vpop.xlane.xlu0 %4580
    %v4582 = vsel %vm127, %v4574, 0.0
    %4583 = vadd.xlane.f32.xlu0 %v4582
    %v4584 = vpop.xlane.xlu0 %4583
    %v4585 = vsel %vm127, %v4575, 0.0
    %4586 = vadd.xlane.f32.xlu0 %v4585
    %v4587 = vpop.xlane.xlu0 %4586
    %v4588 = vmul.f32 %v4578, %v2661
    %v4589 = vmul.f32 %v4581, %v2661
    %v4590 = vmul.f32 %v4584, %v2661
    %v4591 = vmul.f32 %v4587, %v2661
    %v4592 = vsub.f32 %v4572, %v4588
    %v4593 = vsub.f32 %v4573, %v4589
    %v4594 = vsub.f32 %v4574, %v4590
    %v4595 = vsub.f32 %v4575, %v4591
    %v4596 = vmul.f32 %v4592, %v4592
    %v4597 = vmul.f32 %v4593, %v4593
    %v4598 = vmul.f32 %v4594, %v4594
    %v4599 = vmul.f32 %v4595, %v4595
    %v4600 = vsel %vm127, %v4596, 0.0
    %4601 = vadd.xlane.f32.xlu0 %v4600
    %v4602 = vpop.xlane.xlu0 %4601
    %v4603 = vsel %vm127, %v4597, 0.0
    %4604 = vadd.xlane.f32.xlu0 %v4603
    %v4605 = vpop.xlane.xlu0 %4604
    %v4606 = vsel %vm127, %v4598, 0.0
    %4607 = vadd.xlane.f32.xlu0 %v4606
    %v4608 = vpop.xlane.xlu0 %4607
    %v4609 = vsel %vm127, %v4599, 0.0
    %4610 = vadd.xlane.f32.xlu0 %v4609
    %v4611 = vpop.xlane.xlu0 %4610
    %v4612 = vmul.f32 %v4602, %v2661
    %v4613 = vmul.f32 %v4605, %v2661
    %v4614 = vmul.f32 %v4608, %v2661
    %v4615 = vmul.f32 %v4611, %v2661
    %v4616 = vadd.f32 %v4612, 1e-05
    %v4617 = vadd.f32 %v4613, 1e-05
    %v4618 = vadd.f32 %v4614, 1e-05
    %v4619 = vadd.f32 %v4615, 1e-05
    %v4620 = vrsqrt.pop %v4616
    %v4621 = vrsqrt.pop %v4617
    %v4622 = vrsqrt.pop %v4618
    %v4623 = vrsqrt.pop %v4619
    %v4624 = vmul.f32 %v4592, %v4620
    %v4625 = vmul.f32 %v4593, %v4621
    %v4626 = vmul.f32 %v4594, %v4622
    %v4627 = vmul.f32 %v4595, %v4623
    %v4628 = vmul.f32 %v4624, %v2588
    %v4629 = vmul.f32 %v4625, %v2588
    %v4630 = vmul.f32 %v4626, %v2588
    %v4631 = vmul.f32 %v4627, %v2588
    %v4632 = vadd.f32 %v4628, %v2589
    %v4633 = vadd.f32 %v4629, %v2589
    %v4634 = vadd.f32 %v4630, %v2589
    %v4635 = vadd.f32 %v4631, %v2589
    %v4637 = vlaneseq
    %v4638 = vshrl.u32 %v4637, 7
    %v4639 = vsub.s32 0, %v4638
    %v4640 = vrot.slane %v2591, %v4639
    %v4641 = vlaneseq
    %v4642 = vshrl.u32 %v4641, 7
    %v4643 = vsub.s32 1, %v4642
    %v4644 = vrot.slane %v2591, %v4643
    %v4648 = vsel %vm127, %v4632, 0
    %v4651 = vsel %vm127, %v4633, 0
    %v4654 = vsel %vm127, %v4634, 0
    %v4657 = vsel %vm127, %v4635, 0
    %4659 = vmatprep.subr.mxu0 0.0
    %4660 = vmatpush1.msra.mxu0 0.0
    %4661 = vmatprep.subr.mxu0 0.0
    %4662 = vmatpush1.msra.mxu0 0.0
    %4663 = vmatprep.subr.mxu0 0.0
    %4664 = vmatpush1.msra.mxu0 0.0
    %4665 = vmatprep.subr.mxu0 0.0
    %4666 = vmatpush1.msra.mxu0 0.0
    %4667 = vmatprep.subr.mxu0 0.0
    %4668 = vmatpush1.msra.mxu0 0.0
    %4669 = vmatprep.subr.mxu0 0.0
    %4670 = vmatpush1.msra.mxu0 0.0
    %4671 = vmatprep.subr.mxu0 0.0
    %4672 = vmatpush1.msra.mxu0 0.0
    %4673 = vmatprep.subr.mxu0 0.0
    %4674 = vmatpush1.msra.mxu0 0.0
    %4675 = vmatprep.subr.mxu0 0.0
    %4676 = vmatpush1.msra.mxu0 0.0
    %4677 = vmatprep.subr.mxu0 0.0
    %4678 = vmatpush1.msra.mxu0 0.0
    %4679 = vmatprep.subr.mxu0 %v2624
    %4680 = vmatpush1.msra.mxu0 %v2623
    %4681 = vmatprep.subr.mxu0 %v2622
    %4682 = vmatpush1.msra.mxu0 %v2621
    %4683 = vmatprep.subr.mxu0 %v2620
    %4684 = vmatpush1.msra.mxu0 %v2619
    %4685 = vmatprep.subr.mxu0 %v2618
    %4686 = vmatpush1.msra.mxu0 %v2617
    %4687 = vmatprep.subr.mxu0 %v2616
    %4688 = vmatpush1.msra.mxu0 %v2615
    %4689 = vmatprep.subr.mxu0 %v2614
    %4690 = vmatpush1.msra.mxu0 %v2613
    %4691 = vmatprep.subr.mxu0 0.0
    %4692 = vmatpush2.msra.mxu0 0.0
    %4693 = vmatprep.subr.mxu0 0.0
    %4694 = vmatpush2.msra.mxu0 0.0
    %4695 = vmatprep.subr.mxu0 0.0
    %4696 = vmatpush2.msra.mxu0 0.0
    %4697 = vmatprep.subr.mxu0 0.0
    %4698 = vmatpush2.msra.mxu0 0.0
    %4699 = vmatprep.subr.mxu0 0.0
    %4700 = vmatpush2.msra.mxu0 0.0
    %4701 = vmatprep.subr.mxu0 0.0
    %4702 = vmatpush2.msra.mxu0 0.0
    %4703 = vmatprep.subr.mxu0 0.0
    %4704 = vmatpush2.msra.mxu0 0.0
    %4705 = vmatprep.subr.mxu0 0.0
    %4706 = vmatpush2.msra.mxu0 0.0
    %4707 = vmatprep.subr.mxu0 0.0
    %4708 = vmatpush2.msra.mxu0 0.0
    %4709 = vmatprep.subr.mxu0 0.0
    %4710 = vmatpush2.msra.mxu0 0.0
    %4711 = vmatprep.subr.mxu0 0.0
    %4712 = vmatpush2.msra.mxu0 0.0
    %4713 = vmatprep.subr.mxu0 0.0
    %4714 = vmatpush2.msra.mxu0 0.0
    %4715 = vmatprep.subr.mxu0 0.0
    %4716 = vmatpush2.msra.mxu0 0.0
    %4717 = vmatprep.subr.mxu0 0.0
    %4718 = vmatpush2.msra.mxu0 0.0
    %4719 = vmatprep.subr.mxu0 0.0
    %4720 = vmatpush2.msra.mxu0 0.0
    %4721 = vmatprep.subr.mxu0 0.0
    %4722 = vmatpush2.msra.mxu0 0.0
    %4723 = vmatprep.mubr.f32.mxu0 0.0
    %4724 = vmatmul.mubr.f32.gmra.mxu0 %v4648
    %v4725 = vpop.f32.mrf.mxu0
    %v4726 = vadd.f32 %v4640, %v4725
    %v4727 = vpop.f32.mrf.mxu0
    %v4728 = vadd.f32 %v4644, %v4727
    %4729 = vmatprep.mubr.f32.mxu0 0.0
    %4730 = vmatmul.mubr.f32.gmra.mxu0 %v4651
    %v4731 = vpop.f32.mrf.mxu0
    %v4732 = vadd.f32 %v4640, %v4731
    %v4733 = vpop.f32.mrf.mxu0
    %v4734 = vadd.f32 %v4644, %v4733
    %4735 = vmatprep.mubr.f32.mxu0 0.0
    %4736 = vmatmul.mubr.f32.gmra.mxu0 %v4654
    %v4737 = vpop.f32.mrf.mxu0
    %v4738 = vadd.f32 %v4640, %v4737
    %v4739 = vpop.f32.mrf.mxu0
    %v4740 = vadd.f32 %v4644, %v4739
    %4741 = vmatprep.mubr.f32.mxu0 0.0
    %4742 = vmatmul.mubr.f32.gmra.mxu0 %v4657
    %v4743 = vpop.f32.mrf.mxu0
    %v4744 = vadd.f32 %v4640, %v4743
    %v4745 = vpop.f32.mrf.mxu0
    %v4746 = vadd.f32 %v4644, %v4745
    %4747 = vdwg.mxu0
    %v4748 = vmul.f32 %v4726, 0.5
    %v4749 = vmul.f32 %v4728, 0.5
    %v4750 = vmul.f32 %v4732, 0.5
    %v4751 = vmul.f32 %v4734, 0.5
    %v4752 = vmul.f32 %v4738, 0.5
    %v4753 = vmul.f32 %v4740, 0.5
    %v4754 = vmul.f32 %v4744, 0.5
    %v4755 = vmul.f32 %v4746, 0.5
    %v4756 = vmul.f32 %v4726, 0.70710677
    %v4757 = vmul.f32 %v4728, 0.70710677
    %v4758 = vmul.f32 %v4732, 0.70710677
    %v4759 = vmul.f32 %v4734, 0.70710677
    %v4760 = vmul.f32 %v4738, 0.70710677
    %v4761 = vmul.f32 %v4740, 0.70710677
    %v4762 = vmul.f32 %v4744, 0.70710677
    %v4763 = vmul.f32 %v4746, 0.70710677
    %v4764 = verf.f32.pop %v4756
    %v4765 = verf.f32.pop %v4757
    %v4766 = verf.f32.pop %v4758
    %v4767 = verf.f32.pop %v4759
    %v4768 = verf.f32.pop %v4760
    %v4769 = verf.f32.pop %v4761
    %v4770 = verf.f32.pop %v4762
    %v4771 = verf.f32.pop %v4763
    %v4772 = vadd.f32 %v4764, 1.0
    %v4773 = vadd.f32 %v4765, 1.0
    %v4774 = vadd.f32 %v4766, 1.0
    %v4775 = vadd.f32 %v4767, 1.0
    %v4776 = vadd.f32 %v4768, 1.0
    %v4777 = vadd.f32 %v4769, 1.0
    %v4778 = vadd.f32 %v4770, 1.0
    %v4779 = vadd.f32 %v4771, 1.0
    %v4780 = vmul.f32 %v4748, %v4772
    %v4781 = vmul.f32 %v4749, %v4773
    %v4782 = vmul.f32 %v4750, %v4774
    %v4783 = vmul.f32 %v4751, %v4775
    %v4784 = vmul.f32 %v4752, %v4776
    %v4785 = vmul.f32 %v4753, %v4777
    %v4786 = vmul.f32 %v4754, %v4778
    %v4787 = vmul.f32 %v4755, %v4779
    %v4789 = vsel %vm2351, %v4781, 0
    %v4792 = vsel %vm2351, %v4783, 0
    %v4795 = vsel %vm2351, %v4785, 0
    %v4798 = vsel %vm2351, %v4787, 0
    %4800 = vmatprep.subr.mxu0 0.0
    %4801 = vmatpush1.msra.mxu0 %v2640
    %4802 = vmatprep.subr.mxu0 0.0
    %4803 = vmatpush1.msra.mxu0 %v2639
    %4804 = vmatprep.subr.mxu0 0.0
    %4805 = vmatpush1.msra.mxu0 %v2638
    %4806 = vmatprep.subr.mxu0 0.0
    %4807 = vmatpush1.msra.mxu0 %v2637
    %4808 = vmatprep.subr.mxu0 0.0
    %4809 = vmatpush1.msra.mxu0 %v2636
    %4810 = vmatprep.subr.mxu0 0.0
    %4811 = vmatpush1.msra.mxu0 %v2635
    %4812 = vmatprep.subr.mxu0 0.0
    %4813 = vmatpush1.msra.mxu0 %v2634
    %4814 = vmatprep.subr.mxu0 0.0
    %4815 = vmatpush1.msra.mxu0 %v2633
    %4816 = vmatprep.subr.mxu0 0.0
    %4817 = vmatpush1.msra.mxu0 %v2632
    %4818 = vmatprep.subr.mxu0 0.0
    %4819 = vmatpush1.msra.mxu0 %v2631
    %4820 = vmatprep.subr.mxu0 0.0
    %4821 = vmatpush1.msra.mxu0 %v2630
    %4822 = vmatprep.subr.mxu0 0.0
    %4823 = vmatpush1.msra.mxu0 %v2629
    %4824 = vmatprep.subr.mxu0 0.0
    %4825 = vmatpush1.msra.mxu0 %v2628
    %4826 = vmatprep.subr.mxu0 0.0
    %4827 = vmatpush1.msra.mxu0 %v2627
    %4828 = vmatprep.subr.mxu0 0.0
    %4829 = vmatpush1.msra.mxu0 %v2626
    %4830 = vmatprep.subr.mxu0 0.0
    %4831 = vmatpush1.msra.mxu0 %v2625
    %4832 = vmatprep.subr.mxu0 0.0
    %4833 = vmatpush2.msra.mxu0 0.0
    %4834 = vmatprep.subr.mxu0 0.0
    %4835 = vmatpush2.msra.mxu0 0.0
    %4836 = vmatprep.subr.mxu0 0.0
    %4837 = vmatpush2.msra.mxu0 0.0
    %4838 = vmatprep.subr.mxu0 0.0
    %4839 = vmatpush2.msra.mxu0 0.0
    %4840 = vmatprep.subr.mxu0 0.0
    %4841 = vmatpush2.msra.mxu0 0.0
    %4842 = vmatprep.subr.mxu0 0.0
    %4843 = vmatpush2.msra.mxu0 0.0
    %4844 = vmatprep.subr.mxu0 0.0
    %4845 = vmatpush2.msra.mxu0 0.0
    %4846 = vmatprep.subr.mxu0 0.0
    %4847 = vmatpush2.msra.mxu0 0.0
    %4848 = vmatprep.subr.mxu0 0.0
    %4849 = vmatpush2.msra.mxu0 %v2648
    %4850 = vmatprep.subr.mxu0 0.0
    %4851 = vmatpush2.msra.mxu0 %v2647
    %4852 = vmatprep.subr.mxu0 0.0
    %4853 = vmatpush2.msra.mxu0 %v2646
    %4854 = vmatprep.subr.mxu0 0.0
    %4855 = vmatpush2.msra.mxu0 %v2645
    %4856 = vmatprep.subr.mxu0 0.0
    %4857 = vmatpush2.msra.mxu0 %v2644
    %4858 = vmatprep.subr.mxu0 0.0
    %4859 = vmatpush2.msra.mxu0 %v2643
    %4860 = vmatprep.subr.mxu0 0.0
    %4861 = vmatpush2.msra.mxu0 %v2642
    %4862 = vmatprep.subr.mxu0 0.0
    %4863 = vmatpush2.msra.mxu0 %v2641
    %4864 = vmatprep.mubr.f32.mxu0 %v4789
    %4865 = vmatmul.mubr.f32.gmra.mxu0 %v4780
    %v4866 = vpop.f32.mrf.mxu0
    %v4867 = vadd.f32 %v2592, %v4866
    %v4868 = vpop.f32.mrf.mxu0
    %4869 = vmatprep.mubr.f32.mxu0 %v4792
    %4870 = vmatmul.mubr.f32.gmra.mxu0 %v4782
    %v4871 = vpop.f32.mrf.mxu0
    %v4872 = vadd.f32 %v2592, %v4871
    %v4873 = vpop.f32.mrf.mxu0
    %4874 = vmatprep.mubr.f32.mxu0 %v4795
    %4875 = vmatmul.mubr.f32.gmra.mxu0 %v4784
    %v4876 = vpop.f32.mrf.mxu0
    %v4877 = vadd.f32 %v2592, %v4876
    %v4878 = vpop.f32.mrf.mxu0
    %4879 = vmatprep.mubr.f32.mxu0 %v4798
    %4880 = vmatmul.mubr.f32.gmra.mxu0 %v4786
    %v4881 = vpop.f32.mrf.mxu0
    %v4882 = vadd.f32 %v2592, %v4881
    %v4883 = vpop.f32.mrf.mxu0
    %4884 = vdwg.mxu0
    %v4885 = vadd.f32 %v4867, %v4572
    %v4886 = vadd.f32 %v4872, %v4573
    %v4887 = vadd.f32 %v4877, %v4574
    %v4888 = vadd.f32 %v4882, %v4575
    %v4890 = vrot.slane %v2573, 4
    %v4892 = vsel %vm693, %v4886, %v4890
    %v4893 = vsel %vm693, %v4888, %v2573
    %v4894 = vld [vmem:[%s7] sm:$0xff]
    %v4895 = vld [vmem:[%s7 + $0x8] sm:$0xff]
    %v4896 = vld [vmem:[%s7 + $0x10] sm:$0xff]
    %v4897 = vld [vmem:[%s7 + $0x18] sm:$0xff]
    %v4898 = vld [vmem:[%s7 + $0x20] sm:$0xff]
    %v4899 = vld [vmem:[%s7 + $0x28] sm:$0xff]
    %v4901 = vsel %vm127, %v4885, 0
    %v4904 = vsel %vm127, %v4892, 0
    %v4907 = vsel %vm127, %v4887, 0
    %v4910 = vsel %vm127, %v4893, 0
    %4912 = vmatprep.subr.mxu0 0.0
    %4913 = vmatpush1.msra.mxu0 0.0
    %4914 = vmatprep.subr.mxu0 0.0
    %4915 = vmatpush1.msra.mxu0 0.0
    %4916 = vmatprep.subr.mxu0 0.0
    %4917 = vmatpush1.msra.mxu0 0.0
    %4918 = vmatprep.subr.mxu0 0.0
    %4919 = vmatpush1.msra.mxu0 0.0
    %4920 = vmatprep.subr.mxu0 0.0
    %4921 = vmatpush1.msra.mxu0 0.0
    %4922 = vmatprep.subr.mxu0 0.0
    %4923 = vmatpush1.msra.mxu0 0.0
    %4924 = vmatprep.subr.mxu0 0.0
    %4925 = vmatpush1.msra.mxu0 0.0
    %4926 = vmatprep.subr.mxu0 0.0
    %4927 = vmatpush1.msra.mxu0 0.0
    %4928 = vmatprep.subr.mxu0 0.0
    %4929 = vmatpush1.msra.mxu0 0.0
    %4930 = vmatprep.subr.mxu0 0.0
    %4931 = vmatpush1.msra.mxu0 0.0
    %4932 = vmatprep.subr.mxu0 0.0
    %4933 = vmatpush1.msra.mxu0 %v4899
    %4934 = vmatprep.subr.mxu0 0.0
    %4935 = vmatpush1.msra.mxu0 %v4898
    %4936 = vmatprep.subr.mxu0 0.0
    %4937 = vmatpush1.msra.mxu0 %v4897
    %4938 = vmatprep.subr.mxu0 0.0
    %4939 = vmatpush1.msra.mxu0 %v4896
    %4940 = vmatprep.subr.mxu0 0.0
    %4941 = vmatpush1.msra.mxu0 %v4895
    %4942 = vmatprep.subr.mxu0 0.0
    %4943 = vmatpush1.msra.mxu0 %v4894
    %4944 = vmatprep.subr.mxu0 0.0
    %4945 = vmatpush2.msra.mxu0 0.0
    %4946 = vmatprep.subr.mxu0 0.0
    %4947 = vmatpush2.msra.mxu0 0.0
    %4948 = vmatprep.subr.mxu0 0.0
    %4949 = vmatpush2.msra.mxu0 0.0
    %4950 = vmatprep.subr.mxu0 0.0
    %4951 = vmatpush2.msra.mxu0 0.0
    %4952 = vmatprep.subr.mxu0 0.0
    %4953 = vmatpush2.msra.mxu0 0.0
    %4954 = vmatprep.subr.mxu0 0.0
    %4955 = vmatpush2.msra.mxu0 0.0
    %4956 = vmatprep.subr.mxu0 0.0
    %4957 = vmatpush2.msra.mxu0 0.0
    %4958 = vmatprep.subr.mxu0 0.0
    %4959 = vmatpush2.msra.mxu0 0.0
    %4960 = vmatprep.subr.mxu0 0.0
    %4961 = vmatpush2.msra.mxu0 0.0
    %4962 = vmatprep.subr.mxu0 0.0
    %4963 = vmatpush2.msra.mxu0 0.0
    %4964 = vmatprep.subr.mxu0 0.0
    %4965 = vmatpush2.msra.mxu0 0.0
    %4966 = vmatprep.subr.mxu0 0.0
    %4967 = vmatpush2.msra.mxu0 0.0
    %4968 = vmatprep.subr.mxu0 0.0
    %4969 = vmatpush2.msra.mxu0 0.0
    %4970 = vmatprep.subr.mxu0 0.0
    %4971 = vmatpush2.msra.mxu0 0.0
    %4972 = vmatprep.subr.mxu0 0.0
    %4973 = vmatpush2.msra.mxu0 0.0
    %4974 = vmatprep.subr.mxu0 0.0
    %4975 = vmatpush2.msra.mxu0 0.0
    %4976 = vmatprep.mubr.f32.mxu0 0.0
    %4977 = vmatmul.mubr.f32.gmra.mxu0 %v4901
    %v4978 = vpop.f32.mrf.mxu0
    %v4979 = vadd.f32 %v61, %v4978
    %v4980 = vpop.f32.mrf.mxu0
    %4981 = vmatprep.mubr.f32.mxu0 0.0
    %4982 = vmatmul.mubr.f32.gmra.mxu0 %v4904
    %v4983 = vpop.f32.mrf.mxu0
    %v4984 = vadd.f32 %v61, %v4983
    %v4985 = vpop.f32.mrf.mxu0
    %4986 = vmatprep.mubr.f32.mxu0 0.0
    %4987 = vmatmul.mubr.f32.gmra.mxu0 %v4907
    %v4988 = vpop.f32.mrf.mxu0
    %v4989 = vadd.f32 %v61, %v4988
    %v4990 = vpop.f32.mrf.mxu0
    %4991 = vmatprep.mubr.f32.mxu0 0.0
    %4992 = vmatmul.mubr.f32.gmra.mxu0 %v4910
    %v4993 = vpop.f32.mrf.mxu0
    %v4994 = vadd.f32 %v61, %v4993
    %v4995 = vpop.f32.mrf.mxu0
    %4996 = vdwg.mxu0
    %v4998 = vsel %vm227, %v95, 0
    %v5001 = vsel %vm227, %v96, 0
    %5003 = vmatprep.subr.mxu0 0.0
    %5004 = vmatpush1.msra.mxu0 0.0
    %5005 = vmatprep.subr.mxu0 0.0
    %5006 = vmatpush1.msra.mxu0 0.0
    %5007 = vmatprep.subr.mxu0 0.0
    %5008 = vmatpush1.msra.mxu0 0.0
    %5009 = vmatprep.subr.mxu0 0.0
    %5010 = vmatpush1.msra.mxu0 0.0
    %5011 = vmatprep.subr.mxu0 0.0
    %5012 = vmatpush1.msra.mxu0 0.0
    %5013 = vmatprep.subr.mxu0 0.0
    %5014 = vmatpush1.msra.mxu0 0.0
    %5015 = vmatprep.subr.mxu0 0.0
    %5016 = vmatpush1.msra.mxu0 0.0
    %5017 = vmatprep.subr.mxu0 0.0
    %5018 = vmatpush1.msra.mxu0 0.0
    %5019 = vmatprep.subr.mxu0 0.0
    %5020 = vmatpush1.msra.mxu0 0.0
    %5021 = vmatprep.subr.mxu0 0.0
    %5022 = vmatpush1.msra.mxu0 0.0
    %5023 = vmatprep.subr.mxu0 0.0
    %5024 = vmatpush1.msra.mxu0 0.0
    %5025 = vmatprep.subr.mxu0 0.0
    %5026 = vmatpush1.msra.mxu0 0.0
    %5027 = vmatprep.subr.mxu0 0.0
    %5028 = vmatpush1.msra.mxu0 0.0
    %5029 = vmatprep.subr.mxu0 0.0
    %5030 = vmatpush1.msra.mxu0 0.0
    %5031 = vmatprep.subr.mxu0 0.0
    %5032 = vmatpush1.msra.mxu0 %v4984
    %5033 = vmatprep.subr.mxu0 0.0
    %5034 = vmatpush1.msra.mxu0 %v4979
    %5035 = vmatprep.subr.mxu0 0.0
    %5036 = vmatpush2.msra.mxu0 0.0
    %5037 = vmatprep.subr.mxu0 0.0
    %5038 = vmatpush2.msra.mxu0 0.0
    %5039 = vmatprep.subr.mxu0 0.0
    %5040 = vmatpush2.msra.mxu0 0.0
    %5041 = vmatprep.subr.mxu0 0.0
    %5042 = vmatpush2.msra.mxu0 0.0
    %5043 = vmatprep.subr.mxu0 0.0
    %5044 = vmatpush2.msra.mxu0 0.0
    %5045 = vmatprep.subr.mxu0 0.0
    %5046 = vmatpush2.msra.mxu0 0.0
    %5047 = vmatprep.subr.mxu0 0.0
    %5048 = vmatpush2.msra.mxu0 0.0
    %5049 = vmatprep.subr.mxu0 0.0
    %5050 = vmatpush2.msra.mxu0 0.0
    %5051 = vmatprep.subr.mxu0 0.0
    %5052 = vmatpush2.msra.mxu0 0.0
    %5053 = vmatprep.subr.mxu0 0.0
    %5054 = vmatpush2.msra.mxu0 0.0
    %5055 = vmatprep.subr.mxu0 0.0
    %5056 = vmatpush2.msra.mxu0 0.0
    %5057 = vmatprep.subr.mxu0 0.0
    %5058 = vmatpush2.msra.mxu0 0.0
    %5059 = vmatprep.subr.mxu0 0.0
    %5060 = vmatpush2.msra.mxu0 0.0
    %5061 = vmatprep.subr.mxu0 0.0
    %5062 = vmatpush2.msra.mxu0 0.0
    %5063 = vmatprep.subr.mxu0 0.0
    %5064 = vmatpush2.msra.mxu0 0.0
    %5065 = vmatprep.subr.mxu0 0.0
    %5066 = vmatpush2.msra.mxu0 0.0
    %5067 = vmatprep.mubr.f32.mxu0 0.0
    %5068 = vmatmul.mubr.f32.gmra.mxu0 %v4998
    %v5069 = vpop.f32.mrf.mxu0
    %v5070 = vadd.f32 0.0, %v5069
    %v5071 = vpop.f32.mrf.mxu0
    %5072 = vmatprep.mubr.f32.mxu0 0.0
    %5073 = vmatmul.mubr.f32.gmra.mxu0 %v5001
    %v5074 = vpop.f32.mrf.mxu0
    %v5075 = vadd.f32 0.0, %v5074
    %v5076 = vpop.f32.mrf.mxu0
    %5077 = vdwg.mxu0
    %v5079 = vsel %vm227, %v119, 0
    %v5082 = vsel %vm227, %v120, 0
    %5084 = vmatprep.subr.mxu0 0.0
    %5085 = vmatpush1.msra.mxu0 0.0
    %5086 = vmatprep.subr.mxu0 0.0
    %5087 = vmatpush1.msra.mxu0 0.0
    %5088 = vmatprep.subr.mxu0 0.0
    %5089 = vmatpush1.msra.mxu0 0.0
    %5090 = vmatprep.subr.mxu0 0.0
    %5091 = vmatpush1.msra.mxu0 0.0
    %5092 = vmatprep.subr.mxu0 0.0
    %5093 = vmatpush1.msra.mxu0 0.0
    %5094 = vmatprep.subr.mxu0 0.0
    %5095 = vmatpush1.msra.mxu0 0.0
    %5096 = vmatprep.subr.mxu0 0.0
    %5097 = vmatpush1.msra.mxu0 0.0
    %5098 = vmatprep.subr.mxu0 0.0
    %5099 = vmatpush1.msra.mxu0 0.0
    %5100 = vmatprep.subr.mxu0 0.0
    %5101 = vmatpush1.msra.mxu0 0.0
    %5102 = vmatprep.subr.mxu0 0.0
    %5103 = vmatpush1.msra.mxu0 0.0
    %5104 = vmatprep.subr.mxu0 0.0
    %5105 = vmatpush1.msra.mxu0 0.0
    %5106 = vmatprep.subr.mxu0 0.0
    %5107 = vmatpush1.msra.mxu0 0.0
    %5108 = vmatprep.subr.mxu0 0.0
    %5109 = vmatpush1.msra.mxu0 0.0
    %5110 = vmatprep.subr.mxu0 0.0
    %5111 = vmatpush1.msra.mxu0 0.0
    %5112 = vmatprep.subr.mxu0 0.0
    %5113 = vmatpush1.msra.mxu0 %v4994
    %5114 = vmatprep.subr.mxu0 0.0
    %5115 = vmatpush1.msra.mxu0 %v4989
    %5116 = vmatprep.subr.mxu0 0.0
    %5117 = vmatpush2.msra.mxu0 0.0
    %5118 = vmatprep.subr.mxu0 0.0
    %5119 = vmatpush2.msra.mxu0 0.0
    %5120 = vmatprep.subr.mxu0 0.0
    %5121 = vmatpush2.msra.mxu0 0.0
    %5122 = vmatprep.subr.mxu0 0.0
    %5123 = vmatpush2.msra.mxu0 0.0
    %5124 = vmatprep.subr.mxu0 0.0
    %5125 = vmatpush2.msra.mxu0 0.0
    %5126 = vmatprep.subr.mxu0 0.0
    %5127 = vmatpush2.msra.mxu0 0.0
    %5128 = vmatprep.subr.mxu0 0.0
    %5129 = vmatpush2.msra.mxu0 0.0
    %5130 = vmatprep.subr.mxu0 0.0
    %5131 = vmatpush2.msra.mxu0 0.0
    %5132 = vmatprep.subr.mxu0 0.0
    %5133 = vmatpush2.msra.mxu0 0.0
    %5134 = vmatprep.subr.mxu0 0.0
    %5135 = vmatpush2.msra.mxu0 0.0
    %5136 = vmatprep.subr.mxu0 0.0
    %5137 = vmatpush2.msra.mxu0 0.0
    %5138 = vmatprep.subr.mxu0 0.0
    %5139 = vmatpush2.msra.mxu0 0.0
    %5140 = vmatprep.subr.mxu0 0.0
    %5141 = vmatpush2.msra.mxu0 0.0
    %5142 = vmatprep.subr.mxu0 0.0
    %5143 = vmatpush2.msra.mxu0 0.0
    %5144 = vmatprep.subr.mxu0 0.0
    %5145 = vmatpush2.msra.mxu0 0.0
    %5146 = vmatprep.subr.mxu0 0.0
    %5147 = vmatpush2.msra.mxu0 0.0
    %5148 = vmatprep.mubr.f32.mxu0 0.0
    %5149 = vmatmul.mubr.f32.gmra.mxu0 %v5079
    %v5150 = vpop.f32.mrf.mxu0
    %v5151 = vadd.f32 0.0, %v5150
    %v5152 = vpop.f32.mrf.mxu0
    %5153 = vmatprep.mubr.f32.mxu0 0.0
    %5154 = vmatmul.mubr.f32.gmra.mxu0 %v5082
    %v5155 = vpop.f32.mrf.mxu0
    %v5156 = vadd.f32 0.0, %v5155
    %v5157 = vpop.f32.mrf.mxu0
    %5158 = vdwg.mxu0
    %5159 = vst.msk [vmem:[%s17] sm:$0xff] %vm127, %v5070
    %5160 = vst.msk [vmem:[%s17 + $0x8] sm:$0xff] %vm127, %v5075
    %5161 = vst.msk [vmem:[%s17 + $0x10] sm:$0xff] %vm127, %v5151
    %5162 = vst.msk [vmem:[%s17 + $0x18] sm:$0xff] %vm127, %v5156
    %v5165 = vrot.slane %v4989, 4
    %v5166 = vrot.slane %v4994, 4
    %v5167 = vsel %vm693, %v5165, %v5166
    %v5170 = vsel %vm693, %v4984, %v5165
    %v5173 = vrot.slane %v607, 4
    %v5174 = vrot.slane %v612, 4
    %v5175 = vsel %vm693, %v5173, %v5174
    %v5178 = vsel %vm693, %v380, %v5173
    %v5179 = vsub.f32 %v4979, %v375
    %v5180 = vsub.f32 %v5170, %v5178
    %v5181 = vsub.f32 %v5167, %v5175
    %v5182 = vmul.f32 %v5179, %v5179
    %v5183 = vmul.f32 %v5180, %v5180
    %v5184 = vmul.f32 %v5181, %v5181
    %v5185 = vsel %vm127, %v5182, 0.0
    %v5186 = vsel %vm127, %v5183, 0.0
    %v5187 = vadd.f32 %v5185, %v5186
    %v5188 = vsel %vm127, %v5184, 0.0
    %v5189 = vadd.f32 %v5187, %v5188
    %5190 = vadd.xlane.f32.xlu0 %v5189
    %v5191 = vpop.xlane.xlu0 %5190
    %v5192 = vrot.slane %v5191, 4
    %v5193 = vadd.f32 %v5191, %v5192
    %v5194 = vrot.slane %v5193, 2
    %v5195 = vadd.f32 %v5193, %v5194
    %v5196 = vrot.slane %v5195, 1
    %v5197 = vadd.f32 %v5195, %v5196
    %s5198 = vtos %v5197
    %v5199 = vstv %s5198
    %v5200 = vmul.f32 %v5199, 0.00086805556
    %vm5201 = vcmask 0
    %5202 = vst.msk [vmem:[#allocation2] sm:$0x1] %vm5201, %v5200
    // Predicated region
    $region70: #{mae_forward.1} parent=1 // pred_check
      _
    $region71: #{mae_forward.1} parent=1 // pred_check_branch
      %5204 = sbr.rel (0) target = $region73
    $region72: #{mae_forward.1} parent=1 // pred_region
      _
    $region73: #{mae_forward.1} parent=1 // pred_fallthru
      _
    // Predicated region
    $region74: #{mae_forward.1} parent=1 // pred_check
      _
    $region75: #{mae_forward.1} parent=1 // pred_check_branch
      %5206 = sbr.rel (0) target = $region77
    $region76: #{mae_forward.1} parent=1 // pred_region
      %s5208 = ssub.s32 16, 16
      %5209 = vsyncadd [#allocation3], %s5208
      %s5211 = sshll.u32 [#allocation2], 4
      %s5212 = int_to_ptr.vmem [resolvable:$true] %s5211
      %5214 = dma.vmem_to_hbm [thread:$0]  %s5212, 16, %s18, [#allocation3]
    $region77: #{mae_forward.1} parent=1 // pred_fallthru
      _
    // Predicated region
    $region78: #{mae_forward.1} parent=1 // pred_check
      _
    $region79: #{mae_forward.1} parent=1 // pred_check_branch
      %5216 = sbr.rel (0) target = $region81
    $region80: #{mae_forward.1} parent=1 // pred_region
      _
    $region81: #{mae_forward.1} parent=1 // pred_fallthru
      _
    // Predicated region
    $region82: #{mae_forward.1} parent=1 // pred_check
      _
    $region83: #{mae_forward.1} parent=1 // pred_check_branch
      %5218 = sbr.rel (0) target = $region85
    $region84: #{mae_forward.1} parent=1 // pred_region
      %5219 = dma.done [#allocation3], 16
    $region85: #{mae_forward.1} parent=1 // pred_fallthru
      _
    %5220 = vsyncpa [#allocation3], 1

</llo_original>
